<compile_context>
chip_gen: v7x
topology: tpu7x:2x2x1
jax: 0.10.0
libtpu: 0.0.40
codegen_flags: <defaults>
</compile_context>

<pallas_src>
import numpy as np
import jax
import jax.numpy as jnp
from jax.experimental import pallas as pl
from jax.experimental.pallas import tpu as pltpu

# ---- model hyper-parameters (exactly as in the PyTorch module) --------------
d_k = d_v = 64
d_model = 512
n_heads = 8
d_ff = 2048
n_layers = 1
IN_FEATURES = 5
IN_PAD = 8          # pad 5 input features to a sublane-aligned 8
PROJ_PAD = 128      # lane-dense output slab (only column 0 is meaningful)
LN_EPS = 1e-5
NEG_INF = -1000000000.0


def _layernorm(x):
    mean = jnp.mean(x, axis=-1, keepdims=True)
    var = jnp.mean((x - mean) ** 2, axis=-1, keepdims=True)
    return (x - mean) * jax.lax.rsqrt(var + LN_EPS)


# ---------------------------------------------------------------------------
# Fused kernel: embed + pos-enc + MHA (uniform attn) + FFN + final projection
# One grid step processes TB whole batches (TB * S rows).
# ---------------------------------------------------------------------------
def _make_fused_kernel(TB, S):
    rows = TB * S
    hd = n_heads * d_v

    def kernel(x_ref, we_ref, pos_ref, wv_ref, wo_ref, w1_ref, w2_ref,
               wp_ref, out_ref):
        # --- source embedding: Linear(5, d_model); bias folded into pos table
        x = x_ref[...].reshape(rows, IN_PAD)                     # (rows, 8) f32
        emb = jnp.dot(x, we_ref[...], preferred_element_type=jnp.float32)

        # --- positional encoding (+ embedding bias), broadcast over batch ----
        h = (emb.reshape(TB, S, d_model) + pos_ref[...][None]).reshape(
            rows, d_model)
        # TODO(synk): nn.Dropout(p=0.1) active in torch train mode; identity here.

        # --- multi-head self-attention under the all-ones pad mask -----------
        # softmax over constant -1e9 rows is exactly uniform (1/S) => context
        # is the per-batch mean of V over the sequence, broadcast to queries.
        v = jnp.dot(h.astype(jnp.bfloat16), wv_ref[...],
                    preferred_element_type=jnp.float32)          # (rows, H*d_v)
        v3 = v.reshape(TB, S, hd)
        ctx = jnp.sum(v3, axis=1, keepdims=True) * (1.0 / S)     # (TB, 1, H*d_v)
        ctx = jnp.broadcast_to(ctx, (TB, S, hd)).reshape(rows, hd)
        attn_out = jnp.dot(ctx.astype(jnp.bfloat16), wo_ref[...],
                           preferred_element_type=jnp.float32)   # (rows, d_model)
        h1 = _layernorm(attn_out + h)

        # --- position-wise FFN + residual + LayerNorm -------------------------
        ff = jnp.dot(h1.astype(jnp.bfloat16), w1_ref[...],
                     preferred_element_type=jnp.float32)         # (rows, d_ff)
        ff = jnp.maximum(ff, 0.0)
        ff2 = jnp.dot(ff.astype(jnp.bfloat16), w2_ref[...],
                      preferred_element_type=jnp.float32)        # (rows, d_model)
        h2 = _layernorm(ff2 + h1)

        # --- final projection Linear(d_model, 1): VPU multiply + lane reduce.
        # Broadcast the logit across 128 lanes so the store is an unmasked vst.
        logit = jnp.sum(h2 * wp_ref[...], axis=-1, keepdims=True)   # (rows, 1)
        out_ref[...] = jnp.broadcast_to(
            logit, (rows, PROJ_PAD)).reshape(TB, S, PROJ_PAD)

    return kernel


def _pick_tb(B, S, target_rows=512):
    """Largest divisor of B with TB*S <= target_rows (>=1)."""
    tb = max(1, min(B, max(1, target_rows // max(S, 1))))
    while B % tb:
        tb -= 1
    return tb


def fused_forward_call(x_pad, we_t, pos_be, wv_t, wo_t, w1_t, w2_t, wp,
                       *, B, S, TB):
    return pl.pallas_call(
        _make_fused_kernel(TB, S),
        out_shape=jax.ShapeDtypeStruct((B, S, PROJ_PAD), jnp.float32),
        grid=(B // TB,),
        in_specs=[
            pl.BlockSpec((TB, S, IN_PAD), lambda i: (i, 0, 0)),        # x (streamed)
            pl.BlockSpec((IN_PAD, d_model), lambda i: (0, 0)),         # we
            pl.BlockSpec((S, d_model), lambda i: (0, 0)),              # pos + bias
            pl.BlockSpec((d_model, n_heads * d_v), lambda i: (0, 0)),  # wv (bf16)
            pl.BlockSpec((n_heads * d_v, d_model), lambda i: (0, 0)),  # wo (bf16)
            pl.BlockSpec((d_model, d_ff), lambda i: (0, 0)),           # w1 (bf16)
            pl.BlockSpec((d_ff, d_model), lambda i: (0, 0)),           # w2 (bf16)
            pl.BlockSpec((1, d_model), lambda i: (0, 0)),              # wp
        ],
        out_specs=pl.BlockSpec((TB, S, PROJ_PAD), lambda i: (i, 0, 0)),
        compiler_params=pltpu.CompilerParams(
            dimension_semantics=("parallel",),      # megacore-shard on v7x
            vmem_limit_bytes=32 * 1024 * 1024),     # safe on v5e/v6e/v7x
    )(x_pad, we_t, pos_be, wv_t, wo_t, w1_t, w2_t, wp)


# ---------------------------------------------------------------------------
# Glue: positional table, parameters, full forward
# ---------------------------------------------------------------------------
def make_pos_table(seq_len, dm):
    tbl = np.array(
        [[pos / np.power(10000, 2 * i / dm) for i in range(dm)]
         if pos != 0 else np.zeros(dm) for pos in range(seq_len)])
    tbl[1:, 0::2] = np.sin(tbl[1:, 0::2])
    tbl[1:, 1::2] = np.cos(tbl[1:, 1::2])
    return jnp.asarray(tbl, dtype=jnp.float32)


def init_params(key):
    ks = jax.random.split(key, 9)
    f32 = jnp.float32

    def init(k, shape, scale):
        return scale * jax.random.normal(k, shape, f32)

    # PyTorch Linear weight convention: (out_features, in_features)
    return {
        "we": init(ks[0], (d_model, IN_FEATURES), 0.3),
        "be": init(ks[1], (d_model,), 0.1),
        "wq": init(ks[2], (n_heads * d_k, d_model), 0.02),  # unused (dead compute
        "wk": init(ks[3], (n_heads * d_k, d_model), 0.02),  # under all-ones mask)
        "wv": init(ks[4], (n_heads * d_v, d_model), 0.02),
        "wo": init(ks[5], (d_model, n_heads * d_v), 0.02),
        "w1": init(ks[6], (d_ff, d_model), 0.02),
        "w2": init(ks[7], (d_model, d_ff), 0.02),
        "wp": init(ks[8], (1, d_model), 0.05),
    }


def transformer_forward(x, params):
    """x: (B, S, 5) float32 -> (logits (B*S, 1), [attn (B, H, S, S)])."""
    B, S, _ = x.shape
    TB = _pick_tb(B, S)

    # Host-side layout prep (pure plumbing, negligible cost).
    x_pad = jnp.pad(x, ((0, 0), (0, 0), (0, IN_PAD - IN_FEATURES)))
    we_t = jnp.pad(params["we"].T, ((0, IN_PAD - IN_FEATURES), (0, 0)))
    # Fold the embedding bias into the positional table (one fewer DMA + add).
    pos_be = make_pos_table(S, d_model) + params["be"][None, :]
    # bf16 weights for the large matmuls (native MXU path, half the DMA bytes).
    wv_t = params["wv"].T.astype(jnp.bfloat16)
    wo_t = params["wo"].T.astype(jnp.bfloat16)
    w1_t = params["w1"].T.astype(jnp.bfloat16)
    w2_t = params["w2"].T.astype(jnp.bfloat16)
    wp = params["wp"].astype(jnp.float32)                      # (1, d_model)

    logit_pad = fused_forward_call(x_pad, we_t, pos_be,
                                   wv_t, wo_t, w1_t, w2_t, wp,
                                   B=B, S=S, TB=TB)             # (B, S, 128)
    logits = logit_pad[..., 0].reshape(B * S, 1)

    # get_attn_pad_mask is all-ones => softmax over all -1e9 rows is exactly
    # uniform; the attention tensor is a constant 1/S.
    attns = [jnp.full((B, n_heads, S, S), 1.0 / S, jnp.float32)
             for _ in range(n_layers)]
    return logits, attns


# ---------------------------------------------------------------------------
# Pure-JAX reference (literal masked-softmax path, f32) for a sanity check
# ---------------------------------------------------------------------------
def reference_forward(x, params):
    B, S, _ = x.shape
    emb = x @ params["we"].T + params["be"]
    emb = emb + make_pos_table(S, d_model)[None]
    h = emb
    attns = []
    for _ in range(n_layers):
        q = (h @ params["wq"].T).reshape(B, S, n_heads, d_k).transpose(0, 2, 1, 3)
        k = (h @ params["wk"].T).reshape(B, S, n_heads, d_k).transpose(0, 2, 1, 3)
        v = (h @ params["wv"].T).reshape(B, S, n_heads, d_v).transpose(0, 2, 1, 3)
        scores = jnp.einsum("bhqd,bhkd->bhqk", q, k) / np.sqrt(d_k)
        scores = jnp.full_like(scores, NEG_INF)            # all-ones pad mask
        attn = jax.nn.softmax(scores, axis=-1)
        ctx = jnp.einsum("bhqk,bhkd->bhqd", attn, v)
        ctx = ctx.transpose(0, 2, 1, 3).reshape(B, S, n_heads * d_v)
        h = _layernorm(ctx @ params["wo"].T + h)
        f = jnp.maximum(h @ params["w1"].T, 0.0) @ params["w2"].T
        h = _layernorm(f + h)
        attns.append(attn)
    logits = (h @ params["wp"].T).reshape(-1, 1)
    return logits, attns


if __name__ == "__main__":
    B, S = 2, 8
    key = jax.random.PRNGKey(0)
    k_params, k_x = jax.random.split(key)
    params = init_params(k_params)
    x = jax.random.normal(k_x, (B, S, IN_FEATURES), jnp.float32)

    logits, attns = transformer_forward(x, params)
    logits = jax.block_until_ready(logits)
    attn = jax.block_until_ready(attns[0])

    ref_logits, ref_attns = reference_forward(x, params)
    np.testing.assert_allclose(np.asarray(logits), np.asarray(ref_logits),
                               rtol=5e-2, atol=5e-2)
    np.testing.assert_allclose(np.asarray(attn), np.asarray(ref_attns[0]),
                               rtol=5e-2, atol=5e-2)

    assert logits.shape == (B * S, 1)
    assert attn.shape == (B, n_heads, S, S)
    print("KERNEL_OK")
</pallas_src>

<mosaic_0001>
module attributes {stable_mosaic.version = 11 : i64} {
  func.func @kernel(%arg0: i32, %arg1: memref<2x8x8xf32, #tpu.memory_space<vmem>>, %arg2: memref<8x512xf32, #tpu.memory_space<vmem>>, %arg3: memref<8x512xf32, #tpu.memory_space<vmem>>, %arg4: memref<512x512xbf16, #tpu.memory_space<vmem>>, %arg5: memref<512x512xbf16, #tpu.memory_space<vmem>>, %arg6: memref<512x2048xbf16, #tpu.memory_space<vmem>>, %arg7: memref<2048x512xbf16, #tpu.memory_space<vmem>>, %arg8: memref<1x512xf32, #tpu.memory_space<vmem>>, %arg9: memref<2x8x128xf32, #tpu.memory_space<vmem>>) attributes {dimension_semantics = [#tpu.dimension_semantics<parallel>], iteration_bounds = array<i64: 1>, scalar_prefetch = 0 : i64, scratch_operands = 0 : i64, tpu.core_type = #tpu.core_type<tc>, window_params = [{transform_indices = @transform_0, window_bounds = array<i64: 2, 8, 8>}, {pipeline_mode = #tpu.pipeline_mode<synchronous>, transform_indices = @transform_1, window_bounds = array<i64: 8, 512>}, {pipeline_mode = #tpu.pipeline_mode<synchronous>, transform_indices = @transform_2, window_bounds = array<i64: 8, 512>}, {pipeline_mode = #tpu.pipeline_mode<synchronous>, transform_indices = @transform_3, window_bounds = array<i64: 512, 512>}, {pipeline_mode = #tpu.pipeline_mode<synchronous>, transform_indices = @transform_4, window_bounds = array<i64: 512, 512>}, {pipeline_mode = #tpu.pipeline_mode<synchronous>, transform_indices = @transform_5, window_bounds = array<i64: 512, 2048>}, {pipeline_mode = #tpu.pipeline_mode<synchronous>, transform_indices = @transform_6, window_bounds = array<i64: 2048, 512>}, {pipeline_mode = #tpu.pipeline_mode<synchronous>, transform_indices = @transform_7, window_bounds = array<i64: 1, 512>}, {transform_indices = @transform_8, window_bounds = array<i64: 2, 8, 128>}]} {
    %c0 = arith.constant 0 : index
    %c0_0 = arith.constant 0 : index
    %c0_1 = arith.constant 0 : index
    %0 = vector.load %arg1[%c0, %c0_0, %c0_1] : memref<2x8x8xf32, #tpu.memory_space<vmem>>, vector<2x8x8xf32>
    %1 = vector.shape_cast %0 : vector<2x8x8xf32> to vector<16x8xf32>
    %c0_2 = arith.constant 0 : index
    %c0_3 = arith.constant 0 : index
    %2 = vector.load %arg2[%c0_2, %c0_3] : memref<8x512xf32, #tpu.memory_space<vmem>>, vector<8x512xf32>
    %cst = arith.constant dense<0.000000e+00> : vector<16x512xf32>
    %3 = tpu.matmul %1, %2, %cst {dimension_numbers = #tpu.dot_dimension_numbers<[1], [0], [0], [1], [0, 0, 1, 1], [], []>} : vector<16x8xf32>, vector<8x512xf32>, vector<16x512xf32> -> vector<16x512xf32>
    %4 = vector.shape_cast %3 : vector<16x512xf32> to vector<2x8x512xf32>
    %c0_4 = arith.constant 0 : index
    %c0_5 = arith.constant 0 : index
    %5 = vector.load %arg3[%c0_4, %c0_5] : memref<8x512xf32, #tpu.memory_space<vmem>>, vector<8x512xf32>
    %6 = vector.shape_cast %5 : vector<8x512xf32> to vector<1x8x512xf32>
    %7 = vector.broadcast %6 : vector<1x8x512xf32> to vector<2x8x512xf32>
    %8 = arith.addf %4, %7 : vector<2x8x512xf32>
    %9 = vector.shape_cast %8 : vector<2x8x512xf32> to vector<16x512xf32>
    %10 = arith.truncf %9 : vector<16x512xf32> to vector<16x512xbf16>
    %c0_6 = arith.constant 0 : index
    %c0_7 = arith.constant 0 : index
    %11 = vector.load %arg4[%c0_6, %c0_7] : memref<512x512xbf16, #tpu.memory_space<vmem>>, vector<512x512xbf16>
    %cst_8 = arith.constant dense<0.000000e+00> : vector<16x512xf32>
    %12 = tpu.matmul %10, %11, %cst_8 {dimension_numbers = #tpu.dot_dimension_numbers<[1], [0], [0], [1], [0, 0, 1, 1], [], []>} : vector<16x512xbf16>, vector<512x512xbf16>, vector<16x512xf32> -> vector<16x512xf32>
    %13 = vector.shape_cast %12 : vector<16x512xf32> to vector<2x8x512xf32>
    %cst_9 = arith.constant dense<0.000000e+00> : vector<2x512xf32>
    %14 = vector.multi_reduction <add>, %13, %cst_9 [1] : vector<2x8x512xf32> to vector<2x512xf32>
    %15 = vector.shape_cast %14 : vector<2x512xf32> to vector<2x1x512xf32>
    %cst_10 = arith.constant 1.250000e-01 : f32
    %16 = vector.broadcast %cst_10 : f32 to vector<2x1x512xf32>
    %17 = arith.mulf %15, %16 : vector<2x1x512xf32>
    %18 = vector.shape_cast %17 : vector<2x1x512xf32> to vector<2x1x512xf32>
    %19 = vector.broadcast %18 : vector<2x1x512xf32> to vector<2x8x512xf32>
    %20 = vector.shape_cast %19 : vector<2x8x512xf32> to vector<16x512xf32>
    %21 = arith.truncf %20 : vector<16x512xf32> to vector<16x512xbf16>
    %c0_11 = arith.constant 0 : index
    %c0_12 = arith.constant 0 : index
    %22 = vector.load %arg5[%c0_11, %c0_12] : memref<512x512xbf16, #tpu.memory_space<vmem>>, vector<512x512xbf16>
    %cst_13 = arith.constant dense<0.000000e+00> : vector<16x512xf32>
    %23 = tpu.matmul %21, %22, %cst_13 {dimension_numbers = #tpu.dot_dimension_numbers<[1], [0], [0], [1], [0, 0, 1, 1], [], []>} : vector<16x512xbf16>, vector<512x512xbf16>, vector<16x512xf32> -> vector<16x512xf32>
    %24 = arith.addf %23, %9 : vector<16x512xf32>
    %cst_14 = arith.constant dense<0.000000e+00> : vector<16xf32>
    %25 = vector.multi_reduction <add>, %24, %cst_14 [1] : vector<16x512xf32> to vector<16xf32>
    %26 = vector.shape_cast %25 : vector<16xf32> to vector<16x1xf32>
    %cst_15 = arith.constant 5.120000e+02 : f32
    %27 = vector.broadcast %cst_15 : f32 to vector<16x1xf32>
    %28 = arith.divf %26, %27 : vector<16x1xf32>
    %29 = vector.broadcast %28 : vector<16x1xf32> to vector<16x512xf32>
    %30 = arith.subf %24, %29 : vector<16x512xf32>
    %31 = arith.mulf %30, %30 : vector<16x512xf32>
    %cst_16 = arith.constant dense<0.000000e+00> : vector<16xf32>
    %32 = vector.multi_reduction <add>, %31, %cst_16 [1] : vector<16x512xf32> to vector<16xf32>
    %33 = vector.shape_cast %32 : vector<16xf32> to vector<16x1xf32>
    %cst_17 = arith.constant 5.120000e+02 : f32
    %34 = vector.broadcast %cst_17 : f32 to vector<16x1xf32>
    %35 = arith.divf %33, %34 : vector<16x1xf32>
    %36 = vector.broadcast %28 : vector<16x1xf32> to vector<16x512xf32>
    %37 = arith.subf %24, %36 : vector<16x512xf32>
    %cst_18 = arith.constant 9.99999974E-6 : f32
    %38 = vector.broadcast %cst_18 : f32 to vector<16x1xf32>
    %39 = arith.addf %35, %38 : vector<16x1xf32>
    %40 = math.rsqrt %39 : vector<16x1xf32>
    %41 = vector.broadcast %40 : vector<16x1xf32> to vector<16x512xf32>
    %42 = arith.mulf %37, %41 : vector<16x512xf32>
    %43 = arith.truncf %42 : vector<16x512xf32> to vector<16x512xbf16>
    %c0_19 = arith.constant 0 : index
    %c0_20 = arith.constant 0 : index
    %44 = vector.load %arg6[%c0_19, %c0_20] : memref<512x2048xbf16, #tpu.memory_space<vmem>>, vector<512x2048xbf16>
    %cst_21 = arith.constant dense<0.000000e+00> : vector<16x2048xf32>
    %45 = tpu.matmul %43, %44, %cst_21 {dimension_numbers = #tpu.dot_dimension_numbers<[1], [0], [0], [1], [0, 0, 1, 1], [], []>} : vector<16x512xbf16>, vector<512x2048xbf16>, vector<16x2048xf32> -> vector<16x2048xf32>
    %cst_22 = arith.constant 0.000000e+00 : f32
    %46 = vector.broadcast %cst_22 : f32 to vector<16x2048xf32>
    %47 = arith.maximumf %45, %46 : vector<16x2048xf32>
    %48 = arith.truncf %47 : vector<16x2048xf32> to vector<16x2048xbf16>
    %c0_23 = arith.constant 0 : index
    %c0_24 = arith.constant 0 : index
    %49 = vector.load %arg7[%c0_23, %c0_24] : memref<2048x512xbf16, #tpu.memory_space<vmem>>, vector<2048x512xbf16>
    %cst_25 = arith.constant dense<0.000000e+00> : vector<16x512xf32>
    %50 = tpu.matmul %48, %49, %cst_25 {dimension_numbers = #tpu.dot_dimension_numbers<[1], [0], [0], [1], [0, 0, 1, 1], [], []>} : vector<16x2048xbf16>, vector<2048x512xbf16>, vector<16x512xf32> -> vector<16x512xf32>
    %51 = arith.addf %50, %42 : vector<16x512xf32>
    %cst_26 = arith.constant dense<0.000000e+00> : vector<16xf32>
    %52 = vector.multi_reduction <add>, %51, %cst_26 [1] : vector<16x512xf32> to vector<16xf32>
    %53 = vector.shape_cast %52 : vector<16xf32> to vector<16x1xf32>
    %cst_27 = arith.constant 5.120000e+02 : f32
    %54 = vector.broadcast %cst_27 : f32 to vector<16x1xf32>
    %55 = arith.divf %53, %54 : vector<16x1xf32>
    %56 = vector.broadcast %55 : vector<16x1xf32> to vector<16x512xf32>
    %57 = arith.subf %51, %56 : vector<16x512xf32>
    %58 = arith.mulf %57, %57 : vector<16x512xf32>
    %cst_28 = arith.constant dense<0.000000e+00> : vector<16xf32>
    %59 = vector.multi_reduction <add>, %58, %cst_28 [1] : vector<16x512xf32> to vector<16xf32>
    %60 = vector.shape_cast %59 : vector<16xf32> to vector<16x1xf32>
    %cst_29 = arith.constant 5.120000e+02 : f32
    %61 = vector.broadcast %cst_29 : f32 to vector<16x1xf32>
    %62 = arith.divf %60, %61 : vector<16x1xf32>
    %63 = vector.broadcast %55 : vector<16x1xf32> to vector<16x512xf32>
    %64 = arith.subf %51, %63 : vector<16x512xf32>
    %cst_30 = arith.constant 9.99999974E-6 : f32
    %65 = vector.broadcast %cst_30 : f32 to vector<16x1xf32>
    %66 = arith.addf %62, %65 : vector<16x1xf32>
    %67 = math.rsqrt %66 : vector<16x1xf32>
    %68 = vector.broadcast %67 : vector<16x1xf32> to vector<16x512xf32>
    %69 = arith.mulf %64, %68 : vector<16x512xf32>
    %c0_31 = arith.constant 0 : index
    %c0_32 = arith.constant 0 : index
    %70 = vector.load %arg8[%c0_31, %c0_32] : memref<1x512xf32, #tpu.memory_space<vmem>>, vector<1x512xf32>
    %71 = vector.broadcast %70 : vector<1x512xf32> to vector<16x512xf32>
    %72 = arith.mulf %69, %71 : vector<16x512xf32>
    %cst_33 = arith.constant dense<0.000000e+00> : vector<16xf32>
    %73 = vector.multi_reduction <add>, %72, %cst_33 [1] : vector<16x512xf32> to vector<16xf32>
    %74 = vector.shape_cast %73 : vector<16xf32> to vector<16x1xf32>
    %75 = vector.shape_cast %74 : vector<16x1xf32> to vector<16x1xf32>
    %76 = vector.broadcast %75 : vector<16x1xf32> to vector<16x128xf32>
    %77 = vector.shape_cast %76 : vector<16x128xf32> to vector<2x8x128xf32>
    %c0_34 = arith.constant 0 : index
    %c0_35 = arith.constant 0 : index
    %c0_36 = arith.constant 0 : index
    %78 = vector.load %arg9[%c0_34, %c0_35, %c0_36] : memref<2x8x128xf32, #tpu.memory_space<vmem>>, vector<2x8x128xf32>
    tpu.vector_store %arg9[%c0_34, %c0_35, %c0_36], %77 {strides = array<i32>} : memref<2x8x128xf32, #tpu.memory_space<vmem>>, vector<2x8x128xf32>,
    return
  }
  func.func @transform_0(%arg0: i32) -> (i32, i32, i32) {
    %c0_i32 = arith.constant 0 : i32
    %c0_i32_0 = arith.constant 0 : i32
    %c0_i32_1 = arith.constant 0 : i32
    return %arg0, %c0_i32, %c0_i32_0 : i32, i32, i32
  }
  func.func @transform_1(%arg0: i32) -> (i32, i32) {
    %c0_i32 = arith.constant 0 : i32
    %c0_i32_0 = arith.constant 0 : i32
    %c0_i32_1 = arith.constant 0 : i32
    return %c0_i32, %c0_i32_0 : i32, i32
  }
  func.func @transform_2(%arg0: i32) -> (i32, i32) {
    %c0_i32 = arith.constant 0 : i32
    %c0_i32_0 = arith.constant 0 : i32
    %c0_i32_1 = arith.constant 0 : i32
    return %c0_i32, %c0_i32_0 : i32, i32
  }
  func.func @transform_3(%arg0: i32) -> (i32, i32) {
    %c0_i32 = arith.constant 0 : i32
    %c0_i32_0 = arith.constant 0 : i32
    %c0_i32_1 = arith.constant 0 : i32
    return %c0_i32, %c0_i32_0 : i32, i32
  }
  func.func @transform_4(%arg0: i32) -> (i32, i32) {
    %c0_i32 = arith.constant 0 : i32
    %c0_i32_0 = arith.constant 0 : i32
    %c0_i32_1 = arith.constant 0 : i32
    return %c0_i32, %c0_i32_0 : i32, i32
  }
  func.func @transform_5(%arg0: i32) -> (i32, i32) {
    %c0_i32 = arith.constant 0 : i32
    %c0_i32_0 = arith.constant 0 : i32
    %c0_i32_1 = arith.constant 0 : i32
    return %c0_i32, %c0_i32_0 : i32, i32
  }
  func.func @transform_6(%arg0: i32) -> (i32, i32) {
    %c0_i32 = arith.constant 0 : i32
    %c0_i32_0 = arith.constant 0 : i32
    %c0_i32_1 = arith.constant 0 : i32
    return %c0_i32, %c0_i32_0 : i32, i32
  }
  func.func @transform_7(%arg0: i32) -> (i32, i32) {
    %c0_i32 = arith.constant 0 : i32
    %c0_i32_0 = arith.constant 0 : i32
    %c0_i32_1 = arith.constant 0 : i32
    return %c0_i32, %c0_i32_0 : i32, i32
  }
  func.func @transform_8(%arg0: i32) -> (i32, i32, i32) {
    %c0_i32 = arith.constant 0 : i32
    %c0_i32_0 = arith.constant 0 : i32
    %c0_i32_1 = arith.constant 0 : i32
    return %arg0, %c0_i32, %c0_i32_0 : i32, i32, i32
  }
}

</mosaic_0001>

<llo_original>
// kernel: tpu_custom_call.1
$region0: #{tpu_custom_call.1}
  #allocation0 [shape = 'u32[]', space=smem, size = 0x4, offset = 0x4, fixed_abs, tag = 'smem constant byte address 0x4 - core index']
  #allocation1 [shape = 'u32[144,128]{1,0:T(1,128)}', space=vmem, size = 0x12000, scoped, tag = 'internal scratch']
  %s0 = inlined_call_operand.hbm [shape: f32[2,8,8], index: 0, kind: input, shape index: {}]
  %s1 = inlined_call_operand.hbm [shape: f32[8,512], index: 1, kind: input, shape index: {}]
  %s2 = inlined_call_operand.hbm [shape: f32[8,512], index: 2, kind: input, shape index: {}]
  %s3 = inlined_call_operand.hbm [shape: bf16[512,512], index: 3, kind: input, shape index: {}]
  %s4 = inlined_call_operand.hbm [shape: bf16[512,512], index: 4, kind: input, shape index: {}]
  %s5 = inlined_call_operand.hbm [shape: bf16[512,2048], index: 5, kind: input, shape index: {}]
  %s6 = inlined_call_operand.hbm [shape: bf16[2048,512], index: 6, kind: input, shape index: {}]
  %s7 = inlined_call_operand.hbm [shape: f32[1,512], index: 7, kind: input, shape index: {}]
  %s8 = inlined_call_operand.hbm [shape: f32[2,8,128], index: 8, kind: output, shape index: {}]
  %s9 = sld [smem:[#allocation0]]
  $region74: #{tpu_custom_call.1} parent=0
    _
  %s11 = ssub.s32 1, %s9
  %s12 = scalar_select 0, %s11, %s9
  $region1: #{tpu_custom_call.1} parent=0
    #allocation2 [shape = 'u8[8192]{0}', space=vmem, size = 0x2000, scoped, tag = 'input window, operand 0, single buffered']
    #allocation3 [shape = 's32[1]{0}', space=sflag, size = 0x4, scoped, tag = 'scoped memory for tpu_custom_call.1']
    #allocation4 [shape = 's32[1]{0}', space=sflag, size = 0x4, scoped, tag = 'scoped memory for tpu_custom_call.1']
    #allocation5 [shape = 'u8[16384]{0}', space=vmem, size = 0x4000, scoped, tag = 'input window, operand 1, single buffered']
    #allocation6 [shape = 's32[1]{0}', space=sflag, size = 0x4, scoped, tag = 'scoped memory for tpu_custom_call.1']
    #allocation7 [shape = 'u8[16384]{0}', space=vmem, size = 0x4000, scoped, tag = 'input window, operand 2, single buffered']
    #allocation8 [shape = 'u8[524288]{0}', space=vmem, size = 0x80000, scoped, tag = 'input window, operand 3, single buffered']
    #allocation9 [shape = 's32[1]{0}', space=sflag, size = 0x4, scoped, tag = 'scoped memory for tpu_custom_call.1']
    #allocation10 [shape = 'u8[524288]{0}', space=vmem, size = 0x80000, scoped, tag = 'input window, operand 4, single buffered']
    #allocation11 [shape = 'u8[2097152]{0}', space=vmem, size = 0x200000, scoped, tag = 'input window, operand 5, single buffered']
    #allocation12 [shape = 's32[1]{0}', space=sflag, size = 0x4, scoped, tag = 'scoped memory for tpu_custom_call.1']
    #allocation13 [shape = 'u8[2097152]{0}', space=vmem, size = 0x200000, scoped, tag = 'input window, operand 6, single buffered']
    #allocation14 [shape = 'u8[2048]{0}', space=vmem, size = 0x800, scoped, tag = 'input window, operand 7, single buffered']
    #allocation15 [shape = 's32[1]{0}', space=sflag, size = 0x4, scoped, tag = 'scoped memory for tpu_custom_call.1']
    #allocation16 [shape = 'u8[8192]{0}', space=vmem, size = 0x2000, scoped, tag = 'output window, operand 0, single buffered']
    %13 = vsyncpa [#allocation3], 0
    %14 = vsyncpa [#allocation6], 0
    %15 = vsyncpa [#allocation9], 0
    %16 = vsyncpa [#allocation12], 0
    %17 = vsyncpa [#allocation15], 0
    %18 = vsyncpa [#allocation4], 0
    // Predicated region
    $region2: #{tpu_custom_call.1} parent=1 // pred_check
      _
    $region3: #{tpu_custom_call.1} parent=1 // pred_check_branch
      %20 = sbr.rel (0) target = $region5
    $region4: #{tpu_custom_call.1} parent=1 // pred_region
      %s22 = ssub.s32 256, 256
      %23 = vsyncadd [#allocation3], %s22
      %s24 = sshll.u32 [#allocation2], 4
      %s25 = int_to_ptr.vmem [resolvable:$true] %s24
      %30 = dma.hbm_to_vmem [thread:$0]  %s0, 256, %s25, [#allocation3], 128, 128, 8
    $region5: #{tpu_custom_call.1} parent=1 // pred_fallthru
      _
    // Predicated region
    $region6: #{tpu_custom_call.1} parent=1 // pred_check
      _
    $region7: #{tpu_custom_call.1} parent=1 // pred_check_branch
      %32 = sbr.rel (0) target = $region9
    $region8: #{tpu_custom_call.1} parent=1 // pred_region
      %s34 = ssub.s32 512, 512
      %35 = vsyncadd [#allocation6], %s34
      %s37 = sshll.u32 [#allocation5], 4
      %s38 = int_to_ptr.vmem [resolvable:$true] %s37
      %40 = dma.hbm_to_vmem [thread:$0]  %s1, 512, %s38, [#allocation6]
    $region9: #{tpu_custom_call.1} parent=1 // pred_fallthru
      _
    // Predicated region
    $region10: #{tpu_custom_call.1} parent=1 // pred_check
      _
    $region11: #{tpu_custom_call.1} parent=1 // pred_check_branch
      %42 = sbr.rel (0) target = $region13
    $region12: #{tpu_custom_call.1} parent=1 // pred_region
      %s44 = ssub.s32 512, 512
      %45 = vsyncadd [#allocation6], %s44
      %s47 = sshll.u32 [#allocation7], 4
      %s48 = int_to_ptr.vmem [resolvable:$true] %s47
      %50 = dma.hbm_to_vmem [thread:$0]  %s2, 512, %s48, [#allocation6]
    $region13: #{tpu_custom_call.1} parent=1 // pred_fallthru
      _
    // Predicated region
    $region14: #{tpu_custom_call.1} parent=1 // pred_check
      _
    $region15: #{tpu_custom_call.1} parent=1 // pred_check_branch
      %52 = sbr.rel (0) target = $region17
    $region16: #{tpu_custom_call.1} parent=1 // pred_region
      %s54 = ssub.s32 16384, 16384
      %55 = vsyncadd [#allocation9], %s54
      %s56 = sshll.u32 [#allocation8], 4
      %s57 = int_to_ptr.vmem [resolvable:$true] %s56
      %62 = dma.hbm_to_vmem [thread:$0]  %s3, 16384, %s57, [#allocation9], 256, 256, 16
    $region17: #{tpu_custom_call.1} parent=1 // pred_fallthru
      _
    // Predicated region
    $region18: #{tpu_custom_call.1} parent=1 // pred_check
      _
    $region19: #{tpu_custom_call.1} parent=1 // pred_check_branch
      %64 = sbr.rel (0) target = $region21
    $region20: #{tpu_custom_call.1} parent=1 // pred_region
      %s66 = ssub.s32 16384, 16384
      %67 = vsyncadd [#allocation9], %s66
      %s68 = sshll.u32 [#allocation10], 4
      %s69 = int_to_ptr.vmem [resolvable:$true] %s68
      %74 = dma.hbm_to_vmem [thread:$0]  %s4, 16384, %s69, [#allocation9], 256, 256, 16
    $region21: #{tpu_custom_call.1} parent=1 // pred_fallthru
      _
    // Predicated region
    $region22: #{tpu_custom_call.1} parent=1 // pred_check
      _
    $region23: #{tpu_custom_call.1} parent=1 // pred_check_branch
      %76 = sbr.rel (0) target = $region25
    $region24: #{tpu_custom_call.1} parent=1 // pred_region
      %s78 = ssub.s32 65536, 65536
      %79 = vsyncadd [#allocation12], %s78
      %s80 = sshll.u32 [#allocation11], 4
      %s81 = int_to_ptr.vmem [resolvable:$true] %s80
      %86 = dma.hbm_to_vmem [thread:$0]  %s5, 65536, %s81, [#allocation12], 1024, 1024, 64
    $region25: #{tpu_custom_call.1} parent=1 // pred_fallthru
      _
    // Predicated region
    $region26: #{tpu_custom_call.1} parent=1 // pred_check
      _
    $region27: #{tpu_custom_call.1} parent=1 // pred_check_branch
      %88 = sbr.rel (0) target = $region29
    $region28: #{tpu_custom_call.1} parent=1 // pred_region
      %s90 = ssub.s32 65536, 65536
      %91 = vsyncadd [#allocation12], %s90
      %s92 = sshll.u32 [#allocation13], 4
      %s93 = int_to_ptr.vmem [resolvable:$true] %s92
      %98 = dma.hbm_to_vmem [thread:$0]  %s6, 65536, %s93, [#allocation12], 256, 256, 16
    $region29: #{tpu_custom_call.1} parent=1 // pred_fallthru
      _
    // Predicated region
    $region30: #{tpu_custom_call.1} parent=1 // pred_check
      _
    $region31: #{tpu_custom_call.1} parent=1 // pred_check_branch
      %100 = sbr.rel (0) target = $region33
    $region32: #{tpu_custom_call.1} parent=1 // pred_region
      %s102 = ssub.s32 64, 64
      %103 = vsyncadd [#allocation15], %s102
      %s105 = sshll.u32 [#allocation14], 4
      %s106 = int_to_ptr.vmem [resolvable:$true] %s105
      %108 = dma.hbm_to_vmem [thread:$0]  %s7, 64, %s106, [#allocation15]
    $region33: #{tpu_custom_call.1} parent=1 // pred_fallthru
      _
    // Predicated region
    $region34: #{tpu_custom_call.1} parent=1 // pred_check
      _
    $region35: #{tpu_custom_call.1} parent=1 // pred_check_branch
      %110 = sbr.rel (0) target = $region37
    $region36: #{tpu_custom_call.1} parent=1 // pred_region
      %111 = dma.done [#allocation3], 256
    $region37: #{tpu_custom_call.1} parent=1 // pred_fallthru
      _
    // Predicated region
    $region38: #{tpu_custom_call.1} parent=1 // pred_check
      _
    $region39: #{tpu_custom_call.1} parent=1 // pred_check_branch
      %113 = sbr.rel (0) target = $region41
    $region40: #{tpu_custom_call.1} parent=1 // pred_region
      %114 = dma.done [#allocation6], 512
    $region41: #{tpu_custom_call.1} parent=1 // pred_fallthru
      _
    // Predicated region
    $region42: #{tpu_custom_call.1} parent=1 // pred_check
      _
    $region43: #{tpu_custom_call.1} parent=1 // pred_check_branch
      %116 = sbr.rel (0) target = $region45
    $region44: #{tpu_custom_call.1} parent=1 // pred_region
      %117 = dma.done [#allocation6], 512
    $region45: #{tpu_custom_call.1} parent=1 // pred_fallthru
      _
    // Predicated region
    $region46: #{tpu_custom_call.1} parent=1 // pred_check
      _
    $region47: #{tpu_custom_call.1} parent=1 // pred_check_branch
      %119 = sbr.rel (0) target = $region49
    $region48: #{tpu_custom_call.1} parent=1 // pred_region
      %120 = dma.done [#allocation9], 16384
    $region49: #{tpu_custom_call.1} parent=1 // pred_fallthru
      _
    // Predicated region
    $region50: #{tpu_custom_call.1} parent=1 // pred_check
      _
    $region51: #{tpu_custom_call.1} parent=1 // pred_check_branch
      %122 = sbr.rel (0) target = $region53
    $region52: #{tpu_custom_call.1} parent=1 // pred_region
      %123 = dma.done [#allocation9], 16384
    $region53: #{tpu_custom_call.1} parent=1 // pred_fallthru
      _
    // Predicated region
    $region54: #{tpu_custom_call.1} parent=1 // pred_check
      _
    $region55: #{tpu_custom_call.1} parent=1 // pred_check_branch
      %125 = sbr.rel (0) target = $region57
    $region56: #{tpu_custom_call.1} parent=1 // pred_region
      %126 = dma.done [#allocation12], 65536
    $region57: #{tpu_custom_call.1} parent=1 // pred_fallthru
      _
    // Predicated region
    $region58: #{tpu_custom_call.1} parent=1 // pred_check
      _
    $region59: #{tpu_custom_call.1} parent=1 // pred_check_branch
      %128 = sbr.rel (0) target = $region61
    $region60: #{tpu_custom_call.1} parent=1 // pred_region
      %129 = dma.done [#allocation12], 65536
    $region61: #{tpu_custom_call.1} parent=1 // pred_fallthru
      _
    // Predicated region
    $region62: #{tpu_custom_call.1} parent=1 // pred_check
      _
    $region63: #{tpu_custom_call.1} parent=1 // pred_check_branch
      %131 = sbr.rel (0) target = $region65
    $region64: #{tpu_custom_call.1} parent=1 // pred_region
      %132 = dma.done [#allocation15], 64
    $region65: #{tpu_custom_call.1} parent=1 // pred_fallthru
      _
    %v133 = vld [vmem:[#allocation2] sm:$0xff]
    %v134 = vld [vmem:[#allocation2 + $0x8] sm:$0xff]
    %v135 = vld [vmem:[#allocation5] sm:$0xff]
    %v136 = vld [vmem:[#allocation5 + $0x8] sm:$0xff]
    %v137 = vld [vmem:[#allocation5 + $0x10] sm:$0xff]
    %v138 = vld [vmem:[#allocation5 + $0x18] sm:$0xff]
    %vm139 = vcmask 64512
    %v141 = vsel %vm139, %v133, 0
    %v144 = vsel %vm139, %v134, 0
    %146 = vmatprep.subr.mxu0 %v136
    %147 = vmatpush1.msra.mxu0 %v135
    %148 = vmatprep.subr.mxu0 0.0
    %149 = vmatpush1.msra.mxu0 0.0
    %150 = vmatprep.subr.mxu0 0.0
    %151 = vmatpush1.msra.mxu0 0.0
    %152 = vmatprep.subr.mxu0 0.0
    %153 = vmatpush1.msra.mxu0 0.0
    %154 = vmatprep.subr.mxu0 0.0
    %155 = vmatpush1.msra.mxu0 0.0
    %156 = vmatprep.subr.mxu0 0.0
    %157 = vmatpush1.msra.mxu0 0.0
    %158 = vmatprep.subr.mxu0 0.0
    %159 = vmatpush1.msra.mxu0 0.0
    %160 = vmatprep.subr.mxu0 0.0
    %161 = vmatpush1.msra.mxu0 0.0
    %162 = vmatprep.subr.mxu0 0.0
    %163 = vmatpush1.msra.mxu0 0.0
    %164 = vmatprep.subr.mxu0 0.0
    %165 = vmatpush1.msra.mxu0 0.0
    %166 = vmatprep.subr.mxu0 0.0
    %167 = vmatpush1.msra.mxu0 0.0
    %168 = vmatprep.subr.mxu0 0.0
    %169 = vmatpush1.msra.mxu0 0.0
    %170 = vmatprep.subr.mxu0 0.0
    %171 = vmatpush1.msra.mxu0 0.0
    %172 = vmatprep.subr.mxu0 0.0
    %173 = vmatpush1.msra.mxu0 0.0
    %174 = vmatprep.subr.mxu0 0.0
    %175 = vmatpush1.msra.mxu0 0.0
    %176 = vmatprep.subr.mxu0 0.0
    %177 = vmatpush1.msra.mxu0 0.0
    %178 = vmatprep.subr.mxu0 0.0
    %179 = vmatpush1.msra.mxu0 0.0
    %180 = vmatprep.subr.mxu0 0.0
    %181 = vmatpush1.msra.mxu0 0.0
    %182 = vmatprep.subr.mxu0 0.0
    %183 = vmatpush1.msra.mxu0 0.0
    %184 = vmatprep.subr.mxu0 0.0
    %185 = vmatpush1.msra.mxu0 0.0
    %186 = vmatprep.subr.mxu0 0.0
    %187 = vmatpush1.msra.mxu0 0.0
    %188 = vmatprep.subr.mxu0 0.0
    %189 = vmatpush1.msra.mxu0 0.0
    %190 = vmatprep.subr.mxu0 0.0
    %191 = vmatpush1.msra.mxu0 0.0
    %192 = vmatprep.subr.mxu0 0.0
    %193 = vmatpush1.msra.mxu0 0.0
    %194 = vmatprep.subr.mxu0 0.0
    %195 = vmatpush1.msra.mxu0 0.0
    %196 = vmatprep.subr.mxu0 0.0
    %197 = vmatpush1.msra.mxu0 0.0
    %198 = vmatprep.subr.mxu0 0.0
    %199 = vmatpush1.msra.mxu0 0.0
    %200 = vmatprep.subr.mxu0 0.0
    %201 = vmatpush1.msra.mxu0 0.0
    %202 = vmatprep.subr.mxu0 0.0
    %203 = vmatpush1.msra.mxu0 0.0
    %204 = vmatprep.subr.mxu0 0.0
    %205 = vmatpush1.msra.mxu0 0.0
    %206 = vmatprep.subr.mxu0 0.0
    %207 = vmatpush1.msra.mxu0 0.0
    %208 = vmatprep.subr.mxu0 0.0
    %209 = vmatpush1.msra.mxu0 0.0
    %210 = vmatprep.mubr.f32.mxu0 0.0
    %211 = vmatmul.mubr.f32.gmra.mrb[0].mxu0 %v141
    %v212 = vpop.f32.mrb[0].mxu0
    %v213 = vadd.f32 0.0, %v212
    %v214 = vpop.f32.mrb[0].mxu0
    %v215 = vadd.f32 0.0, %v214
    %216 = vmatprep.mubr.f32.mxu0 0.0
    %217 = vmatmul.mubr.f32.gmra.mrb[0].mxu0 %v144
    %v218 = vpop.f32.mrb[0].mxu0
    %v219 = vadd.f32 0.0, %v218
    %v220 = vpop.f32.mrb[0].mxu0
    %v221 = vadd.f32 0.0, %v220
    %222 = vdwg.mxu0
    %223 = vmatprep.subr.mxu0 %v138
    %224 = vmatpush1.msra.mxu0 %v137
    %225 = vmatprep.subr.mxu0 0.0
    %226 = vmatpush1.msra.mxu0 0.0
    %227 = vmatprep.subr.mxu0 0.0
    %228 = vmatpush1.msra.mxu0 0.0
    %229 = vmatprep.subr.mxu0 0.0
    %230 = vmatpush1.msra.mxu0 0.0
    %231 = vmatprep.subr.mxu0 0.0
    %232 = vmatpush1.msra.mxu0 0.0
    %233 = vmatprep.subr.mxu0 0.0
    %234 = vmatpush1.msra.mxu0 0.0
    %235 = vmatprep.subr.mxu0 0.0
    %236 = vmatpush1.msra.mxu0 0.0
    %237 = vmatprep.subr.mxu0 0.0
    %238 = vmatpush1.msra.mxu0 0.0
    %239 = vmatprep.subr.mxu0 0.0
    %240 = vmatpush1.msra.mxu0 0.0
    %241 = vmatprep.subr.mxu0 0.0
    %242 = vmatpush1.msra.mxu0 0.0
    %243 = vmatprep.subr.mxu0 0.0
    %244 = vmatpush1.msra.mxu0 0.0
    %245 = vmatprep.subr.mxu0 0.0
    %246 = vmatpush1.msra.mxu0 0.0
    %247 = vmatprep.subr.mxu0 0.0
    %248 = vmatpush1.msra.mxu0 0.0
    %249 = vmatprep.subr.mxu0 0.0
    %250 = vmatpush1.msra.mxu0 0.0
    %251 = vmatprep.subr.mxu0 0.0
    %252 = vmatpush1.msra.mxu0 0.0
    %253 = vmatprep.subr.mxu0 0.0
    %254 = vmatpush1.msra.mxu0 0.0
    %255 = vmatprep.subr.mxu0 0.0
    %256 = vmatpush1.msra.mxu0 0.0
    %257 = vmatprep.subr.mxu0 0.0
    %258 = vmatpush1.msra.mxu0 0.0
    %259 = vmatprep.subr.mxu0 0.0
    %260 = vmatpush1.msra.mxu0 0.0
    %261 = vmatprep.subr.mxu0 0.0
    %262 = vmatpush1.msra.mxu0 0.0
    %263 = vmatprep.subr.mxu0 0.0
    %264 = vmatpush1.msra.mxu0 0.0
    %265 = vmatprep.subr.mxu0 0.0
    %266 = vmatpush1.msra.mxu0 0.0
    %267 = vmatprep.subr.mxu0 0.0
    %268 = vmatpush1.msra.mxu0 0.0
    %269 = vmatprep.subr.mxu0 0.0
    %270 = vmatpush1.msra.mxu0 0.0
    %271 = vmatprep.subr.mxu0 0.0
    %272 = vmatpush1.msra.mxu0 0.0
    %273 = vmatprep.subr.mxu0 0.0
    %274 = vmatpush1.msra.mxu0 0.0
    %275 = vmatprep.subr.mxu0 0.0
    %276 = vmatpush1.msra.mxu0 0.0
    %277 = vmatprep.subr.mxu0 0.0
    %278 = vmatpush1.msra.mxu0 0.0
    %279 = vmatprep.subr.mxu0 0.0
    %280 = vmatpush1.msra.mxu0 0.0
    %281 = vmatprep.subr.mxu0 0.0
    %282 = vmatpush1.msra.mxu0 0.0
    %283 = vmatprep.subr.mxu0 0.0
    %284 = vmatpush1.msra.mxu0 0.0
    %285 = vmatprep.subr.mxu0 0.0
    %286 = vmatpush1.msra.mxu0 0.0
    %287 = vmatprep.mubr.f32.mxu0 0.0
    %288 = vmatmul.mubr.f32.gmra.mrb[0].mxu0 %v141
    %v289 = vpop.f32.mrb[0].mxu0
    %v290 = vadd.f32 0.0, %v289
    %v291 = vpop.f32.mrb[0].mxu0
    %v292 = vadd.f32 0.0, %v291
    %293 = vmatprep.mubr.f32.mxu0 0.0
    %294 = vmatmul.mubr.f32.gmra.mrb[0].mxu0 %v144
    %v295 = vpop.f32.mrb[0].mxu0
    %v296 = vadd.f32 0.0, %v295
    %v297 = vpop.f32.mrb[0].mxu0
    %v298 = vadd.f32 0.0, %v297
    %299 = vdwg.mxu0
    %v300 = vld [vmem:[#allocation7] sm:$0xff]
    %v301 = vld [vmem:[#allocation7 + $0x8] sm:$0xff]
    %v302 = vld [vmem:[#allocation7 + $0x10] sm:$0xff]
    %v303 = vld [vmem:[#allocation7 + $0x18] sm:$0xff]
    %v304 = vadd.f32 %v213, %v300
    %v305 = vadd.f32 %v215, %v301
    %v306 = vadd.f32 %v290, %v302
    %v307 = vadd.f32 %v292, %v303
    %v308 = vadd.f32 %v219, %v300
    %v309 = vadd.f32 %v221, %v301
    %v310 = vadd.f32 %v296, %v302
    %v311 = vadd.f32 %v298, %v303
    %v312 = vpack.c.bf16 %v308, %v304
    %v313 = vpack.c.bf16 %v309, %v305
    %v314 = vpack.c.bf16 %v310, %v306
    %v315 = vpack.c.bf16 %v311, %v307
    %v316 = vld [vmem:[#allocation8] sm:$0xff]
    %v317 = vld [vmem:[#allocation8 + $0x8] sm:$0xff]
    %v318 = vld [vmem:[#allocation8 + $0x10] sm:$0xff]
    %v319 = vld [vmem:[#allocation8 + $0x18] sm:$0xff]
    %v320 = vld [vmem:[#allocation8 + $0x20] sm:$0xff]
    %v321 = vld [vmem:[#allocation8 + $0x28] sm:$0xff]
    %v322 = vld [vmem:[#allocation8 + $0x30] sm:$0xff]
    %v323 = vld [vmem:[#allocation8 + $0x38] sm:$0xff]
    %v324 = vld [vmem:[#allocation8 + $0x40] sm:$0xff]
    %v325 = vld [vmem:[#allocation8 + $0x48] sm:$0xff]
    %v326 = vld [vmem:[#allocation8 + $0x50] sm:$0xff]
    %v327 = vld [vmem:[#allocation8 + $0x58] sm:$0xff]
    %v328 = vld [vmem:[#allocation8 + $0x60] sm:$0xff]
    %v329 = vld [vmem:[#allocation8 + $0x68] sm:$0xff]
    %v330 = vld [vmem:[#allocation8 + $0x70] sm:$0xff]
    %v331 = vld [vmem:[#allocation8 + $0x78] sm:$0xff]
    %v332 = vld [vmem:[#allocation8 + $0x80] sm:$0xff]
    %v333 = vld [vmem:[#allocation8 + $0x88] sm:$0xff]
    %v334 = vld [vmem:[#allocation8 + $0x90] sm:$0xff]
    %v335 = vld [vmem:[#allocation8 + $0x98] sm:$0xff]
    %v336 = vld [vmem:[#allocation8 + $0xa0] sm:$0xff]
    %v337 = vld [vmem:[#allocation8 + $0xa8] sm:$0xff]
    %v338 = vld [vmem:[#allocation8 + $0xb0] sm:$0xff]
    %v339 = vld [vmem:[#allocation8 + $0xb8] sm:$0xff]
    %v340 = vld [vmem:[#allocation8 + $0xc0] sm:$0xff]
    %v341 = vld [vmem:[#allocation8 + $0xc8] sm:$0xff]
    %v342 = vld [vmem:[#allocation8 + $0xd0] sm:$0xff]
    %v343 = vld [vmem:[#allocation8 + $0xd8] sm:$0xff]
    %v344 = vld [vmem:[#allocation8 + $0xe0] sm:$0xff]
    %v345 = vld [vmem:[#allocation8 + $0xe8] sm:$0xff]
    %v346 = vld [vmem:[#allocation8 + $0xf0] sm:$0xff]
    %v347 = vld [vmem:[#allocation8 + $0xf8] sm:$0xff]
    %v348 = vld [vmem:[#allocation8 + $0x100] sm:$0xff]
    %v349 = vld [vmem:[#allocation8 + $0x108] sm:$0xff]
    %v350 = vld [vmem:[#allocation8 + $0x110] sm:$0xff]
    %v351 = vld [vmem:[#allocation8 + $0x118] sm:$0xff]
    %v352 = vld [vmem:[#allocation8 + $0x120] sm:$0xff]
    %v353 = vld [vmem:[#allocation8 + $0x128] sm:$0xff]
    %v354 = vld [vmem:[#allocation8 + $0x130] sm:$0xff]
    %v355 = vld [vmem:[#allocation8 + $0x138] sm:$0xff]
    %v356 = vld [vmem:[#allocation8 + $0x140] sm:$0xff]
    %v357 = vld [vmem:[#allocation8 + $0x148] sm:$0xff]
    %v358 = vld [vmem:[#allocation8 + $0x150] sm:$0xff]
    %v359 = vld [vmem:[#allocation8 + $0x158] sm:$0xff]
    %v360 = vld [vmem:[#allocation8 + $0x160] sm:$0xff]
    %v361 = vld [vmem:[#allocation8 + $0x168] sm:$0xff]
    %v362 = vld [vmem:[#allocation8 + $0x170] sm:$0xff]
    %v363 = vld [vmem:[#allocation8 + $0x178] sm:$0xff]
    %v364 = vld [vmem:[#allocation8 + $0x180] sm:$0xff]
    %v365 = vld [vmem:[#allocation8 + $0x188] sm:$0xff]
    %v366 = vld [vmem:[#allocation8 + $0x190] sm:$0xff]
    %v367 = vld [vmem:[#allocation8 + $0x198] sm:$0xff]
    %v368 = vld [vmem:[#allocation8 + $0x1a0] sm:$0xff]
    %v369 = vld [vmem:[#allocation8 + $0x1a8] sm:$0xff]
    %v370 = vld [vmem:[#allocation8 + $0x1b0] sm:$0xff]
    %v371 = vld [vmem:[#allocation8 + $0x1b8] sm:$0xff]
    %v372 = vld [vmem:[#allocation8 + $0x1c0] sm:$0xff]
    %v373 = vld [vmem:[#allocation8 + $0x1c8] sm:$0xff]
    %v374 = vld [vmem:[#allocation8 + $0x1d0] sm:$0xff]
    %v375 = vld [vmem:[#allocation8 + $0x1d8] sm:$0xff]
    %v376 = vld [vmem:[#allocation8 + $0x1e0] sm:$0xff]
    %v377 = vld [vmem:[#allocation8 + $0x1e8] sm:$0xff]
    %v378 = vld [vmem:[#allocation8 + $0x1f0] sm:$0xff]
    %v379 = vld [vmem:[#allocation8 + $0x1f8] sm:$0xff]
    %v380 = vld [vmem:[#allocation8 + $0x200] sm:$0xff]
    %v381 = vld [vmem:[#allocation8 + $0x208] sm:$0xff]
    %v382 = vld [vmem:[#allocation8 + $0x210] sm:$0xff]
    %v383 = vld [vmem:[#allocation8 + $0x218] sm:$0xff]
    %v384 = vld [vmem:[#allocation8 + $0x220] sm:$0xff]
    %v385 = vld [vmem:[#allocation8 + $0x228] sm:$0xff]
    %v386 = vld [vmem:[#allocation8 + $0x230] sm:$0xff]
    %v387 = vld [vmem:[#allocation8 + $0x238] sm:$0xff]
    %v388 = vld [vmem:[#allocation8 + $0x240] sm:$0xff]
    %v389 = vld [vmem:[#allocation8 + $0x248] sm:$0xff]
    %v390 = vld [vmem:[#allocation8 + $0x250] sm:$0xff]
    %v391 = vld [vmem:[#allocation8 + $0x258] sm:$0xff]
    %v392 = vld [vmem:[#allocation8 + $0x260] sm:$0xff]
    %v393 = vld [vmem:[#allocation8 + $0x268] sm:$0xff]
    %v394 = vld [vmem:[#allocation8 + $0x270] sm:$0xff]
    %v395 = vld [vmem:[#allocation8 + $0x278] sm:$0xff]
    %v396 = vld [vmem:[#allocation8 + $0x280] sm:$0xff]
    %v397 = vld [vmem:[#allocation8 + $0x288] sm:$0xff]
    %v398 = vld [vmem:[#allocation8 + $0x290] sm:$0xff]
    %v399 = vld [vmem:[#allocation8 + $0x298] sm:$0xff]
    %v400 = vld [vmem:[#allocation8 + $0x2a0] sm:$0xff]
    %v401 = vld [vmem:[#allocation8 + $0x2a8] sm:$0xff]
    %v402 = vld [vmem:[#allocation8 + $0x2b0] sm:$0xff]
    %v403 = vld [vmem:[#allocation8 + $0x2b8] sm:$0xff]
    %v404 = vld [vmem:[#allocation8 + $0x2c0] sm:$0xff]
    %v405 = vld [vmem:[#allocation8 + $0x2c8] sm:$0xff]
    %v406 = vld [vmem:[#allocation8 + $0x2d0] sm:$0xff]
    %v407 = vld [vmem:[#allocation8 + $0x2d8] sm:$0xff]
    %v408 = vld [vmem:[#allocation8 + $0x2e0] sm:$0xff]
    %v409 = vld [vmem:[#allocation8 + $0x2e8] sm:$0xff]
    %v410 = vld [vmem:[#allocation8 + $0x2f0] sm:$0xff]
    %v411 = vld [vmem:[#allocation8 + $0x2f8] sm:$0xff]
    %v412 = vld [vmem:[#allocation8 + $0x300] sm:$0xff]
    %v413 = vld [vmem:[#allocation8 + $0x308] sm:$0xff]
    %v414 = vld [vmem:[#allocation8 + $0x310] sm:$0xff]
    %v415 = vld [vmem:[#allocation8 + $0x318] sm:$0xff]
    %v416 = vld [vmem:[#allocation8 + $0x320] sm:$0xff]
    %v417 = vld [vmem:[#allocation8 + $0x328] sm:$0xff]
    %v418 = vld [vmem:[#allocation8 + $0x330] sm:$0xff]
    %v419 = vld [vmem:[#allocation8 + $0x338] sm:$0xff]
    %v420 = vld [vmem:[#allocation8 + $0x340] sm:$0xff]
    %v421 = vld [vmem:[#allocation8 + $0x348] sm:$0xff]
    %v422 = vld [vmem:[#allocation8 + $0x350] sm:$0xff]
    %v423 = vld [vmem:[#allocation8 + $0x358] sm:$0xff]
    %v424 = vld [vmem:[#allocation8 + $0x360] sm:$0xff]
    %v425 = vld [vmem:[#allocation8 + $0x368] sm:$0xff]
    %v426 = vld [vmem:[#allocation8 + $0x370] sm:$0xff]
    %v427 = vld [vmem:[#allocation8 + $0x378] sm:$0xff]
    %v428 = vld [vmem:[#allocation8 + $0x380] sm:$0xff]
    %v429 = vld [vmem:[#allocation8 + $0x388] sm:$0xff]
    %v430 = vld [vmem:[#allocation8 + $0x390] sm:$0xff]
    %v431 = vld [vmem:[#allocation8 + $0x398] sm:$0xff]
    %v432 = vld [vmem:[#allocation8 + $0x3a0] sm:$0xff]
    %v433 = vld [vmem:[#allocation8 + $0x3a8] sm:$0xff]
    %v434 = vld [vmem:[#allocation8 + $0x3b0] sm:$0xff]
    %v435 = vld [vmem:[#allocation8 + $0x3b8] sm:$0xff]
    %v436 = vld [vmem:[#allocation8 + $0x3c0] sm:$0xff]
    %v437 = vld [vmem:[#allocation8 + $0x3c8] sm:$0xff]
    %v438 = vld [vmem:[#allocation8 + $0x3d0] sm:$0xff]
    %v439 = vld [vmem:[#allocation8 + $0x3d8] sm:$0xff]
    %v440 = vld [vmem:[#allocation8 + $0x3e0] sm:$0xff]
    %v441 = vld [vmem:[#allocation8 + $0x3e8] sm:$0xff]
    %v442 = vld [vmem:[#allocation8 + $0x3f0] sm:$0xff]
    %v443 = vld [vmem:[#allocation8 + $0x3f8] sm:$0xff]
    %v572 = vunpack.c.l.b16 %v316
    %v573 = vunpack.c.h.b16 %v316
    %v574 = vunpack.c.l.b16 %v317
    %v575 = vunpack.c.h.b16 %v317
    %v576 = vunpack.c.l.b16 %v318
    %v577 = vunpack.c.h.b16 %v318
    %v578 = vunpack.c.l.b16 %v319
    %v579 = vunpack.c.h.b16 %v319
    %v580 = vunpack.c.l.b16 %v320
    %v581 = vunpack.c.h.b16 %v320
    %v582 = vunpack.c.l.b16 %v321
    %v583 = vunpack.c.h.b16 %v321
    %v584 = vunpack.c.l.b16 %v322
    %v585 = vunpack.c.h.b16 %v322
    %v586 = vunpack.c.l.b16 %v323
    %v587 = vunpack.c.h.b16 %v323
    %v588 = vunpack.c.l.b16 %v324
    %v589 = vunpack.c.h.b16 %v324
    %v590 = vunpack.c.l.b16 %v325
    %v591 = vunpack.c.h.b16 %v325
    %v592 = vunpack.c.l.b16 %v326
    %v593 = vunpack.c.h.b16 %v326
    %v594 = vunpack.c.l.b16 %v327
    %v595 = vunpack.c.h.b16 %v327
    %v596 = vunpack.c.l.b16 %v328
    %v597 = vunpack.c.h.b16 %v328
    %v598 = vunpack.c.l.b16 %v329
    %v599 = vunpack.c.h.b16 %v329
    %v600 = vunpack.c.l.b16 %v330
    %v601 = vunpack.c.h.b16 %v330
    %v602 = vunpack.c.l.b16 %v331
    %v603 = vunpack.c.h.b16 %v331
    %v604 = vunpack.c.l.b16 %v332
    %v605 = vunpack.c.h.b16 %v332
    %v606 = vunpack.c.l.b16 %v333
    %v607 = vunpack.c.h.b16 %v333
    %v608 = vunpack.c.l.b16 %v334
    %v609 = vunpack.c.h.b16 %v334
    %v610 = vunpack.c.l.b16 %v335
    %v611 = vunpack.c.h.b16 %v335
    %v612 = vunpack.c.l.b16 %v336
    %v613 = vunpack.c.h.b16 %v336
    %v614 = vunpack.c.l.b16 %v337
    %v615 = vunpack.c.h.b16 %v337
    %v616 = vunpack.c.l.b16 %v338
    %v617 = vunpack.c.h.b16 %v338
    %v618 = vunpack.c.l.b16 %v339
    %v619 = vunpack.c.h.b16 %v339
    %v620 = vunpack.c.l.b16 %v340
    %v621 = vunpack.c.h.b16 %v340
    %v622 = vunpack.c.l.b16 %v341
    %v623 = vunpack.c.h.b16 %v341
    %v624 = vunpack.c.l.b16 %v342
    %v625 = vunpack.c.h.b16 %v342
    %v626 = vunpack.c.l.b16 %v343
    %v627 = vunpack.c.h.b16 %v343
    %v628 = vunpack.c.l.b16 %v344
    %v629 = vunpack.c.h.b16 %v344
    %v630 = vunpack.c.l.b16 %v345
    %v631 = vunpack.c.h.b16 %v345
    %v632 = vunpack.c.l.b16 %v346
    %v633 = vunpack.c.h.b16 %v346
    %v634 = vunpack.c.l.b16 %v347
    %v635 = vunpack.c.h.b16 %v347
    %v636 = vunpack.c.l.b16 %v348
    %v637 = vunpack.c.h.b16 %v348
    %v638 = vunpack.c.l.b16 %v349
    %v639 = vunpack.c.h.b16 %v349
    %v640 = vunpack.c.l.b16 %v350
    %v641 = vunpack.c.h.b16 %v350
    %v642 = vunpack.c.l.b16 %v351
    %v643 = vunpack.c.h.b16 %v351
    %v644 = vunpack.c.l.b16 %v352
    %v645 = vunpack.c.h.b16 %v352
    %v646 = vunpack.c.l.b16 %v353
    %v647 = vunpack.c.h.b16 %v353
    %v648 = vunpack.c.l.b16 %v354
    %v649 = vunpack.c.h.b16 %v354
    %v650 = vunpack.c.l.b16 %v355
    %v651 = vunpack.c.h.b16 %v355
    %v652 = vunpack.c.l.b16 %v356
    %v653 = vunpack.c.h.b16 %v356
    %v654 = vunpack.c.l.b16 %v357
    %v655 = vunpack.c.h.b16 %v357
    %v656 = vunpack.c.l.b16 %v358
    %v657 = vunpack.c.h.b16 %v358
    %v658 = vunpack.c.l.b16 %v359
    %v659 = vunpack.c.h.b16 %v359
    %v660 = vunpack.c.l.b16 %v360
    %v661 = vunpack.c.h.b16 %v360
    %v662 = vunpack.c.l.b16 %v361
    %v663 = vunpack.c.h.b16 %v361
    %v664 = vunpack.c.l.b16 %v362
    %v665 = vunpack.c.h.b16 %v362
    %v666 = vunpack.c.l.b16 %v363
    %v667 = vunpack.c.h.b16 %v363
    %v668 = vunpack.c.l.b16 %v364
    %v669 = vunpack.c.h.b16 %v364
    %v670 = vunpack.c.l.b16 %v365
    %v671 = vunpack.c.h.b16 %v365
    %v672 = vunpack.c.l.b16 %v366
    %v673 = vunpack.c.h.b16 %v366
    %v674 = vunpack.c.l.b16 %v367
    %v675 = vunpack.c.h.b16 %v367
    %v676 = vunpack.c.l.b16 %v368
    %v677 = vunpack.c.h.b16 %v368
    %v678 = vunpack.c.l.b16 %v369
    %v679 = vunpack.c.h.b16 %v369
    %v680 = vunpack.c.l.b16 %v370
    %v681 = vunpack.c.h.b16 %v370
    %v682 = vunpack.c.l.b16 %v371
    %v683 = vunpack.c.h.b16 %v371
    %v684 = vunpack.c.l.b16 %v372
    %v685 = vunpack.c.h.b16 %v372
    %v686 = vunpack.c.l.b16 %v373
    %v687 = vunpack.c.h.b16 %v373
    %v688 = vunpack.c.l.b16 %v374
    %v689 = vunpack.c.h.b16 %v374
    %v690 = vunpack.c.l.b16 %v375
    %v691 = vunpack.c.h.b16 %v375
    %v692 = vunpack.c.l.b16 %v376
    %v693 = vunpack.c.h.b16 %v376
    %v694 = vunpack.c.l.b16 %v377
    %v695 = vunpack.c.h.b16 %v377
    %v696 = vunpack.c.l.b16 %v378
    %v697 = vunpack.c.h.b16 %v378
    %v698 = vunpack.c.l.b16 %v379
    %v699 = vunpack.c.h.b16 %v379
    %v700 = vunpack.c.l.b16 %v380
    %v701 = vunpack.c.h.b16 %v380
    %v702 = vunpack.c.l.b16 %v381
    %v703 = vunpack.c.h.b16 %v381
    %v704 = vunpack.c.l.b16 %v382
    %v705 = vunpack.c.h.b16 %v382
    %v706 = vunpack.c.l.b16 %v383
    %v707 = vunpack.c.h.b16 %v383
    %v708 = vunpack.c.l.b16 %v384
    %v709 = vunpack.c.h.b16 %v384
    %v710 = vunpack.c.l.b16 %v385
    %v711 = vunpack.c.h.b16 %v385
    %v712 = vunpack.c.l.b16 %v386
    %v713 = vunpack.c.h.b16 %v386
    %v714 = vunpack.c.l.b16 %v387
    %v715 = vunpack.c.h.b16 %v387
    %v716 = vunpack.c.l.b16 %v388
    %v717 = vunpack.c.h.b16 %v388
    %v718 = vunpack.c.l.b16 %v389
    %v719 = vunpack.c.h.b16 %v389
    %v720 = vunpack.c.l.b16 %v390
    %v721 = vunpack.c.h.b16 %v390
    %v722 = vunpack.c.l.b16 %v391
    %v723 = vunpack.c.h.b16 %v391
    %v724 = vunpack.c.l.b16 %v392
    %v725 = vunpack.c.h.b16 %v392
    %v726 = vunpack.c.l.b16 %v393
    %v727 = vunpack.c.h.b16 %v393
    %v728 = vunpack.c.l.b16 %v394
    %v729 = vunpack.c.h.b16 %v394
    %v730 = vunpack.c.l.b16 %v395
    %v731 = vunpack.c.h.b16 %v395
    %v732 = vunpack.c.l.b16 %v396
    %v733 = vunpack.c.h.b16 %v396
    %v734 = vunpack.c.l.b16 %v397
    %v735 = vunpack.c.h.b16 %v397
    %v736 = vunpack.c.l.b16 %v398
    %v737 = vunpack.c.h.b16 %v398
    %v738 = vunpack.c.l.b16 %v399
    %v739 = vunpack.c.h.b16 %v399
    %v740 = vunpack.c.l.b16 %v400
    %v741 = vunpack.c.h.b16 %v400
    %v742 = vunpack.c.l.b16 %v401
    %v743 = vunpack.c.h.b16 %v401
    %v744 = vunpack.c.l.b16 %v402
    %v745 = vunpack.c.h.b16 %v402
    %v746 = vunpack.c.l.b16 %v403
    %v747 = vunpack.c.h.b16 %v403
    %v748 = vunpack.c.l.b16 %v404
    %v749 = vunpack.c.h.b16 %v404
    %v750 = vunpack.c.l.b16 %v405
    %v751 = vunpack.c.h.b16 %v405
    %v752 = vunpack.c.l.b16 %v406
    %v753 = vunpack.c.h.b16 %v406
    %v754 = vunpack.c.l.b16 %v407
    %v755 = vunpack.c.h.b16 %v407
    %v756 = vunpack.c.l.b16 %v408
    %v757 = vunpack.c.h.b16 %v408
    %v758 = vunpack.c.l.b16 %v409
    %v759 = vunpack.c.h.b16 %v409
    %v760 = vunpack.c.l.b16 %v410
    %v761 = vunpack.c.h.b16 %v410
    %v762 = vunpack.c.l.b16 %v411
    %v763 = vunpack.c.h.b16 %v411
    %v764 = vunpack.c.l.b16 %v412
    %v765 = vunpack.c.h.b16 %v412
    %v766 = vunpack.c.l.b16 %v413
    %v767 = vunpack.c.h.b16 %v413
    %v768 = vunpack.c.l.b16 %v414
    %v769 = vunpack.c.h.b16 %v414
    %v770 = vunpack.c.l.b16 %v415
    %v771 = vunpack.c.h.b16 %v415
    %v772 = vunpack.c.l.b16 %v416
    %v773 = vunpack.c.h.b16 %v416
    %v774 = vunpack.c.l.b16 %v417
    %v775 = vunpack.c.h.b16 %v417
    %v776 = vunpack.c.l.b16 %v418
    %v777 = vunpack.c.h.b16 %v418
    %v778 = vunpack.c.l.b16 %v419
    %v779 = vunpack.c.h.b16 %v419
    %v780 = vunpack.c.l.b16 %v420
    %v781 = vunpack.c.h.b16 %v420
    %v782 = vunpack.c.l.b16 %v421
    %v783 = vunpack.c.h.b16 %v421
    %v784 = vunpack.c.l.b16 %v422
    %v785 = vunpack.c.h.b16 %v422
    %v786 = vunpack.c.l.b16 %v423
    %v787 = vunpack.c.h.b16 %v423
    %v788 = vunpack.c.l.b16 %v424
    %v789 = vunpack.c.h.b16 %v424
    %v790 = vunpack.c.l.b16 %v425
    %v791 = vunpack.c.h.b16 %v425
    %v792 = vunpack.c.l.b16 %v426
    %v793 = vunpack.c.h.b16 %v426
    %v794 = vunpack.c.l.b16 %v427
    %v795 = vunpack.c.h.b16 %v427
    %v796 = vunpack.c.l.b16 %v428
    %v797 = vunpack.c.h.b16 %v428
    %v798 = vunpack.c.l.b16 %v429
    %v799 = vunpack.c.h.b16 %v429
    %v800 = vunpack.c.l.b16 %v430
    %v801 = vunpack.c.h.b16 %v430
    %v802 = vunpack.c.l.b16 %v431
    %v803 = vunpack.c.h.b16 %v431
    %v804 = vunpack.c.l.b16 %v432
    %v805 = vunpack.c.h.b16 %v432
    %v806 = vunpack.c.l.b16 %v433
    %v807 = vunpack.c.h.b16 %v433
    %v808 = vunpack.c.l.b16 %v434
    %v809 = vunpack.c.h.b16 %v434
    %v810 = vunpack.c.l.b16 %v435
    %v811 = vunpack.c.h.b16 %v435
    %v812 = vunpack.c.l.b16 %v436
    %v813 = vunpack.c.h.b16 %v436
    %v814 = vunpack.c.l.b16 %v437
    %v815 = vunpack.c.h.b16 %v437
    %v816 = vunpack.c.l.b16 %v438
    %v817 = vunpack.c.h.b16 %v438
    %v818 = vunpack.c.l.b16 %v439
    %v819 = vunpack.c.h.b16 %v439
    %v820 = vunpack.c.l.b16 %v440
    %v821 = vunpack.c.h.b16 %v440
    %v822 = vunpack.c.l.b16 %v441
    %v823 = vunpack.c.h.b16 %v441
    %v824 = vunpack.c.l.b16 %v442
    %v825 = vunpack.c.h.b16 %v442
    %v826 = vunpack.c.l.b16 %v443
    %v827 = vunpack.c.h.b16 %v443
    %v828 = vpack.c.b16 %v576, %v572
    %v829 = vpack.c.b16 %v577, %v573
    %v830 = vpack.c.b16 %v578, %v574
    %v831 = vpack.c.b16 %v579, %v575
    %v832 = vpack.c.b16 %v584, %v580
    %v833 = vpack.c.b16 %v585, %v581
    %v834 = vpack.c.b16 %v586, %v582
    %v835 = vpack.c.b16 %v587, %v583
    %v836 = vpack.c.b16 %v592, %v588
    %v837 = vpack.c.b16 %v593, %v589
    %v838 = vpack.c.b16 %v594, %v590
    %v839 = vpack.c.b16 %v595, %v591
    %v840 = vpack.c.b16 %v600, %v596
    %v841 = vpack.c.b16 %v601, %v597
    %v842 = vpack.c.b16 %v602, %v598
    %v843 = vpack.c.b16 %v603, %v599
    %v844 = vpack.c.b16 %v608, %v604
    %v845 = vpack.c.b16 %v609, %v605
    %v846 = vpack.c.b16 %v610, %v606
    %v847 = vpack.c.b16 %v611, %v607
    %v848 = vpack.c.b16 %v616, %v612
    %v849 = vpack.c.b16 %v617, %v613
    %v850 = vpack.c.b16 %v618, %v614
    %v851 = vpack.c.b16 %v619, %v615
    %v852 = vpack.c.b16 %v624, %v620
    %v853 = vpack.c.b16 %v625, %v621
    %v854 = vpack.c.b16 %v626, %v622
    %v855 = vpack.c.b16 %v627, %v623
    %v856 = vpack.c.b16 %v632, %v628
    %v857 = vpack.c.b16 %v633, %v629
    %v858 = vpack.c.b16 %v634, %v630
    %v859 = vpack.c.b16 %v635, %v631
    %v860 = vpack.c.b16 %v640, %v636
    %v861 = vpack.c.b16 %v641, %v637
    %v862 = vpack.c.b16 %v642, %v638
    %v863 = vpack.c.b16 %v643, %v639
    %v864 = vpack.c.b16 %v648, %v644
    %v865 = vpack.c.b16 %v649, %v645
    %v866 = vpack.c.b16 %v650, %v646
    %v867 = vpack.c.b16 %v651, %v647
    %v868 = vpack.c.b16 %v656, %v652
    %v869 = vpack.c.b16 %v657, %v653
    %v870 = vpack.c.b16 %v658, %v654
    %v871 = vpack.c.b16 %v659, %v655
    %v872 = vpack.c.b16 %v664, %v660
    %v873 = vpack.c.b16 %v665, %v661
    %v874 = vpack.c.b16 %v666, %v662
    %v875 = vpack.c.b16 %v667, %v663
    %v876 = vpack.c.b16 %v672, %v668
    %v877 = vpack.c.b16 %v673, %v669
    %v878 = vpack.c.b16 %v674, %v670
    %v879 = vpack.c.b16 %v675, %v671
    %v880 = vpack.c.b16 %v680, %v676
    %v881 = vpack.c.b16 %v681, %v677
    %v882 = vpack.c.b16 %v682, %v678
    %v883 = vpack.c.b16 %v683, %v679
    %v884 = vpack.c.b16 %v688, %v684
    %v885 = vpack.c.b16 %v689, %v685
    %v886 = vpack.c.b16 %v690, %v686
    %v887 = vpack.c.b16 %v691, %v687
    %v888 = vpack.c.b16 %v696, %v692
    %v889 = vpack.c.b16 %v697, %v693
    %v890 = vpack.c.b16 %v698, %v694
    %v891 = vpack.c.b16 %v699, %v695
    %v892 = vpack.c.b16 %v704, %v700
    %v893 = vpack.c.b16 %v705, %v701
    %v894 = vpack.c.b16 %v706, %v702
    %v895 = vpack.c.b16 %v707, %v703
    %v896 = vpack.c.b16 %v712, %v708
    %v897 = vpack.c.b16 %v713, %v709
    %v898 = vpack.c.b16 %v714, %v710
    %v899 = vpack.c.b16 %v715, %v711
    %v900 = vpack.c.b16 %v720, %v716
    %v901 = vpack.c.b16 %v721, %v717
    %v902 = vpack.c.b16 %v722, %v718
    %v903 = vpack.c.b16 %v723, %v719
    %v904 = vpack.c.b16 %v728, %v724
    %v905 = vpack.c.b16 %v729, %v725
    %v906 = vpack.c.b16 %v730, %v726
    %v907 = vpack.c.b16 %v731, %v727
    %v908 = vpack.c.b16 %v736, %v732
    %v909 = vpack.c.b16 %v737, %v733
    %v910 = vpack.c.b16 %v738, %v734
    %v911 = vpack.c.b16 %v739, %v735
    %v912 = vpack.c.b16 %v744, %v740
    %v913 = vpack.c.b16 %v745, %v741
    %v914 = vpack.c.b16 %v746, %v742
    %v915 = vpack.c.b16 %v747, %v743
    %v916 = vpack.c.b16 %v752, %v748
    %v917 = vpack.c.b16 %v753, %v749
    %v918 = vpack.c.b16 %v754, %v750
    %v919 = vpack.c.b16 %v755, %v751
    %v920 = vpack.c.b16 %v760, %v756
    %v921 = vpack.c.b16 %v761, %v757
    %v922 = vpack.c.b16 %v762, %v758
    %v923 = vpack.c.b16 %v763, %v759
    %v924 = vpack.c.b16 %v768, %v764
    %v925 = vpack.c.b16 %v769, %v765
    %v926 = vpack.c.b16 %v770, %v766
    %v927 = vpack.c.b16 %v771, %v767
    %v928 = vpack.c.b16 %v776, %v772
    %v929 = vpack.c.b16 %v777, %v773
    %v930 = vpack.c.b16 %v778, %v774
    %v931 = vpack.c.b16 %v779, %v775
    %v932 = vpack.c.b16 %v784, %v780
    %v933 = vpack.c.b16 %v785, %v781
    %v934 = vpack.c.b16 %v786, %v782
    %v935 = vpack.c.b16 %v787, %v783
    %v936 = vpack.c.b16 %v792, %v788
    %v937 = vpack.c.b16 %v793, %v789
    %v938 = vpack.c.b16 %v794, %v790
    %v939 = vpack.c.b16 %v795, %v791
    %v940 = vpack.c.b16 %v800, %v796
    %v941 = vpack.c.b16 %v801, %v797
    %v942 = vpack.c.b16 %v802, %v798
    %v943 = vpack.c.b16 %v803, %v799
    %v944 = vpack.c.b16 %v808, %v804
    %v945 = vpack.c.b16 %v809, %v805
    %v946 = vpack.c.b16 %v810, %v806
    %v947 = vpack.c.b16 %v811, %v807
    %v948 = vpack.c.b16 %v816, %v812
    %v949 = vpack.c.b16 %v817, %v813
    %v950 = vpack.c.b16 %v818, %v814
    %v951 = vpack.c.b16 %v819, %v815
    %v952 = vpack.c.b16 %v824, %v820
    %v953 = vpack.c.b16 %v825, %v821
    %v954 = vpack.c.b16 %v826, %v822
    %v955 = vpack.c.b16 %v827, %v823
    %1084 = vmatprep.subr.bf16.mxu0 %v829
    %1085 = vmatpush1.bf16.msra.mxu0 %v828
    %1086 = vmatprep.subr.bf16.mxu0 %v833
    %1087 = vmatpush1.bf16.msra.mxu0 %v832
    %1088 = vmatprep.subr.bf16.mxu0 %v837
    %1089 = vmatpush1.bf16.msra.mxu0 %v836
    %1090 = vmatprep.subr.bf16.mxu0 %v841
    %1091 = vmatpush1.bf16.msra.mxu0 %v840
    %1092 = vmatprep.subr.bf16.mxu0 %v845
    %1093 = vmatpush1.bf16.msra.mxu0 %v844
    %1094 = vmatprep.subr.bf16.mxu0 %v849
    %1095 = vmatpush1.bf16.msra.mxu0 %v848
    %1096 = vmatprep.subr.bf16.mxu0 %v853
    %1097 = vmatpush1.bf16.msra.mxu0 %v852
    %1098 = vmatprep.subr.bf16.mxu0 %v857
    %1099 = vmatpush1.bf16.msra.mxu0 %v856
    %1100 = vmatprep.subr.bf16.mxu0 %v861
    %1101 = vmatpush1.bf16.msra.mxu0 %v860
    %1102 = vmatprep.subr.bf16.mxu0 %v865
    %1103 = vmatpush1.bf16.msra.mxu0 %v864
    %1104 = vmatprep.subr.bf16.mxu0 %v869
    %1105 = vmatpush1.bf16.msra.mxu0 %v868
    %1106 = vmatprep.subr.bf16.mxu0 %v873
    %1107 = vmatpush1.bf16.msra.mxu0 %v872
    %1108 = vmatprep.subr.bf16.mxu0 %v877
    %1109 = vmatpush1.bf16.msra.mxu0 %v876
    %1110 = vmatprep.subr.bf16.mxu0 %v881
    %1111 = vmatpush1.bf16.msra.mxu0 %v880
    %1112 = vmatprep.subr.bf16.mxu0 %v885
    %1113 = vmatpush1.bf16.msra.mxu0 %v884
    %1114 = vmatprep.subr.bf16.mxu0 %v889
    %1115 = vmatpush1.bf16.msra.mxu0 %v888
    %1116 = vmatprep.mubr.bf16.mxu0 %v313
    %1117 = vmatmul.mubr.bf16.gmra.mrb[0].mxu0 %v312
    %v1118 = vpop.f32.mrb[0].mxu0
    %v1119 = vadd.f32 0.0, %v1118
    %v1120 = vpop.f32.mrb[0].mxu0
    %v1121 = vadd.f32 0.0, %v1120
    %v1122 = vpop.f32.mrb[0].mxu0
    %v1123 = vadd.f32 0.0, %v1122
    %v1124 = vpop.f32.mrb[0].mxu0
    %v1125 = vadd.f32 0.0, %v1124
    %1126 = vdwg.mxu0
    %1127 = vmatprep.subr.bf16.mxu0 %v893
    %1128 = vmatpush1.bf16.msra.mxu0 %v892
    %1129 = vmatprep.subr.bf16.mxu0 %v897
    %1130 = vmatpush1.bf16.msra.mxu0 %v896
    %1131 = vmatprep.subr.bf16.mxu0 %v901
    %1132 = vmatpush1.bf16.msra.mxu0 %v900
    %1133 = vmatprep.subr.bf16.mxu0 %v905
    %1134 = vmatpush1.bf16.msra.mxu0 %v904
    %1135 = vmatprep.subr.bf16.mxu0 %v909
    %1136 = vmatpush1.bf16.msra.mxu0 %v908
    %1137 = vmatprep.subr.bf16.mxu0 %v913
    %1138 = vmatpush1.bf16.msra.mxu0 %v912
    %1139 = vmatprep.subr.bf16.mxu0 %v917
    %1140 = vmatpush1.bf16.msra.mxu0 %v916
    %1141 = vmatprep.subr.bf16.mxu0 %v921
    %1142 = vmatpush1.bf16.msra.mxu0 %v920
    %1143 = vmatprep.subr.bf16.mxu0 %v925
    %1144 = vmatpush1.bf16.msra.mxu0 %v924
    %1145 = vmatprep.subr.bf16.mxu0 %v929
    %1146 = vmatpush1.bf16.msra.mxu0 %v928
    %1147 = vmatprep.subr.bf16.mxu0 %v933
    %1148 = vmatpush1.bf16.msra.mxu0 %v932
    %1149 = vmatprep.subr.bf16.mxu0 %v937
    %1150 = vmatpush1.bf16.msra.mxu0 %v936
    %1151 = vmatprep.subr.bf16.mxu0 %v941
    %1152 = vmatpush1.bf16.msra.mxu0 %v940
    %1153 = vmatprep.subr.bf16.mxu0 %v945
    %1154 = vmatpush1.bf16.msra.mxu0 %v944
    %1155 = vmatprep.subr.bf16.mxu0 %v949
    %1156 = vmatpush1.bf16.msra.mxu0 %v948
    %1157 = vmatprep.subr.bf16.mxu0 %v953
    %1158 = vmatpush1.bf16.msra.mxu0 %v952
    %1159 = vmatprep.mubr.bf16.mxu0 %v315
    %1160 = vmatmul.mubr.bf16.gmra.mrb[0].mxu0 %v314
    %v1161 = vpop.f32.mrb[0].mxu0
    %v1162 = vadd.f32 %v1119, %v1161
    %v1163 = vpop.f32.mrb[0].mxu0
    %v1164 = vadd.f32 %v1121, %v1163
    %v1165 = vpop.f32.mrb[0].mxu0
    %v1166 = vadd.f32 %v1123, %v1165
    %v1167 = vpop.f32.mrb[0].mxu0
    %v1168 = vadd.f32 %v1125, %v1167
    %1169 = vdwg.mxu0
    %1170 = vmatprep.subr.bf16.mxu0 %v831
    %1171 = vmatpush1.bf16.msra.mxu0 %v830
    %1172 = vmatprep.subr.bf16.mxu0 %v835
    %1173 = vmatpush1.bf16.msra.mxu0 %v834
    %1174 = vmatprep.subr.bf16.mxu0 %v839
    %1175 = vmatpush1.bf16.msra.mxu0 %v838
    %1176 = vmatprep.subr.bf16.mxu0 %v843
    %1177 = vmatpush1.bf16.msra.mxu0 %v842
    %1178 = vmatprep.subr.bf16.mxu0 %v847
    %1179 = vmatpush1.bf16.msra.mxu0 %v846
    %1180 = vmatprep.subr.bf16.mxu0 %v851
    %1181 = vmatpush1.bf16.msra.mxu0 %v850
    %1182 = vmatprep.subr.bf16.mxu0 %v855
    %1183 = vmatpush1.bf16.msra.mxu0 %v854
    %1184 = vmatprep.subr.bf16.mxu0 %v859
    %1185 = vmatpush1.bf16.msra.mxu0 %v858
    %1186 = vmatprep.subr.bf16.mxu0 %v863
    %1187 = vmatpush1.bf16.msra.mxu0 %v862
    %1188 = vmatprep.subr.bf16.mxu0 %v867
    %1189 = vmatpush1.bf16.msra.mxu0 %v866
    %1190 = vmatprep.subr.bf16.mxu0 %v871
    %1191 = vmatpush1.bf16.msra.mxu0 %v870
    %1192 = vmatprep.subr.bf16.mxu0 %v875
    %1193 = vmatpush1.bf16.msra.mxu0 %v874
    %1194 = vmatprep.subr.bf16.mxu0 %v879
    %1195 = vmatpush1.bf16.msra.mxu0 %v878
    %1196 = vmatprep.subr.bf16.mxu0 %v883
    %1197 = vmatpush1.bf16.msra.mxu0 %v882
    %1198 = vmatprep.subr.bf16.mxu0 %v887
    %1199 = vmatpush1.bf16.msra.mxu0 %v886
    %1200 = vmatprep.subr.bf16.mxu0 %v891
    %1201 = vmatpush1.bf16.msra.mxu0 %v890
    %1202 = vmatprep.mubr.bf16.mxu0 %v313
    %1203 = vmatmul.mubr.bf16.gmra.mrb[0].mxu0 %v312
    %v1204 = vpop.f32.mrb[0].mxu0
    %v1205 = vadd.f32 0.0, %v1204
    %v1206 = vpop.f32.mrb[0].mxu0
    %v1207 = vadd.f32 0.0, %v1206
    %v1208 = vpop.f32.mrb[0].mxu0
    %v1209 = vadd.f32 0.0, %v1208
    %v1210 = vpop.f32.mrb[0].mxu0
    %v1211 = vadd.f32 0.0, %v1210
    %1212 = vdwg.mxu0
    %1213 = vmatprep.subr.bf16.mxu0 %v895
    %1214 = vmatpush1.bf16.msra.mxu0 %v894
    %1215 = vmatprep.subr.bf16.mxu0 %v899
    %1216 = vmatpush1.bf16.msra.mxu0 %v898
    %1217 = vmatprep.subr.bf16.mxu0 %v903
    %1218 = vmatpush1.bf16.msra.mxu0 %v902
    %1219 = vmatprep.subr.bf16.mxu0 %v907
    %1220 = vmatpush1.bf16.msra.mxu0 %v906
    %1221 = vmatprep.subr.bf16.mxu0 %v911
    %1222 = vmatpush1.bf16.msra.mxu0 %v910
    %1223 = vmatprep.subr.bf16.mxu0 %v915
    %1224 = vmatpush1.bf16.msra.mxu0 %v914
    %1225 = vmatprep.subr.bf16.mxu0 %v919
    %1226 = vmatpush1.bf16.msra.mxu0 %v918
    %1227 = vmatprep.subr.bf16.mxu0 %v923
    %1228 = vmatpush1.bf16.msra.mxu0 %v922
    %1229 = vmatprep.subr.bf16.mxu0 %v927
    %1230 = vmatpush1.bf16.msra.mxu0 %v926
    %1231 = vmatprep.subr.bf16.mxu0 %v931
    %1232 = vmatpush1.bf16.msra.mxu0 %v930
    %1233 = vmatprep.subr.bf16.mxu0 %v935
    %1234 = vmatpush1.bf16.msra.mxu0 %v934
    %1235 = vmatprep.subr.bf16.mxu0 %v939
    %1236 = vmatpush1.bf16.msra.mxu0 %v938
    %1237 = vmatprep.subr.bf16.mxu0 %v943
    %1238 = vmatpush1.bf16.msra.mxu0 %v942
    %1239 = vmatprep.subr.bf16.mxu0 %v947
    %1240 = vmatpush1.bf16.msra.mxu0 %v946
    %1241 = vmatprep.subr.bf16.mxu0 %v951
    %1242 = vmatpush1.bf16.msra.mxu0 %v950
    %1243 = vmatprep.subr.bf16.mxu0 %v955
    %1244 = vmatpush1.bf16.msra.mxu0 %v954
    %1245 = vmatprep.mubr.bf16.mxu0 %v315
    %1246 = vmatmul.mubr.bf16.gmra.mrb[0].mxu0 %v314
    %v1247 = vpop.f32.mrb[0].mxu0
    %v1248 = vadd.f32 %v1205, %v1247
    %v1249 = vpop.f32.mrb[0].mxu0
    %v1250 = vadd.f32 %v1207, %v1249
    %v1251 = vpop.f32.mrb[0].mxu0
    %v1252 = vadd.f32 %v1209, %v1251
    %v1253 = vpop.f32.mrb[0].mxu0
    %v1254 = vadd.f32 %v1211, %v1253
    %1255 = vdwg.mxu0
    %v1256 = vrot.slane %v1162, 4
    %v1257 = vadd.f32 %v1162, %v1256
    %v1258 = vrot.slane %v1257, 2
    %v1259 = vadd.f32 %v1257, %v1258
    %v1260 = vrot.slane %v1259, 1
    %v1261 = vadd.f32 %v1259, %v1260
    %v1262 = vrot.slane %v1164, 4
    %v1263 = vadd.f32 %v1164, %v1262
    %v1264 = vrot.slane %v1263, 2
    %v1265 = vadd.f32 %v1263, %v1264
    %v1266 = vrot.slane %v1265, 1
    %v1267 = vadd.f32 %v1265, %v1266
    %v1268 = vrot.slane %v1248, 4
    %v1269 = vadd.f32 %v1248, %v1268
    %v1270 = vrot.slane %v1269, 2
    %v1271 = vadd.f32 %v1269, %v1270
    %v1272 = vrot.slane %v1271, 1
    %v1273 = vadd.f32 %v1271, %v1272
    %v1274 = vrot.slane %v1250, 4
    %v1275 = vadd.f32 %v1250, %v1274
    %v1276 = vrot.slane %v1275, 2
    %v1277 = vadd.f32 %v1275, %v1276
    %v1278 = vrot.slane %v1277, 1
    %v1279 = vadd.f32 %v1277, %v1278
    %v1280 = vrot.slane %v1166, 4
    %v1281 = vadd.f32 %v1166, %v1280
    %v1282 = vrot.slane %v1281, 2
    %v1283 = vadd.f32 %v1281, %v1282
    %v1284 = vrot.slane %v1283, 1
    %v1285 = vadd.f32 %v1283, %v1284
    %v1286 = vrot.slane %v1168, 4
    %v1287 = vadd.f32 %v1168, %v1286
    %v1288 = vrot.slane %v1287, 2
    %v1289 = vadd.f32 %v1287, %v1288
    %v1290 = vrot.slane %v1289, 1
    %v1291 = vadd.f32 %v1289, %v1290
    %v1292 = vrot.slane %v1252, 4
    %v1293 = vadd.f32 %v1252, %v1292
    %v1294 = vrot.slane %v1293, 2
    %v1295 = vadd.f32 %v1293, %v1294
    %v1296 = vrot.slane %v1295, 1
    %v1297 = vadd.f32 %v1295, %v1296
    %v1298 = vrot.slane %v1254, 4
    %v1299 = vadd.f32 %v1254, %v1298
    %v1300 = vrot.slane %v1299, 2
    %v1301 = vadd.f32 %v1299, %v1300
    %v1302 = vrot.slane %v1301, 1
    %v1303 = vadd.f32 %v1301, %v1302
    %v1304 = vmul.f32 %v1261, 0.125
    %v1305 = vmul.f32 %v1267, 0.125
    %v1306 = vmul.f32 %v1273, 0.125
    %v1307 = vmul.f32 %v1279, 0.125
    %v1308 = vmul.f32 %v1285, 0.125
    %v1309 = vmul.f32 %v1291, 0.125
    %v1310 = vmul.f32 %v1297, 0.125
    %v1311 = vmul.f32 %v1303, 0.125
    %v1312 = vpack.c.bf16 %v1308, %v1304
    %v1313 = vpack.c.bf16 %v1309, %v1305
    %v1314 = vpack.c.bf16 %v1310, %v1306
    %v1315 = vpack.c.bf16 %v1311, %v1307
    %v1316 = vld [vmem:[#allocation10] sm:$0xff]
    %v1317 = vld [vmem:[#allocation10 + $0x8] sm:$0xff]
    %v1318 = vld [vmem:[#allocation10 + $0x10] sm:$0xff]
    %v1319 = vld [vmem:[#allocation10 + $0x18] sm:$0xff]
    %v1320 = vld [vmem:[#allocation10 + $0x20] sm:$0xff]
    %v1321 = vld [vmem:[#allocation10 + $0x28] sm:$0xff]
    %v1322 = vld [vmem:[#allocation10 + $0x30] sm:$0xff]
    %v1323 = vld [vmem:[#allocation10 + $0x38] sm:$0xff]
    %v1324 = vld [vmem:[#allocation10 + $0x40] sm:$0xff]
    %v1325 = vld [vmem:[#allocation10 + $0x48] sm:$0xff]
    %v1326 = vld [vmem:[#allocation10 + $0x50] sm:$0xff]
    %v1327 = vld [vmem:[#allocation10 + $0x58] sm:$0xff]
    %v1328 = vld [vmem:[#allocation10 + $0x60] sm:$0xff]
    %v1329 = vld [vmem:[#allocation10 + $0x68] sm:$0xff]
    %v1330 = vld [vmem:[#allocation10 + $0x70] sm:$0xff]
    %v1331 = vld [vmem:[#allocation10 + $0x78] sm:$0xff]
    %v1332 = vld [vmem:[#allocation10 + $0x80] sm:$0xff]
    %v1333 = vld [vmem:[#allocation10 + $0x88] sm:$0xff]
    %v1334 = vld [vmem:[#allocation10 + $0x90] sm:$0xff]
    %v1335 = vld [vmem:[#allocation10 + $0x98] sm:$0xff]
    %v1336 = vld [vmem:[#allocation10 + $0xa0] sm:$0xff]
    %v1337 = vld [vmem:[#allocation10 + $0xa8] sm:$0xff]
    %v1338 = vld [vmem:[#allocation10 + $0xb0] sm:$0xff]
    %v1339 = vld [vmem:[#allocation10 + $0xb8] sm:$0xff]
    %v1340 = vld [vmem:[#allocation10 + $0xc0] sm:$0xff]
    %v1341 = vld [vmem:[#allocation10 + $0xc8] sm:$0xff]
    %v1342 = vld [vmem:[#allocation10 + $0xd0] sm:$0xff]
    %v1343 = vld [vmem:[#allocation10 + $0xd8] sm:$0xff]
    %v1344 = vld [vmem:[#allocation10 + $0xe0] sm:$0xff]
    %v1345 = vld [vmem:[#allocation10 + $0xe8] sm:$0xff]
    %v1346 = vld [vmem:[#allocation10 + $0xf0] sm:$0xff]
    %v1347 = vld [vmem:[#allocation10 + $0xf8] sm:$0xff]
    %v1348 = vld [vmem:[#allocation10 + $0x100] sm:$0xff]
    %v1349 = vld [vmem:[#allocation10 + $0x108] sm:$0xff]
    %v1350 = vld [vmem:[#allocation10 + $0x110] sm:$0xff]
    %v1351 = vld [vmem:[#allocation10 + $0x118] sm:$0xff]
    %v1352 = vld [vmem:[#allocation10 + $0x120] sm:$0xff]
    %v1353 = vld [vmem:[#allocation10 + $0x128] sm:$0xff]
    %v1354 = vld [vmem:[#allocation10 + $0x130] sm:$0xff]
    %v1355 = vld [vmem:[#allocation10 + $0x138] sm:$0xff]
    %v1356 = vld [vmem:[#allocation10 + $0x140] sm:$0xff]
    %v1357 = vld [vmem:[#allocation10 + $0x148] sm:$0xff]
    %v1358 = vld [vmem:[#allocation10 + $0x150] sm:$0xff]
    %v1359 = vld [vmem:[#allocation10 + $0x158] sm:$0xff]
    %v1360 = vld [vmem:[#allocation10 + $0x160] sm:$0xff]
    %v1361 = vld [vmem:[#allocation10 + $0x168] sm:$0xff]
    %v1362 = vld [vmem:[#allocation10 + $0x170] sm:$0xff]
    %v1363 = vld [vmem:[#allocation10 + $0x178] sm:$0xff]
    %v1364 = vld [vmem:[#allocation10 + $0x180] sm:$0xff]
    %v1365 = vld [vmem:[#allocation10 + $0x188] sm:$0xff]
    %v1366 = vld [vmem:[#allocation10 + $0x190] sm:$0xff]
    %v1367 = vld [vmem:[#allocation10 + $0x198] sm:$0xff]
    %v1368 = vld [vmem:[#allocation10 + $0x1a0] sm:$0xff]
    %v1369 = vld [vmem:[#allocation10 + $0x1a8] sm:$0xff]
    %v1370 = vld [vmem:[#allocation10 + $0x1b0] sm:$0xff]
    %v1371 = vld [vmem:[#allocation10 + $0x1b8] sm:$0xff]
    %v1372 = vld [vmem:[#allocation10 + $0x1c0] sm:$0xff]
    %v1373 = vld [vmem:[#allocation10 + $0x1c8] sm:$0xff]
    %v1374 = vld [vmem:[#allocation10 + $0x1d0] sm:$0xff]
    %v1375 = vld [vmem:[#allocation10 + $0x1d8] sm:$0xff]
    %v1376 = vld [vmem:[#allocation10 + $0x1e0] sm:$0xff]
    %v1377 = vld [vmem:[#allocation10 + $0x1e8] sm:$0xff]
    %v1378 = vld [vmem:[#allocation10 + $0x1f0] sm:$0xff]
    %v1379 = vld [vmem:[#allocation10 + $0x1f8] sm:$0xff]
    %v1380 = vld [vmem:[#allocation10 + $0x200] sm:$0xff]
    %v1381 = vld [vmem:[#allocation10 + $0x208] sm:$0xff]
    %v1382 = vld [vmem:[#allocation10 + $0x210] sm:$0xff]
    %v1383 = vld [vmem:[#allocation10 + $0x218] sm:$0xff]
    %v1384 = vld [vmem:[#allocation10 + $0x220] sm:$0xff]
    %v1385 = vld [vmem:[#allocation10 + $0x228] sm:$0xff]
    %v1386 = vld [vmem:[#allocation10 + $0x230] sm:$0xff]
    %v1387 = vld [vmem:[#allocation10 + $0x238] sm:$0xff]
    %v1388 = vld [vmem:[#allocation10 + $0x240] sm:$0xff]
    %v1389 = vld [vmem:[#allocation10 + $0x248] sm:$0xff]
    %v1390 = vld [vmem:[#allocation10 + $0x250] sm:$0xff]
    %v1391 = vld [vmem:[#allocation10 + $0x258] sm:$0xff]
    %v1392 = vld [vmem:[#allocation10 + $0x260] sm:$0xff]
    %v1393 = vld [vmem:[#allocation10 + $0x268] sm:$0xff]
    %v1394 = vld [vmem:[#allocation10 + $0x270] sm:$0xff]
    %v1395 = vld [vmem:[#allocation10 + $0x278] sm:$0xff]
    %v1396 = vld [vmem:[#allocation10 + $0x280] sm:$0xff]
    %v1397 = vld [vmem:[#allocation10 + $0x288] sm:$0xff]
    %v1398 = vld [vmem:[#allocation10 + $0x290] sm:$0xff]
    %v1399 = vld [vmem:[#allocation10 + $0x298] sm:$0xff]
    %v1400 = vld [vmem:[#allocation10 + $0x2a0] sm:$0xff]
    %v1401 = vld [vmem:[#allocation10 + $0x2a8] sm:$0xff]
    %v1402 = vld [vmem:[#allocation10 + $0x2b0] sm:$0xff]
    %v1403 = vld [vmem:[#allocation10 + $0x2b8] sm:$0xff]
    %v1404 = vld [vmem:[#allocation10 + $0x2c0] sm:$0xff]
    %v1405 = vld [vmem:[#allocation10 + $0x2c8] sm:$0xff]
    %v1406 = vld [vmem:[#allocation10 + $0x2d0] sm:$0xff]
    %v1407 = vld [vmem:[#allocation10 + $0x2d8] sm:$0xff]
    %v1408 = vld [vmem:[#allocation10 + $0x2e0] sm:$0xff]
    %v1409 = vld [vmem:[#allocation10 + $0x2e8] sm:$0xff]
    %v1410 = vld [vmem:[#allocation10 + $0x2f0] sm:$0xff]
    %v1411 = vld [vmem:[#allocation10 + $0x2f8] sm:$0xff]
    %v1412 = vld [vmem:[#allocation10 + $0x300] sm:$0xff]
    %v1413 = vld [vmem:[#allocation10 + $0x308] sm:$0xff]
    %v1414 = vld [vmem:[#allocation10 + $0x310] sm:$0xff]
    %v1415 = vld [vmem:[#allocation10 + $0x318] sm:$0xff]
    %v1416 = vld [vmem:[#allocation10 + $0x320] sm:$0xff]
    %v1417 = vld [vmem:[#allocation10 + $0x328] sm:$0xff]
    %v1418 = vld [vmem:[#allocation10 + $0x330] sm:$0xff]
    %v1419 = vld [vmem:[#allocation10 + $0x338] sm:$0xff]
    %v1420 = vld [vmem:[#allocation10 + $0x340] sm:$0xff]
    %v1421 = vld [vmem:[#allocation10 + $0x348] sm:$0xff]
    %v1422 = vld [vmem:[#allocation10 + $0x350] sm:$0xff]
    %v1423 = vld [vmem:[#allocation10 + $0x358] sm:$0xff]
    %v1424 = vld [vmem:[#allocation10 + $0x360] sm:$0xff]
    %v1425 = vld [vmem:[#allocation10 + $0x368] sm:$0xff]
    %v1426 = vld [vmem:[#allocation10 + $0x370] sm:$0xff]
    %v1427 = vld [vmem:[#allocation10 + $0x378] sm:$0xff]
    %v1428 = vld [vmem:[#allocation10 + $0x380] sm:$0xff]
    %v1429 = vld [vmem:[#allocation10 + $0x388] sm:$0xff]
    %v1430 = vld [vmem:[#allocation10 + $0x390] sm:$0xff]
    %v1431 = vld [vmem:[#allocation10 + $0x398] sm:$0xff]
    %v1432 = vld [vmem:[#allocation10 + $0x3a0] sm:$0xff]
    %v1433 = vld [vmem:[#allocation10 + $0x3a8] sm:$0xff]
    %v1434 = vld [vmem:[#allocation10 + $0x3b0] sm:$0xff]
    %v1435 = vld [vmem:[#allocation10 + $0x3b8] sm:$0xff]
    %v1436 = vld [vmem:[#allocation10 + $0x3c0] sm:$0xff]
    %v1437 = vld [vmem:[#allocation10 + $0x3c8] sm:$0xff]
    %v1438 = vld [vmem:[#allocation10 + $0x3d0] sm:$0xff]
    %v1439 = vld [vmem:[#allocation10 + $0x3d8] sm:$0xff]
    %v1440 = vld [vmem:[#allocation10 + $0x3e0] sm:$0xff]
    %v1441 = vld [vmem:[#allocation10 + $0x3e8] sm:$0xff]
    %v1442 = vld [vmem:[#allocation10 + $0x3f0] sm:$0xff]
    %v1443 = vld [vmem:[#allocation10 + $0x3f8] sm:$0xff]
    %v1572 = vunpack.c.l.b16 %v1316
    %v1573 = vunpack.c.h.b16 %v1316
    %v1574 = vunpack.c.l.b16 %v1317
    %v1575 = vunpack.c.h.b16 %v1317
    %v1576 = vunpack.c.l.b16 %v1318
    %v1577 = vunpack.c.h.b16 %v1318
    %v1578 = vunpack.c.l.b16 %v1319
    %v1579 = vunpack.c.h.b16 %v1319
    %v1580 = vunpack.c.l.b16 %v1320
    %v1581 = vunpack.c.h.b16 %v1320
    %v1582 = vunpack.c.l.b16 %v1321
    %v1583 = vunpack.c.h.b16 %v1321
    %v1584 = vunpack.c.l.b16 %v1322
    %v1585 = vunpack.c.h.b16 %v1322
    %v1586 = vunpack.c.l.b16 %v1323
    %v1587 = vunpack.c.h.b16 %v1323
    %v1588 = vunpack.c.l.b16 %v1324
    %v1589 = vunpack.c.h.b16 %v1324
    %v1590 = vunpack.c.l.b16 %v1325
    %v1591 = vunpack.c.h.b16 %v1325
    %v1592 = vunpack.c.l.b16 %v1326
    %v1593 = vunpack.c.h.b16 %v1326
    %v1594 = vunpack.c.l.b16 %v1327
    %v1595 = vunpack.c.h.b16 %v1327
    %v1596 = vunpack.c.l.b16 %v1328
    %v1597 = vunpack.c.h.b16 %v1328
    %v1598 = vunpack.c.l.b16 %v1329
    %v1599 = vunpack.c.h.b16 %v1329
    %v1600 = vunpack.c.l.b16 %v1330
    %v1601 = vunpack.c.h.b16 %v1330
    %v1602 = vunpack.c.l.b16 %v1331
    %v1603 = vunpack.c.h.b16 %v1331
    %v1604 = vunpack.c.l.b16 %v1332
    %v1605 = vunpack.c.h.b16 %v1332
    %v1606 = vunpack.c.l.b16 %v1333
    %v1607 = vunpack.c.h.b16 %v1333
    %v1608 = vunpack.c.l.b16 %v1334
    %v1609 = vunpack.c.h.b16 %v1334
    %v1610 = vunpack.c.l.b16 %v1335
    %v1611 = vunpack.c.h.b16 %v1335
    %v1612 = vunpack.c.l.b16 %v1336
    %v1613 = vunpack.c.h.b16 %v1336
    %v1614 = vunpack.c.l.b16 %v1337
    %v1615 = vunpack.c.h.b16 %v1337
    %v1616 = vunpack.c.l.b16 %v1338
    %v1617 = vunpack.c.h.b16 %v1338
    %v1618 = vunpack.c.l.b16 %v1339
    %v1619 = vunpack.c.h.b16 %v1339
    %v1620 = vunpack.c.l.b16 %v1340
    %v1621 = vunpack.c.h.b16 %v1340
    %v1622 = vunpack.c.l.b16 %v1341
    %v1623 = vunpack.c.h.b16 %v1341
    %v1624 = vunpack.c.l.b16 %v1342
    %v1625 = vunpack.c.h.b16 %v1342
    %v1626 = vunpack.c.l.b16 %v1343
    %v1627 = vunpack.c.h.b16 %v1343
    %v1628 = vunpack.c.l.b16 %v1344
    %v1629 = vunpack.c.h.b16 %v1344
    %v1630 = vunpack.c.l.b16 %v1345
    %v1631 = vunpack.c.h.b16 %v1345
    %v1632 = vunpack.c.l.b16 %v1346
    %v1633 = vunpack.c.h.b16 %v1346
    %v1634 = vunpack.c.l.b16 %v1347
    %v1635 = vunpack.c.h.b16 %v1347
    %v1636 = vunpack.c.l.b16 %v1348
    %v1637 = vunpack.c.h.b16 %v1348
    %v1638 = vunpack.c.l.b16 %v1349
    %v1639 = vunpack.c.h.b16 %v1349
    %v1640 = vunpack.c.l.b16 %v1350
    %v1641 = vunpack.c.h.b16 %v1350
    %v1642 = vunpack.c.l.b16 %v1351
    %v1643 = vunpack.c.h.b16 %v1351
    %v1644 = vunpack.c.l.b16 %v1352
    %v1645 = vunpack.c.h.b16 %v1352
    %v1646 = vunpack.c.l.b16 %v1353
    %v1647 = vunpack.c.h.b16 %v1353
    %v1648 = vunpack.c.l.b16 %v1354
    %v1649 = vunpack.c.h.b16 %v1354
    %v1650 = vunpack.c.l.b16 %v1355
    %v1651 = vunpack.c.h.b16 %v1355
    %v1652 = vunpack.c.l.b16 %v1356
    %v1653 = vunpack.c.h.b16 %v1356
    %v1654 = vunpack.c.l.b16 %v1357
    %v1655 = vunpack.c.h.b16 %v1357
    %v1656 = vunpack.c.l.b16 %v1358
    %v1657 = vunpack.c.h.b16 %v1358
    %v1658 = vunpack.c.l.b16 %v1359
    %v1659 = vunpack.c.h.b16 %v1359
    %v1660 = vunpack.c.l.b16 %v1360
    %v1661 = vunpack.c.h.b16 %v1360
    %v1662 = vunpack.c.l.b16 %v1361
    %v1663 = vunpack.c.h.b16 %v1361
    %v1664 = vunpack.c.l.b16 %v1362
    %v1665 = vunpack.c.h.b16 %v1362
    %v1666 = vunpack.c.l.b16 %v1363
    %v1667 = vunpack.c.h.b16 %v1363
    %v1668 = vunpack.c.l.b16 %v1364
    %v1669 = vunpack.c.h.b16 %v1364
    %v1670 = vunpack.c.l.b16 %v1365
    %v1671 = vunpack.c.h.b16 %v1365
    %v1672 = vunpack.c.l.b16 %v1366
    %v1673 = vunpack.c.h.b16 %v1366
    %v1674 = vunpack.c.l.b16 %v1367
    %v1675 = vunpack.c.h.b16 %v1367
    %v1676 = vunpack.c.l.b16 %v1368
    %v1677 = vunpack.c.h.b16 %v1368
    %v1678 = vunpack.c.l.b16 %v1369
    %v1679 = vunpack.c.h.b16 %v1369
    %v1680 = vunpack.c.l.b16 %v1370
    %v1681 = vunpack.c.h.b16 %v1370
    %v1682 = vunpack.c.l.b16 %v1371
    %v1683 = vunpack.c.h.b16 %v1371
    %v1684 = vunpack.c.l.b16 %v1372
    %v1685 = vunpack.c.h.b16 %v1372
    %v1686 = vunpack.c.l.b16 %v1373
    %v1687 = vunpack.c.h.b16 %v1373
    %v1688 = vunpack.c.l.b16 %v1374
    %v1689 = vunpack.c.h.b16 %v1374
    %v1690 = vunpack.c.l.b16 %v1375
    %v1691 = vunpack.c.h.b16 %v1375
    %v1692 = vunpack.c.l.b16 %v1376
    %v1693 = vunpack.c.h.b16 %v1376
    %v1694 = vunpack.c.l.b16 %v1377
    %v1695 = vunpack.c.h.b16 %v1377
    %v1696 = vunpack.c.l.b16 %v1378
    %v1697 = vunpack.c.h.b16 %v1378
    %v1698 = vunpack.c.l.b16 %v1379
    %v1699 = vunpack.c.h.b16 %v1379
    %v1700 = vunpack.c.l.b16 %v1380
    %v1701 = vunpack.c.h.b16 %v1380
    %v1702 = vunpack.c.l.b16 %v1381
    %v1703 = vunpack.c.h.b16 %v1381
    %v1704 = vunpack.c.l.b16 %v1382
    %v1705 = vunpack.c.h.b16 %v1382
    %v1706 = vunpack.c.l.b16 %v1383
    %v1707 = vunpack.c.h.b16 %v1383
    %v1708 = vunpack.c.l.b16 %v1384
    %v1709 = vunpack.c.h.b16 %v1384
    %v1710 = vunpack.c.l.b16 %v1385
    %v1711 = vunpack.c.h.b16 %v1385
    %v1712 = vunpack.c.l.b16 %v1386
    %v1713 = vunpack.c.h.b16 %v1386
    %v1714 = vunpack.c.l.b16 %v1387
    %v1715 = vunpack.c.h.b16 %v1387
    %v1716 = vunpack.c.l.b16 %v1388
    %v1717 = vunpack.c.h.b16 %v1388
    %v1718 = vunpack.c.l.b16 %v1389
    %v1719 = vunpack.c.h.b16 %v1389
    %v1720 = vunpack.c.l.b16 %v1390
    %v1721 = vunpack.c.h.b16 %v1390
    %v1722 = vunpack.c.l.b16 %v1391
    %v1723 = vunpack.c.h.b16 %v1391
    %v1724 = vunpack.c.l.b16 %v1392
    %v1725 = vunpack.c.h.b16 %v1392
    %v1726 = vunpack.c.l.b16 %v1393
    %v1727 = vunpack.c.h.b16 %v1393
    %v1728 = vunpack.c.l.b16 %v1394
    %v1729 = vunpack.c.h.b16 %v1394
    %v1730 = vunpack.c.l.b16 %v1395
    %v1731 = vunpack.c.h.b16 %v1395
    %v1732 = vunpack.c.l.b16 %v1396
    %v1733 = vunpack.c.h.b16 %v1396
    %v1734 = vunpack.c.l.b16 %v1397
    %v1735 = vunpack.c.h.b16 %v1397
    %v1736 = vunpack.c.l.b16 %v1398
    %v1737 = vunpack.c.h.b16 %v1398
    %v1738 = vunpack.c.l.b16 %v1399
    %v1739 = vunpack.c.h.b16 %v1399
    %v1740 = vunpack.c.l.b16 %v1400
    %v1741 = vunpack.c.h.b16 %v1400
    %v1742 = vunpack.c.l.b16 %v1401
    %v1743 = vunpack.c.h.b16 %v1401
    %v1744 = vunpack.c.l.b16 %v1402
    %v1745 = vunpack.c.h.b16 %v1402
    %v1746 = vunpack.c.l.b16 %v1403
    %v1747 = vunpack.c.h.b16 %v1403
    %v1748 = vunpack.c.l.b16 %v1404
    %v1749 = vunpack.c.h.b16 %v1404
    %v1750 = vunpack.c.l.b16 %v1405
    %v1751 = vunpack.c.h.b16 %v1405
    %v1752 = vunpack.c.l.b16 %v1406
    %v1753 = vunpack.c.h.b16 %v1406
    %v1754 = vunpack.c.l.b16 %v1407
    %v1755 = vunpack.c.h.b16 %v1407
    %v1756 = vunpack.c.l.b16 %v1408
    %v1757 = vunpack.c.h.b16 %v1408
    %v1758 = vunpack.c.l.b16 %v1409
    %v1759 = vunpack.c.h.b16 %v1409
    %v1760 = vunpack.c.l.b16 %v1410
    %v1761 = vunpack.c.h.b16 %v1410
    %v1762 = vunpack.c.l.b16 %v1411
    %v1763 = vunpack.c.h.b16 %v1411
    %v1764 = vunpack.c.l.b16 %v1412
    %v1765 = vunpack.c.h.b16 %v1412
    %v1766 = vunpack.c.l.b16 %v1413
    %v1767 = vunpack.c.h.b16 %v1413
    %v1768 = vunpack.c.l.b16 %v1414
    %v1769 = vunpack.c.h.b16 %v1414
    %v1770 = vunpack.c.l.b16 %v1415
    %v1771 = vunpack.c.h.b16 %v1415
    %v1772 = vunpack.c.l.b16 %v1416
    %v1773 = vunpack.c.h.b16 %v1416
    %v1774 = vunpack.c.l.b16 %v1417
    %v1775 = vunpack.c.h.b16 %v1417
    %v1776 = vunpack.c.l.b16 %v1418
    %v1777 = vunpack.c.h.b16 %v1418
    %v1778 = vunpack.c.l.b16 %v1419
    %v1779 = vunpack.c.h.b16 %v1419
    %v1780 = vunpack.c.l.b16 %v1420
    %v1781 = vunpack.c.h.b16 %v1420
    %v1782 = vunpack.c.l.b16 %v1421
    %v1783 = vunpack.c.h.b16 %v1421
    %v1784 = vunpack.c.l.b16 %v1422
    %v1785 = vunpack.c.h.b16 %v1422
    %v1786 = vunpack.c.l.b16 %v1423
    %v1787 = vunpack.c.h.b16 %v1423
    %v1788 = vunpack.c.l.b16 %v1424
    %v1789 = vunpack.c.h.b16 %v1424
    %v1790 = vunpack.c.l.b16 %v1425
    %v1791 = vunpack.c.h.b16 %v1425
    %v1792 = vunpack.c.l.b16 %v1426
    %v1793 = vunpack.c.h.b16 %v1426
    %v1794 = vunpack.c.l.b16 %v1427
    %v1795 = vunpack.c.h.b16 %v1427
    %v1796 = vunpack.c.l.b16 %v1428
    %v1797 = vunpack.c.h.b16 %v1428
    %v1798 = vunpack.c.l.b16 %v1429
    %v1799 = vunpack.c.h.b16 %v1429
    %v1800 = vunpack.c.l.b16 %v1430
    %v1801 = vunpack.c.h.b16 %v1430
    %v1802 = vunpack.c.l.b16 %v1431
    %v1803 = vunpack.c.h.b16 %v1431
    %v1804 = vunpack.c.l.b16 %v1432
    %v1805 = vunpack.c.h.b16 %v1432
    %v1806 = vunpack.c.l.b16 %v1433
    %v1807 = vunpack.c.h.b16 %v1433
    %v1808 = vunpack.c.l.b16 %v1434
    %v1809 = vunpack.c.h.b16 %v1434
    %v1810 = vunpack.c.l.b16 %v1435
    %v1811 = vunpack.c.h.b16 %v1435
    %v1812 = vunpack.c.l.b16 %v1436
    %v1813 = vunpack.c.h.b16 %v1436
    %v1814 = vunpack.c.l.b16 %v1437
    %v1815 = vunpack.c.h.b16 %v1437
    %v1816 = vunpack.c.l.b16 %v1438
    %v1817 = vunpack.c.h.b16 %v1438
    %v1818 = vunpack.c.l.b16 %v1439
    %v1819 = vunpack.c.h.b16 %v1439
    %v1820 = vunpack.c.l.b16 %v1440
    %v1821 = vunpack.c.h.b16 %v1440
    %v1822 = vunpack.c.l.b16 %v1441
    %v1823 = vunpack.c.h.b16 %v1441
    %v1824 = vunpack.c.l.b16 %v1442
    %v1825 = vunpack.c.h.b16 %v1442
    %v1826 = vunpack.c.l.b16 %v1443
    %v1827 = vunpack.c.h.b16 %v1443
    %v1828 = vpack.c.b16 %v1576, %v1572
    %v1829 = vpack.c.b16 %v1577, %v1573
    %v1830 = vpack.c.b16 %v1578, %v1574
    %v1831 = vpack.c.b16 %v1579, %v1575
    %v1832 = vpack.c.b16 %v1584, %v1580
    %v1833 = vpack.c.b16 %v1585, %v1581
    %v1834 = vpack.c.b16 %v1586, %v1582
    %v1835 = vpack.c.b16 %v1587, %v1583
    %v1836 = vpack.c.b16 %v1592, %v1588
    %v1837 = vpack.c.b16 %v1593, %v1589
    %v1838 = vpack.c.b16 %v1594, %v1590
    %v1839 = vpack.c.b16 %v1595, %v1591
    %v1840 = vpack.c.b16 %v1600, %v1596
    %v1841 = vpack.c.b16 %v1601, %v1597
    %v1842 = vpack.c.b16 %v1602, %v1598
    %v1843 = vpack.c.b16 %v1603, %v1599
    %v1844 = vpack.c.b16 %v1608, %v1604
    %v1845 = vpack.c.b16 %v1609, %v1605
    %v1846 = vpack.c.b16 %v1610, %v1606
    %v1847 = vpack.c.b16 %v1611, %v1607
    %v1848 = vpack.c.b16 %v1616, %v1612
    %v1849 = vpack.c.b16 %v1617, %v1613
    %v1850 = vpack.c.b16 %v1618, %v1614
    %v1851 = vpack.c.b16 %v1619, %v1615
    %v1852 = vpack.c.b16 %v1624, %v1620
    %v1853 = vpack.c.b16 %v1625, %v1621
    %v1854 = vpack.c.b16 %v1626, %v1622
    %v1855 = vpack.c.b16 %v1627, %v1623
    %v1856 = vpack.c.b16 %v1632, %v1628
    %v1857 = vpack.c.b16 %v1633, %v1629
    %v1858 = vpack.c.b16 %v1634, %v1630
    %v1859 = vpack.c.b16 %v1635, %v1631
    %v1860 = vpack.c.b16 %v1640, %v1636
    %v1861 = vpack.c.b16 %v1641, %v1637
    %v1862 = vpack.c.b16 %v1642, %v1638
    %v1863 = vpack.c.b16 %v1643, %v1639
    %v1864 = vpack.c.b16 %v1648, %v1644
    %v1865 = vpack.c.b16 %v1649, %v1645
    %v1866 = vpack.c.b16 %v1650, %v1646
    %v1867 = vpack.c.b16 %v1651, %v1647
    %v1868 = vpack.c.b16 %v1656, %v1652
    %v1869 = vpack.c.b16 %v1657, %v1653
    %v1870 = vpack.c.b16 %v1658, %v1654
    %v1871 = vpack.c.b16 %v1659, %v1655
    %v1872 = vpack.c.b16 %v1664, %v1660
    %v1873 = vpack.c.b16 %v1665, %v1661
    %v1874 = vpack.c.b16 %v1666, %v1662
    %v1875 = vpack.c.b16 %v1667, %v1663
    %v1876 = vpack.c.b16 %v1672, %v1668
    %v1877 = vpack.c.b16 %v1673, %v1669
    %v1878 = vpack.c.b16 %v1674, %v1670
    %v1879 = vpack.c.b16 %v1675, %v1671
    %v1880 = vpack.c.b16 %v1680, %v1676
    %v1881 = vpack.c.b16 %v1681, %v1677
    %v1882 = vpack.c.b16 %v1682, %v1678
    %v1883 = vpack.c.b16 %v1683, %v1679
    %v1884 = vpack.c.b16 %v1688, %v1684
    %v1885 = vpack.c.b16 %v1689, %v1685
    %v1886 = vpack.c.b16 %v1690, %v1686
    %v1887 = vpack.c.b16 %v1691, %v1687
    %v1888 = vpack.c.b16 %v1696, %v1692
    %v1889 = vpack.c.b16 %v1697, %v1693
    %v1890 = vpack.c.b16 %v1698, %v1694
    %v1891 = vpack.c.b16 %v1699, %v1695
    %v1892 = vpack.c.b16 %v1704, %v1700
    %v1893 = vpack.c.b16 %v1705, %v1701
    %v1894 = vpack.c.b16 %v1706, %v1702
    %v1895 = vpack.c.b16 %v1707, %v1703
    %v1896 = vpack.c.b16 %v1712, %v1708
    %v1897 = vpack.c.b16 %v1713, %v1709
    %v1898 = vpack.c.b16 %v1714, %v1710
    %v1899 = vpack.c.b16 %v1715, %v1711
    %v1900 = vpack.c.b16 %v1720, %v1716
    %v1901 = vpack.c.b16 %v1721, %v1717
    %v1902 = vpack.c.b16 %v1722, %v1718
    %v1903 = vpack.c.b16 %v1723, %v1719
    %v1904 = vpack.c.b16 %v1728, %v1724
    %v1905 = vpack.c.b16 %v1729, %v1725
    %v1906 = vpack.c.b16 %v1730, %v1726
    %v1907 = vpack.c.b16 %v1731, %v1727
    %v1908 = vpack.c.b16 %v1736, %v1732
    %v1909 = vpack.c.b16 %v1737, %v1733
    %v1910 = vpack.c.b16 %v1738, %v1734
    %v1911 = vpack.c.b16 %v1739, %v1735
    %v1912 = vpack.c.b16 %v1744, %v1740
    %v1913 = vpack.c.b16 %v1745, %v1741
    %v1914 = vpack.c.b16 %v1746, %v1742
    %v1915 = vpack.c.b16 %v1747, %v1743
    %v1916 = vpack.c.b16 %v1752, %v1748
    %v1917 = vpack.c.b16 %v1753, %v1749
    %v1918 = vpack.c.b16 %v1754, %v1750
    %v1919 = vpack.c.b16 %v1755, %v1751
    %v1920 = vpack.c.b16 %v1760, %v1756
    %v1921 = vpack.c.b16 %v1761, %v1757
    %v1922 = vpack.c.b16 %v1762, %v1758
    %v1923 = vpack.c.b16 %v1763, %v1759
    %v1924 = vpack.c.b16 %v1768, %v1764
    %v1925 = vpack.c.b16 %v1769, %v1765
    %v1926 = vpack.c.b16 %v1770, %v1766
    %v1927 = vpack.c.b16 %v1771, %v1767
    %v1928 = vpack.c.b16 %v1776, %v1772
    %v1929 = vpack.c.b16 %v1777, %v1773
    %v1930 = vpack.c.b16 %v1778, %v1774
    %v1931 = vpack.c.b16 %v1779, %v1775
    %v1932 = vpack.c.b16 %v1784, %v1780
    %v1933 = vpack.c.b16 %v1785, %v1781
    %v1934 = vpack.c.b16 %v1786, %v1782
    %v1935 = vpack.c.b16 %v1787, %v1783
    %v1936 = vpack.c.b16 %v1792, %v1788
    %v1937 = vpack.c.b16 %v1793, %v1789
    %v1938 = vpack.c.b16 %v1794, %v1790
    %v1939 = vpack.c.b16 %v1795, %v1791
    %v1940 = vpack.c.b16 %v1800, %v1796
    %v1941 = vpack.c.b16 %v1801, %v1797
    %v1942 = vpack.c.b16 %v1802, %v1798
    %v1943 = vpack.c.b16 %v1803, %v1799
    %v1944 = vpack.c.b16 %v1808, %v1804
    %v1945 = vpack.c.b16 %v1809, %v1805
    %v1946 = vpack.c.b16 %v1810, %v1806
    %v1947 = vpack.c.b16 %v1811, %v1807
    %v1948 = vpack.c.b16 %v1816, %v1812
    %v1949 = vpack.c.b16 %v1817, %v1813
    %v1950 = vpack.c.b16 %v1818, %v1814
    %v1951 = vpack.c.b16 %v1819, %v1815
    %v1952 = vpack.c.b16 %v1824, %v1820
    %v1953 = vpack.c.b16 %v1825, %v1821
    %v1954 = vpack.c.b16 %v1826, %v1822
    %v1955 = vpack.c.b16 %v1827, %v1823
    %2084 = vmatprep.subr.bf16.mxu0 %v1829
    %2085 = vmatpush1.bf16.msra.mxu0 %v1828
    %2086 = vmatprep.subr.bf16.mxu0 %v1833
    %2087 = vmatpush1.bf16.msra.mxu0 %v1832
    %2088 = vmatprep.subr.bf16.mxu0 %v1837
    %2089 = vmatpush1.bf16.msra.mxu0 %v1836
    %2090 = vmatprep.subr.bf16.mxu0 %v1841
    %2091 = vmatpush1.bf16.msra.mxu0 %v1840
    %2092 = vmatprep.subr.bf16.mxu0 %v1845
    %2093 = vmatpush1.bf16.msra.mxu0 %v1844
    %2094 = vmatprep.subr.bf16.mxu0 %v1849
    %2095 = vmatpush1.bf16.msra.mxu0 %v1848
    %2096 = vmatprep.subr.bf16.mxu0 %v1853
    %2097 = vmatpush1.bf16.msra.mxu0 %v1852
    %2098 = vmatprep.subr.bf16.mxu0 %v1857
    %2099 = vmatpush1.bf16.msra.mxu0 %v1856
    %2100 = vmatprep.subr.bf16.mxu0 %v1861
    %2101 = vmatpush1.bf16.msra.mxu0 %v1860
    %2102 = vmatprep.subr.bf16.mxu0 %v1865
    %2103 = vmatpush1.bf16.msra.mxu0 %v1864
    %2104 = vmatprep.subr.bf16.mxu0 %v1869
    %2105 = vmatpush1.bf16.msra.mxu0 %v1868
    %2106 = vmatprep.subr.bf16.mxu0 %v1873
    %2107 = vmatpush1.bf16.msra.mxu0 %v1872
    %2108 = vmatprep.subr.bf16.mxu0 %v1877
    %2109 = vmatpush1.bf16.msra.mxu0 %v1876
    %2110 = vmatprep.subr.bf16.mxu0 %v1881
    %2111 = vmatpush1.bf16.msra.mxu0 %v1880
    %2112 = vmatprep.subr.bf16.mxu0 %v1885
    %2113 = vmatpush1.bf16.msra.mxu0 %v1884
    %2114 = vmatprep.subr.bf16.mxu0 %v1889
    %2115 = vmatpush1.bf16.msra.mxu0 %v1888
    %2116 = vmatprep.mubr.bf16.mxu0 %v1313
    %2117 = vmatmul.mubr.bf16.gmra.mrb[0].mxu0 %v1312
    %v2118 = vpop.f32.mrb[0].mxu0
    %v2119 = vadd.f32 %v304, %v2118
    %v2120 = vpop.f32.mrb[0].mxu0
    %v2121 = vadd.f32 %v305, %v2120
    %v2122 = vpop.f32.mrb[0].mxu0
    %v2123 = vadd.f32 %v308, %v2122
    %v2124 = vpop.f32.mrb[0].mxu0
    %v2125 = vadd.f32 %v309, %v2124
    %2126 = vdwg.mxu0
    %2127 = vmatprep.subr.bf16.mxu0 %v1893
    %2128 = vmatpush1.bf16.msra.mxu0 %v1892
    %2129 = vmatprep.subr.bf16.mxu0 %v1897
    %2130 = vmatpush1.bf16.msra.mxu0 %v1896
    %2131 = vmatprep.subr.bf16.mxu0 %v1901
    %2132 = vmatpush1.bf16.msra.mxu0 %v1900
    %2133 = vmatprep.subr.bf16.mxu0 %v1905
    %2134 = vmatpush1.bf16.msra.mxu0 %v1904
    %2135 = vmatprep.subr.bf16.mxu0 %v1909
    %2136 = vmatpush1.bf16.msra.mxu0 %v1908
    %2137 = vmatprep.subr.bf16.mxu0 %v1913
    %2138 = vmatpush1.bf16.msra.mxu0 %v1912
    %2139 = vmatprep.subr.bf16.mxu0 %v1917
    %2140 = vmatpush1.bf16.msra.mxu0 %v1916
    %2141 = vmatprep.subr.bf16.mxu0 %v1921
    %2142 = vmatpush1.bf16.msra.mxu0 %v1920
    %2143 = vmatprep.subr.bf16.mxu0 %v1925
    %2144 = vmatpush1.bf16.msra.mxu0 %v1924
    %2145 = vmatprep.subr.bf16.mxu0 %v1929
    %2146 = vmatpush1.bf16.msra.mxu0 %v1928
    %2147 = vmatprep.subr.bf16.mxu0 %v1933
    %2148 = vmatpush1.bf16.msra.mxu0 %v1932
    %2149 = vmatprep.subr.bf16.mxu0 %v1937
    %2150 = vmatpush1.bf16.msra.mxu0 %v1936
    %2151 = vmatprep.subr.bf16.mxu0 %v1941
    %2152 = vmatpush1.bf16.msra.mxu0 %v1940
    %2153 = vmatprep.subr.bf16.mxu0 %v1945
    %2154 = vmatpush1.bf16.msra.mxu0 %v1944
    %2155 = vmatprep.subr.bf16.mxu0 %v1949
    %2156 = vmatpush1.bf16.msra.mxu0 %v1948
    %2157 = vmatprep.subr.bf16.mxu0 %v1953
    %2158 = vmatpush1.bf16.msra.mxu0 %v1952
    %2159 = vmatprep.mubr.bf16.mxu0 %v1315
    %2160 = vmatmul.mubr.bf16.gmra.mrb[0].mxu0 %v1314
    %v2161 = vpop.f32.mrb[0].mxu0
    %v2162 = vadd.f32 %v2119, %v2161
    %v2163 = vpop.f32.mrb[0].mxu0
    %v2164 = vadd.f32 %v2121, %v2163
    %v2165 = vpop.f32.mrb[0].mxu0
    %v2166 = vadd.f32 %v2123, %v2165
    %v2167 = vpop.f32.mrb[0].mxu0
    %v2168 = vadd.f32 %v2125, %v2167
    %2169 = vdwg.mxu0
    %2170 = vmatprep.subr.bf16.mxu0 %v1831
    %2171 = vmatpush1.bf16.msra.mxu0 %v1830
    %2172 = vmatprep.subr.bf16.mxu0 %v1835
    %2173 = vmatpush1.bf16.msra.mxu0 %v1834
    %2174 = vmatprep.subr.bf16.mxu0 %v1839
    %2175 = vmatpush1.bf16.msra.mxu0 %v1838
    %2176 = vmatprep.subr.bf16.mxu0 %v1843
    %2177 = vmatpush1.bf16.msra.mxu0 %v1842
    %2178 = vmatprep.subr.bf16.mxu0 %v1847
    %2179 = vmatpush1.bf16.msra.mxu0 %v1846
    %2180 = vmatprep.subr.bf16.mxu0 %v1851
    %2181 = vmatpush1.bf16.msra.mxu0 %v1850
    %2182 = vmatprep.subr.bf16.mxu0 %v1855
    %2183 = vmatpush1.bf16.msra.mxu0 %v1854
    %2184 = vmatprep.subr.bf16.mxu0 %v1859
    %2185 = vmatpush1.bf16.msra.mxu0 %v1858
    %2186 = vmatprep.subr.bf16.mxu0 %v1863
    %2187 = vmatpush1.bf16.msra.mxu0 %v1862
    %2188 = vmatprep.subr.bf16.mxu0 %v1867
    %2189 = vmatpush1.bf16.msra.mxu0 %v1866
    %2190 = vmatprep.subr.bf16.mxu0 %v1871
    %2191 = vmatpush1.bf16.msra.mxu0 %v1870
    %2192 = vmatprep.subr.bf16.mxu0 %v1875
    %2193 = vmatpush1.bf16.msra.mxu0 %v1874
    %2194 = vmatprep.subr.bf16.mxu0 %v1879
    %2195 = vmatpush1.bf16.msra.mxu0 %v1878
    %2196 = vmatprep.subr.bf16.mxu0 %v1883
    %2197 = vmatpush1.bf16.msra.mxu0 %v1882
    %2198 = vmatprep.subr.bf16.mxu0 %v1887
    %2199 = vmatpush1.bf16.msra.mxu0 %v1886
    %2200 = vmatprep.subr.bf16.mxu0 %v1891
    %2201 = vmatpush1.bf16.msra.mxu0 %v1890
    %2202 = vmatprep.mubr.bf16.mxu0 %v1313
    %2203 = vmatmul.mubr.bf16.gmra.mrb[0].mxu0 %v1312
    %v2204 = vpop.f32.mrb[0].mxu0
    %v2205 = vadd.f32 %v306, %v2204
    %v2206 = vpop.f32.mrb[0].mxu0
    %v2207 = vadd.f32 %v307, %v2206
    %v2208 = vpop.f32.mrb[0].mxu0
    %v2209 = vadd.f32 %v310, %v2208
    %v2210 = vpop.f32.mrb[0].mxu0
    %v2211 = vadd.f32 %v311, %v2210
    %2212 = vdwg.mxu0
    %2213 = vmatprep.subr.bf16.mxu0 %v1895
    %2214 = vmatpush1.bf16.msra.mxu0 %v1894
    %2215 = vmatprep.subr.bf16.mxu0 %v1899
    %2216 = vmatpush1.bf16.msra.mxu0 %v1898
    %2217 = vmatprep.subr.bf16.mxu0 %v1903
    %2218 = vmatpush1.bf16.msra.mxu0 %v1902
    %2219 = vmatprep.subr.bf16.mxu0 %v1907
    %2220 = vmatpush1.bf16.msra.mxu0 %v1906
    %2221 = vmatprep.subr.bf16.mxu0 %v1911
    %2222 = vmatpush1.bf16.msra.mxu0 %v1910
    %2223 = vmatprep.subr.bf16.mxu0 %v1915
    %2224 = vmatpush1.bf16.msra.mxu0 %v1914
    %2225 = vmatprep.subr.bf16.mxu0 %v1919
    %2226 = vmatpush1.bf16.msra.mxu0 %v1918
    %2227 = vmatprep.subr.bf16.mxu0 %v1923
    %2228 = vmatpush1.bf16.msra.mxu0 %v1922
    %2229 = vmatprep.subr.bf16.mxu0 %v1927
    %2230 = vmatpush1.bf16.msra.mxu0 %v1926
    %2231 = vmatprep.subr.bf16.mxu0 %v1931
    %2232 = vmatpush1.bf16.msra.mxu0 %v1930
    %2233 = vmatprep.subr.bf16.mxu0 %v1935
    %2234 = vmatpush1.bf16.msra.mxu0 %v1934
    %2235 = vmatprep.subr.bf16.mxu0 %v1939
    %2236 = vmatpush1.bf16.msra.mxu0 %v1938
    %2237 = vmatprep.subr.bf16.mxu0 %v1943
    %2238 = vmatpush1.bf16.msra.mxu0 %v1942
    %2239 = vmatprep.subr.bf16.mxu0 %v1947
    %2240 = vmatpush1.bf16.msra.mxu0 %v1946
    %2241 = vmatprep.subr.bf16.mxu0 %v1951
    %2242 = vmatpush1.bf16.msra.mxu0 %v1950
    %2243 = vmatprep.subr.bf16.mxu0 %v1955
    %2244 = vmatpush1.bf16.msra.mxu0 %v1954
    %2245 = vmatprep.mubr.bf16.mxu0 %v1315
    %2246 = vmatmul.mubr.bf16.gmra.mrb[0].mxu0 %v1314
    %v2247 = vpop.f32.mrb[0].mxu0
    %v2248 = vadd.f32 %v2205, %v2247
    %v2249 = vpop.f32.mrb[0].mxu0
    %v2250 = vadd.f32 %v2207, %v2249
    %v2251 = vpop.f32.mrb[0].mxu0
    %v2252 = vadd.f32 %v2209, %v2251
    %v2253 = vpop.f32.mrb[0].mxu0
    %v2254 = vadd.f32 %v2211, %v2253
    %2255 = vdwg.mxu0
    %v2256 = vadd.f32 %v2162, %v2164
    %v2257 = vadd.f32 %v2256, %v2248
    %v2258 = vadd.f32 %v2257, %v2250
    %2259 = vadd.xlane.f32.xlu0 %v2258
    %v2260 = vpop.xlane.xlu0 %2259
    %v2261 = vadd.f32 %v2166, %v2168
    %v2262 = vadd.f32 %v2261, %v2252
    %v2263 = vadd.f32 %v2262, %v2254
    %2264 = vadd.xlane.f32.xlu0 %v2263
    %v2265 = vpop.xlane.xlu0 %2264
    %v2266 = vrcp.pop 512.0
    %v2267 = vmul.f32 %v2260, %v2266
    %v2268 = vmul.f32 %v2265, %v2266
    %v2269 = vsub.f32 %v2162, %v2267
    %v2270 = vsub.f32 %v2164, %v2267
    %v2271 = vsub.f32 %v2248, %v2267
    %v2272 = vsub.f32 %v2250, %v2267
    %v2273 = vsub.f32 %v2166, %v2268
    %v2274 = vsub.f32 %v2168, %v2268
    %v2275 = vsub.f32 %v2252, %v2268
    %v2276 = vsub.f32 %v2254, %v2268
    %v2277 = vmul.f32 %v2269, %v2269
    %v2278 = vmul.f32 %v2270, %v2270
    %v2279 = vmul.f32 %v2271, %v2271
    %v2280 = vmul.f32 %v2272, %v2272
    %v2281 = vmul.f32 %v2273, %v2273
    %v2282 = vmul.f32 %v2274, %v2274
    %v2283 = vmul.f32 %v2275, %v2275
    %v2284 = vmul.f32 %v2276, %v2276
    %v2285 = vadd.f32 %v2277, %v2278
    %v2286 = vadd.f32 %v2285, %v2279
    %v2287 = vadd.f32 %v2286, %v2280
    %2288 = vadd.xlane.f32.xlu0 %v2287
    %v2289 = vpop.xlane.xlu0 %2288
    %v2290 = vadd.f32 %v2281, %v2282
    %v2291 = vadd.f32 %v2290, %v2283
    %v2292 = vadd.f32 %v2291, %v2284
    %2293 = vadd.xlane.f32.xlu0 %v2292
    %v2294 = vpop.xlane.xlu0 %2293
    %v2295 = vmul.f32 %v2289, %v2266
    %v2296 = vmul.f32 %v2294, %v2266
    %v2297 = vadd.f32 %v2295, 1e-05
    %v2298 = vadd.f32 %v2296, 1e-05
    %v2299 = vrsqrt.pop %v2297
    %v2300 = vrsqrt.pop %v2298
    %v2301 = vmul.f32 %v2269, %v2299
    %v2302 = vmul.f32 %v2270, %v2299
    %v2303 = vmul.f32 %v2271, %v2299
    %v2304 = vmul.f32 %v2272, %v2299
    %v2305 = vmul.f32 %v2273, %v2300
    %v2306 = vmul.f32 %v2274, %v2300
    %v2307 = vmul.f32 %v2275, %v2300
    %v2308 = vmul.f32 %v2276, %v2300
    %v2309 = vpack.c.bf16 %v2305, %v2301
    %v2310 = vpack.c.bf16 %v2306, %v2302
    %v2311 = vpack.c.bf16 %v2307, %v2303
    %v2312 = vpack.c.bf16 %v2308, %v2304
    %v2313 = vld [vmem:[#allocation11] sm:$0xff]
    %v2314 = vld [vmem:[#allocation11 + $0x8] sm:$0xff]
    %v2315 = vld [vmem:[#allocation11 + $0x10] sm:$0xff]
    %v2316 = vld [vmem:[#allocation11 + $0x18] sm:$0xff]
    %v2317 = vld [vmem:[#allocation11 + $0x20] sm:$0xff]
    %v2318 = vld [vmem:[#allocation11 + $0x28] sm:$0xff]
    %v2319 = vld [vmem:[#allocation11 + $0x30] sm:$0xff]
    %v2320 = vld [vmem:[#allocation11 + $0x38] sm:$0xff]
    %v2321 = vld [vmem:[#allocation11 + $0x40] sm:$0xff]
    %v2322 = vld [vmem:[#allocation11 + $0x48] sm:$0xff]
    %v2323 = vld [vmem:[#allocation11 + $0x50] sm:$0xff]
    %v2324 = vld [vmem:[#allocation11 + $0x58] sm:$0xff]
    %v2325 = vld [vmem:[#allocation11 + $0x60] sm:$0xff]
    %v2326 = vld [vmem:[#allocation11 + $0x68] sm:$0xff]
    %v2327 = vld [vmem:[#allocation11 + $0x70] sm:$0xff]
    %v2328 = vld [vmem:[#allocation11 + $0x78] sm:$0xff]
    %v2329 = vld [vmem:[#allocation11 + $0x80] sm:$0xff]
    %v2330 = vld [vmem:[#allocation11 + $0x88] sm:$0xff]
    %v2331 = vld [vmem:[#allocation11 + $0x90] sm:$0xff]
    %v2332 = vld [vmem:[#allocation11 + $0x98] sm:$0xff]
    %v2333 = vld [vmem:[#allocation11 + $0xa0] sm:$0xff]
    %v2334 = vld [vmem:[#allocation11 + $0xa8] sm:$0xff]
    %v2335 = vld [vmem:[#allocation11 + $0xb0] sm:$0xff]
    %v2336 = vld [vmem:[#allocation11 + $0xb8] sm:$0xff]
    %v2337 = vld [vmem:[#allocation11 + $0xc0] sm:$0xff]
    %v2338 = vld [vmem:[#allocation11 + $0xc8] sm:$0xff]
    %v2339 = vld [vmem:[#allocation11 + $0xd0] sm:$0xff]
    %v2340 = vld [vmem:[#allocation11 + $0xd8] sm:$0xff]
    %v2341 = vld [vmem:[#allocation11 + $0xe0] sm:$0xff]
    %v2342 = vld [vmem:[#allocation11 + $0xe8] sm:$0xff]
    %v2343 = vld [vmem:[#allocation11 + $0xf0] sm:$0xff]
    %v2344 = vld [vmem:[#allocation11 + $0xf8] sm:$0xff]
    %v2345 = vld [vmem:[#allocation11 + $0x100] sm:$0xff]
    %v2346 = vld [vmem:[#allocation11 + $0x108] sm:$0xff]
    %v2347 = vld [vmem:[#allocation11 + $0x110] sm:$0xff]
    %v2348 = vld [vmem:[#allocation11 + $0x118] sm:$0xff]
    %v2349 = vld [vmem:[#allocation11 + $0x120] sm:$0xff]
    %v2350 = vld [vmem:[#allocation11 + $0x128] sm:$0xff]
    %v2351 = vld [vmem:[#allocation11 + $0x130] sm:$0xff]
    %v2352 = vld [vmem:[#allocation11 + $0x138] sm:$0xff]
    %v2353 = vld [vmem:[#allocation11 + $0x140] sm:$0xff]
    %v2354 = vld [vmem:[#allocation11 + $0x148] sm:$0xff]
    %v2355 = vld [vmem:[#allocation11 + $0x150] sm:$0xff]
    %v2356 = vld [vmem:[#allocation11 + $0x158] sm:$0xff]
    %v2357 = vld [vmem:[#allocation11 + $0x160] sm:$0xff]
    %v2358 = vld [vmem:[#allocation11 + $0x168] sm:$0xff]
    %v2359 = vld [vmem:[#allocation11 + $0x170] sm:$0xff]
    %v2360 = vld [vmem:[#allocation11 + $0x178] sm:$0xff]
    %v2361 = vld [vmem:[#allocation11 + $0x180] sm:$0xff]
    %v2362 = vld [vmem:[#allocation11 + $0x188] sm:$0xff]
    %v2363 = vld [vmem:[#allocation11 + $0x190] sm:$0xff]
    %v2364 = vld [vmem:[#allocation11 + $0x198] sm:$0xff]
    %v2365 = vld [vmem:[#allocation11 + $0x1a0] sm:$0xff]
    %v2366 = vld [vmem:[#allocation11 + $0x1a8] sm:$0xff]
    %v2367 = vld [vmem:[#allocation11 + $0x1b0] sm:$0xff]
    %v2368 = vld [vmem:[#allocation11 + $0x1b8] sm:$0xff]
    %v2369 = vld [vmem:[#allocation11 + $0x1c0] sm:$0xff]
    %v2370 = vld [vmem:[#allocation11 + $0x1c8] sm:$0xff]
    %v2371 = vld [vmem:[#allocation11 + $0x1d0] sm:$0xff]
    %v2372 = vld [vmem:[#allocation11 + $0x1d8] sm:$0xff]
    %v2373 = vld [vmem:[#allocation11 + $0x1e0] sm:$0xff]
    %v2374 = vld [vmem:[#allocation11 + $0x1e8] sm:$0xff]
    %v2375 = vld [vmem:[#allocation11 + $0x1f0] sm:$0xff]
    %v2376 = vld [vmem:[#allocation11 + $0x1f8] sm:$0xff]
    %v2377 = vld [vmem:[#allocation11 + $0x200] sm:$0xff]
    %v2378 = vld [vmem:[#allocation11 + $0x208] sm:$0xff]
    %v2379 = vld [vmem:[#allocation11 + $0x210] sm:$0xff]
    %v2380 = vld [vmem:[#allocation11 + $0x218] sm:$0xff]
    %v2381 = vld [vmem:[#allocation11 + $0x220] sm:$0xff]
    %v2382 = vld [vmem:[#allocation11 + $0x228] sm:$0xff]
    %v2383 = vld [vmem:[#allocation11 + $0x230] sm:$0xff]
    %v2384 = vld [vmem:[#allocation11 + $0x238] sm:$0xff]
    %v2385 = vld [vmem:[#allocation11 + $0x240] sm:$0xff]
    %v2386 = vld [vmem:[#allocation11 + $0x248] sm:$0xff]
    %v2387 = vld [vmem:[#allocation11 + $0x250] sm:$0xff]
    %v2388 = vld [vmem:[#allocation11 + $0x258] sm:$0xff]
    %v2389 = vld [vmem:[#allocation11 + $0x260] sm:$0xff]
    %v2390 = vld [vmem:[#allocation11 + $0x268] sm:$0xff]
    %v2391 = vld [vmem:[#allocation11 + $0x270] sm:$0xff]
    %v2392 = vld [vmem:[#allocation11 + $0x278] sm:$0xff]
    %v2393 = vld [vmem:[#allocation11 + $0x280] sm:$0xff]
    %v2394 = vld [vmem:[#allocation11 + $0x288] sm:$0xff]
    %v2395 = vld [vmem:[#allocation11 + $0x290] sm:$0xff]
    %v2396 = vld [vmem:[#allocation11 + $0x298] sm:$0xff]
    %v2397 = vld [vmem:[#allocation11 + $0x2a0] sm:$0xff]
    %v2398 = vld [vmem:[#allocation11 + $0x2a8] sm:$0xff]
    %v2399 = vld [vmem:[#allocation11 + $0x2b0] sm:$0xff]
    %v2400 = vld [vmem:[#allocation11 + $0x2b8] sm:$0xff]
    %v2401 = vld [vmem:[#allocation11 + $0x2c0] sm:$0xff]
    %v2402 = vld [vmem:[#allocation11 + $0x2c8] sm:$0xff]
    %v2403 = vld [vmem:[#allocation11 + $0x2d0] sm:$0xff]
    %v2404 = vld [vmem:[#allocation11 + $0x2d8] sm:$0xff]
    %v2405 = vld [vmem:[#allocation11 + $0x2e0] sm:$0xff]
    %v2406 = vld [vmem:[#allocation11 + $0x2e8] sm:$0xff]
    %v2407 = vld [vmem:[#allocation11 + $0x2f0] sm:$0xff]
    %v2408 = vld [vmem:[#allocation11 + $0x2f8] sm:$0xff]
    %v2409 = vld [vmem:[#allocation11 + $0x300] sm:$0xff]
    %v2410 = vld [vmem:[#allocation11 + $0x308] sm:$0xff]
    %v2411 = vld [vmem:[#allocation11 + $0x310] sm:$0xff]
    %v2412 = vld [vmem:[#allocation11 + $0x318] sm:$0xff]
    %v2413 = vld [vmem:[#allocation11 + $0x320] sm:$0xff]
    %v2414 = vld [vmem:[#allocation11 + $0x328] sm:$0xff]
    %v2415 = vld [vmem:[#allocation11 + $0x330] sm:$0xff]
    %v2416 = vld [vmem:[#allocation11 + $0x338] sm:$0xff]
    %v2417 = vld [vmem:[#allocation11 + $0x340] sm:$0xff]
    %v2418 = vld [vmem:[#allocation11 + $0x348] sm:$0xff]
    %v2419 = vld [vmem:[#allocation11 + $0x350] sm:$0xff]
    %v2420 = vld [vmem:[#allocation11 + $0x358] sm:$0xff]
    %v2421 = vld [vmem:[#allocation11 + $0x360] sm:$0xff]
    %v2422 = vld [vmem:[#allocation11 + $0x368] sm:$0xff]
    %v2423 = vld [vmem:[#allocation11 + $0x370] sm:$0xff]
    %v2424 = vld [vmem:[#allocation11 + $0x378] sm:$0xff]
    %v2425 = vld [vmem:[#allocation11 + $0x380] sm:$0xff]
    %v2426 = vld [vmem:[#allocation11 + $0x388] sm:$0xff]
    %v2427 = vld [vmem:[#allocation11 + $0x390] sm:$0xff]
    %v2428 = vld [vmem:[#allocation11 + $0x398] sm:$0xff]
    %v2429 = vld [vmem:[#allocation11 + $0x3a0] sm:$0xff]
    %v2430 = vld [vmem:[#allocation11 + $0x3a8] sm:$0xff]
    %v2431 = vld [vmem:[#allocation11 + $0x3b0] sm:$0xff]
    %v2432 = vld [vmem:[#allocation11 + $0x3b8] sm:$0xff]
    %v2433 = vld [vmem:[#allocation11 + $0x3c0] sm:$0xff]
    %v2434 = vld [vmem:[#allocation11 + $0x3c8] sm:$0xff]
    %v2435 = vld [vmem:[#allocation11 + $0x3d0] sm:$0xff]
    %v2436 = vld [vmem:[#allocation11 + $0x3d8] sm:$0xff]
    %v2437 = vld [vmem:[#allocation11 + $0x3e0] sm:$0xff]
    %v2438 = vld [vmem:[#allocation11 + $0x3e8] sm:$0xff]
    %v2439 = vld [vmem:[#allocation11 + $0x3f0] sm:$0xff]
    %v2440 = vld [vmem:[#allocation11 + $0x3f8] sm:$0xff]
    %v2441 = vld [vmem:[#allocation11 + $0x400] sm:$0xff]
    %v2442 = vld [vmem:[#allocation11 + $0x408] sm:$0xff]
    %v2443 = vld [vmem:[#allocation11 + $0x410] sm:$0xff]
    %v2444 = vld [vmem:[#allocation11 + $0x418] sm:$0xff]
    %v2445 = vld [vmem:[#allocation11 + $0x420] sm:$0xff]
    %v2446 = vld [vmem:[#allocation11 + $0x428] sm:$0xff]
    %v2447 = vld [vmem:[#allocation11 + $0x430] sm:$0xff]
    %v2448 = vld [vmem:[#allocation11 + $0x438] sm:$0xff]
    %v2449 = vld [vmem:[#allocation11 + $0x440] sm:$0xff]
    %v2450 = vld [vmem:[#allocation11 + $0x448] sm:$0xff]
    %v2451 = vld [vmem:[#allocation11 + $0x450] sm:$0xff]
    %v2452 = vld [vmem:[#allocation11 + $0x458] sm:$0xff]
    %v2453 = vld [vmem:[#allocation11 + $0x460] sm:$0xff]
    %v2454 = vld [vmem:[#allocation11 + $0x468] sm:$0xff]
    %v2455 = vld [vmem:[#allocation11 + $0x470] sm:$0xff]
    %v2456 = vld [vmem:[#allocation11 + $0x478] sm:$0xff]
    %v2457 = vld [vmem:[#allocation11 + $0x480] sm:$0xff]
    %v2458 = vld [vmem:[#allocation11 + $0x488] sm:$0xff]
    %v2459 = vld [vmem:[#allocation11 + $0x490] sm:$0xff]
    %v2460 = vld [vmem:[#allocation11 + $0x498] sm:$0xff]
    %v2461 = vld [vmem:[#allocation11 + $0x4a0] sm:$0xff]
    %v2462 = vld [vmem:[#allocation11 + $0x4a8] sm:$0xff]
    %v2463 = vld [vmem:[#allocation11 + $0x4b0] sm:$0xff]
    %v2464 = vld [vmem:[#allocation11 + $0x4b8] sm:$0xff]
    %v2465 = vld [vmem:[#allocation11 + $0x4c0] sm:$0xff]
    %v2466 = vld [vmem:[#allocation11 + $0x4c8] sm:$0xff]
    %v2467 = vld [vmem:[#allocation11 + $0x4d0] sm:$0xff]
    %v2468 = vld [vmem:[#allocation11 + $0x4d8] sm:$0xff]
    %v2469 = vld [vmem:[#allocation11 + $0x4e0] sm:$0xff]
    %v2470 = vld [vmem:[#allocation11 + $0x4e8] sm:$0xff]
    %v2471 = vld [vmem:[#allocation11 + $0x4f0] sm:$0xff]
    %v2472 = vld [vmem:[#allocation11 + $0x4f8] sm:$0xff]
    %v2473 = vld [vmem:[#allocation11 + $0x500] sm:$0xff]
    %v2474 = vld [vmem:[#allocation11 + $0x508] sm:$0xff]
    %v2475 = vld [vmem:[#allocation11 + $0x510] sm:$0xff]
    %v2476 = vld [vmem:[#allocation11 + $0x518] sm:$0xff]
    %v2477 = vld [vmem:[#allocation11 + $0x520] sm:$0xff]
    %v2478 = vld [vmem:[#allocation11 + $0x528] sm:$0xff]
    %v2479 = vld [vmem:[#allocation11 + $0x530] sm:$0xff]
    %v2480 = vld [vmem:[#allocation11 + $0x538] sm:$0xff]
    %v2481 = vld [vmem:[#allocation11 + $0x540] sm:$0xff]
    %v2482 = vld [vmem:[#allocation11 + $0x548] sm:$0xff]
    %v2483 = vld [vmem:[#allocation11 + $0x550] sm:$0xff]
    %v2484 = vld [vmem:[#allocation11 + $0x558] sm:$0xff]
    %v2485 = vld [vmem:[#allocation11 + $0x560] sm:$0xff]
    %v2486 = vld [vmem:[#allocation11 + $0x568] sm:$0xff]
    %v2487 = vld [vmem:[#allocation11 + $0x570] sm:$0xff]
    %v2488 = vld [vmem:[#allocation11 + $0x578] sm:$0xff]
    %v2489 = vld [vmem:[#allocation11 + $0x580] sm:$0xff]
    %v2490 = vld [vmem:[#allocation11 + $0x588] sm:$0xff]
    %v2491 = vld [vmem:[#allocation11 + $0x590] sm:$0xff]
    %v2492 = vld [vmem:[#allocation11 + $0x598] sm:$0xff]
    %v2493 = vld [vmem:[#allocation11 + $0x5a0] sm:$0xff]
    %v2494 = vld [vmem:[#allocation11 + $0x5a8] sm:$0xff]
    %v2495 = vld [vmem:[#allocation11 + $0x5b0] sm:$0xff]
    %v2496 = vld [vmem:[#allocation11 + $0x5b8] sm:$0xff]
    %v2497 = vld [vmem:[#allocation11 + $0x5c0] sm:$0xff]
    %v2498 = vld [vmem:[#allocation11 + $0x5c8] sm:$0xff]
    %v2499 = vld [vmem:[#allocation11 + $0x5d0] sm:$0xff]
    %v2500 = vld [vmem:[#allocation11 + $0x5d8] sm:$0xff]
    %v2501 = vld [vmem:[#allocation11 + $0x5e0] sm:$0xff]
    %v2502 = vld [vmem:[#allocation11 + $0x5e8] sm:$0xff]
    %v2503 = vld [vmem:[#allocation11 + $0x5f0] sm:$0xff]
    %v2504 = vld [vmem:[#allocation11 + $0x5f8] sm:$0xff]
    %v2505 = vld [vmem:[#allocation11 + $0x600] sm:$0xff]
    %v2506 = vld [vmem:[#allocation11 + $0x608] sm:$0xff]
    %v2507 = vld [vmem:[#allocation11 + $0x610] sm:$0xff]
    %v2508 = vld [vmem:[#allocation11 + $0x618] sm:$0xff]
    %v2509 = vld [vmem:[#allocation11 + $0x620] sm:$0xff]
    %v2510 = vld [vmem:[#allocation11 + $0x628] sm:$0xff]
    %v2511 = vld [vmem:[#allocation11 + $0x630] sm:$0xff]
    %v2512 = vld [vmem:[#allocation11 + $0x638] sm:$0xff]
    %v2513 = vld [vmem:[#allocation11 + $0x640] sm:$0xff]
    %v2514 = vld [vmem:[#allocation11 + $0x648] sm:$0xff]
    %v2515 = vld [vmem:[#allocation11 + $0x650] sm:$0xff]
    %v2516 = vld [vmem:[#allocation11 + $0x658] sm:$0xff]
    %v2517 = vld [vmem:[#allocation11 + $0x660] sm:$0xff]
    %v2518 = vld [vmem:[#allocation11 + $0x668] sm:$0xff]
    %v2519 = vld [vmem:[#allocation11 + $0x670] sm:$0xff]
    %v2520 = vld [vmem:[#allocation11 + $0x678] sm:$0xff]
    %v2521 = vld [vmem:[#allocation11 + $0x680] sm:$0xff]
    %v2522 = vld [vmem:[#allocation11 + $0x688] sm:$0xff]
    %v2523 = vld [vmem:[#allocation11 + $0x690] sm:$0xff]
    %v2524 = vld [vmem:[#allocation11 + $0x698] sm:$0xff]
    %v2525 = vld [vmem:[#allocation11 + $0x6a0] sm:$0xff]
    %v2526 = vld [vmem:[#allocation11 + $0x6a8] sm:$0xff]
    %v2527 = vld [vmem:[#allocation11 + $0x6b0] sm:$0xff]
    %v2528 = vld [vmem:[#allocation11 + $0x6b8] sm:$0xff]
    %v2529 = vld [vmem:[#allocation11 + $0x6c0] sm:$0xff]
    %v2530 = vld [vmem:[#allocation11 + $0x6c8] sm:$0xff]
    %v2531 = vld [vmem:[#allocation11 + $0x6d0] sm:$0xff]
    %v2532 = vld [vmem:[#allocation11 + $0x6d8] sm:$0xff]
    %v2533 = vld [vmem:[#allocation11 + $0x6e0] sm:$0xff]
    %v2534 = vld [vmem:[#allocation11 + $0x6e8] sm:$0xff]
    %v2535 = vld [vmem:[#allocation11 + $0x6f0] sm:$0xff]
    %v2536 = vld [vmem:[#allocation11 + $0x6f8] sm:$0xff]
    %v2537 = vld [vmem:[#allocation11 + $0x700] sm:$0xff]
    %v2538 = vld [vmem:[#allocation11 + $0x708] sm:$0xff]
    %v2539 = vld [vmem:[#allocation11 + $0x710] sm:$0xff]
    %v2540 = vld [vmem:[#allocation11 + $0x718] sm:$0xff]
    %v2541 = vld [vmem:[#allocation11 + $0x720] sm:$0xff]
    %v2542 = vld [vmem:[#allocation11 + $0x728] sm:$0xff]
    %v2543 = vld [vmem:[#allocation11 + $0x730] sm:$0xff]
    %v2544 = vld [vmem:[#allocation11 + $0x738] sm:$0xff]
    %v2545 = vld [vmem:[#allocation11 + $0x740] sm:$0xff]
    %v2546 = vld [vmem:[#allocation11 + $0x748] sm:$0xff]
    %v2547 = vld [vmem:[#allocation11 + $0x750] sm:$0xff]
    %v2548 = vld [vmem:[#allocation11 + $0x758] sm:$0xff]
    %v2549 = vld [vmem:[#allocation11 + $0x760] sm:$0xff]
    %v2550 = vld [vmem:[#allocation11 + $0x768] sm:$0xff]
    %v2551 = vld [vmem:[#allocation11 + $0x770] sm:$0xff]
    %v2552 = vld [vmem:[#allocation11 + $0x778] sm:$0xff]
    %v2553 = vld [vmem:[#allocation11 + $0x780] sm:$0xff]
    %v2554 = vld [vmem:[#allocation11 + $0x788] sm:$0xff]
    %v2555 = vld [vmem:[#allocation11 + $0x790] sm:$0xff]
    %v2556 = vld [vmem:[#allocation11 + $0x798] sm:$0xff]
    %v2557 = vld [vmem:[#allocation11 + $0x7a0] sm:$0xff]
    %v2558 = vld [vmem:[#allocation11 + $0x7a8] sm:$0xff]
    %v2559 = vld [vmem:[#allocation11 + $0x7b0] sm:$0xff]
    %v2560 = vld [vmem:[#allocation11 + $0x7b8] sm:$0xff]
    %v2561 = vld [vmem:[#allocation11 + $0x7c0] sm:$0xff]
    %v2562 = vld [vmem:[#allocation11 + $0x7c8] sm:$0xff]
    %v2563 = vld [vmem:[#allocation11 + $0x7d0] sm:$0xff]
    %v2564 = vld [vmem:[#allocation11 + $0x7d8] sm:$0xff]
    %v2565 = vld [vmem:[#allocation11 + $0x7e0] sm:$0xff]
    %v2566 = vld [vmem:[#allocation11 + $0x7e8] sm:$0xff]
    %v2567 = vld [vmem:[#allocation11 + $0x7f0] sm:$0xff]
    %v2568 = vld [vmem:[#allocation11 + $0x7f8] sm:$0xff]
    %v2569 = vld [vmem:[#allocation11 + $0x800] sm:$0xff]
    %v2570 = vld [vmem:[#allocation11 + $0x808] sm:$0xff]
    %v2571 = vld [vmem:[#allocation11 + $0x810] sm:$0xff]
    %v2572 = vld [vmem:[#allocation11 + $0x818] sm:$0xff]
    %v2573 = vld [vmem:[#allocation11 + $0x820] sm:$0xff]
    %v2574 = vld [vmem:[#allocation11 + $0x828] sm:$0xff]
    %v2575 = vld [vmem:[#allocation11 + $0x830] sm:$0xff]
    %v2576 = vld [vmem:[#allocation11 + $0x838] sm:$0xff]
    %v2577 = vld [vmem:[#allocation11 + $0x840] sm:$0xff]
    %v2578 = vld [vmem:[#allocation11 + $0x848] sm:$0xff]
    %v2579 = vld [vmem:[#allocation11 + $0x850] sm:$0xff]
    %v2580 = vld [vmem:[#allocation11 + $0x858] sm:$0xff]
    %v2581 = vld [vmem:[#allocation11 + $0x860] sm:$0xff]
    %v2582 = vld [vmem:[#allocation11 + $0x868] sm:$0xff]
    %v2583 = vld [vmem:[#allocation11 + $0x870] sm:$0xff]
    %v2584 = vld [vmem:[#allocation11 + $0x878] sm:$0xff]
    %v2585 = vld [vmem:[#allocation11 + $0x880] sm:$0xff]
    %v2586 = vld [vmem:[#allocation11 + $0x888] sm:$0xff]
    %v2587 = vld [vmem:[#allocation11 + $0x890] sm:$0xff]
    %v2588 = vld [vmem:[#allocation11 + $0x898] sm:$0xff]
    %v2589 = vld [vmem:[#allocation11 + $0x8a0] sm:$0xff]
    %v2590 = vld [vmem:[#allocation11 + $0x8a8] sm:$0xff]
    %v2591 = vld [vmem:[#allocation11 + $0x8b0] sm:$0xff]
    %v2592 = vld [vmem:[#allocation11 + $0x8b8] sm:$0xff]
    %v2593 = vld [vmem:[#allocation11 + $0x8c0] sm:$0xff]
    %v2594 = vld [vmem:[#allocation11 + $0x8c8] sm:$0xff]
    %v2595 = vld [vmem:[#allocation11 + $0x8d0] sm:$0xff]
    %v2596 = vld [vmem:[#allocation11 + $0x8d8] sm:$0xff]
    %v2597 = vld [vmem:[#allocation11 + $0x8e0] sm:$0xff]
    %v2598 = vld [vmem:[#allocation11 + $0x8e8] sm:$0xff]
    %v2599 = vld [vmem:[#allocation11 + $0x8f0] sm:$0xff]
    %v2600 = vld [vmem:[#allocation11 + $0x8f8] sm:$0xff]
    %v2601 = vld [vmem:[#allocation11 + $0x900] sm:$0xff]
    %v2602 = vld [vmem:[#allocation11 + $0x908] sm:$0xff]
    %v2603 = vld [vmem:[#allocation11 + $0x910] sm:$0xff]
    %v2604 = vld [vmem:[#allocation11 + $0x918] sm:$0xff]
    %v2605 = vld [vmem:[#allocation11 + $0x920] sm:$0xff]
    %v2606 = vld [vmem:[#allocation11 + $0x928] sm:$0xff]
    %v2607 = vld [vmem:[#allocation11 + $0x930] sm:$0xff]
    %v2608 = vld [vmem:[#allocation11 + $0x938] sm:$0xff]
    %v2609 = vld [vmem:[#allocation11 + $0x940] sm:$0xff]
    %v2610 = vld [vmem:[#allocation11 + $0x948] sm:$0xff]
    %v2611 = vld [vmem:[#allocation11 + $0x950] sm:$0xff]
    %v2612 = vld [vmem:[#allocation11 + $0x958] sm:$0xff]
    %v2613 = vld [vmem:[#allocation11 + $0x960] sm:$0xff]
    %v2614 = vld [vmem:[#allocation11 + $0x968] sm:$0xff]
    %v2615 = vld [vmem:[#allocation11 + $0x970] sm:$0xff]
    %v2616 = vld [vmem:[#allocation11 + $0x978] sm:$0xff]
    %v2617 = vld [vmem:[#allocation11 + $0x980] sm:$0xff]
    %v2618 = vld [vmem:[#allocation11 + $0x988] sm:$0xff]
    %v2619 = vld [vmem:[#allocation11 + $0x990] sm:$0xff]
    %v2620 = vld [vmem:[#allocation11 + $0x998] sm:$0xff]
    %v2621 = vld [vmem:[#allocation11 + $0x9a0] sm:$0xff]
    %v2622 = vld [vmem:[#allocation11 + $0x9a8] sm:$0xff]
    %v2623 = vld [vmem:[#allocation11 + $0x9b0] sm:$0xff]
    %v2624 = vld [vmem:[#allocation11 + $0x9b8] sm:$0xff]
    %v2625 = vld [vmem:[#allocation11 + $0x9c0] sm:$0xff]
    %v2626 = vld [vmem:[#allocation11 + $0x9c8] sm:$0xff]
    %v2627 = vld [vmem:[#allocation11 + $0x9d0] sm:$0xff]
    %v2628 = vld [vmem:[#allocation11 + $0x9d8] sm:$0xff]
    %v2629 = vld [vmem:[#allocation11 + $0x9e0] sm:$0xff]
    %v2630 = vld [vmem:[#allocation11 + $0x9e8] sm:$0xff]
    %v2631 = vld [vmem:[#allocation11 + $0x9f0] sm:$0xff]
    %v2632 = vld [vmem:[#allocation11 + $0x9f8] sm:$0xff]
    %v2633 = vld [vmem:[#allocation11 + $0xa00] sm:$0xff]
    %v2634 = vld [vmem:[#allocation11 + $0xa08] sm:$0xff]
    %v2635 = vld [vmem:[#allocation11 + $0xa10] sm:$0xff]
    %v2636 = vld [vmem:[#allocation11 + $0xa18] sm:$0xff]
    %v2637 = vld [vmem:[#allocation11 + $0xa20] sm:$0xff]
    %v2638 = vld [vmem:[#allocation11 + $0xa28] sm:$0xff]
    %v2639 = vld [vmem:[#allocation11 + $0xa30] sm:$0xff]
    %v2640 = vld [vmem:[#allocation11 + $0xa38] sm:$0xff]
    %v2641 = vld [vmem:[#allocation11 + $0xa40] sm:$0xff]
    %v2642 = vld [vmem:[#allocation11 + $0xa48] sm:$0xff]
    %v2643 = vld [vmem:[#allocation11 + $0xa50] sm:$0xff]
    %v2644 = vld [vmem:[#allocation11 + $0xa58] sm:$0xff]
    %v2645 = vld [vmem:[#allocation11 + $0xa60] sm:$0xff]
    %v2646 = vld [vmem:[#allocation11 + $0xa68] sm:$0xff]
    %v2647 = vld [vmem:[#allocation11 + $0xa70] sm:$0xff]
    %v2648 = vld [vmem:[#allocation11 + $0xa78] sm:$0xff]
    %v2649 = vld [vmem:[#allocation11 + $0xa80] sm:$0xff]
    %v2650 = vld [vmem:[#allocation11 + $0xa88] sm:$0xff]
    %v2651 = vld [vmem:[#allocation11 + $0xa90] sm:$0xff]
    %v2652 = vld [vmem:[#allocation11 + $0xa98] sm:$0xff]
    %v2653 = vld [vmem:[#allocation11 + $0xaa0] sm:$0xff]
    %v2654 = vld [vmem:[#allocation11 + $0xaa8] sm:$0xff]
    %v2655 = vld [vmem:[#allocation11 + $0xab0] sm:$0xff]
    %v2656 = vld [vmem:[#allocation11 + $0xab8] sm:$0xff]
    %v2657 = vld [vmem:[#allocation11 + $0xac0] sm:$0xff]
    %v2658 = vld [vmem:[#allocation11 + $0xac8] sm:$0xff]
    %v2659 = vld [vmem:[#allocation11 + $0xad0] sm:$0xff]
    %v2660 = vld [vmem:[#allocation11 + $0xad8] sm:$0xff]
    %v2661 = vld [vmem:[#allocation11 + $0xae0] sm:$0xff]
    %v2662 = vld [vmem:[#allocation11 + $0xae8] sm:$0xff]
    %v2663 = vld [vmem:[#allocation11 + $0xaf0] sm:$0xff]
    %v2664 = vld [vmem:[#allocation11 + $0xaf8] sm:$0xff]
    %v2665 = vld [vmem:[#allocation11 + $0xb00] sm:$0xff]
    %v2666 = vld [vmem:[#allocation11 + $0xb08] sm:$0xff]
    %v2667 = vld [vmem:[#allocation11 + $0xb10] sm:$0xff]
    %v2668 = vld [vmem:[#allocation11 + $0xb18] sm:$0xff]
    %v2669 = vld [vmem:[#allocation11 + $0xb20] sm:$0xff]
    %v2670 = vld [vmem:[#allocation11 + $0xb28] sm:$0xff]
    %v2671 = vld [vmem:[#allocation11 + $0xb30] sm:$0xff]
    %v2672 = vld [vmem:[#allocation11 + $0xb38] sm:$0xff]
    %v2673 = vld [vmem:[#allocation11 + $0xb40] sm:$0xff]
    %v2674 = vld [vmem:[#allocation11 + $0xb48] sm:$0xff]
    %v2675 = vld [vmem:[#allocation11 + $0xb50] sm:$0xff]
    %v2676 = vld [vmem:[#allocation11 + $0xb58] sm:$0xff]
    %v2677 = vld [vmem:[#allocation11 + $0xb60] sm:$0xff]
    %v2678 = vld [vmem:[#allocation11 + $0xb68] sm:$0xff]
    %v2679 = vld [vmem:[#allocation11 + $0xb70] sm:$0xff]
    %v2680 = vld [vmem:[#allocation11 + $0xb78] sm:$0xff]
    %v2681 = vld [vmem:[#allocation11 + $0xb80] sm:$0xff]
    %v2682 = vld [vmem:[#allocation11 + $0xb88] sm:$0xff]
    %v2683 = vld [vmem:[#allocation11 + $0xb90] sm:$0xff]
    %v2684 = vld [vmem:[#allocation11 + $0xb98] sm:$0xff]
    %v2685 = vld [vmem:[#allocation11 + $0xba0] sm:$0xff]
    %v2686 = vld [vmem:[#allocation11 + $0xba8] sm:$0xff]
    %v2687 = vld [vmem:[#allocation11 + $0xbb0] sm:$0xff]
    %v2688 = vld [vmem:[#allocation11 + $0xbb8] sm:$0xff]
    %v2689 = vld [vmem:[#allocation11 + $0xbc0] sm:$0xff]
    %v2690 = vld [vmem:[#allocation11 + $0xbc8] sm:$0xff]
    %v2691 = vld [vmem:[#allocation11 + $0xbd0] sm:$0xff]
    %v2692 = vld [vmem:[#allocation11 + $0xbd8] sm:$0xff]
    %v2693 = vld [vmem:[#allocation11 + $0xbe0] sm:$0xff]
    %v2694 = vld [vmem:[#allocation11 + $0xbe8] sm:$0xff]
    %v2695 = vld [vmem:[#allocation11 + $0xbf0] sm:$0xff]
    %v2696 = vld [vmem:[#allocation11 + $0xbf8] sm:$0xff]
    %v2697 = vld [vmem:[#allocation11 + $0xc00] sm:$0xff]
    %v2698 = vld [vmem:[#allocation11 + $0xc08] sm:$0xff]
    %v2699 = vld [vmem:[#allocation11 + $0xc10] sm:$0xff]
    %v2700 = vld [vmem:[#allocation11 + $0xc18] sm:$0xff]
    %v2701 = vld [vmem:[#allocation11 + $0xc20] sm:$0xff]
    %v2702 = vld [vmem:[#allocation11 + $0xc28] sm:$0xff]
    %v2703 = vld [vmem:[#allocation11 + $0xc30] sm:$0xff]
    %v2704 = vld [vmem:[#allocation11 + $0xc38] sm:$0xff]
    %v2705 = vld [vmem:[#allocation11 + $0xc40] sm:$0xff]
    %v2706 = vld [vmem:[#allocation11 + $0xc48] sm:$0xff]
    %v2707 = vld [vmem:[#allocation11 + $0xc50] sm:$0xff]
    %v2708 = vld [vmem:[#allocation11 + $0xc58] sm:$0xff]
    %v2709 = vld [vmem:[#allocation11 + $0xc60] sm:$0xff]
    %v2710 = vld [vmem:[#allocation11 + $0xc68] sm:$0xff]
    %v2711 = vld [vmem:[#allocation11 + $0xc70] sm:$0xff]
    %v2712 = vld [vmem:[#allocation11 + $0xc78] sm:$0xff]
    %v2713 = vld [vmem:[#allocation11 + $0xc80] sm:$0xff]
    %v2714 = vld [vmem:[#allocation11 + $0xc88] sm:$0xff]
    %v2715 = vld [vmem:[#allocation11 + $0xc90] sm:$0xff]
    %v2716 = vld [vmem:[#allocation11 + $0xc98] sm:$0xff]
    %v2717 = vld [vmem:[#allocation11 + $0xca0] sm:$0xff]
    %v2718 = vld [vmem:[#allocation11 + $0xca8] sm:$0xff]
    %v2719 = vld [vmem:[#allocation11 + $0xcb0] sm:$0xff]
    %v2720 = vld [vmem:[#allocation11 + $0xcb8] sm:$0xff]
    %v2721 = vld [vmem:[#allocation11 + $0xcc0] sm:$0xff]
    %v2722 = vld [vmem:[#allocation11 + $0xcc8] sm:$0xff]
    %v2723 = vld [vmem:[#allocation11 + $0xcd0] sm:$0xff]
    %v2724 = vld [vmem:[#allocation11 + $0xcd8] sm:$0xff]
    %v2725 = vld [vmem:[#allocation11 + $0xce0] sm:$0xff]
    %v2726 = vld [vmem:[#allocation11 + $0xce8] sm:$0xff]
    %v2727 = vld [vmem:[#allocation11 + $0xcf0] sm:$0xff]
    %v2728 = vld [vmem:[#allocation11 + $0xcf8] sm:$0xff]
    %v2729 = vld [vmem:[#allocation11 + $0xd00] sm:$0xff]
    %v2730 = vld [vmem:[#allocation11 + $0xd08] sm:$0xff]
    %v2731 = vld [vmem:[#allocation11 + $0xd10] sm:$0xff]
    %v2732 = vld [vmem:[#allocation11 + $0xd18] sm:$0xff]
    %v2733 = vld [vmem:[#allocation11 + $0xd20] sm:$0xff]
    %v2734 = vld [vmem:[#allocation11 + $0xd28] sm:$0xff]
    %v2735 = vld [vmem:[#allocation11 + $0xd30] sm:$0xff]
    %v2736 = vld [vmem:[#allocation11 + $0xd38] sm:$0xff]
    %v2737 = vld [vmem:[#allocation11 + $0xd40] sm:$0xff]
    %v2738 = vld [vmem:[#allocation11 + $0xd48] sm:$0xff]
    %v2739 = vld [vmem:[#allocation11 + $0xd50] sm:$0xff]
    %v2740 = vld [vmem:[#allocation11 + $0xd58] sm:$0xff]
    %v2741 = vld [vmem:[#allocation11 + $0xd60] sm:$0xff]
    %v2742 = vld [vmem:[#allocation11 + $0xd68] sm:$0xff]
    %v2743 = vld [vmem:[#allocation11 + $0xd70] sm:$0xff]
    %v2744 = vld [vmem:[#allocation11 + $0xd78] sm:$0xff]
    %v2745 = vld [vmem:[#allocation11 + $0xd80] sm:$0xff]
    %v2746 = vld [vmem:[#allocation11 + $0xd88] sm:$0xff]
    %v2747 = vld [vmem:[#allocation11 + $0xd90] sm:$0xff]
    %v2748 = vld [vmem:[#allocation11 + $0xd98] sm:$0xff]
    %v2749 = vld [vmem:[#allocation11 + $0xda0] sm:$0xff]
    %v2750 = vld [vmem:[#allocation11 + $0xda8] sm:$0xff]
    %v2751 = vld [vmem:[#allocation11 + $0xdb0] sm:$0xff]
    %v2752 = vld [vmem:[#allocation11 + $0xdb8] sm:$0xff]
    %v2753 = vld [vmem:[#allocation11 + $0xdc0] sm:$0xff]
    %v2754 = vld [vmem:[#allocation11 + $0xdc8] sm:$0xff]
    %v2755 = vld [vmem:[#allocation11 + $0xdd0] sm:$0xff]
    %v2756 = vld [vmem:[#allocation11 + $0xdd8] sm:$0xff]
    %v2757 = vld [vmem:[#allocation11 + $0xde0] sm:$0xff]
    %v2758 = vld [vmem:[#allocation11 + $0xde8] sm:$0xff]
    %v2759 = vld [vmem:[#allocation11 + $0xdf0] sm:$0xff]
    %v2760 = vld [vmem:[#allocation11 + $0xdf8] sm:$0xff]
    %v2761 = vld [vmem:[#allocation11 + $0xe00] sm:$0xff]
    %v2762 = vld [vmem:[#allocation11 + $0xe08] sm:$0xff]
    %v2763 = vld [vmem:[#allocation11 + $0xe10] sm:$0xff]
    %v2764 = vld [vmem:[#allocation11 + $0xe18] sm:$0xff]
    %v2765 = vld [vmem:[#allocation11 + $0xe20] sm:$0xff]
    %v2766 = vld [vmem:[#allocation11 + $0xe28] sm:$0xff]
    %v2767 = vld [vmem:[#allocation11 + $0xe30] sm:$0xff]
    %v2768 = vld [vmem:[#allocation11 + $0xe38] sm:$0xff]
    %v2769 = vld [vmem:[#allocation11 + $0xe40] sm:$0xff]
    %v2770 = vld [vmem:[#allocation11 + $0xe48] sm:$0xff]
    %v2771 = vld [vmem:[#allocation11 + $0xe50] sm:$0xff]
    %v2772 = vld [vmem:[#allocation11 + $0xe58] sm:$0xff]
    %v2773 = vld [vmem:[#allocation11 + $0xe60] sm:$0xff]
    %v2774 = vld [vmem:[#allocation11 + $0xe68] sm:$0xff]
    %v2775 = vld [vmem:[#allocation11 + $0xe70] sm:$0xff]
    %v2776 = vld [vmem:[#allocation11 + $0xe78] sm:$0xff]
    %v2777 = vld [vmem:[#allocation11 + $0xe80] sm:$0xff]
    %v2778 = vld [vmem:[#allocation11 + $0xe88] sm:$0xff]
    %v2779 = vld [vmem:[#allocation11 + $0xe90] sm:$0xff]
    %v2780 = vld [vmem:[#allocation11 + $0xe98] sm:$0xff]
    %v2781 = vld [vmem:[#allocation11 + $0xea0] sm:$0xff]
    %v2782 = vld [vmem:[#allocation11 + $0xea8] sm:$0xff]
    %v2783 = vld [vmem:[#allocation11 + $0xeb0] sm:$0xff]
    %v2784 = vld [vmem:[#allocation11 + $0xeb8] sm:$0xff]
    %v2785 = vld [vmem:[#allocation11 + $0xec0] sm:$0xff]
    %v2786 = vld [vmem:[#allocation11 + $0xec8] sm:$0xff]
    %v2787 = vld [vmem:[#allocation11 + $0xed0] sm:$0xff]
    %v2788 = vld [vmem:[#allocation11 + $0xed8] sm:$0xff]
    %v2789 = vld [vmem:[#allocation11 + $0xee0] sm:$0xff]
    %v2790 = vld [vmem:[#allocation11 + $0xee8] sm:$0xff]
    %v2791 = vld [vmem:[#allocation11 + $0xef0] sm:$0xff]
    %v2792 = vld [vmem:[#allocation11 + $0xef8] sm:$0xff]
    %v2793 = vld [vmem:[#allocation11 + $0xf00] sm:$0xff]
    %v2794 = vld [vmem:[#allocation11 + $0xf08] sm:$0xff]
    %v2795 = vld [vmem:[#allocation11 + $0xf10] sm:$0xff]
    %v2796 = vld [vmem:[#allocation11 + $0xf18] sm:$0xff]
    %v2797 = vld [vmem:[#allocation11 + $0xf20] sm:$0xff]
    %v2798 = vld [vmem:[#allocation11 + $0xf28] sm:$0xff]
    %v2799 = vld [vmem:[#allocation11 + $0xf30] sm:$0xff]
    %v2800 = vld [vmem:[#allocation11 + $0xf38] sm:$0xff]
    %v2801 = vld [vmem:[#allocation11 + $0xf40] sm:$0xff]
    %v2802 = vld [vmem:[#allocation11 + $0xf48] sm:$0xff]
    %v2803 = vld [vmem:[#allocation11 + $0xf50] sm:$0xff]
    %v2804 = vld [vmem:[#allocation11 + $0xf58] sm:$0xff]
    %v2805 = vld [vmem:[#allocation11 + $0xf60] sm:$0xff]
    %v2806 = vld [vmem:[#allocation11 + $0xf68] sm:$0xff]
    %v2807 = vld [vmem:[#allocation11 + $0xf70] sm:$0xff]
    %v2808 = vld [vmem:[#allocation11 + $0xf78] sm:$0xff]
    %v2809 = vld [vmem:[#allocation11 + $0xf80] sm:$0xff]
    %v2810 = vld [vmem:[#allocation11 + $0xf88] sm:$0xff]
    %v2811 = vld [vmem:[#allocation11 + $0xf90] sm:$0xff]
    %v2812 = vld [vmem:[#allocation11 + $0xf98] sm:$0xff]
    %v2813 = vld [vmem:[#allocation11 + $0xfa0] sm:$0xff]
    %v2814 = vld [vmem:[#allocation11 + $0xfa8] sm:$0xff]
    %v2815 = vld [vmem:[#allocation11 + $0xfb0] sm:$0xff]
    %v2816 = vld [vmem:[#allocation11 + $0xfb8] sm:$0xff]
    %v2817 = vld [vmem:[#allocation11 + $0xfc0] sm:$0xff]
    %v2818 = vld [vmem:[#allocation11 + $0xfc8] sm:$0xff]
    %v2819 = vld [vmem:[#allocation11 + $0xfd0] sm:$0xff]
    %v2820 = vld [vmem:[#allocation11 + $0xfd8] sm:$0xff]
    %v2821 = vld [vmem:[#allocation11 + $0xfe0] sm:$0xff]
    %v2822 = vld [vmem:[#allocation11 + $0xfe8] sm:$0xff]
    %v2823 = vld [vmem:[#allocation11 + $0xff0] sm:$0xff]
    %v2824 = vld [vmem:[#allocation11 + $0xff8] sm:$0xff]
    %v3337 = vunpack.c.l.b16 %v2313
    %v3338 = vunpack.c.h.b16 %v2313
    %v3339 = vunpack.c.l.b16 %v2314
    %v3340 = vunpack.c.h.b16 %v2314
    %v3341 = vunpack.c.l.b16 %v2315
    %v3342 = vunpack.c.h.b16 %v2315
    %v3343 = vunpack.c.l.b16 %v2316
    %v3344 = vunpack.c.h.b16 %v2316
    %v3345 = vunpack.c.l.b16 %v2317
    %v3346 = vunpack.c.h.b16 %v2317
    %v3347 = vunpack.c.l.b16 %v2318
    %v3348 = vunpack.c.h.b16 %v2318
    %v3349 = vunpack.c.l.b16 %v2319
    %v3350 = vunpack.c.h.b16 %v2319
    %v3351 = vunpack.c.l.b16 %v2320
    %v3352 = vunpack.c.h.b16 %v2320
    %v3353 = vunpack.c.l.b16 %v2321
    %v3354 = vunpack.c.h.b16 %v2321
    %v3355 = vunpack.c.l.b16 %v2322
    %v3356 = vunpack.c.h.b16 %v2322
    %v3357 = vunpack.c.l.b16 %v2323
    %v3358 = vunpack.c.h.b16 %v2323
    %v3359 = vunpack.c.l.b16 %v2324
    %v3360 = vunpack.c.h.b16 %v2324
    %v3361 = vunpack.c.l.b16 %v2325
    %v3362 = vunpack.c.h.b16 %v2325
    %v3363 = vunpack.c.l.b16 %v2326
    %v3364 = vunpack.c.h.b16 %v2326
    %v3365 = vunpack.c.l.b16 %v2327
    %v3366 = vunpack.c.h.b16 %v2327
    %v3367 = vunpack.c.l.b16 %v2328
    %v3368 = vunpack.c.h.b16 %v2328
    %v3369 = vunpack.c.l.b16 %v2329
    %v3370 = vunpack.c.h.b16 %v2329
    %v3371 = vunpack.c.l.b16 %v2330
    %v3372 = vunpack.c.h.b16 %v2330
    %v3373 = vunpack.c.l.b16 %v2331
    %v3374 = vunpack.c.h.b16 %v2331
    %v3375 = vunpack.c.l.b16 %v2332
    %v3376 = vunpack.c.h.b16 %v2332
    %v3377 = vunpack.c.l.b16 %v2333
    %v3378 = vunpack.c.h.b16 %v2333
    %v3379 = vunpack.c.l.b16 %v2334
    %v3380 = vunpack.c.h.b16 %v2334
    %v3381 = vunpack.c.l.b16 %v2335
    %v3382 = vunpack.c.h.b16 %v2335
    %v3383 = vunpack.c.l.b16 %v2336
    %v3384 = vunpack.c.h.b16 %v2336
    %v3385 = vunpack.c.l.b16 %v2337
    %v3386 = vunpack.c.h.b16 %v2337
    %v3387 = vunpack.c.l.b16 %v2338
    %v3388 = vunpack.c.h.b16 %v2338
    %v3389 = vunpack.c.l.b16 %v2339
    %v3390 = vunpack.c.h.b16 %v2339
    %v3391 = vunpack.c.l.b16 %v2340
    %v3392 = vunpack.c.h.b16 %v2340
    %v3393 = vunpack.c.l.b16 %v2341
    %v3394 = vunpack.c.h.b16 %v2341
    %v3395 = vunpack.c.l.b16 %v2342
    %v3396 = vunpack.c.h.b16 %v2342
    %v3397 = vunpack.c.l.b16 %v2343
    %v3398 = vunpack.c.h.b16 %v2343
    %v3399 = vunpack.c.l.b16 %v2344
    %v3400 = vunpack.c.h.b16 %v2344
    %v3401 = vunpack.c.l.b16 %v2345
    %v3402 = vunpack.c.h.b16 %v2345
    %v3403 = vunpack.c.l.b16 %v2346
    %v3404 = vunpack.c.h.b16 %v2346
    %v3405 = vunpack.c.l.b16 %v2347
    %v3406 = vunpack.c.h.b16 %v2347
    %v3407 = vunpack.c.l.b16 %v2348
    %v3408 = vunpack.c.h.b16 %v2348
    %v3409 = vunpack.c.l.b16 %v2349
    %v3410 = vunpack.c.h.b16 %v2349
    %v3411 = vunpack.c.l.b16 %v2350
    %v3412 = vunpack.c.h.b16 %v2350
    %v3413 = vunpack.c.l.b16 %v2351
    %v3414 = vunpack.c.h.b16 %v2351
    %v3415 = vunpack.c.l.b16 %v2352
    %v3416 = vunpack.c.h.b16 %v2352
    %v3417 = vunpack.c.l.b16 %v2353
    %v3418 = vunpack.c.h.b16 %v2353
    %v3419 = vunpack.c.l.b16 %v2354
    %v3420 = vunpack.c.h.b16 %v2354
    %v3421 = vunpack.c.l.b16 %v2355
    %v3422 = vunpack.c.h.b16 %v2355
    %v3423 = vunpack.c.l.b16 %v2356
    %v3424 = vunpack.c.h.b16 %v2356
    %v3425 = vunpack.c.l.b16 %v2357
    %v3426 = vunpack.c.h.b16 %v2357
    %v3427 = vunpack.c.l.b16 %v2358
    %v3428 = vunpack.c.h.b16 %v2358
    %v3429 = vunpack.c.l.b16 %v2359
    %v3430 = vunpack.c.h.b16 %v2359
    %v3431 = vunpack.c.l.b16 %v2360
    %v3432 = vunpack.c.h.b16 %v2360
    %v3433 = vunpack.c.l.b16 %v2361
    %v3434 = vunpack.c.h.b16 %v2361
    %v3435 = vunpack.c.l.b16 %v2362
    %v3436 = vunpack.c.h.b16 %v2362
    %v3437 = vunpack.c.l.b16 %v2363
    %v3438 = vunpack.c.h.b16 %v2363
    %v3439 = vunpack.c.l.b16 %v2364
    %v3440 = vunpack.c.h.b16 %v2364
    %v3441 = vunpack.c.l.b16 %v2365
    %v3442 = vunpack.c.h.b16 %v2365
    %v3443 = vunpack.c.l.b16 %v2366
    %v3444 = vunpack.c.h.b16 %v2366
    %v3445 = vunpack.c.l.b16 %v2367
    %v3446 = vunpack.c.h.b16 %v2367
    %v3447 = vunpack.c.l.b16 %v2368
    %v3448 = vunpack.c.h.b16 %v2368
    %v3449 = vunpack.c.l.b16 %v2369
    %v3450 = vunpack.c.h.b16 %v2369
    %v3451 = vunpack.c.l.b16 %v2370
    %v3452 = vunpack.c.h.b16 %v2370
    %v3453 = vunpack.c.l.b16 %v2371
    %v3454 = vunpack.c.h.b16 %v2371
    %v3455 = vunpack.c.l.b16 %v2372
    %v3456 = vunpack.c.h.b16 %v2372
    %v3457 = vunpack.c.l.b16 %v2373
    %v3458 = vunpack.c.h.b16 %v2373
    %v3459 = vunpack.c.l.b16 %v2374
    %v3460 = vunpack.c.h.b16 %v2374
    %v3461 = vunpack.c.l.b16 %v2375
    %v3462 = vunpack.c.h.b16 %v2375
    %v3463 = vunpack.c.l.b16 %v2376
    %v3464 = vunpack.c.h.b16 %v2376
    %v3465 = vunpack.c.l.b16 %v2377
    %v3466 = vunpack.c.h.b16 %v2377
    %v3467 = vunpack.c.l.b16 %v2378
    %v3468 = vunpack.c.h.b16 %v2378
    %v3469 = vunpack.c.l.b16 %v2379
    %v3470 = vunpack.c.h.b16 %v2379
    %v3471 = vunpack.c.l.b16 %v2380
    %v3472 = vunpack.c.h.b16 %v2380
    %v3473 = vunpack.c.l.b16 %v2381
    %v3474 = vunpack.c.h.b16 %v2381
    %v3475 = vunpack.c.l.b16 %v2382
    %v3476 = vunpack.c.h.b16 %v2382
    %v3477 = vunpack.c.l.b16 %v2383
    %v3478 = vunpack.c.h.b16 %v2383
    %v3479 = vunpack.c.l.b16 %v2384
    %v3480 = vunpack.c.h.b16 %v2384
    %v3481 = vunpack.c.l.b16 %v2385
    %v3482 = vunpack.c.h.b16 %v2385
    %v3483 = vunpack.c.l.b16 %v2386
    %v3484 = vunpack.c.h.b16 %v2386
    %v3485 = vunpack.c.l.b16 %v2387
    %v3486 = vunpack.c.h.b16 %v2387
    %v3487 = vunpack.c.l.b16 %v2388
    %v3488 = vunpack.c.h.b16 %v2388
    %v3489 = vunpack.c.l.b16 %v2389
    %v3490 = vunpack.c.h.b16 %v2389
    %v3491 = vunpack.c.l.b16 %v2390
    %v3492 = vunpack.c.h.b16 %v2390
    %v3493 = vunpack.c.l.b16 %v2391
    %v3494 = vunpack.c.h.b16 %v2391
    %v3495 = vunpack.c.l.b16 %v2392
    %v3496 = vunpack.c.h.b16 %v2392
    %v3497 = vunpack.c.l.b16 %v2393
    %v3498 = vunpack.c.h.b16 %v2393
    %v3499 = vunpack.c.l.b16 %v2394
    %v3500 = vunpack.c.h.b16 %v2394
    %v3501 = vunpack.c.l.b16 %v2395
    %v3502 = vunpack.c.h.b16 %v2395
    %v3503 = vunpack.c.l.b16 %v2396
    %v3504 = vunpack.c.h.b16 %v2396
    %v3505 = vunpack.c.l.b16 %v2397
    %v3506 = vunpack.c.h.b16 %v2397
    %v3507 = vunpack.c.l.b16 %v2398
    %v3508 = vunpack.c.h.b16 %v2398
    %v3509 = vunpack.c.l.b16 %v2399
    %v3510 = vunpack.c.h.b16 %v2399
    %v3511 = vunpack.c.l.b16 %v2400
    %v3512 = vunpack.c.h.b16 %v2400
    %v3513 = vunpack.c.l.b16 %v2401
    %v3514 = vunpack.c.h.b16 %v2401
    %v3515 = vunpack.c.l.b16 %v2402
    %v3516 = vunpack.c.h.b16 %v2402
    %v3517 = vunpack.c.l.b16 %v2403
    %v3518 = vunpack.c.h.b16 %v2403
    %v3519 = vunpack.c.l.b16 %v2404
    %v3520 = vunpack.c.h.b16 %v2404
    %v3521 = vunpack.c.l.b16 %v2405
    %v3522 = vunpack.c.h.b16 %v2405
    %v3523 = vunpack.c.l.b16 %v2406
    %v3524 = vunpack.c.h.b16 %v2406
    %v3525 = vunpack.c.l.b16 %v2407
    %v3526 = vunpack.c.h.b16 %v2407
    %v3527 = vunpack.c.l.b16 %v2408
    %v3528 = vunpack.c.h.b16 %v2408
    %v3529 = vunpack.c.l.b16 %v2409
    %v3530 = vunpack.c.h.b16 %v2409
    %v3531 = vunpack.c.l.b16 %v2410
    %v3532 = vunpack.c.h.b16 %v2410
    %v3533 = vunpack.c.l.b16 %v2411
    %v3534 = vunpack.c.h.b16 %v2411
    %v3535 = vunpack.c.l.b16 %v2412
    %v3536 = vunpack.c.h.b16 %v2412
    %v3537 = vunpack.c.l.b16 %v2413
    %v3538 = vunpack.c.h.b16 %v2413
    %v3539 = vunpack.c.l.b16 %v2414
    %v3540 = vunpack.c.h.b16 %v2414
    %v3541 = vunpack.c.l.b16 %v2415
    %v3542 = vunpack.c.h.b16 %v2415
    %v3543 = vunpack.c.l.b16 %v2416
    %v3544 = vunpack.c.h.b16 %v2416
    %v3545 = vunpack.c.l.b16 %v2417
    %v3546 = vunpack.c.h.b16 %v2417
    %v3547 = vunpack.c.l.b16 %v2418
    %v3548 = vunpack.c.h.b16 %v2418
    %v3549 = vunpack.c.l.b16 %v2419
    %v3550 = vunpack.c.h.b16 %v2419
    %v3551 = vunpack.c.l.b16 %v2420
    %v3552 = vunpack.c.h.b16 %v2420
    %v3553 = vunpack.c.l.b16 %v2421
    %v3554 = vunpack.c.h.b16 %v2421
    %v3555 = vunpack.c.l.b16 %v2422
    %v3556 = vunpack.c.h.b16 %v2422
    %v3557 = vunpack.c.l.b16 %v2423
    %v3558 = vunpack.c.h.b16 %v2423
    %v3559 = vunpack.c.l.b16 %v2424
    %v3560 = vunpack.c.h.b16 %v2424
    %v3561 = vunpack.c.l.b16 %v2425
    %v3562 = vunpack.c.h.b16 %v2425
    %v3563 = vunpack.c.l.b16 %v2426
    %v3564 = vunpack.c.h.b16 %v2426
    %v3565 = vunpack.c.l.b16 %v2427
    %v3566 = vunpack.c.h.b16 %v2427
    %v3567 = vunpack.c.l.b16 %v2428
    %v3568 = vunpack.c.h.b16 %v2428
    %v3569 = vunpack.c.l.b16 %v2429
    %v3570 = vunpack.c.h.b16 %v2429
    %v3571 = vunpack.c.l.b16 %v2430
    %v3572 = vunpack.c.h.b16 %v2430
    %v3573 = vunpack.c.l.b16 %v2431
    %v3574 = vunpack.c.h.b16 %v2431
    %v3575 = vunpack.c.l.b16 %v2432
    %v3576 = vunpack.c.h.b16 %v2432
    %v3577 = vunpack.c.l.b16 %v2433
    %v3578 = vunpack.c.h.b16 %v2433
    %v3579 = vunpack.c.l.b16 %v2434
    %v3580 = vunpack.c.h.b16 %v2434
    %v3581 = vunpack.c.l.b16 %v2435
    %v3582 = vunpack.c.h.b16 %v2435
    %v3583 = vunpack.c.l.b16 %v2436
    %v3584 = vunpack.c.h.b16 %v2436
    %v3585 = vunpack.c.l.b16 %v2437
    %v3586 = vunpack.c.h.b16 %v2437
    %v3587 = vunpack.c.l.b16 %v2438
    %v3588 = vunpack.c.h.b16 %v2438
    %v3589 = vunpack.c.l.b16 %v2439
    %v3590 = vunpack.c.h.b16 %v2439
    %v3591 = vunpack.c.l.b16 %v2440
    %v3592 = vunpack.c.h.b16 %v2440
    %v3593 = vunpack.c.l.b16 %v2441
    %v3594 = vunpack.c.h.b16 %v2441
    %v3595 = vunpack.c.l.b16 %v2442
    %v3596 = vunpack.c.h.b16 %v2442
    %v3597 = vunpack.c.l.b16 %v2443
    %v3598 = vunpack.c.h.b16 %v2443
    %v3599 = vunpack.c.l.b16 %v2444
    %v3600 = vunpack.c.h.b16 %v2444
    %v3601 = vunpack.c.l.b16 %v2445
    %v3602 = vunpack.c.h.b16 %v2445
    %v3603 = vunpack.c.l.b16 %v2446
    %v3604 = vunpack.c.h.b16 %v2446
    %v3605 = vunpack.c.l.b16 %v2447
    %v3606 = vunpack.c.h.b16 %v2447
    %v3607 = vunpack.c.l.b16 %v2448
    %v3608 = vunpack.c.h.b16 %v2448
    %v3609 = vunpack.c.l.b16 %v2449
    %v3610 = vunpack.c.h.b16 %v2449
    %v3611 = vunpack.c.l.b16 %v2450
    %v3612 = vunpack.c.h.b16 %v2450
    %v3613 = vunpack.c.l.b16 %v2451
    %v3614 = vunpack.c.h.b16 %v2451
    %v3615 = vunpack.c.l.b16 %v2452
    %v3616 = vunpack.c.h.b16 %v2452
    %v3617 = vunpack.c.l.b16 %v2453
    %v3618 = vunpack.c.h.b16 %v2453
    %v3619 = vunpack.c.l.b16 %v2454
    %v3620 = vunpack.c.h.b16 %v2454
    %v3621 = vunpack.c.l.b16 %v2455
    %v3622 = vunpack.c.h.b16 %v2455
    %v3623 = vunpack.c.l.b16 %v2456
    %v3624 = vunpack.c.h.b16 %v2456
    %v3625 = vunpack.c.l.b16 %v2457
    %v3626 = vunpack.c.h.b16 %v2457
    %v3627 = vunpack.c.l.b16 %v2458
    %v3628 = vunpack.c.h.b16 %v2458
    %v3629 = vunpack.c.l.b16 %v2459
    %v3630 = vunpack.c.h.b16 %v2459
    %v3631 = vunpack.c.l.b16 %v2460
    %v3632 = vunpack.c.h.b16 %v2460
    %v3633 = vunpack.c.l.b16 %v2461
    %v3634 = vunpack.c.h.b16 %v2461
    %v3635 = vunpack.c.l.b16 %v2462
    %v3636 = vunpack.c.h.b16 %v2462
    %v3637 = vunpack.c.l.b16 %v2463
    %v3638 = vunpack.c.h.b16 %v2463
    %v3639 = vunpack.c.l.b16 %v2464
    %v3640 = vunpack.c.h.b16 %v2464
    %v3641 = vunpack.c.l.b16 %v2465
    %v3642 = vunpack.c.h.b16 %v2465
    %v3643 = vunpack.c.l.b16 %v2466
    %v3644 = vunpack.c.h.b16 %v2466
    %v3645 = vunpack.c.l.b16 %v2467
    %v3646 = vunpack.c.h.b16 %v2467
    %v3647 = vunpack.c.l.b16 %v2468
    %v3648 = vunpack.c.h.b16 %v2468
    %v3649 = vunpack.c.l.b16 %v2469
    %v3650 = vunpack.c.h.b16 %v2469
    %v3651 = vunpack.c.l.b16 %v2470
    %v3652 = vunpack.c.h.b16 %v2470
    %v3653 = vunpack.c.l.b16 %v2471
    %v3654 = vunpack.c.h.b16 %v2471
    %v3655 = vunpack.c.l.b16 %v2472
    %v3656 = vunpack.c.h.b16 %v2472
    %v3657 = vunpack.c.l.b16 %v2473
    %v3658 = vunpack.c.h.b16 %v2473
    %v3659 = vunpack.c.l.b16 %v2474
    %v3660 = vunpack.c.h.b16 %v2474
    %v3661 = vunpack.c.l.b16 %v2475
    %v3662 = vunpack.c.h.b16 %v2475
    %v3663 = vunpack.c.l.b16 %v2476
    %v3664 = vunpack.c.h.b16 %v2476
    %v3665 = vunpack.c.l.b16 %v2477
    %v3666 = vunpack.c.h.b16 %v2477
    %v3667 = vunpack.c.l.b16 %v2478
    %v3668 = vunpack.c.h.b16 %v2478
    %v3669 = vunpack.c.l.b16 %v2479
    %v3670 = vunpack.c.h.b16 %v2479
    %v3671 = vunpack.c.l.b16 %v2480
    %v3672 = vunpack.c.h.b16 %v2480
    %v3673 = vunpack.c.l.b16 %v2481
    %v3674 = vunpack.c.h.b16 %v2481
    %v3675 = vunpack.c.l.b16 %v2482
    %v3676 = vunpack.c.h.b16 %v2482
    %v3677 = vunpack.c.l.b16 %v2483
    %v3678 = vunpack.c.h.b16 %v2483
    %v3679 = vunpack.c.l.b16 %v2484
    %v3680 = vunpack.c.h.b16 %v2484
    %v3681 = vunpack.c.l.b16 %v2485
    %v3682 = vunpack.c.h.b16 %v2485
    %v3683 = vunpack.c.l.b16 %v2486
    %v3684 = vunpack.c.h.b16 %v2486
    %v3685 = vunpack.c.l.b16 %v2487
    %v3686 = vunpack.c.h.b16 %v2487
    %v3687 = vunpack.c.l.b16 %v2488
    %v3688 = vunpack.c.h.b16 %v2488
    %v3689 = vunpack.c.l.b16 %v2489
    %v3690 = vunpack.c.h.b16 %v2489
    %v3691 = vunpack.c.l.b16 %v2490
    %v3692 = vunpack.c.h.b16 %v2490
    %v3693 = vunpack.c.l.b16 %v2491
    %v3694 = vunpack.c.h.b16 %v2491
    %v3695 = vunpack.c.l.b16 %v2492
    %v3696 = vunpack.c.h.b16 %v2492
    %v3697 = vunpack.c.l.b16 %v2493
    %v3698 = vunpack.c.h.b16 %v2493
    %v3699 = vunpack.c.l.b16 %v2494
    %v3700 = vunpack.c.h.b16 %v2494
    %v3701 = vunpack.c.l.b16 %v2495
    %v3702 = vunpack.c.h.b16 %v2495
    %v3703 = vunpack.c.l.b16 %v2496
    %v3704 = vunpack.c.h.b16 %v2496
    %v3705 = vunpack.c.l.b16 %v2497
    %v3706 = vunpack.c.h.b16 %v2497
    %v3707 = vunpack.c.l.b16 %v2498
    %v3708 = vunpack.c.h.b16 %v2498
    %v3709 = vunpack.c.l.b16 %v2499
    %v3710 = vunpack.c.h.b16 %v2499
    %v3711 = vunpack.c.l.b16 %v2500
    %v3712 = vunpack.c.h.b16 %v2500
    %v3713 = vunpack.c.l.b16 %v2501
    %v3714 = vunpack.c.h.b16 %v2501
    %v3715 = vunpack.c.l.b16 %v2502
    %v3716 = vunpack.c.h.b16 %v2502
    %v3717 = vunpack.c.l.b16 %v2503
    %v3718 = vunpack.c.h.b16 %v2503
    %v3719 = vunpack.c.l.b16 %v2504
    %v3720 = vunpack.c.h.b16 %v2504
    %v3721 = vunpack.c.l.b16 %v2505
    %v3722 = vunpack.c.h.b16 %v2505
    %v3723 = vunpack.c.l.b16 %v2506
    %v3724 = vunpack.c.h.b16 %v2506
    %v3725 = vunpack.c.l.b16 %v2507
    %v3726 = vunpack.c.h.b16 %v2507
    %v3727 = vunpack.c.l.b16 %v2508
    %v3728 = vunpack.c.h.b16 %v2508
    %v3729 = vunpack.c.l.b16 %v2509
    %v3730 = vunpack.c.h.b16 %v2509
    %v3731 = vunpack.c.l.b16 %v2510
    %v3732 = vunpack.c.h.b16 %v2510
    %v3733 = vunpack.c.l.b16 %v2511
    %v3734 = vunpack.c.h.b16 %v2511
    %v3735 = vunpack.c.l.b16 %v2512
    %v3736 = vunpack.c.h.b16 %v2512
    %v3737 = vunpack.c.l.b16 %v2513
    %v3738 = vunpack.c.h.b16 %v2513
    %v3739 = vunpack.c.l.b16 %v2514
    %v3740 = vunpack.c.h.b16 %v2514
    %v3741 = vunpack.c.l.b16 %v2515
    %v3742 = vunpack.c.h.b16 %v2515
    %v3743 = vunpack.c.l.b16 %v2516
    %v3744 = vunpack.c.h.b16 %v2516
    %v3745 = vunpack.c.l.b16 %v2517
    %v3746 = vunpack.c.h.b16 %v2517
    %v3747 = vunpack.c.l.b16 %v2518
    %v3748 = vunpack.c.h.b16 %v2518
    %v3749 = vunpack.c.l.b16 %v2519
    %v3750 = vunpack.c.h.b16 %v2519
    %v3751 = vunpack.c.l.b16 %v2520
    %v3752 = vunpack.c.h.b16 %v2520
    %v3753 = vunpack.c.l.b16 %v2521
    %v3754 = vunpack.c.h.b16 %v2521
    %v3755 = vunpack.c.l.b16 %v2522
    %v3756 = vunpack.c.h.b16 %v2522
    %v3757 = vunpack.c.l.b16 %v2523
    %v3758 = vunpack.c.h.b16 %v2523
    %v3759 = vunpack.c.l.b16 %v2524
    %v3760 = vunpack.c.h.b16 %v2524
    %v3761 = vunpack.c.l.b16 %v2525
    %v3762 = vunpack.c.h.b16 %v2525
    %v3763 = vunpack.c.l.b16 %v2526
    %v3764 = vunpack.c.h.b16 %v2526
    %v3765 = vunpack.c.l.b16 %v2527
    %v3766 = vunpack.c.h.b16 %v2527
    %v3767 = vunpack.c.l.b16 %v2528
    %v3768 = vunpack.c.h.b16 %v2528
    %v3769 = vunpack.c.l.b16 %v2529
    %v3770 = vunpack.c.h.b16 %v2529
    %v3771 = vunpack.c.l.b16 %v2530
    %v3772 = vunpack.c.h.b16 %v2530
    %v3773 = vunpack.c.l.b16 %v2531
    %v3774 = vunpack.c.h.b16 %v2531
    %v3775 = vunpack.c.l.b16 %v2532
    %v3776 = vunpack.c.h.b16 %v2532
    %v3777 = vunpack.c.l.b16 %v2533
    %v3778 = vunpack.c.h.b16 %v2533
    %v3779 = vunpack.c.l.b16 %v2534
    %v3780 = vunpack.c.h.b16 %v2534
    %v3781 = vunpack.c.l.b16 %v2535
    %v3782 = vunpack.c.h.b16 %v2535
    %v3783 = vunpack.c.l.b16 %v2536
    %v3784 = vunpack.c.h.b16 %v2536
    %v3785 = vunpack.c.l.b16 %v2537
    %v3786 = vunpack.c.h.b16 %v2537
    %v3787 = vunpack.c.l.b16 %v2538
    %v3788 = vunpack.c.h.b16 %v2538
    %v3789 = vunpack.c.l.b16 %v2539
    %v3790 = vunpack.c.h.b16 %v2539
    %v3791 = vunpack.c.l.b16 %v2540
    %v3792 = vunpack.c.h.b16 %v2540
    %v3793 = vunpack.c.l.b16 %v2541
    %v3794 = vunpack.c.h.b16 %v2541
    %v3795 = vunpack.c.l.b16 %v2542
    %v3796 = vunpack.c.h.b16 %v2542
    %v3797 = vunpack.c.l.b16 %v2543
    %v3798 = vunpack.c.h.b16 %v2543
    %v3799 = vunpack.c.l.b16 %v2544
    %v3800 = vunpack.c.h.b16 %v2544
    %v3801 = vunpack.c.l.b16 %v2545
    %v3802 = vunpack.c.h.b16 %v2545
    %v3803 = vunpack.c.l.b16 %v2546
    %v3804 = vunpack.c.h.b16 %v2546
    %v3805 = vunpack.c.l.b16 %v2547
    %v3806 = vunpack.c.h.b16 %v2547
    %v3807 = vunpack.c.l.b16 %v2548
    %v3808 = vunpack.c.h.b16 %v2548
    %v3809 = vunpack.c.l.b16 %v2549
    %v3810 = vunpack.c.h.b16 %v2549
    %v3811 = vunpack.c.l.b16 %v2550
    %v3812 = vunpack.c.h.b16 %v2550
    %v3813 = vunpack.c.l.b16 %v2551
    %v3814 = vunpack.c.h.b16 %v2551
    %v3815 = vunpack.c.l.b16 %v2552
    %v3816 = vunpack.c.h.b16 %v2552
    %v3817 = vunpack.c.l.b16 %v2553
    %v3818 = vunpack.c.h.b16 %v2553
    %v3819 = vunpack.c.l.b16 %v2554
    %v3820 = vunpack.c.h.b16 %v2554
    %v3821 = vunpack.c.l.b16 %v2555
    %v3822 = vunpack.c.h.b16 %v2555
    %v3823 = vunpack.c.l.b16 %v2556
    %v3824 = vunpack.c.h.b16 %v2556
    %v3825 = vunpack.c.l.b16 %v2557
    %v3826 = vunpack.c.h.b16 %v2557
    %v3827 = vunpack.c.l.b16 %v2558
    %v3828 = vunpack.c.h.b16 %v2558
    %v3829 = vunpack.c.l.b16 %v2559
    %v3830 = vunpack.c.h.b16 %v2559
    %v3831 = vunpack.c.l.b16 %v2560
    %v3832 = vunpack.c.h.b16 %v2560
    %v3833 = vunpack.c.l.b16 %v2561
    %v3834 = vunpack.c.h.b16 %v2561
    %v3835 = vunpack.c.l.b16 %v2562
    %v3836 = vunpack.c.h.b16 %v2562
    %v3837 = vunpack.c.l.b16 %v2563
    %v3838 = vunpack.c.h.b16 %v2563
    %v3839 = vunpack.c.l.b16 %v2564
    %v3840 = vunpack.c.h.b16 %v2564
    %v3841 = vunpack.c.l.b16 %v2565
    %v3842 = vunpack.c.h.b16 %v2565
    %v3843 = vunpack.c.l.b16 %v2566
    %v3844 = vunpack.c.h.b16 %v2566
    %v3845 = vunpack.c.l.b16 %v2567
    %v3846 = vunpack.c.h.b16 %v2567
    %v3847 = vunpack.c.l.b16 %v2568
    %v3848 = vunpack.c.h.b16 %v2568
    %v3849 = vunpack.c.l.b16 %v2569
    %v3850 = vunpack.c.h.b16 %v2569
    %v3851 = vunpack.c.l.b16 %v2570
    %v3852 = vunpack.c.h.b16 %v2570
    %v3853 = vunpack.c.l.b16 %v2571
    %v3854 = vunpack.c.h.b16 %v2571
    %v3855 = vunpack.c.l.b16 %v2572
    %v3856 = vunpack.c.h.b16 %v2572
    %v3857 = vunpack.c.l.b16 %v2573
    %v3858 = vunpack.c.h.b16 %v2573
    %v3859 = vunpack.c.l.b16 %v2574
    %v3860 = vunpack.c.h.b16 %v2574
    %v3861 = vunpack.c.l.b16 %v2575
    %v3862 = vunpack.c.h.b16 %v2575
    %v3863 = vunpack.c.l.b16 %v2576
    %v3864 = vunpack.c.h.b16 %v2576
    %v3865 = vunpack.c.l.b16 %v2577
    %v3866 = vunpack.c.h.b16 %v2577
    %v3867 = vunpack.c.l.b16 %v2578
    %v3868 = vunpack.c.h.b16 %v2578
    %v3869 = vunpack.c.l.b16 %v2579
    %v3870 = vunpack.c.h.b16 %v2579
    %v3871 = vunpack.c.l.b16 %v2580
    %v3872 = vunpack.c.h.b16 %v2580
    %v3873 = vunpack.c.l.b16 %v2581
    %v3874 = vunpack.c.h.b16 %v2581
    %v3875 = vunpack.c.l.b16 %v2582
    %v3876 = vunpack.c.h.b16 %v2582
    %v3877 = vunpack.c.l.b16 %v2583
    %v3878 = vunpack.c.h.b16 %v2583
    %v3879 = vunpack.c.l.b16 %v2584
    %v3880 = vunpack.c.h.b16 %v2584
    %v3881 = vunpack.c.l.b16 %v2585
    %v3882 = vunpack.c.h.b16 %v2585
    %v3883 = vunpack.c.l.b16 %v2586
    %v3884 = vunpack.c.h.b16 %v2586
    %v3885 = vunpack.c.l.b16 %v2587
    %v3886 = vunpack.c.h.b16 %v2587
    %v3887 = vunpack.c.l.b16 %v2588
    %v3888 = vunpack.c.h.b16 %v2588
    %v3889 = vunpack.c.l.b16 %v2589
    %v3890 = vunpack.c.h.b16 %v2589
    %v3891 = vunpack.c.l.b16 %v2590
    %v3892 = vunpack.c.h.b16 %v2590
    %v3893 = vunpack.c.l.b16 %v2591
    %v3894 = vunpack.c.h.b16 %v2591
    %v3895 = vunpack.c.l.b16 %v2592
    %v3896 = vunpack.c.h.b16 %v2592
    %v3897 = vunpack.c.l.b16 %v2593
    %v3898 = vunpack.c.h.b16 %v2593
    %v3899 = vunpack.c.l.b16 %v2594
    %v3900 = vunpack.c.h.b16 %v2594
    %v3901 = vunpack.c.l.b16 %v2595
    %v3902 = vunpack.c.h.b16 %v2595
    %v3903 = vunpack.c.l.b16 %v2596
    %v3904 = vunpack.c.h.b16 %v2596
    %v3905 = vunpack.c.l.b16 %v2597
    %v3906 = vunpack.c.h.b16 %v2597
    %v3907 = vunpack.c.l.b16 %v2598
    %v3908 = vunpack.c.h.b16 %v2598
    %v3909 = vunpack.c.l.b16 %v2599
    %v3910 = vunpack.c.h.b16 %v2599
    %v3911 = vunpack.c.l.b16 %v2600
    %v3912 = vunpack.c.h.b16 %v2600
    %v3913 = vunpack.c.l.b16 %v2601
    %v3914 = vunpack.c.h.b16 %v2601
    %v3915 = vunpack.c.l.b16 %v2602
    %v3916 = vunpack.c.h.b16 %v2602
    %v3917 = vunpack.c.l.b16 %v2603
    %v3918 = vunpack.c.h.b16 %v2603
    %v3919 = vunpack.c.l.b16 %v2604
    %v3920 = vunpack.c.h.b16 %v2604
    %v3921 = vunpack.c.l.b16 %v2605
    %v3922 = vunpack.c.h.b16 %v2605
    %v3923 = vunpack.c.l.b16 %v2606
    %v3924 = vunpack.c.h.b16 %v2606
    %v3925 = vunpack.c.l.b16 %v2607
    %v3926 = vunpack.c.h.b16 %v2607
    %v3927 = vunpack.c.l.b16 %v2608
    %v3928 = vunpack.c.h.b16 %v2608
    %v3929 = vunpack.c.l.b16 %v2609
    %v3930 = vunpack.c.h.b16 %v2609
    %v3931 = vunpack.c.l.b16 %v2610
    %v3932 = vunpack.c.h.b16 %v2610
    %v3933 = vunpack.c.l.b16 %v2611
    %v3934 = vunpack.c.h.b16 %v2611
    %v3935 = vunpack.c.l.b16 %v2612
    %v3936 = vunpack.c.h.b16 %v2612
    %v3937 = vunpack.c.l.b16 %v2613
    %v3938 = vunpack.c.h.b16 %v2613
    %v3939 = vunpack.c.l.b16 %v2614
    %v3940 = vunpack.c.h.b16 %v2614
    %v3941 = vunpack.c.l.b16 %v2615
    %v3942 = vunpack.c.h.b16 %v2615
    %v3943 = vunpack.c.l.b16 %v2616
    %v3944 = vunpack.c.h.b16 %v2616
    %v3945 = vunpack.c.l.b16 %v2617
    %v3946 = vunpack.c.h.b16 %v2617
    %v3947 = vunpack.c.l.b16 %v2618
    %v3948 = vunpack.c.h.b16 %v2618
    %v3949 = vunpack.c.l.b16 %v2619
    %v3950 = vunpack.c.h.b16 %v2619
    %v3951 = vunpack.c.l.b16 %v2620
    %v3952 = vunpack.c.h.b16 %v2620
    %v3953 = vunpack.c.l.b16 %v2621
    %v3954 = vunpack.c.h.b16 %v2621
    %v3955 = vunpack.c.l.b16 %v2622
    %v3956 = vunpack.c.h.b16 %v2622
    %v3957 = vunpack.c.l.b16 %v2623
    %v3958 = vunpack.c.h.b16 %v2623
    %v3959 = vunpack.c.l.b16 %v2624
    %v3960 = vunpack.c.h.b16 %v2624
    %v3961 = vunpack.c.l.b16 %v2625
    %v3962 = vunpack.c.h.b16 %v2625
    %v3963 = vunpack.c.l.b16 %v2626
    %v3964 = vunpack.c.h.b16 %v2626
    %v3965 = vunpack.c.l.b16 %v2627
    %v3966 = vunpack.c.h.b16 %v2627
    %v3967 = vunpack.c.l.b16 %v2628
    %v3968 = vunpack.c.h.b16 %v2628
    %v3969 = vunpack.c.l.b16 %v2629
    %v3970 = vunpack.c.h.b16 %v2629
    %v3971 = vunpack.c.l.b16 %v2630
    %v3972 = vunpack.c.h.b16 %v2630
    %v3973 = vunpack.c.l.b16 %v2631
    %v3974 = vunpack.c.h.b16 %v2631
    %v3975 = vunpack.c.l.b16 %v2632
    %v3976 = vunpack.c.h.b16 %v2632
    %v3977 = vunpack.c.l.b16 %v2633
    %v3978 = vunpack.c.h.b16 %v2633
    %v3979 = vunpack.c.l.b16 %v2634
    %v3980 = vunpack.c.h.b16 %v2634
    %v3981 = vunpack.c.l.b16 %v2635
    %v3982 = vunpack.c.h.b16 %v2635
    %v3983 = vunpack.c.l.b16 %v2636
    %v3984 = vunpack.c.h.b16 %v2636
    %v3985 = vunpack.c.l.b16 %v2637
    %v3986 = vunpack.c.h.b16 %v2637
    %v3987 = vunpack.c.l.b16 %v2638
    %v3988 = vunpack.c.h.b16 %v2638
    %v3989 = vunpack.c.l.b16 %v2639
    %v3990 = vunpack.c.h.b16 %v2639
    %v3991 = vunpack.c.l.b16 %v2640
    %v3992 = vunpack.c.h.b16 %v2640
    %v3993 = vunpack.c.l.b16 %v2641
    %v3994 = vunpack.c.h.b16 %v2641
    %v3995 = vunpack.c.l.b16 %v2642
    %v3996 = vunpack.c.h.b16 %v2642
    %v3997 = vunpack.c.l.b16 %v2643
    %v3998 = vunpack.c.h.b16 %v2643
    %v3999 = vunpack.c.l.b16 %v2644
    %v4000 = vunpack.c.h.b16 %v2644
    %v4001 = vunpack.c.l.b16 %v2645
    %v4002 = vunpack.c.h.b16 %v2645
    %v4003 = vunpack.c.l.b16 %v2646
    %v4004 = vunpack.c.h.b16 %v2646
    %v4005 = vunpack.c.l.b16 %v2647
    %v4006 = vunpack.c.h.b16 %v2647
    %v4007 = vunpack.c.l.b16 %v2648
    %v4008 = vunpack.c.h.b16 %v2648
    %v4009 = vunpack.c.l.b16 %v2649
    %v4010 = vunpack.c.h.b16 %v2649
    %v4011 = vunpack.c.l.b16 %v2650
    %v4012 = vunpack.c.h.b16 %v2650
    %v4013 = vunpack.c.l.b16 %v2651
    %v4014 = vunpack.c.h.b16 %v2651
    %v4015 = vunpack.c.l.b16 %v2652
    %v4016 = vunpack.c.h.b16 %v2652
    %v4017 = vunpack.c.l.b16 %v2653
    %v4018 = vunpack.c.h.b16 %v2653
    %v4019 = vunpack.c.l.b16 %v2654
    %v4020 = vunpack.c.h.b16 %v2654
    %v4021 = vunpack.c.l.b16 %v2655
    %v4022 = vunpack.c.h.b16 %v2655
    %v4023 = vunpack.c.l.b16 %v2656
    %v4024 = vunpack.c.h.b16 %v2656
    %v4025 = vunpack.c.l.b16 %v2657
    %v4026 = vunpack.c.h.b16 %v2657
    %v4027 = vunpack.c.l.b16 %v2658
    %v4028 = vunpack.c.h.b16 %v2658
    %v4029 = vunpack.c.l.b16 %v2659
    %v4030 = vunpack.c.h.b16 %v2659
    %v4031 = vunpack.c.l.b16 %v2660
    %v4032 = vunpack.c.h.b16 %v2660
    %v4033 = vunpack.c.l.b16 %v2661
    %v4034 = vunpack.c.h.b16 %v2661
    %v4035 = vunpack.c.l.b16 %v2662
    %v4036 = vunpack.c.h.b16 %v2662
    %v4037 = vunpack.c.l.b16 %v2663
    %v4038 = vunpack.c.h.b16 %v2663
    %v4039 = vunpack.c.l.b16 %v2664
    %v4040 = vunpack.c.h.b16 %v2664
    %v4041 = vunpack.c.l.b16 %v2665
    %v4042 = vunpack.c.h.b16 %v2665
    %v4043 = vunpack.c.l.b16 %v2666
    %v4044 = vunpack.c.h.b16 %v2666
    %v4045 = vunpack.c.l.b16 %v2667
    %v4046 = vunpack.c.h.b16 %v2667
    %v4047 = vunpack.c.l.b16 %v2668
    %v4048 = vunpack.c.h.b16 %v2668
    %v4049 = vunpack.c.l.b16 %v2669
    %v4050 = vunpack.c.h.b16 %v2669
    %v4051 = vunpack.c.l.b16 %v2670
    %v4052 = vunpack.c.h.b16 %v2670
    %v4053 = vunpack.c.l.b16 %v2671
    %v4054 = vunpack.c.h.b16 %v2671
    %v4055 = vunpack.c.l.b16 %v2672
    %v4056 = vunpack.c.h.b16 %v2672
    %v4057 = vunpack.c.l.b16 %v2673
    %v4058 = vunpack.c.h.b16 %v2673
    %v4059 = vunpack.c.l.b16 %v2674
    %v4060 = vunpack.c.h.b16 %v2674
    %v4061 = vunpack.c.l.b16 %v2675
    %v4062 = vunpack.c.h.b16 %v2675
    %v4063 = vunpack.c.l.b16 %v2676
    %v4064 = vunpack.c.h.b16 %v2676
    %v4065 = vunpack.c.l.b16 %v2677
    %v4066 = vunpack.c.h.b16 %v2677
    %v4067 = vunpack.c.l.b16 %v2678
    %v4068 = vunpack.c.h.b16 %v2678
    %v4069 = vunpack.c.l.b16 %v2679
    %v4070 = vunpack.c.h.b16 %v2679
    %v4071 = vunpack.c.l.b16 %v2680
    %v4072 = vunpack.c.h.b16 %v2680
    %v4073 = vunpack.c.l.b16 %v2681
    %v4074 = vunpack.c.h.b16 %v2681
    %v4075 = vunpack.c.l.b16 %v2682
    %v4076 = vunpack.c.h.b16 %v2682
    %v4077 = vunpack.c.l.b16 %v2683
    %v4078 = vunpack.c.h.b16 %v2683
    %v4079 = vunpack.c.l.b16 %v2684
    %v4080 = vunpack.c.h.b16 %v2684
    %v4081 = vunpack.c.l.b16 %v2685
    %v4082 = vunpack.c.h.b16 %v2685
    %v4083 = vunpack.c.l.b16 %v2686
    %v4084 = vunpack.c.h.b16 %v2686
    %v4085 = vunpack.c.l.b16 %v2687
    %v4086 = vunpack.c.h.b16 %v2687
    %v4087 = vunpack.c.l.b16 %v2688
    %v4088 = vunpack.c.h.b16 %v2688
    %v4089 = vunpack.c.l.b16 %v2689
    %v4090 = vunpack.c.h.b16 %v2689
    %v4091 = vunpack.c.l.b16 %v2690
    %v4092 = vunpack.c.h.b16 %v2690
    %v4093 = vunpack.c.l.b16 %v2691
    %v4094 = vunpack.c.h.b16 %v2691
    %v4095 = vunpack.c.l.b16 %v2692
    %v4096 = vunpack.c.h.b16 %v2692
    %v4097 = vunpack.c.l.b16 %v2693
    %v4098 = vunpack.c.h.b16 %v2693
    %v4099 = vunpack.c.l.b16 %v2694
    %v4100 = vunpack.c.h.b16 %v2694
    %v4101 = vunpack.c.l.b16 %v2695
    %v4102 = vunpack.c.h.b16 %v2695
    %v4103 = vunpack.c.l.b16 %v2696
    %v4104 = vunpack.c.h.b16 %v2696
    %v4105 = vunpack.c.l.b16 %v2697
    %v4106 = vunpack.c.h.b16 %v2697
    %v4107 = vunpack.c.l.b16 %v2698
    %v4108 = vunpack.c.h.b16 %v2698
    %v4109 = vunpack.c.l.b16 %v2699
    %v4110 = vunpack.c.h.b16 %v2699
    %v4111 = vunpack.c.l.b16 %v2700
    %v4112 = vunpack.c.h.b16 %v2700
    %v4113 = vunpack.c.l.b16 %v2701
    %v4114 = vunpack.c.h.b16 %v2701
    %v4115 = vunpack.c.l.b16 %v2702
    %v4116 = vunpack.c.h.b16 %v2702
    %v4117 = vunpack.c.l.b16 %v2703
    %v4118 = vunpack.c.h.b16 %v2703
    %v4119 = vunpack.c.l.b16 %v2704
    %v4120 = vunpack.c.h.b16 %v2704
    %v4121 = vunpack.c.l.b16 %v2705
    %v4122 = vunpack.c.h.b16 %v2705
    %v4123 = vunpack.c.l.b16 %v2706
    %v4124 = vunpack.c.h.b16 %v2706
    %v4125 = vunpack.c.l.b16 %v2707
    %v4126 = vunpack.c.h.b16 %v2707
    %v4127 = vunpack.c.l.b16 %v2708
    %v4128 = vunpack.c.h.b16 %v2708
    %v4129 = vunpack.c.l.b16 %v2709
    %v4130 = vunpack.c.h.b16 %v2709
    %v4131 = vunpack.c.l.b16 %v2710
    %v4132 = vunpack.c.h.b16 %v2710
    %v4133 = vunpack.c.l.b16 %v2711
    %v4134 = vunpack.c.h.b16 %v2711
    %v4135 = vunpack.c.l.b16 %v2712
    %v4136 = vunpack.c.h.b16 %v2712
    %v4137 = vunpack.c.l.b16 %v2713
    %v4138 = vunpack.c.h.b16 %v2713
    %v4139 = vunpack.c.l.b16 %v2714
    %v4140 = vunpack.c.h.b16 %v2714
    %v4141 = vunpack.c.l.b16 %v2715
    %v4142 = vunpack.c.h.b16 %v2715
    %v4143 = vunpack.c.l.b16 %v2716
    %v4144 = vunpack.c.h.b16 %v2716
    %v4145 = vunpack.c.l.b16 %v2717
    %v4146 = vunpack.c.h.b16 %v2717
    %v4147 = vunpack.c.l.b16 %v2718
    %v4148 = vunpack.c.h.b16 %v2718
    %v4149 = vunpack.c.l.b16 %v2719
    %v4150 = vunpack.c.h.b16 %v2719
    %v4151 = vunpack.c.l.b16 %v2720
    %v4152 = vunpack.c.h.b16 %v2720
    %v4153 = vunpack.c.l.b16 %v2721
    %v4154 = vunpack.c.h.b16 %v2721
    %v4155 = vunpack.c.l.b16 %v2722
    %v4156 = vunpack.c.h.b16 %v2722
    %v4157 = vunpack.c.l.b16 %v2723
    %v4158 = vunpack.c.h.b16 %v2723
    %v4159 = vunpack.c.l.b16 %v2724
    %v4160 = vunpack.c.h.b16 %v2724
    %v4161 = vunpack.c.l.b16 %v2725
    %v4162 = vunpack.c.h.b16 %v2725
    %v4163 = vunpack.c.l.b16 %v2726
    %v4164 = vunpack.c.h.b16 %v2726
    %v4165 = vunpack.c.l.b16 %v2727
    %v4166 = vunpack.c.h.b16 %v2727
    %v4167 = vunpack.c.l.b16 %v2728
    %v4168 = vunpack.c.h.b16 %v2728
    %v4169 = vunpack.c.l.b16 %v2729
    %v4170 = vunpack.c.h.b16 %v2729
    %v4171 = vunpack.c.l.b16 %v2730
    %v4172 = vunpack.c.h.b16 %v2730
    %v4173 = vunpack.c.l.b16 %v2731
    %v4174 = vunpack.c.h.b16 %v2731
    %v4175 = vunpack.c.l.b16 %v2732
    %v4176 = vunpack.c.h.b16 %v2732
    %v4177 = vunpack.c.l.b16 %v2733
    %v4178 = vunpack.c.h.b16 %v2733
    %v4179 = vunpack.c.l.b16 %v2734
    %v4180 = vunpack.c.h.b16 %v2734
    %v4181 = vunpack.c.l.b16 %v2735
    %v4182 = vunpack.c.h.b16 %v2735
    %v4183 = vunpack.c.l.b16 %v2736
    %v4184 = vunpack.c.h.b16 %v2736
    %v4185 = vunpack.c.l.b16 %v2737
    %v4186 = vunpack.c.h.b16 %v2737
    %v4187 = vunpack.c.l.b16 %v2738
    %v4188 = vunpack.c.h.b16 %v2738
    %v4189 = vunpack.c.l.b16 %v2739
    %v4190 = vunpack.c.h.b16 %v2739
    %v4191 = vunpack.c.l.b16 %v2740
    %v4192 = vunpack.c.h.b16 %v2740
    %v4193 = vunpack.c.l.b16 %v2741
    %v4194 = vunpack.c.h.b16 %v2741
    %v4195 = vunpack.c.l.b16 %v2742
    %v4196 = vunpack.c.h.b16 %v2742
    %v4197 = vunpack.c.l.b16 %v2743
    %v4198 = vunpack.c.h.b16 %v2743
    %v4199 = vunpack.c.l.b16 %v2744
    %v4200 = vunpack.c.h.b16 %v2744
    %v4201 = vunpack.c.l.b16 %v2745
    %v4202 = vunpack.c.h.b16 %v2745
    %v4203 = vunpack.c.l.b16 %v2746
    %v4204 = vunpack.c.h.b16 %v2746
    %v4205 = vunpack.c.l.b16 %v2747
    %v4206 = vunpack.c.h.b16 %v2747
    %v4207 = vunpack.c.l.b16 %v2748
    %v4208 = vunpack.c.h.b16 %v2748
    %v4209 = vunpack.c.l.b16 %v2749
    %v4210 = vunpack.c.h.b16 %v2749
    %v4211 = vunpack.c.l.b16 %v2750
    %v4212 = vunpack.c.h.b16 %v2750
    %v4213 = vunpack.c.l.b16 %v2751
    %v4214 = vunpack.c.h.b16 %v2751
    %v4215 = vunpack.c.l.b16 %v2752
    %v4216 = vunpack.c.h.b16 %v2752
    %v4217 = vunpack.c.l.b16 %v2753
    %v4218 = vunpack.c.h.b16 %v2753
    %v4219 = vunpack.c.l.b16 %v2754
    %v4220 = vunpack.c.h.b16 %v2754
    %v4221 = vunpack.c.l.b16 %v2755
    %v4222 = vunpack.c.h.b16 %v2755
    %v4223 = vunpack.c.l.b16 %v2756
    %v4224 = vunpack.c.h.b16 %v2756
    %v4225 = vunpack.c.l.b16 %v2757
    %v4226 = vunpack.c.h.b16 %v2757
    %v4227 = vunpack.c.l.b16 %v2758
    %v4228 = vunpack.c.h.b16 %v2758
    %v4229 = vunpack.c.l.b16 %v2759
    %v4230 = vunpack.c.h.b16 %v2759
    %v4231 = vunpack.c.l.b16 %v2760
    %v4232 = vunpack.c.h.b16 %v2760
    %v4233 = vunpack.c.l.b16 %v2761
    %v4234 = vunpack.c.h.b16 %v2761
    %v4235 = vunpack.c.l.b16 %v2762
    %v4236 = vunpack.c.h.b16 %v2762
    %v4237 = vunpack.c.l.b16 %v2763
    %v4238 = vunpack.c.h.b16 %v2763
    %v4239 = vunpack.c.l.b16 %v2764
    %v4240 = vunpack.c.h.b16 %v2764
    %v4241 = vunpack.c.l.b16 %v2765
    %v4242 = vunpack.c.h.b16 %v2765
    %v4243 = vunpack.c.l.b16 %v2766
    %v4244 = vunpack.c.h.b16 %v2766
    %v4245 = vunpack.c.l.b16 %v2767
    %v4246 = vunpack.c.h.b16 %v2767
    %v4247 = vunpack.c.l.b16 %v2768
    %v4248 = vunpack.c.h.b16 %v2768
    %v4249 = vunpack.c.l.b16 %v2769
    %v4250 = vunpack.c.h.b16 %v2769
    %v4251 = vunpack.c.l.b16 %v2770
    %v4252 = vunpack.c.h.b16 %v2770
    %v4253 = vunpack.c.l.b16 %v2771
    %v4254 = vunpack.c.h.b16 %v2771
    %v4255 = vunpack.c.l.b16 %v2772
    %v4256 = vunpack.c.h.b16 %v2772
    %v4257 = vunpack.c.l.b16 %v2773
    %v4258 = vunpack.c.h.b16 %v2773
    %v4259 = vunpack.c.l.b16 %v2774
    %v4260 = vunpack.c.h.b16 %v2774
    %v4261 = vunpack.c.l.b16 %v2775
    %v4262 = vunpack.c.h.b16 %v2775
    %v4263 = vunpack.c.l.b16 %v2776
    %v4264 = vunpack.c.h.b16 %v2776
    %v4265 = vunpack.c.l.b16 %v2777
    %v4266 = vunpack.c.h.b16 %v2777
    %v4267 = vunpack.c.l.b16 %v2778
    %v4268 = vunpack.c.h.b16 %v2778
    %v4269 = vunpack.c.l.b16 %v2779
    %v4270 = vunpack.c.h.b16 %v2779
    %v4271 = vunpack.c.l.b16 %v2780
    %v4272 = vunpack.c.h.b16 %v2780
    %v4273 = vunpack.c.l.b16 %v2781
    %v4274 = vunpack.c.h.b16 %v2781
    %v4275 = vunpack.c.l.b16 %v2782
    %v4276 = vunpack.c.h.b16 %v2782
    %v4277 = vunpack.c.l.b16 %v2783
    %v4278 = vunpack.c.h.b16 %v2783
    %v4279 = vunpack.c.l.b16 %v2784
    %v4280 = vunpack.c.h.b16 %v2784
    %v4281 = vunpack.c.l.b16 %v2785
    %v4282 = vunpack.c.h.b16 %v2785
    %v4283 = vunpack.c.l.b16 %v2786
    %v4284 = vunpack.c.h.b16 %v2786
    %v4285 = vunpack.c.l.b16 %v2787
    %v4286 = vunpack.c.h.b16 %v2787
    %v4287 = vunpack.c.l.b16 %v2788
    %v4288 = vunpack.c.h.b16 %v2788
    %v4289 = vunpack.c.l.b16 %v2789
    %v4290 = vunpack.c.h.b16 %v2789
    %v4291 = vunpack.c.l.b16 %v2790
    %v4292 = vunpack.c.h.b16 %v2790
    %v4293 = vunpack.c.l.b16 %v2791
    %v4294 = vunpack.c.h.b16 %v2791
    %v4295 = vunpack.c.l.b16 %v2792
    %v4296 = vunpack.c.h.b16 %v2792
    %v4297 = vunpack.c.l.b16 %v2793
    %v4298 = vunpack.c.h.b16 %v2793
    %v4299 = vunpack.c.l.b16 %v2794
    %v4300 = vunpack.c.h.b16 %v2794
    %v4301 = vunpack.c.l.b16 %v2795
    %v4302 = vunpack.c.h.b16 %v2795
    %v4303 = vunpack.c.l.b16 %v2796
    %v4304 = vunpack.c.h.b16 %v2796
    %v4305 = vunpack.c.l.b16 %v2797
    %v4306 = vunpack.c.h.b16 %v2797
    %v4307 = vunpack.c.l.b16 %v2798
    %v4308 = vunpack.c.h.b16 %v2798
    %v4309 = vunpack.c.l.b16 %v2799
    %v4310 = vunpack.c.h.b16 %v2799
    %v4311 = vunpack.c.l.b16 %v2800
    %v4312 = vunpack.c.h.b16 %v2800
    %v4313 = vunpack.c.l.b16 %v2801
    %v4314 = vunpack.c.h.b16 %v2801
    %v4315 = vunpack.c.l.b16 %v2802
    %v4316 = vunpack.c.h.b16 %v2802
    %v4317 = vunpack.c.l.b16 %v2803
    %v4318 = vunpack.c.h.b16 %v2803
    %v4319 = vunpack.c.l.b16 %v2804
    %v4320 = vunpack.c.h.b16 %v2804
    %v4321 = vunpack.c.l.b16 %v2805
    %v4322 = vunpack.c.h.b16 %v2805
    %v4323 = vunpack.c.l.b16 %v2806
    %v4324 = vunpack.c.h.b16 %v2806
    %v4325 = vunpack.c.l.b16 %v2807
    %v4326 = vunpack.c.h.b16 %v2807
    %v4327 = vunpack.c.l.b16 %v2808
    %v4328 = vunpack.c.h.b16 %v2808
    %v4329 = vunpack.c.l.b16 %v2809
    %v4330 = vunpack.c.h.b16 %v2809
    %v4331 = vunpack.c.l.b16 %v2810
    %v4332 = vunpack.c.h.b16 %v2810
    %v4333 = vunpack.c.l.b16 %v2811
    %v4334 = vunpack.c.h.b16 %v2811
    %v4335 = vunpack.c.l.b16 %v2812
    %v4336 = vunpack.c.h.b16 %v2812
    %v4337 = vunpack.c.l.b16 %v2813
    %v4338 = vunpack.c.h.b16 %v2813
    %v4339 = vunpack.c.l.b16 %v2814
    %v4340 = vunpack.c.h.b16 %v2814
    %v4341 = vunpack.c.l.b16 %v2815
    %v4342 = vunpack.c.h.b16 %v2815
    %v4343 = vunpack.c.l.b16 %v2816
    %v4344 = vunpack.c.h.b16 %v2816
    %v4345 = vunpack.c.l.b16 %v2817
    %v4346 = vunpack.c.h.b16 %v2817
    %v4347 = vunpack.c.l.b16 %v2818
    %v4348 = vunpack.c.h.b16 %v2818
    %v4349 = vunpack.c.l.b16 %v2819
    %v4350 = vunpack.c.h.b16 %v2819
    %v4351 = vunpack.c.l.b16 %v2820
    %v4352 = vunpack.c.h.b16 %v2820
    %v4353 = vunpack.c.l.b16 %v2821
    %v4354 = vunpack.c.h.b16 %v2821
    %v4355 = vunpack.c.l.b16 %v2822
    %v4356 = vunpack.c.h.b16 %v2822
    %v4357 = vunpack.c.l.b16 %v2823
    %v4358 = vunpack.c.h.b16 %v2823
    %v4359 = vunpack.c.l.b16 %v2824
    %v4360 = vunpack.c.h.b16 %v2824
    %v4361 = vpack.c.b16 %v3353, %v3337
    %v4362 = vpack.c.b16 %v3354, %v3338
    %v4363 = vpack.c.b16 %v3355, %v3339
    %v4364 = vpack.c.b16 %v3356, %v3340
    %v4365 = vpack.c.b16 %v3357, %v3341
    %v4366 = vpack.c.b16 %v3358, %v3342
    %v4367 = vpack.c.b16 %v3359, %v3343
    %v4368 = vpack.c.b16 %v3360, %v3344
    %v4369 = vpack.c.b16 %v3361, %v3345
    %v4370 = vpack.c.b16 %v3362, %v3346
    %v4371 = vpack.c.b16 %v3363, %v3347
    %v4372 = vpack.c.b16 %v3364, %v3348
    %v4373 = vpack.c.b16 %v3365, %v3349
    %v4374 = vpack.c.b16 %v3366, %v3350
    %v4375 = vpack.c.b16 %v3367, %v3351
    %v4376 = vpack.c.b16 %v3368, %v3352
    %v4377 = vpack.c.b16 %v3385, %v3369
    %v4378 = vpack.c.b16 %v3386, %v3370
    %v4379 = vpack.c.b16 %v3387, %v3371
    %v4380 = vpack.c.b16 %v3388, %v3372
    %v4381 = vpack.c.b16 %v3389, %v3373
    %v4382 = vpack.c.b16 %v3390, %v3374
    %v4383 = vpack.c.b16 %v3391, %v3375
    %v4384 = vpack.c.b16 %v3392, %v3376
    %v4385 = vpack.c.b16 %v3393, %v3377
    %v4386 = vpack.c.b16 %v3394, %v3378
    %v4387 = vpack.c.b16 %v3395, %v3379
    %v4388 = vpack.c.b16 %v3396, %v3380
    %v4389 = vpack.c.b16 %v3397, %v3381
    %v4390 = vpack.c.b16 %v3398, %v3382
    %v4391 = vpack.c.b16 %v3399, %v3383
    %v4392 = vpack.c.b16 %v3400, %v3384
    %v4393 = vpack.c.b16 %v3417, %v3401
    %v4394 = vpack.c.b16 %v3418, %v3402
    %v4395 = vpack.c.b16 %v3419, %v3403
    %v4396 = vpack.c.b16 %v3420, %v3404
    %v4397 = vpack.c.b16 %v3421, %v3405
    %v4398 = vpack.c.b16 %v3422, %v3406
    %v4399 = vpack.c.b16 %v3423, %v3407
    %v4400 = vpack.c.b16 %v3424, %v3408
    %v4401 = vpack.c.b16 %v3425, %v3409
    %v4402 = vpack.c.b16 %v3426, %v3410
    %v4403 = vpack.c.b16 %v3427, %v3411
    %v4404 = vpack.c.b16 %v3428, %v3412
    %v4405 = vpack.c.b16 %v3429, %v3413
    %v4406 = vpack.c.b16 %v3430, %v3414
    %v4407 = vpack.c.b16 %v3431, %v3415
    %v4408 = vpack.c.b16 %v3432, %v3416
    %v4409 = vpack.c.b16 %v3449, %v3433
    %v4410 = vpack.c.b16 %v3450, %v3434
    %v4411 = vpack.c.b16 %v3451, %v3435
    %v4412 = vpack.c.b16 %v3452, %v3436
    %v4413 = vpack.c.b16 %v3453, %v3437
    %v4414 = vpack.c.b16 %v3454, %v3438
    %v4415 = vpack.c.b16 %v3455, %v3439
    %v4416 = vpack.c.b16 %v3456, %v3440
    %v4417 = vpack.c.b16 %v3457, %v3441
    %v4418 = vpack.c.b16 %v3458, %v3442
    %v4419 = vpack.c.b16 %v3459, %v3443
    %v4420 = vpack.c.b16 %v3460, %v3444
    %v4421 = vpack.c.b16 %v3461, %v3445
    %v4422 = vpack.c.b16 %v3462, %v3446
    %v4423 = vpack.c.b16 %v3463, %v3447
    %v4424 = vpack.c.b16 %v3464, %v3448
    %v4425 = vpack.c.b16 %v3481, %v3465
    %v4426 = vpack.c.b16 %v3482, %v3466
    %v4427 = vpack.c.b16 %v3483, %v3467
    %v4428 = vpack.c.b16 %v3484, %v3468
    %v4429 = vpack.c.b16 %v3485, %v3469
    %v4430 = vpack.c.b16 %v3486, %v3470
    %v4431 = vpack.c.b16 %v3487, %v3471
    %v4432 = vpack.c.b16 %v3488, %v3472
    %v4433 = vpack.c.b16 %v3489, %v3473
    %v4434 = vpack.c.b16 %v3490, %v3474
    %v4435 = vpack.c.b16 %v3491, %v3475
    %v4436 = vpack.c.b16 %v3492, %v3476
    %v4437 = vpack.c.b16 %v3493, %v3477
    %v4438 = vpack.c.b16 %v3494, %v3478
    %v4439 = vpack.c.b16 %v3495, %v3479
    %v4440 = vpack.c.b16 %v3496, %v3480
    %v4441 = vpack.c.b16 %v3513, %v3497
    %v4442 = vpack.c.b16 %v3514, %v3498
    %v4443 = vpack.c.b16 %v3515, %v3499
    %v4444 = vpack.c.b16 %v3516, %v3500
    %v4445 = vpack.c.b16 %v3517, %v3501
    %v4446 = vpack.c.b16 %v3518, %v3502
    %v4447 = vpack.c.b16 %v3519, %v3503
    %v4448 = vpack.c.b16 %v3520, %v3504
    %v4449 = vpack.c.b16 %v3521, %v3505
    %v4450 = vpack.c.b16 %v3522, %v3506
    %v4451 = vpack.c.b16 %v3523, %v3507
    %v4452 = vpack.c.b16 %v3524, %v3508
    %v4453 = vpack.c.b16 %v3525, %v3509
    %v4454 = vpack.c.b16 %v3526, %v3510
    %v4455 = vpack.c.b16 %v3527, %v3511
    %v4456 = vpack.c.b16 %v3528, %v3512
    %v4457 = vpack.c.b16 %v3545, %v3529
    %v4458 = vpack.c.b16 %v3546, %v3530
    %v4459 = vpack.c.b16 %v3547, %v3531
    %v4460 = vpack.c.b16 %v3548, %v3532
    %v4461 = vpack.c.b16 %v3549, %v3533
    %v4462 = vpack.c.b16 %v3550, %v3534
    %v4463 = vpack.c.b16 %v3551, %v3535
    %v4464 = vpack.c.b16 %v3552, %v3536
    %v4465 = vpack.c.b16 %v3553, %v3537
    %v4466 = vpack.c.b16 %v3554, %v3538
    %v4467 = vpack.c.b16 %v3555, %v3539
    %v4468 = vpack.c.b16 %v3556, %v3540
    %v4469 = vpack.c.b16 %v3557, %v3541
    %v4470 = vpack.c.b16 %v3558, %v3542
    %v4471 = vpack.c.b16 %v3559, %v3543
    %v4472 = vpack.c.b16 %v3560, %v3544
    %v4473 = vpack.c.b16 %v3577, %v3561
    %v4474 = vpack.c.b16 %v3578, %v3562
    %v4475 = vpack.c.b16 %v3579, %v3563
    %v4476 = vpack.c.b16 %v3580, %v3564
    %v4477 = vpack.c.b16 %v3581, %v3565
    %v4478 = vpack.c.b16 %v3582, %v3566
    %v4479 = vpack.c.b16 %v3583, %v3567
    %v4480 = vpack.c.b16 %v3584, %v3568
    %v4481 = vpack.c.b16 %v3585, %v3569
    %v4482 = vpack.c.b16 %v3586, %v3570
    %v4483 = vpack.c.b16 %v3587, %v3571
    %v4484 = vpack.c.b16 %v3588, %v3572
    %v4485 = vpack.c.b16 %v3589, %v3573
    %v4486 = vpack.c.b16 %v3590, %v3574
    %v4487 = vpack.c.b16 %v3591, %v3575
    %v4488 = vpack.c.b16 %v3592, %v3576
    %v4489 = vpack.c.b16 %v3609, %v3593
    %v4490 = vpack.c.b16 %v3610, %v3594
    %v4491 = vpack.c.b16 %v3611, %v3595
    %v4492 = vpack.c.b16 %v3612, %v3596
    %v4493 = vpack.c.b16 %v3613, %v3597
    %v4494 = vpack.c.b16 %v3614, %v3598
    %v4495 = vpack.c.b16 %v3615, %v3599
    %v4496 = vpack.c.b16 %v3616, %v3600
    %v4497 = vpack.c.b16 %v3617, %v3601
    %v4498 = vpack.c.b16 %v3618, %v3602
    %v4499 = vpack.c.b16 %v3619, %v3603
    %v4500 = vpack.c.b16 %v3620, %v3604
    %v4501 = vpack.c.b16 %v3621, %v3605
    %v4502 = vpack.c.b16 %v3622, %v3606
    %v4503 = vpack.c.b16 %v3623, %v3607
    %v4504 = vpack.c.b16 %v3624, %v3608
    %v4505 = vpack.c.b16 %v3641, %v3625
    %v4506 = vpack.c.b16 %v3642, %v3626
    %v4507 = vpack.c.b16 %v3643, %v3627
    %v4508 = vpack.c.b16 %v3644, %v3628
    %v4509 = vpack.c.b16 %v3645, %v3629
    %v4510 = vpack.c.b16 %v3646, %v3630
    %v4511 = vpack.c.b16 %v3647, %v3631
    %v4512 = vpack.c.b16 %v3648, %v3632
    %v4513 = vpack.c.b16 %v3649, %v3633
    %v4514 = vpack.c.b16 %v3650, %v3634
    %v4515 = vpack.c.b16 %v3651, %v3635
    %v4516 = vpack.c.b16 %v3652, %v3636
    %v4517 = vpack.c.b16 %v3653, %v3637
    %v4518 = vpack.c.b16 %v3654, %v3638
    %v4519 = vpack.c.b16 %v3655, %v3639
    %v4520 = vpack.c.b16 %v3656, %v3640
    %v4521 = vpack.c.b16 %v3673, %v3657
    %v4522 = vpack.c.b16 %v3674, %v3658
    %v4523 = vpack.c.b16 %v3675, %v3659
    %v4524 = vpack.c.b16 %v3676, %v3660
    %v4525 = vpack.c.b16 %v3677, %v3661
    %v4526 = vpack.c.b16 %v3678, %v3662
    %v4527 = vpack.c.b16 %v3679, %v3663
    %v4528 = vpack.c.b16 %v3680, %v3664
    %v4529 = vpack.c.b16 %v3681, %v3665
    %v4530 = vpack.c.b16 %v3682, %v3666
    %v4531 = vpack.c.b16 %v3683, %v3667
    %v4532 = vpack.c.b16 %v3684, %v3668
    %v4533 = vpack.c.b16 %v3685, %v3669
    %v4534 = vpack.c.b16 %v3686, %v3670
    %v4535 = vpack.c.b16 %v3687, %v3671
    %v4536 = vpack.c.b16 %v3688, %v3672
    %v4537 = vpack.c.b16 %v3705, %v3689
    %v4538 = vpack.c.b16 %v3706, %v3690
    %v4539 = vpack.c.b16 %v3707, %v3691
    %v4540 = vpack.c.b16 %v3708, %v3692
    %v4541 = vpack.c.b16 %v3709, %v3693
    %v4542 = vpack.c.b16 %v3710, %v3694
    %v4543 = vpack.c.b16 %v3711, %v3695
    %v4544 = vpack.c.b16 %v3712, %v3696
    %v4545 = vpack.c.b16 %v3713, %v3697
    %v4546 = vpack.c.b16 %v3714, %v3698
    %v4547 = vpack.c.b16 %v3715, %v3699
    %v4548 = vpack.c.b16 %v3716, %v3700
    %v4549 = vpack.c.b16 %v3717, %v3701
    %v4550 = vpack.c.b16 %v3718, %v3702
    %v4551 = vpack.c.b16 %v3719, %v3703
    %v4552 = vpack.c.b16 %v3720, %v3704
    %v4553 = vpack.c.b16 %v3737, %v3721
    %v4554 = vpack.c.b16 %v3738, %v3722
    %v4555 = vpack.c.b16 %v3739, %v3723
    %v4556 = vpack.c.b16 %v3740, %v3724
    %v4557 = vpack.c.b16 %v3741, %v3725
    %v4558 = vpack.c.b16 %v3742, %v3726
    %v4559 = vpack.c.b16 %v3743, %v3727
    %v4560 = vpack.c.b16 %v3744, %v3728
    %v4561 = vpack.c.b16 %v3745, %v3729
    %v4562 = vpack.c.b16 %v3746, %v3730
    %v4563 = vpack.c.b16 %v3747, %v3731
    %v4564 = vpack.c.b16 %v3748, %v3732
    %v4565 = vpack.c.b16 %v3749, %v3733
    %v4566 = vpack.c.b16 %v3750, %v3734
    %v4567 = vpack.c.b16 %v3751, %v3735
    %v4568 = vpack.c.b16 %v3752, %v3736
    %v4569 = vpack.c.b16 %v3769, %v3753
    %v4570 = vpack.c.b16 %v3770, %v3754
    %v4571 = vpack.c.b16 %v3771, %v3755
    %v4572 = vpack.c.b16 %v3772, %v3756
    %v4573 = vpack.c.b16 %v3773, %v3757
    %v4574 = vpack.c.b16 %v3774, %v3758
    %v4575 = vpack.c.b16 %v3775, %v3759
    %v4576 = vpack.c.b16 %v3776, %v3760
    %v4577 = vpack.c.b16 %v3777, %v3761
    %v4578 = vpack.c.b16 %v3778, %v3762
    %v4579 = vpack.c.b16 %v3779, %v3763
    %v4580 = vpack.c.b16 %v3780, %v3764
    %v4581 = vpack.c.b16 %v3781, %v3765
    %v4582 = vpack.c.b16 %v3782, %v3766
    %v4583 = vpack.c.b16 %v3783, %v3767
    %v4584 = vpack.c.b16 %v3784, %v3768
    %v4585 = vpack.c.b16 %v3801, %v3785
    %v4586 = vpack.c.b16 %v3802, %v3786
    %v4587 = vpack.c.b16 %v3803, %v3787
    %v4588 = vpack.c.b16 %v3804, %v3788
    %v4589 = vpack.c.b16 %v3805, %v3789
    %v4590 = vpack.c.b16 %v3806, %v3790
    %v4591 = vpack.c.b16 %v3807, %v3791
    %v4592 = vpack.c.b16 %v3808, %v3792
    %v4593 = vpack.c.b16 %v3809, %v3793
    %v4594 = vpack.c.b16 %v3810, %v3794
    %v4595 = vpack.c.b16 %v3811, %v3795
    %v4596 = vpack.c.b16 %v3812, %v3796
    %v4597 = vpack.c.b16 %v3813, %v3797
    %v4598 = vpack.c.b16 %v3814, %v3798
    %v4599 = vpack.c.b16 %v3815, %v3799
    %v4600 = vpack.c.b16 %v3816, %v3800
    %v4601 = vpack.c.b16 %v3833, %v3817
    %v4602 = vpack.c.b16 %v3834, %v3818
    %v4603 = vpack.c.b16 %v3835, %v3819
    %v4604 = vpack.c.b16 %v3836, %v3820
    %v4605 = vpack.c.b16 %v3837, %v3821
    %v4606 = vpack.c.b16 %v3838, %v3822
    %v4607 = vpack.c.b16 %v3839, %v3823
    %v4608 = vpack.c.b16 %v3840, %v3824
    %v4609 = vpack.c.b16 %v3841, %v3825
    %v4610 = vpack.c.b16 %v3842, %v3826
    %v4611 = vpack.c.b16 %v3843, %v3827
    %v4612 = vpack.c.b16 %v3844, %v3828
    %v4613 = vpack.c.b16 %v3845, %v3829
    %v4614 = vpack.c.b16 %v3846, %v3830
    %v4615 = vpack.c.b16 %v3847, %v3831
    %v4616 = vpack.c.b16 %v3848, %v3832
    %v4617 = vpack.c.b16 %v3865, %v3849
    %v4618 = vpack.c.b16 %v3866, %v3850
    %v4619 = vpack.c.b16 %v3867, %v3851
    %v4620 = vpack.c.b16 %v3868, %v3852
    %v4621 = vpack.c.b16 %v3869, %v3853
    %v4622 = vpack.c.b16 %v3870, %v3854
    %v4623 = vpack.c.b16 %v3871, %v3855
    %v4624 = vpack.c.b16 %v3872, %v3856
    %v4625 = vpack.c.b16 %v3873, %v3857
    %v4626 = vpack.c.b16 %v3874, %v3858
    %v4627 = vpack.c.b16 %v3875, %v3859
    %v4628 = vpack.c.b16 %v3876, %v3860
    %v4629 = vpack.c.b16 %v3877, %v3861
    %v4630 = vpack.c.b16 %v3878, %v3862
    %v4631 = vpack.c.b16 %v3879, %v3863
    %v4632 = vpack.c.b16 %v3880, %v3864
    %v4633 = vpack.c.b16 %v3897, %v3881
    %v4634 = vpack.c.b16 %v3898, %v3882
    %v4635 = vpack.c.b16 %v3899, %v3883
    %v4636 = vpack.c.b16 %v3900, %v3884
    %v4637 = vpack.c.b16 %v3901, %v3885
    %v4638 = vpack.c.b16 %v3902, %v3886
    %v4639 = vpack.c.b16 %v3903, %v3887
    %v4640 = vpack.c.b16 %v3904, %v3888
    %v4641 = vpack.c.b16 %v3905, %v3889
    %v4642 = vpack.c.b16 %v3906, %v3890
    %v4643 = vpack.c.b16 %v3907, %v3891
    %v4644 = vpack.c.b16 %v3908, %v3892
    %v4645 = vpack.c.b16 %v3909, %v3893
    %v4646 = vpack.c.b16 %v3910, %v3894
    %v4647 = vpack.c.b16 %v3911, %v3895
    %v4648 = vpack.c.b16 %v3912, %v3896
    %v4649 = vpack.c.b16 %v3929, %v3913
    %v4650 = vpack.c.b16 %v3930, %v3914
    %v4651 = vpack.c.b16 %v3931, %v3915
    %v4652 = vpack.c.b16 %v3932, %v3916
    %v4653 = vpack.c.b16 %v3933, %v3917
    %v4654 = vpack.c.b16 %v3934, %v3918
    %v4655 = vpack.c.b16 %v3935, %v3919
    %v4656 = vpack.c.b16 %v3936, %v3920
    %v4657 = vpack.c.b16 %v3937, %v3921
    %v4658 = vpack.c.b16 %v3938, %v3922
    %v4659 = vpack.c.b16 %v3939, %v3923
    %v4660 = vpack.c.b16 %v3940, %v3924
    %v4661 = vpack.c.b16 %v3941, %v3925
    %v4662 = vpack.c.b16 %v3942, %v3926
    %v4663 = vpack.c.b16 %v3943, %v3927
    %v4664 = vpack.c.b16 %v3944, %v3928
    %v4665 = vpack.c.b16 %v3961, %v3945
    %v4666 = vpack.c.b16 %v3962, %v3946
    %v4667 = vpack.c.b16 %v3963, %v3947
    %v4668 = vpack.c.b16 %v3964, %v3948
    %v4669 = vpack.c.b16 %v3965, %v3949
    %v4670 = vpack.c.b16 %v3966, %v3950
    %v4671 = vpack.c.b16 %v3967, %v3951
    %v4672 = vpack.c.b16 %v3968, %v3952
    %v4673 = vpack.c.b16 %v3969, %v3953
    %v4674 = vpack.c.b16 %v3970, %v3954
    %v4675 = vpack.c.b16 %v3971, %v3955
    %v4676 = vpack.c.b16 %v3972, %v3956
    %v4677 = vpack.c.b16 %v3973, %v3957
    %v4678 = vpack.c.b16 %v3974, %v3958
    %v4679 = vpack.c.b16 %v3975, %v3959
    %v4680 = vpack.c.b16 %v3976, %v3960
    %v4681 = vpack.c.b16 %v3993, %v3977
    %v4682 = vpack.c.b16 %v3994, %v3978
    %v4683 = vpack.c.b16 %v3995, %v3979
    %v4684 = vpack.c.b16 %v3996, %v3980
    %v4685 = vpack.c.b16 %v3997, %v3981
    %v4686 = vpack.c.b16 %v3998, %v3982
    %v4687 = vpack.c.b16 %v3999, %v3983
    %v4688 = vpack.c.b16 %v4000, %v3984
    %v4689 = vpack.c.b16 %v4001, %v3985
    %v4690 = vpack.c.b16 %v4002, %v3986
    %v4691 = vpack.c.b16 %v4003, %v3987
    %v4692 = vpack.c.b16 %v4004, %v3988
    %v4693 = vpack.c.b16 %v4005, %v3989
    %v4694 = vpack.c.b16 %v4006, %v3990
    %v4695 = vpack.c.b16 %v4007, %v3991
    %v4696 = vpack.c.b16 %v4008, %v3992
    %v4697 = vpack.c.b16 %v4025, %v4009
    %v4698 = vpack.c.b16 %v4026, %v4010
    %v4699 = vpack.c.b16 %v4027, %v4011
    %v4700 = vpack.c.b16 %v4028, %v4012
    %v4701 = vpack.c.b16 %v4029, %v4013
    %v4702 = vpack.c.b16 %v4030, %v4014
    %v4703 = vpack.c.b16 %v4031, %v4015
    %v4704 = vpack.c.b16 %v4032, %v4016
    %v4705 = vpack.c.b16 %v4033, %v4017
    %v4706 = vpack.c.b16 %v4034, %v4018
    %v4707 = vpack.c.b16 %v4035, %v4019
    %v4708 = vpack.c.b16 %v4036, %v4020
    %v4709 = vpack.c.b16 %v4037, %v4021
    %v4710 = vpack.c.b16 %v4038, %v4022
    %v4711 = vpack.c.b16 %v4039, %v4023
    %v4712 = vpack.c.b16 %v4040, %v4024
    %v4713 = vpack.c.b16 %v4057, %v4041
    %v4714 = vpack.c.b16 %v4058, %v4042
    %v4715 = vpack.c.b16 %v4059, %v4043
    %v4716 = vpack.c.b16 %v4060, %v4044
    %v4717 = vpack.c.b16 %v4061, %v4045
    %v4718 = vpack.c.b16 %v4062, %v4046
    %v4719 = vpack.c.b16 %v4063, %v4047
    %v4720 = vpack.c.b16 %v4064, %v4048
    %v4721 = vpack.c.b16 %v4065, %v4049
    %v4722 = vpack.c.b16 %v4066, %v4050
    %v4723 = vpack.c.b16 %v4067, %v4051
    %v4724 = vpack.c.b16 %v4068, %v4052
    %v4725 = vpack.c.b16 %v4069, %v4053
    %v4726 = vpack.c.b16 %v4070, %v4054
    %v4727 = vpack.c.b16 %v4071, %v4055
    %v4728 = vpack.c.b16 %v4072, %v4056
    %v4729 = vpack.c.b16 %v4089, %v4073
    %v4730 = vpack.c.b16 %v4090, %v4074
    %v4731 = vpack.c.b16 %v4091, %v4075
    %v4732 = vpack.c.b16 %v4092, %v4076
    %v4733 = vpack.c.b16 %v4093, %v4077
    %v4734 = vpack.c.b16 %v4094, %v4078
    %v4735 = vpack.c.b16 %v4095, %v4079
    %v4736 = vpack.c.b16 %v4096, %v4080
    %v4737 = vpack.c.b16 %v4097, %v4081
    %v4738 = vpack.c.b16 %v4098, %v4082
    %v4739 = vpack.c.b16 %v4099, %v4083
    %v4740 = vpack.c.b16 %v4100, %v4084
    %v4741 = vpack.c.b16 %v4101, %v4085
    %v4742 = vpack.c.b16 %v4102, %v4086
    %v4743 = vpack.c.b16 %v4103, %v4087
    %v4744 = vpack.c.b16 %v4104, %v4088
    %v4745 = vpack.c.b16 %v4121, %v4105
    %v4746 = vpack.c.b16 %v4122, %v4106
    %v4747 = vpack.c.b16 %v4123, %v4107
    %v4748 = vpack.c.b16 %v4124, %v4108
    %v4749 = vpack.c.b16 %v4125, %v4109
    %v4750 = vpack.c.b16 %v4126, %v4110
    %v4751 = vpack.c.b16 %v4127, %v4111
    %v4752 = vpack.c.b16 %v4128, %v4112
    %v4753 = vpack.c.b16 %v4129, %v4113
    %v4754 = vpack.c.b16 %v4130, %v4114
    %v4755 = vpack.c.b16 %v4131, %v4115
    %v4756 = vpack.c.b16 %v4132, %v4116
    %v4757 = vpack.c.b16 %v4133, %v4117
    %v4758 = vpack.c.b16 %v4134, %v4118
    %v4759 = vpack.c.b16 %v4135, %v4119
    %v4760 = vpack.c.b16 %v4136, %v4120
    %v4761 = vpack.c.b16 %v4153, %v4137
    %v4762 = vpack.c.b16 %v4154, %v4138
    %v4763 = vpack.c.b16 %v4155, %v4139
    %v4764 = vpack.c.b16 %v4156, %v4140
    %v4765 = vpack.c.b16 %v4157, %v4141
    %v4766 = vpack.c.b16 %v4158, %v4142
    %v4767 = vpack.c.b16 %v4159, %v4143
    %v4768 = vpack.c.b16 %v4160, %v4144
    %v4769 = vpack.c.b16 %v4161, %v4145
    %v4770 = vpack.c.b16 %v4162, %v4146
    %v4771 = vpack.c.b16 %v4163, %v4147
    %v4772 = vpack.c.b16 %v4164, %v4148
    %v4773 = vpack.c.b16 %v4165, %v4149
    %v4774 = vpack.c.b16 %v4166, %v4150
    %v4775 = vpack.c.b16 %v4167, %v4151
    %v4776 = vpack.c.b16 %v4168, %v4152
    %v4777 = vpack.c.b16 %v4185, %v4169
    %v4778 = vpack.c.b16 %v4186, %v4170
    %v4779 = vpack.c.b16 %v4187, %v4171
    %v4780 = vpack.c.b16 %v4188, %v4172
    %v4781 = vpack.c.b16 %v4189, %v4173
    %v4782 = vpack.c.b16 %v4190, %v4174
    %v4783 = vpack.c.b16 %v4191, %v4175
    %v4784 = vpack.c.b16 %v4192, %v4176
    %v4785 = vpack.c.b16 %v4193, %v4177
    %v4786 = vpack.c.b16 %v4194, %v4178
    %v4787 = vpack.c.b16 %v4195, %v4179
    %v4788 = vpack.c.b16 %v4196, %v4180
    %v4789 = vpack.c.b16 %v4197, %v4181
    %v4790 = vpack.c.b16 %v4198, %v4182
    %v4791 = vpack.c.b16 %v4199, %v4183
    %v4792 = vpack.c.b16 %v4200, %v4184
    %v4793 = vpack.c.b16 %v4217, %v4201
    %v4794 = vpack.c.b16 %v4218, %v4202
    %v4795 = vpack.c.b16 %v4219, %v4203
    %v4796 = vpack.c.b16 %v4220, %v4204
    %v4797 = vpack.c.b16 %v4221, %v4205
    %v4798 = vpack.c.b16 %v4222, %v4206
    %v4799 = vpack.c.b16 %v4223, %v4207
    %v4800 = vpack.c.b16 %v4224, %v4208
    %v4801 = vpack.c.b16 %v4225, %v4209
    %v4802 = vpack.c.b16 %v4226, %v4210
    %v4803 = vpack.c.b16 %v4227, %v4211
    %v4804 = vpack.c.b16 %v4228, %v4212
    %v4805 = vpack.c.b16 %v4229, %v4213
    %v4806 = vpack.c.b16 %v4230, %v4214
    %v4807 = vpack.c.b16 %v4231, %v4215
    %v4808 = vpack.c.b16 %v4232, %v4216
    %v4809 = vpack.c.b16 %v4249, %v4233
    %v4810 = vpack.c.b16 %v4250, %v4234
    %v4811 = vpack.c.b16 %v4251, %v4235
    %v4812 = vpack.c.b16 %v4252, %v4236
    %v4813 = vpack.c.b16 %v4253, %v4237
    %v4814 = vpack.c.b16 %v4254, %v4238
    %v4815 = vpack.c.b16 %v4255, %v4239
    %v4816 = vpack.c.b16 %v4256, %v4240
    %v4817 = vpack.c.b16 %v4257, %v4241
    %v4818 = vpack.c.b16 %v4258, %v4242
    %v4819 = vpack.c.b16 %v4259, %v4243
    %v4820 = vpack.c.b16 %v4260, %v4244
    %v4821 = vpack.c.b16 %v4261, %v4245
    %v4822 = vpack.c.b16 %v4262, %v4246
    %v4823 = vpack.c.b16 %v4263, %v4247
    %v4824 = vpack.c.b16 %v4264, %v4248
    %v4825 = vpack.c.b16 %v4281, %v4265
    %v4826 = vpack.c.b16 %v4282, %v4266
    %v4827 = vpack.c.b16 %v4283, %v4267
    %v4828 = vpack.c.b16 %v4284, %v4268
    %v4829 = vpack.c.b16 %v4285, %v4269
    %v4830 = vpack.c.b16 %v4286, %v4270
    %v4831 = vpack.c.b16 %v4287, %v4271
    %v4832 = vpack.c.b16 %v4288, %v4272
    %v4833 = vpack.c.b16 %v4289, %v4273
    %v4834 = vpack.c.b16 %v4290, %v4274
    %v4835 = vpack.c.b16 %v4291, %v4275
    %v4836 = vpack.c.b16 %v4292, %v4276
    %v4837 = vpack.c.b16 %v4293, %v4277
    %v4838 = vpack.c.b16 %v4294, %v4278
    %v4839 = vpack.c.b16 %v4295, %v4279
    %v4840 = vpack.c.b16 %v4296, %v4280
    %v4841 = vpack.c.b16 %v4313, %v4297
    %v4842 = vpack.c.b16 %v4314, %v4298
    %v4843 = vpack.c.b16 %v4315, %v4299
    %v4844 = vpack.c.b16 %v4316, %v4300
    %v4845 = vpack.c.b16 %v4317, %v4301
    %v4846 = vpack.c.b16 %v4318, %v4302
    %v4847 = vpack.c.b16 %v4319, %v4303
    %v4848 = vpack.c.b16 %v4320, %v4304
    %v4849 = vpack.c.b16 %v4321, %v4305
    %v4850 = vpack.c.b16 %v4322, %v4306
    %v4851 = vpack.c.b16 %v4323, %v4307
    %v4852 = vpack.c.b16 %v4324, %v4308
    %v4853 = vpack.c.b16 %v4325, %v4309
    %v4854 = vpack.c.b16 %v4326, %v4310
    %v4855 = vpack.c.b16 %v4327, %v4311
    %v4856 = vpack.c.b16 %v4328, %v4312
    %v4857 = vpack.c.b16 %v4345, %v4329
    %v4858 = vpack.c.b16 %v4346, %v4330
    %v4859 = vpack.c.b16 %v4347, %v4331
    %v4860 = vpack.c.b16 %v4348, %v4332
    %v4861 = vpack.c.b16 %v4349, %v4333
    %v4862 = vpack.c.b16 %v4350, %v4334
    %v4863 = vpack.c.b16 %v4351, %v4335
    %v4864 = vpack.c.b16 %v4352, %v4336
    %v4865 = vpack.c.b16 %v4353, %v4337
    %v4866 = vpack.c.b16 %v4354, %v4338
    %v4867 = vpack.c.b16 %v4355, %v4339
    %v4868 = vpack.c.b16 %v4356, %v4340
    %v4869 = vpack.c.b16 %v4357, %v4341
    %v4870 = vpack.c.b16 %v4358, %v4342
    %v4871 = vpack.c.b16 %v4359, %v4343
    %v4872 = vpack.c.b16 %v4360, %v4344
    %5385 = vmatprep.subr.bf16.mxu0 %v4362
    %5386 = vmatpush1.bf16.msra.mxu0 %v4361
    %5387 = vmatprep.subr.bf16.mxu0 %v4378
    %5388 = vmatpush1.bf16.msra.mxu0 %v4377
    %5389 = vmatprep.subr.bf16.mxu0 %v4394
    %5390 = vmatpush1.bf16.msra.mxu0 %v4393
    %5391 = vmatprep.subr.bf16.mxu0 %v4410
    %5392 = vmatpush1.bf16.msra.mxu0 %v4409
    %5393 = vmatprep.subr.bf16.mxu0 %v4426
    %5394 = vmatpush1.bf16.msra.mxu0 %v4425
    %5395 = vmatprep.subr.bf16.mxu0 %v4442
    %5396 = vmatpush1.bf16.msra.mxu0 %v4441
    %5397 = vmatprep.subr.bf16.mxu0 %v4458
    %5398 = vmatpush1.bf16.msra.mxu0 %v4457
    %5399 = vmatprep.subr.bf16.mxu0 %v4474
    %5400 = vmatpush1.bf16.msra.mxu0 %v4473
    %5401 = vmatprep.subr.bf16.mxu0 %v4490
    %5402 = vmatpush1.bf16.msra.mxu0 %v4489
    %5403 = vmatprep.subr.bf16.mxu0 %v4506
    %5404 = vmatpush1.bf16.msra.mxu0 %v4505
    %5405 = vmatprep.subr.bf16.mxu0 %v4522
    %5406 = vmatpush1.bf16.msra.mxu0 %v4521
    %5407 = vmatprep.subr.bf16.mxu0 %v4538
    %5408 = vmatpush1.bf16.msra.mxu0 %v4537
    %5409 = vmatprep.subr.bf16.mxu0 %v4554
    %5410 = vmatpush1.bf16.msra.mxu0 %v4553
    %5411 = vmatprep.subr.bf16.mxu0 %v4570
    %5412 = vmatpush1.bf16.msra.mxu0 %v4569
    %5413 = vmatprep.subr.bf16.mxu0 %v4586
    %5414 = vmatpush1.bf16.msra.mxu0 %v4585
    %5415 = vmatprep.subr.bf16.mxu0 %v4602
    %5416 = vmatpush1.bf16.msra.mxu0 %v4601
    %5417 = vmatprep.mubr.bf16.mxu0 %v2310
    %5418 = vmatmul.mubr.bf16.gmra.mrb[0].mxu0 %v2309
    %v5419 = vpop.f32.mrb[0].mxu0
    %v5420 = vadd.f32 0.0, %v5419
    %v5421 = vpop.f32.mrb[0].mxu0
    %v5422 = vadd.f32 0.0, %v5421
    %v5423 = vpop.f32.mrb[0].mxu0
    %v5424 = vadd.f32 0.0, %v5423
    %v5425 = vpop.f32.mrb[0].mxu0
    %v5426 = vadd.f32 0.0, %v5425
    %5427 = vdwg.mxu0
    %5428 = vmatprep.subr.bf16.mxu0 %v4618
    %5429 = vmatpush1.bf16.msra.mxu0 %v4617
    %5430 = vmatprep.subr.bf16.mxu0 %v4634
    %5431 = vmatpush1.bf16.msra.mxu0 %v4633
    %5432 = vmatprep.subr.bf16.mxu0 %v4650
    %5433 = vmatpush1.bf16.msra.mxu0 %v4649
    %5434 = vmatprep.subr.bf16.mxu0 %v4666
    %5435 = vmatpush1.bf16.msra.mxu0 %v4665
    %5436 = vmatprep.subr.bf16.mxu0 %v4682
    %5437 = vmatpush1.bf16.msra.mxu0 %v4681
    %5438 = vmatprep.subr.bf16.mxu0 %v4698
    %5439 = vmatpush1.bf16.msra.mxu0 %v4697
    %5440 = vmatprep.subr.bf16.mxu0 %v4714
    %5441 = vmatpush1.bf16.msra.mxu0 %v4713
    %5442 = vmatprep.subr.bf16.mxu0 %v4730
    %5443 = vmatpush1.bf16.msra.mxu0 %v4729
    %5444 = vmatprep.subr.bf16.mxu0 %v4746
    %5445 = vmatpush1.bf16.msra.mxu0 %v4745
    %5446 = vmatprep.subr.bf16.mxu0 %v4762
    %5447 = vmatpush1.bf16.msra.mxu0 %v4761
    %5448 = vmatprep.subr.bf16.mxu0 %v4778
    %5449 = vmatpush1.bf16.msra.mxu0 %v4777
    %5450 = vmatprep.subr.bf16.mxu0 %v4794
    %5451 = vmatpush1.bf16.msra.mxu0 %v4793
    %5452 = vmatprep.subr.bf16.mxu0 %v4810
    %5453 = vmatpush1.bf16.msra.mxu0 %v4809
    %5454 = vmatprep.subr.bf16.mxu0 %v4826
    %5455 = vmatpush1.bf16.msra.mxu0 %v4825
    %5456 = vmatprep.subr.bf16.mxu0 %v4842
    %5457 = vmatpush1.bf16.msra.mxu0 %v4841
    %5458 = vmatprep.subr.bf16.mxu0 %v4858
    %5459 = vmatpush1.bf16.msra.mxu0 %v4857
    %5460 = vmatprep.mubr.bf16.mxu0 %v2312
    %5461 = vmatmul.mubr.bf16.gmra.mrb[0].mxu0 %v2311
    %v5462 = vpop.f32.mrb[0].mxu0
    %v5463 = vadd.f32 %v5420, %v5462
    %v5464 = vpop.f32.mrb[0].mxu0
    %v5465 = vadd.f32 %v5422, %v5464
    %v5466 = vpop.f32.mrb[0].mxu0
    %v5467 = vadd.f32 %v5424, %v5466
    %v5468 = vpop.f32.mrb[0].mxu0
    %v5469 = vadd.f32 %v5426, %v5468
    %5470 = vdwg.mxu0
    %5471 = vmatprep.subr.bf16.mxu0 %v4364
    %5472 = vmatpush1.bf16.msra.mxu0 %v4363
    %5473 = vmatprep.subr.bf16.mxu0 %v4380
    %5474 = vmatpush1.bf16.msra.mxu0 %v4379
    %5475 = vmatprep.subr.bf16.mxu0 %v4396
    %5476 = vmatpush1.bf16.msra.mxu0 %v4395
    %5477 = vmatprep.subr.bf16.mxu0 %v4412
    %5478 = vmatpush1.bf16.msra.mxu0 %v4411
    %5479 = vmatprep.subr.bf16.mxu0 %v4428
    %5480 = vmatpush1.bf16.msra.mxu0 %v4427
    %5481 = vmatprep.subr.bf16.mxu0 %v4444
    %5482 = vmatpush1.bf16.msra.mxu0 %v4443
    %5483 = vmatprep.subr.bf16.mxu0 %v4460
    %5484 = vmatpush1.bf16.msra.mxu0 %v4459
    %5485 = vmatprep.subr.bf16.mxu0 %v4476
    %5486 = vmatpush1.bf16.msra.mxu0 %v4475
    %5487 = vmatprep.subr.bf16.mxu0 %v4492
    %5488 = vmatpush1.bf16.msra.mxu0 %v4491
    %5489 = vmatprep.subr.bf16.mxu0 %v4508
    %5490 = vmatpush1.bf16.msra.mxu0 %v4507
    %5491 = vmatprep.subr.bf16.mxu0 %v4524
    %5492 = vmatpush1.bf16.msra.mxu0 %v4523
    %5493 = vmatprep.subr.bf16.mxu0 %v4540
    %5494 = vmatpush1.bf16.msra.mxu0 %v4539
    %5495 = vmatprep.subr.bf16.mxu0 %v4556
    %5496 = vmatpush1.bf16.msra.mxu0 %v4555
    %5497 = vmatprep.subr.bf16.mxu0 %v4572
    %5498 = vmatpush1.bf16.msra.mxu0 %v4571
    %5499 = vmatprep.subr.bf16.mxu0 %v4588
    %5500 = vmatpush1.bf16.msra.mxu0 %v4587
    %5501 = vmatprep.subr.bf16.mxu0 %v4604
    %5502 = vmatpush1.bf16.msra.mxu0 %v4603
    %5503 = vmatprep.mubr.bf16.mxu0 %v2310
    %5504 = vmatmul.mubr.bf16.gmra.mrb[0].mxu0 %v2309
    %v5505 = vpop.f32.mrb[0].mxu0
    %v5506 = vadd.f32 0.0, %v5505
    %v5507 = vpop.f32.mrb[0].mxu0
    %v5508 = vadd.f32 0.0, %v5507
    %v5509 = vpop.f32.mrb[0].mxu0
    %v5510 = vadd.f32 0.0, %v5509
    %v5511 = vpop.f32.mrb[0].mxu0
    %v5512 = vadd.f32 0.0, %v5511
    %5513 = vdwg.mxu0
    %5514 = vmatprep.subr.bf16.mxu0 %v4620
    %5515 = vmatpush1.bf16.msra.mxu0 %v4619
    %5516 = vmatprep.subr.bf16.mxu0 %v4636
    %5517 = vmatpush1.bf16.msra.mxu0 %v4635
    %5518 = vmatprep.subr.bf16.mxu0 %v4652
    %5519 = vmatpush1.bf16.msra.mxu0 %v4651
    %5520 = vmatprep.subr.bf16.mxu0 %v4668
    %5521 = vmatpush1.bf16.msra.mxu0 %v4667
    %5522 = vmatprep.subr.bf16.mxu0 %v4684
    %5523 = vmatpush1.bf16.msra.mxu0 %v4683
    %5524 = vmatprep.subr.bf16.mxu0 %v4700
    %5525 = vmatpush1.bf16.msra.mxu0 %v4699
    %5526 = vmatprep.subr.bf16.mxu0 %v4716
    %5527 = vmatpush1.bf16.msra.mxu0 %v4715
    %5528 = vmatprep.subr.bf16.mxu0 %v4732
    %5529 = vmatpush1.bf16.msra.mxu0 %v4731
    %5530 = vmatprep.subr.bf16.mxu0 %v4748
    %5531 = vmatpush1.bf16.msra.mxu0 %v4747
    %5532 = vmatprep.subr.bf16.mxu0 %v4764
    %5533 = vmatpush1.bf16.msra.mxu0 %v4763
    %5534 = vmatprep.subr.bf16.mxu0 %v4780
    %5535 = vmatpush1.bf16.msra.mxu0 %v4779
    %5536 = vmatprep.subr.bf16.mxu0 %v4796
    %5537 = vmatpush1.bf16.msra.mxu0 %v4795
    %5538 = vmatprep.subr.bf16.mxu0 %v4812
    %5539 = vmatpush1.bf16.msra.mxu0 %v4811
    %5540 = vmatprep.subr.bf16.mxu0 %v4828
    %5541 = vmatpush1.bf16.msra.mxu0 %v4827
    %5542 = vmatprep.subr.bf16.mxu0 %v4844
    %5543 = vmatpush1.bf16.msra.mxu0 %v4843
    %5544 = vmatprep.subr.bf16.mxu0 %v4860
    %5545 = vmatpush1.bf16.msra.mxu0 %v4859
    %5546 = vmatprep.mubr.bf16.mxu0 %v2312
    %5547 = vmatmul.mubr.bf16.gmra.mrb[0].mxu0 %v2311
    %v5548 = vpop.f32.mrb[0].mxu0
    %v5549 = vadd.f32 %v5506, %v5548
    %v5550 = vpop.f32.mrb[0].mxu0
    %v5551 = vadd.f32 %v5508, %v5550
    %v5552 = vpop.f32.mrb[0].mxu0
    %v5553 = vadd.f32 %v5510, %v5552
    %v5554 = vpop.f32.mrb[0].mxu0
    %v5555 = vadd.f32 %v5512, %v5554
    %5556 = vdwg.mxu0
    %5557 = vmatprep.subr.bf16.mxu0 %v4366
    %5558 = vmatpush1.bf16.msra.mxu0 %v4365
    %5559 = vmatprep.subr.bf16.mxu0 %v4382
    %5560 = vmatpush1.bf16.msra.mxu0 %v4381
    %5561 = vmatprep.subr.bf16.mxu0 %v4398
    %5562 = vmatpush1.bf16.msra.mxu0 %v4397
    %5563 = vmatprep.subr.bf16.mxu0 %v4414
    %5564 = vmatpush1.bf16.msra.mxu0 %v4413
    %5565 = vmatprep.subr.bf16.mxu0 %v4430
    %5566 = vmatpush1.bf16.msra.mxu0 %v4429
    %5567 = vmatprep.subr.bf16.mxu0 %v4446
    %5568 = vmatpush1.bf16.msra.mxu0 %v4445
    %5569 = vmatprep.subr.bf16.mxu0 %v4462
    %5570 = vmatpush1.bf16.msra.mxu0 %v4461
    %5571 = vmatprep.subr.bf16.mxu0 %v4478
    %5572 = vmatpush1.bf16.msra.mxu0 %v4477
    %5573 = vmatprep.subr.bf16.mxu0 %v4494
    %5574 = vmatpush1.bf16.msra.mxu0 %v4493
    %5575 = vmatprep.subr.bf16.mxu0 %v4510
    %5576 = vmatpush1.bf16.msra.mxu0 %v4509
    %5577 = vmatprep.subr.bf16.mxu0 %v4526
    %5578 = vmatpush1.bf16.msra.mxu0 %v4525
    %5579 = vmatprep.subr.bf16.mxu0 %v4542
    %5580 = vmatpush1.bf16.msra.mxu0 %v4541
    %5581 = vmatprep.subr.bf16.mxu0 %v4558
    %5582 = vmatpush1.bf16.msra.mxu0 %v4557
    %5583 = vmatprep.subr.bf16.mxu0 %v4574
    %5584 = vmatpush1.bf16.msra.mxu0 %v4573
    %5585 = vmatprep.subr.bf16.mxu0 %v4590
    %5586 = vmatpush1.bf16.msra.mxu0 %v4589
    %5587 = vmatprep.subr.bf16.mxu0 %v4606
    %5588 = vmatpush1.bf16.msra.mxu0 %v4605
    %5589 = vmatprep.mubr.bf16.mxu0 %v2310
    %5590 = vmatmul.mubr.bf16.gmra.mrb[0].mxu0 %v2309
    %v5591 = vpop.f32.mrb[0].mxu0
    %v5592 = vadd.f32 0.0, %v5591
    %v5593 = vpop.f32.mrb[0].mxu0
    %v5594 = vadd.f32 0.0, %v5593
    %v5595 = vpop.f32.mrb[0].mxu0
    %v5596 = vadd.f32 0.0, %v5595
    %v5597 = vpop.f32.mrb[0].mxu0
    %v5598 = vadd.f32 0.0, %v5597
    %5599 = vdwg.mxu0
    %5600 = vmatprep.subr.bf16.mxu0 %v4622
    %5601 = vmatpush1.bf16.msra.mxu0 %v4621
    %5602 = vmatprep.subr.bf16.mxu0 %v4638
    %5603 = vmatpush1.bf16.msra.mxu0 %v4637
    %5604 = vmatprep.subr.bf16.mxu0 %v4654
    %5605 = vmatpush1.bf16.msra.mxu0 %v4653
    %5606 = vmatprep.subr.bf16.mxu0 %v4670
    %5607 = vmatpush1.bf16.msra.mxu0 %v4669
    %5608 = vmatprep.subr.bf16.mxu0 %v4686
    %5609 = vmatpush1.bf16.msra.mxu0 %v4685
    %5610 = vmatprep.subr.bf16.mxu0 %v4702
    %5611 = vmatpush1.bf16.msra.mxu0 %v4701
    %5612 = vmatprep.subr.bf16.mxu0 %v4718
    %5613 = vmatpush1.bf16.msra.mxu0 %v4717
    %5614 = vmatprep.subr.bf16.mxu0 %v4734
    %5615 = vmatpush1.bf16.msra.mxu0 %v4733
    %5616 = vmatprep.subr.bf16.mxu0 %v4750
    %5617 = vmatpush1.bf16.msra.mxu0 %v4749
    %5618 = vmatprep.subr.bf16.mxu0 %v4766
    %5619 = vmatpush1.bf16.msra.mxu0 %v4765
    %5620 = vmatprep.subr.bf16.mxu0 %v4782
    %5621 = vmatpush1.bf16.msra.mxu0 %v4781
    %5622 = vmatprep.subr.bf16.mxu0 %v4798
    %5623 = vmatpush1.bf16.msra.mxu0 %v4797
    %5624 = vmatprep.subr.bf16.mxu0 %v4814
    %5625 = vmatpush1.bf16.msra.mxu0 %v4813
    %5626 = vmatprep.subr.bf16.mxu0 %v4830
    %5627 = vmatpush1.bf16.msra.mxu0 %v4829
    %5628 = vmatprep.subr.bf16.mxu0 %v4846
    %5629 = vmatpush1.bf16.msra.mxu0 %v4845
    %5630 = vmatprep.subr.bf16.mxu0 %v4862
    %5631 = vmatpush1.bf16.msra.mxu0 %v4861
    %5632 = vmatprep.mubr.bf16.mxu0 %v2312
    %5633 = vmatmul.mubr.bf16.gmra.mrb[0].mxu0 %v2311
    %v5634 = vpop.f32.mrb[0].mxu0
    %v5635 = vadd.f32 %v5592, %v5634
    %v5636 = vpop.f32.mrb[0].mxu0
    %v5637 = vadd.f32 %v5594, %v5636
    %v5638 = vpop.f32.mrb[0].mxu0
    %v5639 = vadd.f32 %v5596, %v5638
    %v5640 = vpop.f32.mrb[0].mxu0
    %v5641 = vadd.f32 %v5598, %v5640
    %5642 = vdwg.mxu0
    %5643 = vmatprep.subr.bf16.mxu0 %v4368
    %5644 = vmatpush1.bf16.msra.mxu0 %v4367
    %5645 = vmatprep.subr.bf16.mxu0 %v4384
    %5646 = vmatpush1.bf16.msra.mxu0 %v4383
    %5647 = vmatprep.subr.bf16.mxu0 %v4400
    %5648 = vmatpush1.bf16.msra.mxu0 %v4399
    %5649 = vmatprep.subr.bf16.mxu0 %v4416
    %5650 = vmatpush1.bf16.msra.mxu0 %v4415
    %5651 = vmatprep.subr.bf16.mxu0 %v4432
    %5652 = vmatpush1.bf16.msra.mxu0 %v4431
    %5653 = vmatprep.subr.bf16.mxu0 %v4448
    %5654 = vmatpush1.bf16.msra.mxu0 %v4447
    %5655 = vmatprep.subr.bf16.mxu0 %v4464
    %5656 = vmatpush1.bf16.msra.mxu0 %v4463
    %5657 = vmatprep.subr.bf16.mxu0 %v4480
    %5658 = vmatpush1.bf16.msra.mxu0 %v4479
    %5659 = vmatprep.subr.bf16.mxu0 %v4496
    %5660 = vmatpush1.bf16.msra.mxu0 %v4495
    %5661 = vmatprep.subr.bf16.mxu0 %v4512
    %5662 = vmatpush1.bf16.msra.mxu0 %v4511
    %5663 = vmatprep.subr.bf16.mxu0 %v4528
    %5664 = vmatpush1.bf16.msra.mxu0 %v4527
    %5665 = vmatprep.subr.bf16.mxu0 %v4544
    %5666 = vmatpush1.bf16.msra.mxu0 %v4543
    %5667 = vmatprep.subr.bf16.mxu0 %v4560
    %5668 = vmatpush1.bf16.msra.mxu0 %v4559
    %5669 = vmatprep.subr.bf16.mxu0 %v4576
    %5670 = vmatpush1.bf16.msra.mxu0 %v4575
    %5671 = vmatprep.subr.bf16.mxu0 %v4592
    %5672 = vmatpush1.bf16.msra.mxu0 %v4591
    %5673 = vmatprep.subr.bf16.mxu0 %v4608
    %5674 = vmatpush1.bf16.msra.mxu0 %v4607
    %5675 = vmatprep.mubr.bf16.mxu0 %v2310
    %5676 = vmatmul.mubr.bf16.gmra.mrb[0].mxu0 %v2309
    %v5677 = vpop.f32.mrb[0].mxu0
    %v5678 = vadd.f32 0.0, %v5677
    %v5679 = vpop.f32.mrb[0].mxu0
    %v5680 = vadd.f32 0.0, %v5679
    %v5681 = vpop.f32.mrb[0].mxu0
    %v5682 = vadd.f32 0.0, %v5681
    %v5683 = vpop.f32.mrb[0].mxu0
    %v5684 = vadd.f32 0.0, %v5683
    %5685 = vdwg.mxu0
    %5686 = vmatprep.subr.bf16.mxu0 %v4624
    %5687 = vmatpush1.bf16.msra.mxu0 %v4623
    %5688 = vmatprep.subr.bf16.mxu0 %v4640
    %5689 = vmatpush1.bf16.msra.mxu0 %v4639
    %5690 = vmatprep.subr.bf16.mxu0 %v4656
    %5691 = vmatpush1.bf16.msra.mxu0 %v4655
    %5692 = vmatprep.subr.bf16.mxu0 %v4672
    %5693 = vmatpush1.bf16.msra.mxu0 %v4671
    %5694 = vmatprep.subr.bf16.mxu0 %v4688
    %5695 = vmatpush1.bf16.msra.mxu0 %v4687
    %5696 = vmatprep.subr.bf16.mxu0 %v4704
    %5697 = vmatpush1.bf16.msra.mxu0 %v4703
    %5698 = vmatprep.subr.bf16.mxu0 %v4720
    %5699 = vmatpush1.bf16.msra.mxu0 %v4719
    %5700 = vmatprep.subr.bf16.mxu0 %v4736
    %5701 = vmatpush1.bf16.msra.mxu0 %v4735
    %5702 = vmatprep.subr.bf16.mxu0 %v4752
    %5703 = vmatpush1.bf16.msra.mxu0 %v4751
    %5704 = vmatprep.subr.bf16.mxu0 %v4768
    %5705 = vmatpush1.bf16.msra.mxu0 %v4767
    %5706 = vmatprep.subr.bf16.mxu0 %v4784
    %5707 = vmatpush1.bf16.msra.mxu0 %v4783
    %5708 = vmatprep.subr.bf16.mxu0 %v4800
    %5709 = vmatpush1.bf16.msra.mxu0 %v4799
    %5710 = vmatprep.subr.bf16.mxu0 %v4816
    %5711 = vmatpush1.bf16.msra.mxu0 %v4815
    %5712 = vmatprep.subr.bf16.mxu0 %v4832
    %5713 = vmatpush1.bf16.msra.mxu0 %v4831
    %5714 = vmatprep.subr.bf16.mxu0 %v4848
    %5715 = vmatpush1.bf16.msra.mxu0 %v4847
    %5716 = vmatprep.subr.bf16.mxu0 %v4864
    %5717 = vmatpush1.bf16.msra.mxu0 %v4863
    %5718 = vmatprep.mubr.bf16.mxu0 %v2312
    %5719 = vmatmul.mubr.bf16.gmra.mrb[0].mxu0 %v2311
    %v5720 = vpop.f32.mrb[0].mxu0
    %v5721 = vadd.f32 %v5678, %v5720
    %v5722 = vpop.f32.mrb[0].mxu0
    %v5723 = vadd.f32 %v5680, %v5722
    %v5724 = vpop.f32.mrb[0].mxu0
    %v5725 = vadd.f32 %v5682, %v5724
    %v5726 = vpop.f32.mrb[0].mxu0
    %v5727 = vadd.f32 %v5684, %v5726
    %5728 = vdwg.mxu0
    %5729 = vmatprep.subr.bf16.mxu0 %v4370
    %5730 = vmatpush1.bf16.msra.mxu0 %v4369
    %5731 = vmatprep.subr.bf16.mxu0 %v4386
    %5732 = vmatpush1.bf16.msra.mxu0 %v4385
    %5733 = vmatprep.subr.bf16.mxu0 %v4402
    %5734 = vmatpush1.bf16.msra.mxu0 %v4401
    %5735 = vmatprep.subr.bf16.mxu0 %v4418
    %5736 = vmatpush1.bf16.msra.mxu0 %v4417
    %5737 = vmatprep.subr.bf16.mxu0 %v4434
    %5738 = vmatpush1.bf16.msra.mxu0 %v4433
    %5739 = vmatprep.subr.bf16.mxu0 %v4450
    %5740 = vmatpush1.bf16.msra.mxu0 %v4449
    %5741 = vmatprep.subr.bf16.mxu0 %v4466
    %5742 = vmatpush1.bf16.msra.mxu0 %v4465
    %5743 = vmatprep.subr.bf16.mxu0 %v4482
    %5744 = vmatpush1.bf16.msra.mxu0 %v4481
    %5745 = vmatprep.subr.bf16.mxu0 %v4498
    %5746 = vmatpush1.bf16.msra.mxu0 %v4497
    %5747 = vmatprep.subr.bf16.mxu0 %v4514
    %5748 = vmatpush1.bf16.msra.mxu0 %v4513
    %5749 = vmatprep.subr.bf16.mxu0 %v4530
    %5750 = vmatpush1.bf16.msra.mxu0 %v4529
    %5751 = vmatprep.subr.bf16.mxu0 %v4546
    %5752 = vmatpush1.bf16.msra.mxu0 %v4545
    %5753 = vmatprep.subr.bf16.mxu0 %v4562
    %5754 = vmatpush1.bf16.msra.mxu0 %v4561
    %5755 = vmatprep.subr.bf16.mxu0 %v4578
    %5756 = vmatpush1.bf16.msra.mxu0 %v4577
    %5757 = vmatprep.subr.bf16.mxu0 %v4594
    %5758 = vmatpush1.bf16.msra.mxu0 %v4593
    %5759 = vmatprep.subr.bf16.mxu0 %v4610
    %5760 = vmatpush1.bf16.msra.mxu0 %v4609
    %5761 = vmatprep.mubr.bf16.mxu0 %v2310
    %5762 = vmatmul.mubr.bf16.gmra.mrb[0].mxu0 %v2309
    %v5763 = vpop.f32.mrb[0].mxu0
    %v5764 = vadd.f32 0.0, %v5763
    %v5765 = vpop.f32.mrb[0].mxu0
    %v5766 = vadd.f32 0.0, %v5765
    %v5767 = vpop.f32.mrb[0].mxu0
    %v5768 = vadd.f32 0.0, %v5767
    %v5769 = vpop.f32.mrb[0].mxu0
    %v5770 = vadd.f32 0.0, %v5769
    %5771 = vdwg.mxu0
    %5772 = vmatprep.subr.bf16.mxu0 %v4626
    %5773 = vmatpush1.bf16.msra.mxu0 %v4625
    %5774 = vmatprep.subr.bf16.mxu0 %v4642
    %5775 = vmatpush1.bf16.msra.mxu0 %v4641
    %5776 = vmatprep.subr.bf16.mxu0 %v4658
    %5777 = vmatpush1.bf16.msra.mxu0 %v4657
    %5778 = vmatprep.subr.bf16.mxu0 %v4674
    %5779 = vmatpush1.bf16.msra.mxu0 %v4673
    %5780 = vmatprep.subr.bf16.mxu0 %v4690
    %5781 = vmatpush1.bf16.msra.mxu0 %v4689
    %5782 = vmatprep.subr.bf16.mxu0 %v4706
    %5783 = vmatpush1.bf16.msra.mxu0 %v4705
    %5784 = vmatprep.subr.bf16.mxu0 %v4722
    %5785 = vmatpush1.bf16.msra.mxu0 %v4721
    %5786 = vmatprep.subr.bf16.mxu0 %v4738
    %5787 = vmatpush1.bf16.msra.mxu0 %v4737
    %5788 = vmatprep.subr.bf16.mxu0 %v4754
    %5789 = vmatpush1.bf16.msra.mxu0 %v4753
    %5790 = vmatprep.subr.bf16.mxu0 %v4770
    %5791 = vmatpush1.bf16.msra.mxu0 %v4769
    %5792 = vmatprep.subr.bf16.mxu0 %v4786
    %5793 = vmatpush1.bf16.msra.mxu0 %v4785
    %5794 = vmatprep.subr.bf16.mxu0 %v4802
    %5795 = vmatpush1.bf16.msra.mxu0 %v4801
    %5796 = vmatprep.subr.bf16.mxu0 %v4818
    %5797 = vmatpush1.bf16.msra.mxu0 %v4817
    %5798 = vmatprep.subr.bf16.mxu0 %v4834
    %5799 = vmatpush1.bf16.msra.mxu0 %v4833
    %5800 = vmatprep.subr.bf16.mxu0 %v4850
    %5801 = vmatpush1.bf16.msra.mxu0 %v4849
    %5802 = vmatprep.subr.bf16.mxu0 %v4866
    %5803 = vmatpush1.bf16.msra.mxu0 %v4865
    %5804 = vmatprep.mubr.bf16.mxu0 %v2312
    %5805 = vmatmul.mubr.bf16.gmra.mrb[0].mxu0 %v2311
    %v5806 = vpop.f32.mrb[0].mxu0
    %v5807 = vadd.f32 %v5764, %v5806
    %v5808 = vpop.f32.mrb[0].mxu0
    %v5809 = vadd.f32 %v5766, %v5808
    %v5810 = vpop.f32.mrb[0].mxu0
    %v5811 = vadd.f32 %v5768, %v5810
    %v5812 = vpop.f32.mrb[0].mxu0
    %v5813 = vadd.f32 %v5770, %v5812
    %5814 = vdwg.mxu0
    %5815 = vmatprep.subr.bf16.mxu0 %v4372
    %5816 = vmatpush1.bf16.msra.mxu0 %v4371
    %5817 = vmatprep.subr.bf16.mxu0 %v4388
    %5818 = vmatpush1.bf16.msra.mxu0 %v4387
    %5819 = vmatprep.subr.bf16.mxu0 %v4404
    %5820 = vmatpush1.bf16.msra.mxu0 %v4403
    %5821 = vmatprep.subr.bf16.mxu0 %v4420
    %5822 = vmatpush1.bf16.msra.mxu0 %v4419
    %5823 = vmatprep.subr.bf16.mxu0 %v4436
    %5824 = vmatpush1.bf16.msra.mxu0 %v4435
    %5825 = vmatprep.subr.bf16.mxu0 %v4452
    %5826 = vmatpush1.bf16.msra.mxu0 %v4451
    %5827 = vmatprep.subr.bf16.mxu0 %v4468
    %5828 = vmatpush1.bf16.msra.mxu0 %v4467
    %5829 = vmatprep.subr.bf16.mxu0 %v4484
    %5830 = vmatpush1.bf16.msra.mxu0 %v4483
    %5831 = vmatprep.subr.bf16.mxu0 %v4500
    %5832 = vmatpush1.bf16.msra.mxu0 %v4499
    %5833 = vmatprep.subr.bf16.mxu0 %v4516
    %5834 = vmatpush1.bf16.msra.mxu0 %v4515
    %5835 = vmatprep.subr.bf16.mxu0 %v4532
    %5836 = vmatpush1.bf16.msra.mxu0 %v4531
    %5837 = vmatprep.subr.bf16.mxu0 %v4548
    %5838 = vmatpush1.bf16.msra.mxu0 %v4547
    %5839 = vmatprep.subr.bf16.mxu0 %v4564
    %5840 = vmatpush1.bf16.msra.mxu0 %v4563
    %5841 = vmatprep.subr.bf16.mxu0 %v4580
    %5842 = vmatpush1.bf16.msra.mxu0 %v4579
    %5843 = vmatprep.subr.bf16.mxu0 %v4596
    %5844 = vmatpush1.bf16.msra.mxu0 %v4595
    %5845 = vmatprep.subr.bf16.mxu0 %v4612
    %5846 = vmatpush1.bf16.msra.mxu0 %v4611
    %5847 = vmatprep.mubr.bf16.mxu0 %v2310
    %5848 = vmatmul.mubr.bf16.gmra.mrb[0].mxu0 %v2309
    %v5849 = vpop.f32.mrb[0].mxu0
    %v5850 = vadd.f32 0.0, %v5849
    %v5851 = vpop.f32.mrb[0].mxu0
    %v5852 = vadd.f32 0.0, %v5851
    %v5853 = vpop.f32.mrb[0].mxu0
    %v5854 = vadd.f32 0.0, %v5853
    %v5855 = vpop.f32.mrb[0].mxu0
    %v5856 = vadd.f32 0.0, %v5855
    %5857 = vdwg.mxu0
    %5858 = vmatprep.subr.bf16.mxu0 %v4628
    %5859 = vmatpush1.bf16.msra.mxu0 %v4627
    %5860 = vmatprep.subr.bf16.mxu0 %v4644
    %5861 = vmatpush1.bf16.msra.mxu0 %v4643
    %5862 = vmatprep.subr.bf16.mxu0 %v4660
    %5863 = vmatpush1.bf16.msra.mxu0 %v4659
    %5864 = vmatprep.subr.bf16.mxu0 %v4676
    %5865 = vmatpush1.bf16.msra.mxu0 %v4675
    %5866 = vmatprep.subr.bf16.mxu0 %v4692
    %5867 = vmatpush1.bf16.msra.mxu0 %v4691
    %5868 = vmatprep.subr.bf16.mxu0 %v4708
    %5869 = vmatpush1.bf16.msra.mxu0 %v4707
    %5870 = vmatprep.subr.bf16.mxu0 %v4724
    %5871 = vmatpush1.bf16.msra.mxu0 %v4723
    %5872 = vmatprep.subr.bf16.mxu0 %v4740
    %5873 = vmatpush1.bf16.msra.mxu0 %v4739
    %5874 = vmatprep.subr.bf16.mxu0 %v4756
    %5875 = vmatpush1.bf16.msra.mxu0 %v4755
    %5876 = vmatprep.subr.bf16.mxu0 %v4772
    %5877 = vmatpush1.bf16.msra.mxu0 %v4771
    %5878 = vmatprep.subr.bf16.mxu0 %v4788
    %5879 = vmatpush1.bf16.msra.mxu0 %v4787
    %5880 = vmatprep.subr.bf16.mxu0 %v4804
    %5881 = vmatpush1.bf16.msra.mxu0 %v4803
    %5882 = vmatprep.subr.bf16.mxu0 %v4820
    %5883 = vmatpush1.bf16.msra.mxu0 %v4819
    %5884 = vmatprep.subr.bf16.mxu0 %v4836
    %5885 = vmatpush1.bf16.msra.mxu0 %v4835
    %5886 = vmatprep.subr.bf16.mxu0 %v4852
    %5887 = vmatpush1.bf16.msra.mxu0 %v4851
    %5888 = vmatprep.subr.bf16.mxu0 %v4868
    %5889 = vmatpush1.bf16.msra.mxu0 %v4867
    %5890 = vmatprep.mubr.bf16.mxu0 %v2312
    %5891 = vmatmul.mubr.bf16.gmra.mrb[0].mxu0 %v2311
    %v5892 = vpop.f32.mrb[0].mxu0
    %v5893 = vadd.f32 %v5850, %v5892
    %v5894 = vpop.f32.mrb[0].mxu0
    %v5895 = vadd.f32 %v5852, %v5894
    %v5896 = vpop.f32.mrb[0].mxu0
    %v5897 = vadd.f32 %v5854, %v5896
    %v5898 = vpop.f32.mrb[0].mxu0
    %v5899 = vadd.f32 %v5856, %v5898
    %5900 = vdwg.mxu0
    %5901 = vmatprep.subr.bf16.mxu0 %v4374
    %5902 = vmatpush1.bf16.msra.mxu0 %v4373
    %5903 = vmatprep.subr.bf16.mxu0 %v4390
    %5904 = vmatpush1.bf16.msra.mxu0 %v4389
    %5905 = vmatprep.subr.bf16.mxu0 %v4406
    %5906 = vmatpush1.bf16.msra.mxu0 %v4405
    %5907 = vmatprep.subr.bf16.mxu0 %v4422
    %5908 = vmatpush1.bf16.msra.mxu0 %v4421
    %5909 = vmatprep.subr.bf16.mxu0 %v4438
    %5910 = vmatpush1.bf16.msra.mxu0 %v4437
    %5911 = vmatprep.subr.bf16.mxu0 %v4454
    %5912 = vmatpush1.bf16.msra.mxu0 %v4453
    %5913 = vmatprep.subr.bf16.mxu0 %v4470
    %5914 = vmatpush1.bf16.msra.mxu0 %v4469
    %5915 = vmatprep.subr.bf16.mxu0 %v4486
    %5916 = vmatpush1.bf16.msra.mxu0 %v4485
    %5917 = vmatprep.subr.bf16.mxu0 %v4502
    %5918 = vmatpush1.bf16.msra.mxu0 %v4501
    %5919 = vmatprep.subr.bf16.mxu0 %v4518
    %5920 = vmatpush1.bf16.msra.mxu0 %v4517
    %5921 = vmatprep.subr.bf16.mxu0 %v4534
    %5922 = vmatpush1.bf16.msra.mxu0 %v4533
    %5923 = vmatprep.subr.bf16.mxu0 %v4550
    %5924 = vmatpush1.bf16.msra.mxu0 %v4549
    %5925 = vmatprep.subr.bf16.mxu0 %v4566
    %5926 = vmatpush1.bf16.msra.mxu0 %v4565
    %5927 = vmatprep.subr.bf16.mxu0 %v4582
    %5928 = vmatpush1.bf16.msra.mxu0 %v4581
    %5929 = vmatprep.subr.bf16.mxu0 %v4598
    %5930 = vmatpush1.bf16.msra.mxu0 %v4597
    %5931 = vmatprep.subr.bf16.mxu0 %v4614
    %5932 = vmatpush1.bf16.msra.mxu0 %v4613
    %5933 = vmatprep.mubr.bf16.mxu0 %v2310
    %5934 = vmatmul.mubr.bf16.gmra.mrb[0].mxu0 %v2309
    %v5935 = vpop.f32.mrb[0].mxu0
    %v5936 = vadd.f32 0.0, %v5935
    %v5937 = vpop.f32.mrb[0].mxu0
    %v5938 = vadd.f32 0.0, %v5937
    %v5939 = vpop.f32.mrb[0].mxu0
    %v5940 = vadd.f32 0.0, %v5939
    %v5941 = vpop.f32.mrb[0].mxu0
    %v5942 = vadd.f32 0.0, %v5941
    %5943 = vdwg.mxu0
    %5944 = vmatprep.subr.bf16.mxu0 %v4630
    %5945 = vmatpush1.bf16.msra.mxu0 %v4629
    %5946 = vmatprep.subr.bf16.mxu0 %v4646
    %5947 = vmatpush1.bf16.msra.mxu0 %v4645
    %5948 = vmatprep.subr.bf16.mxu0 %v4662
    %5949 = vmatpush1.bf16.msra.mxu0 %v4661
    %5950 = vmatprep.subr.bf16.mxu0 %v4678
    %5951 = vmatpush1.bf16.msra.mxu0 %v4677
    %5952 = vmatprep.subr.bf16.mxu0 %v4694
    %5953 = vmatpush1.bf16.msra.mxu0 %v4693
    %5954 = vmatprep.subr.bf16.mxu0 %v4710
    %5955 = vmatpush1.bf16.msra.mxu0 %v4709
    %5956 = vmatprep.subr.bf16.mxu0 %v4726
    %5957 = vmatpush1.bf16.msra.mxu0 %v4725
    %5958 = vmatprep.subr.bf16.mxu0 %v4742
    %5959 = vmatpush1.bf16.msra.mxu0 %v4741
    %5960 = vmatprep.subr.bf16.mxu0 %v4758
    %5961 = vmatpush1.bf16.msra.mxu0 %v4757
    %5962 = vmatprep.subr.bf16.mxu0 %v4774
    %5963 = vmatpush1.bf16.msra.mxu0 %v4773
    %5964 = vmatprep.subr.bf16.mxu0 %v4790
    %5965 = vmatpush1.bf16.msra.mxu0 %v4789
    %5966 = vmatprep.subr.bf16.mxu0 %v4806
    %5967 = vmatpush1.bf16.msra.mxu0 %v4805
    %5968 = vmatprep.subr.bf16.mxu0 %v4822
    %5969 = vmatpush1.bf16.msra.mxu0 %v4821
    %5970 = vmatprep.subr.bf16.mxu0 %v4838
    %5971 = vmatpush1.bf16.msra.mxu0 %v4837
    %5972 = vmatprep.subr.bf16.mxu0 %v4854
    %5973 = vmatpush1.bf16.msra.mxu0 %v4853
    %5974 = vmatprep.subr.bf16.mxu0 %v4870
    %5975 = vmatpush1.bf16.msra.mxu0 %v4869
    %5976 = vmatprep.mubr.bf16.mxu0 %v2312
    %5977 = vmatmul.mubr.bf16.gmra.mrb[0].mxu0 %v2311
    %v5978 = vpop.f32.mrb[0].mxu0
    %v5979 = vadd.f32 %v5936, %v5978
    %v5980 = vpop.f32.mrb[0].mxu0
    %v5981 = vadd.f32 %v5938, %v5980
    %v5982 = vpop.f32.mrb[0].mxu0
    %v5983 = vadd.f32 %v5940, %v5982
    %v5984 = vpop.f32.mrb[0].mxu0
    %v5985 = vadd.f32 %v5942, %v5984
    %5986 = vdwg.mxu0
    %5987 = vmatprep.subr.bf16.mxu0 %v4376
    %5988 = vmatpush1.bf16.msra.mxu0 %v4375
    %5989 = vmatprep.subr.bf16.mxu0 %v4392
    %5990 = vmatpush1.bf16.msra.mxu0 %v4391
    %5991 = vmatprep.subr.bf16.mxu0 %v4408
    %5992 = vmatpush1.bf16.msra.mxu0 %v4407
    %5993 = vmatprep.subr.bf16.mxu0 %v4424
    %5994 = vmatpush1.bf16.msra.mxu0 %v4423
    %5995 = vmatprep.subr.bf16.mxu0 %v4440
    %5996 = vmatpush1.bf16.msra.mxu0 %v4439
    %5997 = vmatprep.subr.bf16.mxu0 %v4456
    %5998 = vmatpush1.bf16.msra.mxu0 %v4455
    %5999 = vmatprep.subr.bf16.mxu0 %v4472
    %6000 = vmatpush1.bf16.msra.mxu0 %v4471
    %6001 = vmatprep.subr.bf16.mxu0 %v4488
    %6002 = vmatpush1.bf16.msra.mxu0 %v4487
    %6003 = vmatprep.subr.bf16.mxu0 %v4504
    %6004 = vmatpush1.bf16.msra.mxu0 %v4503
    %6005 = vmatprep.subr.bf16.mxu0 %v4520
    %6006 = vmatpush1.bf16.msra.mxu0 %v4519
    %6007 = vmatprep.subr.bf16.mxu0 %v4536
    %6008 = vmatpush1.bf16.msra.mxu0 %v4535
    %6009 = vmatprep.subr.bf16.mxu0 %v4552
    %6010 = vmatpush1.bf16.msra.mxu0 %v4551
    %6011 = vmatprep.subr.bf16.mxu0 %v4568
    %6012 = vmatpush1.bf16.msra.mxu0 %v4567
    %6013 = vmatprep.subr.bf16.mxu0 %v4584
    %6014 = vmatpush1.bf16.msra.mxu0 %v4583
    %6015 = vmatprep.subr.bf16.mxu0 %v4600
    %6016 = vmatpush1.bf16.msra.mxu0 %v4599
    %6017 = vmatprep.subr.bf16.mxu0 %v4616
    %6018 = vmatpush1.bf16.msra.mxu0 %v4615
    %6019 = vmatprep.mubr.bf16.mxu0 %v2310
    %6020 = vmatmul.mubr.bf16.gmra.mrb[0].mxu0 %v2309
    %v6021 = vpop.f32.mrb[0].mxu0
    %v6022 = vadd.f32 0.0, %v6021
    %v6023 = vpop.f32.mrb[0].mxu0
    %v6024 = vadd.f32 0.0, %v6023
    %v6025 = vpop.f32.mrb[0].mxu0
    %v6026 = vadd.f32 0.0, %v6025
    %v6027 = vpop.f32.mrb[0].mxu0
    %v6028 = vadd.f32 0.0, %v6027
    %6029 = vdwg.mxu0
    %6030 = vmatprep.subr.bf16.mxu0 %v4632
    %6031 = vmatpush1.bf16.msra.mxu0 %v4631
    %6032 = vmatprep.subr.bf16.mxu0 %v4648
    %6033 = vmatpush1.bf16.msra.mxu0 %v4647
    %6034 = vmatprep.subr.bf16.mxu0 %v4664
    %6035 = vmatpush1.bf16.msra.mxu0 %v4663
    %6036 = vmatprep.subr.bf16.mxu0 %v4680
    %6037 = vmatpush1.bf16.msra.mxu0 %v4679
    %6038 = vmatprep.subr.bf16.mxu0 %v4696
    %6039 = vmatpush1.bf16.msra.mxu0 %v4695
    %6040 = vmatprep.subr.bf16.mxu0 %v4712
    %6041 = vmatpush1.bf16.msra.mxu0 %v4711
    %6042 = vmatprep.subr.bf16.mxu0 %v4728
    %6043 = vmatpush1.bf16.msra.mxu0 %v4727
    %6044 = vmatprep.subr.bf16.mxu0 %v4744
    %6045 = vmatpush1.bf16.msra.mxu0 %v4743
    %6046 = vmatprep.subr.bf16.mxu0 %v4760
    %6047 = vmatpush1.bf16.msra.mxu0 %v4759
    %6048 = vmatprep.subr.bf16.mxu0 %v4776
    %6049 = vmatpush1.bf16.msra.mxu0 %v4775
    %6050 = vmatprep.subr.bf16.mxu0 %v4792
    %6051 = vmatpush1.bf16.msra.mxu0 %v4791
    %6052 = vmatprep.subr.bf16.mxu0 %v4808
    %6053 = vmatpush1.bf16.msra.mxu0 %v4807
    %6054 = vmatprep.subr.bf16.mxu0 %v4824
    %6055 = vmatpush1.bf16.msra.mxu0 %v4823
    %6056 = vmatprep.subr.bf16.mxu0 %v4840
    %6057 = vmatpush1.bf16.msra.mxu0 %v4839
    %6058 = vmatprep.subr.bf16.mxu0 %v4856
    %6059 = vmatpush1.bf16.msra.mxu0 %v4855
    %6060 = vmatprep.subr.bf16.mxu0 %v4872
    %6061 = vmatpush1.bf16.msra.mxu0 %v4871
    %6062 = vmatprep.mubr.bf16.mxu0 %v2312
    %6063 = vmatmul.mubr.bf16.gmra.mrb[0].mxu0 %v2311
    %v6064 = vpop.f32.mrb[0].mxu0
    %v6065 = vadd.f32 %v6022, %v6064
    %v6066 = vpop.f32.mrb[0].mxu0
    %v6067 = vadd.f32 %v6024, %v6066
    %v6068 = vpop.f32.mrb[0].mxu0
    %v6069 = vadd.f32 %v6026, %v6068
    %v6070 = vpop.f32.mrb[0].mxu0
    %v6071 = vadd.f32 %v6028, %v6070
    %6072 = vdwg.mxu0
    %v6073 = vmax.f32 %v5463, 0.0
    %v6074 = vmax.f32 %v5465, 0.0
    %v6075 = vmax.f32 %v5549, 0.0
    %v6076 = vmax.f32 %v5551, 0.0
    %v6077 = vmax.f32 %v5635, 0.0
    %v6078 = vmax.f32 %v5637, 0.0
    %v6079 = vmax.f32 %v5721, 0.0
    %v6080 = vmax.f32 %v5723, 0.0
    %v6081 = vmax.f32 %v5807, 0.0
    %v6082 = vmax.f32 %v5809, 0.0
    %v6083 = vmax.f32 %v5893, 0.0
    %v6084 = vmax.f32 %v5895, 0.0
    %v6085 = vmax.f32 %v5979, 0.0
    %v6086 = vmax.f32 %v5981, 0.0
    %v6087 = vmax.f32 %v6065, 0.0
    %v6088 = vmax.f32 %v6067, 0.0
    %v6089 = vmax.f32 %v5467, 0.0
    %v6090 = vmax.f32 %v5469, 0.0
    %v6091 = vmax.f32 %v5553, 0.0
    %v6092 = vmax.f32 %v5555, 0.0
    %v6093 = vmax.f32 %v5639, 0.0
    %v6094 = vmax.f32 %v5641, 0.0
    %v6095 = vmax.f32 %v5725, 0.0
    %v6096 = vmax.f32 %v5727, 0.0
    %v6097 = vmax.f32 %v5811, 0.0
    %v6098 = vmax.f32 %v5813, 0.0
    %v6099 = vmax.f32 %v5897, 0.0
    %v6100 = vmax.f32 %v5899, 0.0
    %v6101 = vmax.f32 %v5983, 0.0
    %v6102 = vmax.f32 %v5985, 0.0
    %v6103 = vmax.f32 %v6069, 0.0
    %v6104 = vmax.f32 %v6071, 0.0
    %v6105 = vpack.c.bf16 %v6089, %v6073
    %v6106 = vpack.c.bf16 %v6090, %v6074
    %v6107 = vpack.c.bf16 %v6091, %v6075
    %v6108 = vpack.c.bf16 %v6092, %v6076
    %v6109 = vpack.c.bf16 %v6093, %v6077
    %v6110 = vpack.c.bf16 %v6094, %v6078
    %v6111 = vpack.c.bf16 %v6095, %v6079
    %v6112 = vpack.c.bf16 %v6096, %v6080
    %v6113 = vpack.c.bf16 %v6097, %v6081
    %v6114 = vpack.c.bf16 %v6098, %v6082
    %v6115 = vpack.c.bf16 %v6099, %v6083
    %v6116 = vpack.c.bf16 %v6100, %v6084
    %v6117 = vpack.c.bf16 %v6101, %v6085
    %v6118 = vpack.c.bf16 %v6102, %v6086
    %v6119 = vpack.c.bf16 %v6103, %v6087
    %v6120 = vpack.c.bf16 %v6104, %v6088
    %v6121 = vld [vmem:[#allocation13] sm:$0xff]
    %v6122 = vld [vmem:[#allocation13 + $0x8] sm:$0xff]
    %v6123 = vld [vmem:[#allocation13 + $0x10] sm:$0xff]
    %v6124 = vld [vmem:[#allocation13 + $0x18] sm:$0xff]
    %v6125 = vld [vmem:[#allocation13 + $0x20] sm:$0xff]
    %v6126 = vld [vmem:[#allocation13 + $0x28] sm:$0xff]
    %v6127 = vld [vmem:[#allocation13 + $0x30] sm:$0xff]
    %v6128 = vld [vmem:[#allocation13 + $0x38] sm:$0xff]
    %v6129 = vld [vmem:[#allocation13 + $0x40] sm:$0xff]
    %v6130 = vld [vmem:[#allocation13 + $0x48] sm:$0xff]
    %v6131 = vld [vmem:[#allocation13 + $0x50] sm:$0xff]
    %v6132 = vld [vmem:[#allocation13 + $0x58] sm:$0xff]
    %v6133 = vld [vmem:[#allocation13 + $0x60] sm:$0xff]
    %v6134 = vld [vmem:[#allocation13 + $0x68] sm:$0xff]
    %v6135 = vld [vmem:[#allocation13 + $0x70] sm:$0xff]
    %v6136 = vld [vmem:[#allocation13 + $0x78] sm:$0xff]
    %v6137 = vld [vmem:[#allocation13 + $0x80] sm:$0xff]
    %v6138 = vld [vmem:[#allocation13 + $0x88] sm:$0xff]
    %v6139 = vld [vmem:[#allocation13 + $0x90] sm:$0xff]
    %v6140 = vld [vmem:[#allocation13 + $0x98] sm:$0xff]
    %v6141 = vld [vmem:[#allocation13 + $0xa0] sm:$0xff]
    %v6142 = vld [vmem:[#allocation13 + $0xa8] sm:$0xff]
    %v6143 = vld [vmem:[#allocation13 + $0xb0] sm:$0xff]
    %v6144 = vld [vmem:[#allocation13 + $0xb8] sm:$0xff]
    %v6145 = vld [vmem:[#allocation13 + $0xc0] sm:$0xff]
    %v6146 = vld [vmem:[#allocation13 + $0xc8] sm:$0xff]
    %v6147 = vld [vmem:[#allocation13 + $0xd0] sm:$0xff]
    %v6148 = vld [vmem:[#allocation13 + $0xd8] sm:$0xff]
    %v6149 = vld [vmem:[#allocation13 + $0xe0] sm:$0xff]
    %v6150 = vld [vmem:[#allocation13 + $0xe8] sm:$0xff]
    %v6151 = vld [vmem:[#allocation13 + $0xf0] sm:$0xff]
    %v6152 = vld [vmem:[#allocation13 + $0xf8] sm:$0xff]
    %v6153 = vld [vmem:[#allocation13 + $0x100] sm:$0xff]
    %v6154 = vld [vmem:[#allocation13 + $0x108] sm:$0xff]
    %v6155 = vld [vmem:[#allocation13 + $0x110] sm:$0xff]
    %v6156 = vld [vmem:[#allocation13 + $0x118] sm:$0xff]
    %v6157 = vld [vmem:[#allocation13 + $0x120] sm:$0xff]
    %v6158 = vld [vmem:[#allocation13 + $0x128] sm:$0xff]
    %v6159 = vld [vmem:[#allocation13 + $0x130] sm:$0xff]
    %v6160 = vld [vmem:[#allocation13 + $0x138] sm:$0xff]
    %v6161 = vld [vmem:[#allocation13 + $0x140] sm:$0xff]
    %v6162 = vld [vmem:[#allocation13 + $0x148] sm:$0xff]
    %v6163 = vld [vmem:[#allocation13 + $0x150] sm:$0xff]
    %v6164 = vld [vmem:[#allocation13 + $0x158] sm:$0xff]
    %v6165 = vld [vmem:[#allocation13 + $0x160] sm:$0xff]
    %v6166 = vld [vmem:[#allocation13 + $0x168] sm:$0xff]
    %v6167 = vld [vmem:[#allocation13 + $0x170] sm:$0xff]
    %v6168 = vld [vmem:[#allocation13 + $0x178] sm:$0xff]
    %v6169 = vld [vmem:[#allocation13 + $0x180] sm:$0xff]
    %v6170 = vld [vmem:[#allocation13 + $0x188] sm:$0xff]
    %v6171 = vld [vmem:[#allocation13 + $0x190] sm:$0xff]
    %v6172 = vld [vmem:[#allocation13 + $0x198] sm:$0xff]
    %v6173 = vld [vmem:[#allocation13 + $0x1a0] sm:$0xff]
    %v6174 = vld [vmem:[#allocation13 + $0x1a8] sm:$0xff]
    %v6175 = vld [vmem:[#allocation13 + $0x1b0] sm:$0xff]
    %v6176 = vld [vmem:[#allocation13 + $0x1b8] sm:$0xff]
    %v6177 = vld [vmem:[#allocation13 + $0x1c0] sm:$0xff]
    %v6178 = vld [vmem:[#allocation13 + $0x1c8] sm:$0xff]
    %v6179 = vld [vmem:[#allocation13 + $0x1d0] sm:$0xff]
    %v6180 = vld [vmem:[#allocation13 + $0x1d8] sm:$0xff]
    %v6181 = vld [vmem:[#allocation13 + $0x1e0] sm:$0xff]
    %v6182 = vld [vmem:[#allocation13 + $0x1e8] sm:$0xff]
    %v6183 = vld [vmem:[#allocation13 + $0x1f0] sm:$0xff]
    %v6184 = vld [vmem:[#allocation13 + $0x1f8] sm:$0xff]
    %v6185 = vld [vmem:[#allocation13 + $0x200] sm:$0xff]
    %v6186 = vld [vmem:[#allocation13 + $0x208] sm:$0xff]
    %v6187 = vld [vmem:[#allocation13 + $0x210] sm:$0xff]
    %v6188 = vld [vmem:[#allocation13 + $0x218] sm:$0xff]
    %v6189 = vld [vmem:[#allocation13 + $0x220] sm:$0xff]
    %v6190 = vld [vmem:[#allocation13 + $0x228] sm:$0xff]
    %v6191 = vld [vmem:[#allocation13 + $0x230] sm:$0xff]
    %v6192 = vld [vmem:[#allocation13 + $0x238] sm:$0xff]
    %v6193 = vld [vmem:[#allocation13 + $0x240] sm:$0xff]
    %v6194 = vld [vmem:[#allocation13 + $0x248] sm:$0xff]
    %v6195 = vld [vmem:[#allocation13 + $0x250] sm:$0xff]
    %v6196 = vld [vmem:[#allocation13 + $0x258] sm:$0xff]
    %v6197 = vld [vmem:[#allocation13 + $0x260] sm:$0xff]
    %v6198 = vld [vmem:[#allocation13 + $0x268] sm:$0xff]
    %v6199 = vld [vmem:[#allocation13 + $0x270] sm:$0xff]
    %v6200 = vld [vmem:[#allocation13 + $0x278] sm:$0xff]
    %v6201 = vld [vmem:[#allocation13 + $0x280] sm:$0xff]
    %v6202 = vld [vmem:[#allocation13 + $0x288] sm:$0xff]
    %v6203 = vld [vmem:[#allocation13 + $0x290] sm:$0xff]
    %v6204 = vld [vmem:[#allocation13 + $0x298] sm:$0xff]
    %v6205 = vld [vmem:[#allocation13 + $0x2a0] sm:$0xff]
    %v6206 = vld [vmem:[#allocation13 + $0x2a8] sm:$0xff]
    %v6207 = vld [vmem:[#allocation13 + $0x2b0] sm:$0xff]
    %v6208 = vld [vmem:[#allocation13 + $0x2b8] sm:$0xff]
    %v6209 = vld [vmem:[#allocation13 + $0x2c0] sm:$0xff]
    %v6210 = vld [vmem:[#allocation13 + $0x2c8] sm:$0xff]
    %v6211 = vld [vmem:[#allocation13 + $0x2d0] sm:$0xff]
    %v6212 = vld [vmem:[#allocation13 + $0x2d8] sm:$0xff]
    %v6213 = vld [vmem:[#allocation13 + $0x2e0] sm:$0xff]
    %v6214 = vld [vmem:[#allocation13 + $0x2e8] sm:$0xff]
    %v6215 = vld [vmem:[#allocation13 + $0x2f0] sm:$0xff]
    %v6216 = vld [vmem:[#allocation13 + $0x2f8] sm:$0xff]
    %v6217 = vld [vmem:[#allocation13 + $0x300] sm:$0xff]
    %v6218 = vld [vmem:[#allocation13 + $0x308] sm:$0xff]
    %v6219 = vld [vmem:[#allocation13 + $0x310] sm:$0xff]
    %v6220 = vld [vmem:[#allocation13 + $0x318] sm:$0xff]
    %v6221 = vld [vmem:[#allocation13 + $0x320] sm:$0xff]
    %v6222 = vld [vmem:[#allocation13 + $0x328] sm:$0xff]
    %v6223 = vld [vmem:[#allocation13 + $0x330] sm:$0xff]
    %v6224 = vld [vmem:[#allocation13 + $0x338] sm:$0xff]
    %v6225 = vld [vmem:[#allocation13 + $0x340] sm:$0xff]
    %v6226 = vld [vmem:[#allocation13 + $0x348] sm:$0xff]
    %v6227 = vld [vmem:[#allocation13 + $0x350] sm:$0xff]
    %v6228 = vld [vmem:[#allocation13 + $0x358] sm:$0xff]
    %v6229 = vld [vmem:[#allocation13 + $0x360] sm:$0xff]
    %v6230 = vld [vmem:[#allocation13 + $0x368] sm:$0xff]
    %v6231 = vld [vmem:[#allocation13 + $0x370] sm:$0xff]
    %v6232 = vld [vmem:[#allocation13 + $0x378] sm:$0xff]
    %v6233 = vld [vmem:[#allocation13 + $0x380] sm:$0xff]
    %v6234 = vld [vmem:[#allocation13 + $0x388] sm:$0xff]
    %v6235 = vld [vmem:[#allocation13 + $0x390] sm:$0xff]
    %v6236 = vld [vmem:[#allocation13 + $0x398] sm:$0xff]
    %v6237 = vld [vmem:[#allocation13 + $0x3a0] sm:$0xff]
    %v6238 = vld [vmem:[#allocation13 + $0x3a8] sm:$0xff]
    %v6239 = vld [vmem:[#allocation13 + $0x3b0] sm:$0xff]
    %v6240 = vld [vmem:[#allocation13 + $0x3b8] sm:$0xff]
    %v6241 = vld [vmem:[#allocation13 + $0x3c0] sm:$0xff]
    %v6242 = vld [vmem:[#allocation13 + $0x3c8] sm:$0xff]
    %v6243 = vld [vmem:[#allocation13 + $0x3d0] sm:$0xff]
    %v6244 = vld [vmem:[#allocation13 + $0x3d8] sm:$0xff]
    %v6245 = vld [vmem:[#allocation13 + $0x3e0] sm:$0xff]
    %v6246 = vld [vmem:[#allocation13 + $0x3e8] sm:$0xff]
    %v6247 = vld [vmem:[#allocation13 + $0x3f0] sm:$0xff]
    %v6248 = vld [vmem:[#allocation13 + $0x3f8] sm:$0xff]
    %v6249 = vld [vmem:[#allocation13 + $0x400] sm:$0xff]
    %v6250 = vld [vmem:[#allocation13 + $0x408] sm:$0xff]
    %v6251 = vld [vmem:[#allocation13 + $0x410] sm:$0xff]
    %v6252 = vld [vmem:[#allocation13 + $0x418] sm:$0xff]
    %v6253 = vld [vmem:[#allocation13 + $0x420] sm:$0xff]
    %v6254 = vld [vmem:[#allocation13 + $0x428] sm:$0xff]
    %v6255 = vld [vmem:[#allocation13 + $0x430] sm:$0xff]
    %v6256 = vld [vmem:[#allocation13 + $0x438] sm:$0xff]
    %v6257 = vld [vmem:[#allocation13 + $0x440] sm:$0xff]
    %v6258 = vld [vmem:[#allocation13 + $0x448] sm:$0xff]
    %v6259 = vld [vmem:[#allocation13 + $0x450] sm:$0xff]
    %v6260 = vld [vmem:[#allocation13 + $0x458] sm:$0xff]
    %v6261 = vld [vmem:[#allocation13 + $0x460] sm:$0xff]
    %v6262 = vld [vmem:[#allocation13 + $0x468] sm:$0xff]
    %v6263 = vld [vmem:[#allocation13 + $0x470] sm:$0xff]
    %v6264 = vld [vmem:[#allocation13 + $0x478] sm:$0xff]
    %v6265 = vld [vmem:[#allocation13 + $0x480] sm:$0xff]
    %v6266 = vld [vmem:[#allocation13 + $0x488] sm:$0xff]
    %v6267 = vld [vmem:[#allocation13 + $0x490] sm:$0xff]
    %v6268 = vld [vmem:[#allocation13 + $0x498] sm:$0xff]
    %v6269 = vld [vmem:[#allocation13 + $0x4a0] sm:$0xff]
    %v6270 = vld [vmem:[#allocation13 + $0x4a8] sm:$0xff]
    %v6271 = vld [vmem:[#allocation13 + $0x4b0] sm:$0xff]
    %v6272 = vld [vmem:[#allocation13 + $0x4b8] sm:$0xff]
    %v6273 = vld [vmem:[#allocation13 + $0x4c0] sm:$0xff]
    %v6274 = vld [vmem:[#allocation13 + $0x4c8] sm:$0xff]
    %v6275 = vld [vmem:[#allocation13 + $0x4d0] sm:$0xff]
    %v6276 = vld [vmem:[#allocation13 + $0x4d8] sm:$0xff]
    %v6277 = vld [vmem:[#allocation13 + $0x4e0] sm:$0xff]
    %v6278 = vld [vmem:[#allocation13 + $0x4e8] sm:$0xff]
    %v6279 = vld [vmem:[#allocation13 + $0x4f0] sm:$0xff]
    %v6280 = vld [vmem:[#allocation13 + $0x4f8] sm:$0xff]
    %v6281 = vld [vmem:[#allocation13 + $0x500] sm:$0xff]
    %v6282 = vld [vmem:[#allocation13 + $0x508] sm:$0xff]
    %v6283 = vld [vmem:[#allocation13 + $0x510] sm:$0xff]
    %v6284 = vld [vmem:[#allocation13 + $0x518] sm:$0xff]
    %v6285 = vld [vmem:[#allocation13 + $0x520] sm:$0xff]
    %v6286 = vld [vmem:[#allocation13 + $0x528] sm:$0xff]
    %v6287 = vld [vmem:[#allocation13 + $0x530] sm:$0xff]
    %v6288 = vld [vmem:[#allocation13 + $0x538] sm:$0xff]
    %v6289 = vld [vmem:[#allocation13 + $0x540] sm:$0xff]
    %v6290 = vld [vmem:[#allocation13 + $0x548] sm:$0xff]
    %v6291 = vld [vmem:[#allocation13 + $0x550] sm:$0xff]
    %v6292 = vld [vmem:[#allocation13 + $0x558] sm:$0xff]
    %v6293 = vld [vmem:[#allocation13 + $0x560] sm:$0xff]
    %v6294 = vld [vmem:[#allocation13 + $0x568] sm:$0xff]
    %v6295 = vld [vmem:[#allocation13 + $0x570] sm:$0xff]
    %v6296 = vld [vmem:[#allocation13 + $0x578] sm:$0xff]
    %v6297 = vld [vmem:[#allocation13 + $0x580] sm:$0xff]
    %v6298 = vld [vmem:[#allocation13 + $0x588] sm:$0xff]
    %v6299 = vld [vmem:[#allocation13 + $0x590] sm:$0xff]
    %v6300 = vld [vmem:[#allocation13 + $0x598] sm:$0xff]
    %v6301 = vld [vmem:[#allocation13 + $0x5a0] sm:$0xff]
    %v6302 = vld [vmem:[#allocation13 + $0x5a8] sm:$0xff]
    %v6303 = vld [vmem:[#allocation13 + $0x5b0] sm:$0xff]
    %v6304 = vld [vmem:[#allocation13 + $0x5b8] sm:$0xff]
    %v6305 = vld [vmem:[#allocation13 + $0x5c0] sm:$0xff]
    %v6306 = vld [vmem:[#allocation13 + $0x5c8] sm:$0xff]
    %v6307 = vld [vmem:[#allocation13 + $0x5d0] sm:$0xff]
    %v6308 = vld [vmem:[#allocation13 + $0x5d8] sm:$0xff]
    %v6309 = vld [vmem:[#allocation13 + $0x5e0] sm:$0xff]
    %v6310 = vld [vmem:[#allocation13 + $0x5e8] sm:$0xff]
    %v6311 = vld [vmem:[#allocation13 + $0x5f0] sm:$0xff]
    %v6312 = vld [vmem:[#allocation13 + $0x5f8] sm:$0xff]
    %v6313 = vld [vmem:[#allocation13 + $0x600] sm:$0xff]
    %v6314 = vld [vmem:[#allocation13 + $0x608] sm:$0xff]
    %v6315 = vld [vmem:[#allocation13 + $0x610] sm:$0xff]
    %v6316 = vld [vmem:[#allocation13 + $0x618] sm:$0xff]
    %v6317 = vld [vmem:[#allocation13 + $0x620] sm:$0xff]
    %v6318 = vld [vmem:[#allocation13 + $0x628] sm:$0xff]
    %v6319 = vld [vmem:[#allocation13 + $0x630] sm:$0xff]
    %v6320 = vld [vmem:[#allocation13 + $0x638] sm:$0xff]
    %v6321 = vld [vmem:[#allocation13 + $0x640] sm:$0xff]
    %v6322 = vld [vmem:[#allocation13 + $0x648] sm:$0xff]
    %v6323 = vld [vmem:[#allocation13 + $0x650] sm:$0xff]
    %v6324 = vld [vmem:[#allocation13 + $0x658] sm:$0xff]
    %v6325 = vld [vmem:[#allocation13 + $0x660] sm:$0xff]
    %v6326 = vld [vmem:[#allocation13 + $0x668] sm:$0xff]
    %v6327 = vld [vmem:[#allocation13 + $0x670] sm:$0xff]
    %v6328 = vld [vmem:[#allocation13 + $0x678] sm:$0xff]
    %v6329 = vld [vmem:[#allocation13 + $0x680] sm:$0xff]
    %v6330 = vld [vmem:[#allocation13 + $0x688] sm:$0xff]
    %v6331 = vld [vmem:[#allocation13 + $0x690] sm:$0xff]
    %v6332 = vld [vmem:[#allocation13 + $0x698] sm:$0xff]
    %v6333 = vld [vmem:[#allocation13 + $0x6a0] sm:$0xff]
    %v6334 = vld [vmem:[#allocation13 + $0x6a8] sm:$0xff]
    %v6335 = vld [vmem:[#allocation13 + $0x6b0] sm:$0xff]
    %v6336 = vld [vmem:[#allocation13 + $0x6b8] sm:$0xff]
    %v6337 = vld [vmem:[#allocation13 + $0x6c0] sm:$0xff]
    %v6338 = vld [vmem:[#allocation13 + $0x6c8] sm:$0xff]
    %v6339 = vld [vmem:[#allocation13 + $0x6d0] sm:$0xff]
    %v6340 = vld [vmem:[#allocation13 + $0x6d8] sm:$0xff]
    %v6341 = vld [vmem:[#allocation13 + $0x6e0] sm:$0xff]
    %v6342 = vld [vmem:[#allocation13 + $0x6e8] sm:$0xff]
    %v6343 = vld [vmem:[#allocation13 + $0x6f0] sm:$0xff]
    %v6344 = vld [vmem:[#allocation13 + $0x6f8] sm:$0xff]
    %v6345 = vld [vmem:[#allocation13 + $0x700] sm:$0xff]
    %v6346 = vld [vmem:[#allocation13 + $0x708] sm:$0xff]
    %v6347 = vld [vmem:[#allocation13 + $0x710] sm:$0xff]
    %v6348 = vld [vmem:[#allocation13 + $0x718] sm:$0xff]
    %v6349 = vld [vmem:[#allocation13 + $0x720] sm:$0xff]
    %v6350 = vld [vmem:[#allocation13 + $0x728] sm:$0xff]
    %v6351 = vld [vmem:[#allocation13 + $0x730] sm:$0xff]
    %v6352 = vld [vmem:[#allocation13 + $0x738] sm:$0xff]
    %v6353 = vld [vmem:[#allocation13 + $0x740] sm:$0xff]
    %v6354 = vld [vmem:[#allocation13 + $0x748] sm:$0xff]
    %v6355 = vld [vmem:[#allocation13 + $0x750] sm:$0xff]
    %v6356 = vld [vmem:[#allocation13 + $0x758] sm:$0xff]
    %v6357 = vld [vmem:[#allocation13 + $0x760] sm:$0xff]
    %v6358 = vld [vmem:[#allocation13 + $0x768] sm:$0xff]
    %v6359 = vld [vmem:[#allocation13 + $0x770] sm:$0xff]
    %v6360 = vld [vmem:[#allocation13 + $0x778] sm:$0xff]
    %v6361 = vld [vmem:[#allocation13 + $0x780] sm:$0xff]
    %v6362 = vld [vmem:[#allocation13 + $0x788] sm:$0xff]
    %v6363 = vld [vmem:[#allocation13 + $0x790] sm:$0xff]
    %v6364 = vld [vmem:[#allocation13 + $0x798] sm:$0xff]
    %v6365 = vld [vmem:[#allocation13 + $0x7a0] sm:$0xff]
    %v6366 = vld [vmem:[#allocation13 + $0x7a8] sm:$0xff]
    %v6367 = vld [vmem:[#allocation13 + $0x7b0] sm:$0xff]
    %v6368 = vld [vmem:[#allocation13 + $0x7b8] sm:$0xff]
    %v6369 = vld [vmem:[#allocation13 + $0x7c0] sm:$0xff]
    %v6370 = vld [vmem:[#allocation13 + $0x7c8] sm:$0xff]
    %v6371 = vld [vmem:[#allocation13 + $0x7d0] sm:$0xff]
    %v6372 = vld [vmem:[#allocation13 + $0x7d8] sm:$0xff]
    %v6373 = vld [vmem:[#allocation13 + $0x7e0] sm:$0xff]
    %v6374 = vld [vmem:[#allocation13 + $0x7e8] sm:$0xff]
    %v6375 = vld [vmem:[#allocation13 + $0x7f0] sm:$0xff]
    %v6376 = vld [vmem:[#allocation13 + $0x7f8] sm:$0xff]
    %v6377 = vld [vmem:[#allocation13 + $0x800] sm:$0xff]
    %v6378 = vld [vmem:[#allocation13 + $0x808] sm:$0xff]
    %v6379 = vld [vmem:[#allocation13 + $0x810] sm:$0xff]
    %v6380 = vld [vmem:[#allocation13 + $0x818] sm:$0xff]
    %v6381 = vld [vmem:[#allocation13 + $0x820] sm:$0xff]
    %v6382 = vld [vmem:[#allocation13 + $0x828] sm:$0xff]
    %v6383 = vld [vmem:[#allocation13 + $0x830] sm:$0xff]
    %v6384 = vld [vmem:[#allocation13 + $0x838] sm:$0xff]
    %v6385 = vld [vmem:[#allocation13 + $0x840] sm:$0xff]
    %v6386 = vld [vmem:[#allocation13 + $0x848] sm:$0xff]
    %v6387 = vld [vmem:[#allocation13 + $0x850] sm:$0xff]
    %v6388 = vld [vmem:[#allocation13 + $0x858] sm:$0xff]
    %v6389 = vld [vmem:[#allocation13 + $0x860] sm:$0xff]
    %v6390 = vld [vmem:[#allocation13 + $0x868] sm:$0xff]
    %v6391 = vld [vmem:[#allocation13 + $0x870] sm:$0xff]
    %v6392 = vld [vmem:[#allocation13 + $0x878] sm:$0xff]
    %v6393 = vld [vmem:[#allocation13 + $0x880] sm:$0xff]
    %v6394 = vld [vmem:[#allocation13 + $0x888] sm:$0xff]
    %v6395 = vld [vmem:[#allocation13 + $0x890] sm:$0xff]
    %v6396 = vld [vmem:[#allocation13 + $0x898] sm:$0xff]
    %v6397 = vld [vmem:[#allocation13 + $0x8a0] sm:$0xff]
    %v6398 = vld [vmem:[#allocation13 + $0x8a8] sm:$0xff]
    %v6399 = vld [vmem:[#allocation13 + $0x8b0] sm:$0xff]
    %v6400 = vld [vmem:[#allocation13 + $0x8b8] sm:$0xff]
    %v6401 = vld [vmem:[#allocation13 + $0x8c0] sm:$0xff]
    %v6402 = vld [vmem:[#allocation13 + $0x8c8] sm:$0xff]
    %v6403 = vld [vmem:[#allocation13 + $0x8d0] sm:$0xff]
    %v6404 = vld [vmem:[#allocation13 + $0x8d8] sm:$0xff]
    %v6405 = vld [vmem:[#allocation13 + $0x8e0] sm:$0xff]
    %v6406 = vld [vmem:[#allocation13 + $0x8e8] sm:$0xff]
    %v6407 = vld [vmem:[#allocation13 + $0x8f0] sm:$0xff]
    %v6408 = vld [vmem:[#allocation13 + $0x8f8] sm:$0xff]
    %v6409 = vld [vmem:[#allocation13 + $0x900] sm:$0xff]
    %v6410 = vld [vmem:[#allocation13 + $0x908] sm:$0xff]
    %v6411 = vld [vmem:[#allocation13 + $0x910] sm:$0xff]
    %v6412 = vld [vmem:[#allocation13 + $0x918] sm:$0xff]
    %v6413 = vld [vmem:[#allocation13 + $0x920] sm:$0xff]
    %v6414 = vld [vmem:[#allocation13 + $0x928] sm:$0xff]
    %v6415 = vld [vmem:[#allocation13 + $0x930] sm:$0xff]
    %v6416 = vld [vmem:[#allocation13 + $0x938] sm:$0xff]
    %v6417 = vld [vmem:[#allocation13 + $0x940] sm:$0xff]
    %v6418 = vld [vmem:[#allocation13 + $0x948] sm:$0xff]
    %v6419 = vld [vmem:[#allocation13 + $0x950] sm:$0xff]
    %v6420 = vld [vmem:[#allocation13 + $0x958] sm:$0xff]
    %v6421 = vld [vmem:[#allocation13 + $0x960] sm:$0xff]
    %v6422 = vld [vmem:[#allocation13 + $0x968] sm:$0xff]
    %v6423 = vld [vmem:[#allocation13 + $0x970] sm:$0xff]
    %v6424 = vld [vmem:[#allocation13 + $0x978] sm:$0xff]
    %v6425 = vld [vmem:[#allocation13 + $0x980] sm:$0xff]
    %v6426 = vld [vmem:[#allocation13 + $0x988] sm:$0xff]
    %v6427 = vld [vmem:[#allocation13 + $0x990] sm:$0xff]
    %v6428 = vld [vmem:[#allocation13 + $0x998] sm:$0xff]
    %v6429 = vld [vmem:[#allocation13 + $0x9a0] sm:$0xff]
    %v6430 = vld [vmem:[#allocation13 + $0x9a8] sm:$0xff]
    %v6431 = vld [vmem:[#allocation13 + $0x9b0] sm:$0xff]
    %v6432 = vld [vmem:[#allocation13 + $0x9b8] sm:$0xff]
    %v6433 = vld [vmem:[#allocation13 + $0x9c0] sm:$0xff]
    %v6434 = vld [vmem:[#allocation13 + $0x9c8] sm:$0xff]
    %v6435 = vld [vmem:[#allocation13 + $0x9d0] sm:$0xff]
    %v6436 = vld [vmem:[#allocation13 + $0x9d8] sm:$0xff]
    %v6437 = vld [vmem:[#allocation13 + $0x9e0] sm:$0xff]
    %v6438 = vld [vmem:[#allocation13 + $0x9e8] sm:$0xff]
    %v6439 = vld [vmem:[#allocation13 + $0x9f0] sm:$0xff]
    %v6440 = vld [vmem:[#allocation13 + $0x9f8] sm:$0xff]
    %v6441 = vld [vmem:[#allocation13 + $0xa00] sm:$0xff]
    %v6442 = vld [vmem:[#allocation13 + $0xa08] sm:$0xff]
    %v6443 = vld [vmem:[#allocation13 + $0xa10] sm:$0xff]
    %v6444 = vld [vmem:[#allocation13 + $0xa18] sm:$0xff]
    %v6445 = vld [vmem:[#allocation13 + $0xa20] sm:$0xff]
    %v6446 = vld [vmem:[#allocation13 + $0xa28] sm:$0xff]
    %v6447 = vld [vmem:[#allocation13 + $0xa30] sm:$0xff]
    %v6448 = vld [vmem:[#allocation13 + $0xa38] sm:$0xff]
    %v6449 = vld [vmem:[#allocation13 + $0xa40] sm:$0xff]
    %v6450 = vld [vmem:[#allocation13 + $0xa48] sm:$0xff]
    %v6451 = vld [vmem:[#allocation13 + $0xa50] sm:$0xff]
    %v6452 = vld [vmem:[#allocation13 + $0xa58] sm:$0xff]
    %v6453 = vld [vmem:[#allocation13 + $0xa60] sm:$0xff]
    %v6454 = vld [vmem:[#allocation13 + $0xa68] sm:$0xff]
    %v6455 = vld [vmem:[#allocation13 + $0xa70] sm:$0xff]
    %v6456 = vld [vmem:[#allocation13 + $0xa78] sm:$0xff]
    %v6457 = vld [vmem:[#allocation13 + $0xa80] sm:$0xff]
    %v6458 = vld [vmem:[#allocation13 + $0xa88] sm:$0xff]
    %v6459 = vld [vmem:[#allocation13 + $0xa90] sm:$0xff]
    %v6460 = vld [vmem:[#allocation13 + $0xa98] sm:$0xff]
    %v6461 = vld [vmem:[#allocation13 + $0xaa0] sm:$0xff]
    %v6462 = vld [vmem:[#allocation13 + $0xaa8] sm:$0xff]
    %v6463 = vld [vmem:[#allocation13 + $0xab0] sm:$0xff]
    %v6464 = vld [vmem:[#allocation13 + $0xab8] sm:$0xff]
    %v6465 = vld [vmem:[#allocation13 + $0xac0] sm:$0xff]
    %v6466 = vld [vmem:[#allocation13 + $0xac8] sm:$0xff]
    %v6467 = vld [vmem:[#allocation13 + $0xad0] sm:$0xff]
    %v6468 = vld [vmem:[#allocation13 + $0xad8] sm:$0xff]
    %v6469 = vld [vmem:[#allocation13 + $0xae0] sm:$0xff]
    %v6470 = vld [vmem:[#allocation13 + $0xae8] sm:$0xff]
    %v6471 = vld [vmem:[#allocation13 + $0xaf0] sm:$0xff]
    %v6472 = vld [vmem:[#allocation13 + $0xaf8] sm:$0xff]
    %v6473 = vld [vmem:[#allocation13 + $0xb00] sm:$0xff]
    %v6474 = vld [vmem:[#allocation13 + $0xb08] sm:$0xff]
    %v6475 = vld [vmem:[#allocation13 + $0xb10] sm:$0xff]
    %v6476 = vld [vmem:[#allocation13 + $0xb18] sm:$0xff]
    %v6477 = vld [vmem:[#allocation13 + $0xb20] sm:$0xff]
    %v6478 = vld [vmem:[#allocation13 + $0xb28] sm:$0xff]
    %v6479 = vld [vmem:[#allocation13 + $0xb30] sm:$0xff]
    %v6480 = vld [vmem:[#allocation13 + $0xb38] sm:$0xff]
    %v6481 = vld [vmem:[#allocation13 + $0xb40] sm:$0xff]
    %v6482 = vld [vmem:[#allocation13 + $0xb48] sm:$0xff]
    %v6483 = vld [vmem:[#allocation13 + $0xb50] sm:$0xff]
    %v6484 = vld [vmem:[#allocation13 + $0xb58] sm:$0xff]
    %v6485 = vld [vmem:[#allocation13 + $0xb60] sm:$0xff]
    %v6486 = vld [vmem:[#allocation13 + $0xb68] sm:$0xff]
    %v6487 = vld [vmem:[#allocation13 + $0xb70] sm:$0xff]
    %v6488 = vld [vmem:[#allocation13 + $0xb78] sm:$0xff]
    %v6489 = vld [vmem:[#allocation13 + $0xb80] sm:$0xff]
    %v6490 = vld [vmem:[#allocation13 + $0xb88] sm:$0xff]
    %v6491 = vld [vmem:[#allocation13 + $0xb90] sm:$0xff]
    %v6492 = vld [vmem:[#allocation13 + $0xb98] sm:$0xff]
    %v6493 = vld [vmem:[#allocation13 + $0xba0] sm:$0xff]
    %v6494 = vld [vmem:[#allocation13 + $0xba8] sm:$0xff]
    %v6495 = vld [vmem:[#allocation13 + $0xbb0] sm:$0xff]
    %v6496 = vld [vmem:[#allocation13 + $0xbb8] sm:$0xff]
    %v6497 = vld [vmem:[#allocation13 + $0xbc0] sm:$0xff]
    %v6498 = vld [vmem:[#allocation13 + $0xbc8] sm:$0xff]
    %v6499 = vld [vmem:[#allocation13 + $0xbd0] sm:$0xff]
    %v6500 = vld [vmem:[#allocation13 + $0xbd8] sm:$0xff]
    %v6501 = vld [vmem:[#allocation13 + $0xbe0] sm:$0xff]
    %v6502 = vld [vmem:[#allocation13 + $0xbe8] sm:$0xff]
    %v6503 = vld [vmem:[#allocation13 + $0xbf0] sm:$0xff]
    %v6504 = vld [vmem:[#allocation13 + $0xbf8] sm:$0xff]
    %v6505 = vld [vmem:[#allocation13 + $0xc00] sm:$0xff]
    %v6506 = vld [vmem:[#allocation13 + $0xc08] sm:$0xff]
    %v6507 = vld [vmem:[#allocation13 + $0xc10] sm:$0xff]
    %v6508 = vld [vmem:[#allocation13 + $0xc18] sm:$0xff]
    %v6509 = vld [vmem:[#allocation13 + $0xc20] sm:$0xff]
    %v6510 = vld [vmem:[#allocation13 + $0xc28] sm:$0xff]
    %v6511 = vld [vmem:[#allocation13 + $0xc30] sm:$0xff]
    %v6512 = vld [vmem:[#allocation13 + $0xc38] sm:$0xff]
    %v6513 = vld [vmem:[#allocation13 + $0xc40] sm:$0xff]
    %v6514 = vld [vmem:[#allocation13 + $0xc48] sm:$0xff]
    %v6515 = vld [vmem:[#allocation13 + $0xc50] sm:$0xff]
    %v6516 = vld [vmem:[#allocation13 + $0xc58] sm:$0xff]
    %v6517 = vld [vmem:[#allocation13 + $0xc60] sm:$0xff]
    %v6518 = vld [vmem:[#allocation13 + $0xc68] sm:$0xff]
    %v6519 = vld [vmem:[#allocation13 + $0xc70] sm:$0xff]
    %v6520 = vld [vmem:[#allocation13 + $0xc78] sm:$0xff]
    %v6521 = vld [vmem:[#allocation13 + $0xc80] sm:$0xff]
    %v6522 = vld [vmem:[#allocation13 + $0xc88] sm:$0xff]
    %v6523 = vld [vmem:[#allocation13 + $0xc90] sm:$0xff]
    %v6524 = vld [vmem:[#allocation13 + $0xc98] sm:$0xff]
    %v6525 = vld [vmem:[#allocation13 + $0xca0] sm:$0xff]
    %v6526 = vld [vmem:[#allocation13 + $0xca8] sm:$0xff]
    %v6527 = vld [vmem:[#allocation13 + $0xcb0] sm:$0xff]
    %v6528 = vld [vmem:[#allocation13 + $0xcb8] sm:$0xff]
    %v6529 = vld [vmem:[#allocation13 + $0xcc0] sm:$0xff]
    %v6530 = vld [vmem:[#allocation13 + $0xcc8] sm:$0xff]
    %v6531 = vld [vmem:[#allocation13 + $0xcd0] sm:$0xff]
    %v6532 = vld [vmem:[#allocation13 + $0xcd8] sm:$0xff]
    %v6533 = vld [vmem:[#allocation13 + $0xce0] sm:$0xff]
    %v6534 = vld [vmem:[#allocation13 + $0xce8] sm:$0xff]
    %v6535 = vld [vmem:[#allocation13 + $0xcf0] sm:$0xff]
    %v6536 = vld [vmem:[#allocation13 + $0xcf8] sm:$0xff]
    %v6537 = vld [vmem:[#allocation13 + $0xd00] sm:$0xff]
    %v6538 = vld [vmem:[#allocation13 + $0xd08] sm:$0xff]
    %v6539 = vld [vmem:[#allocation13 + $0xd10] sm:$0xff]
    %v6540 = vld [vmem:[#allocation13 + $0xd18] sm:$0xff]
    %v6541 = vld [vmem:[#allocation13 + $0xd20] sm:$0xff]
    %v6542 = vld [vmem:[#allocation13 + $0xd28] sm:$0xff]
    %v6543 = vld [vmem:[#allocation13 + $0xd30] sm:$0xff]
    %v6544 = vld [vmem:[#allocation13 + $0xd38] sm:$0xff]
    %v6545 = vld [vmem:[#allocation13 + $0xd40] sm:$0xff]
    %v6546 = vld [vmem:[#allocation13 + $0xd48] sm:$0xff]
    %v6547 = vld [vmem:[#allocation13 + $0xd50] sm:$0xff]
    %v6548 = vld [vmem:[#allocation13 + $0xd58] sm:$0xff]
    %v6549 = vld [vmem:[#allocation13 + $0xd60] sm:$0xff]
    %v6550 = vld [vmem:[#allocation13 + $0xd68] sm:$0xff]
    %v6551 = vld [vmem:[#allocation13 + $0xd70] sm:$0xff]
    %v6552 = vld [vmem:[#allocation13 + $0xd78] sm:$0xff]
    %v6553 = vld [vmem:[#allocation13 + $0xd80] sm:$0xff]
    %v6554 = vld [vmem:[#allocation13 + $0xd88] sm:$0xff]
    %v6555 = vld [vmem:[#allocation13 + $0xd90] sm:$0xff]
    %v6556 = vld [vmem:[#allocation13 + $0xd98] sm:$0xff]
    %v6557 = vld [vmem:[#allocation13 + $0xda0] sm:$0xff]
    %v6558 = vld [vmem:[#allocation13 + $0xda8] sm:$0xff]
    %v6559 = vld [vmem:[#allocation13 + $0xdb0] sm:$0xff]
    %v6560 = vld [vmem:[#allocation13 + $0xdb8] sm:$0xff]
    %v6561 = vld [vmem:[#allocation13 + $0xdc0] sm:$0xff]
    %v6562 = vld [vmem:[#allocation13 + $0xdc8] sm:$0xff]
    %v6563 = vld [vmem:[#allocation13 + $0xdd0] sm:$0xff]
    %v6564 = vld [vmem:[#allocation13 + $0xdd8] sm:$0xff]
    %v6565 = vld [vmem:[#allocation13 + $0xde0] sm:$0xff]
    %v6566 = vld [vmem:[#allocation13 + $0xde8] sm:$0xff]
    %v6567 = vld [vmem:[#allocation13 + $0xdf0] sm:$0xff]
    %v6568 = vld [vmem:[#allocation13 + $0xdf8] sm:$0xff]
    %v6569 = vld [vmem:[#allocation13 + $0xe00] sm:$0xff]
    %v6570 = vld [vmem:[#allocation13 + $0xe08] sm:$0xff]
    %v6571 = vld [vmem:[#allocation13 + $0xe10] sm:$0xff]
    %v6572 = vld [vmem:[#allocation13 + $0xe18] sm:$0xff]
    %v6573 = vld [vmem:[#allocation13 + $0xe20] sm:$0xff]
    %v6574 = vld [vmem:[#allocation13 + $0xe28] sm:$0xff]
    %v6575 = vld [vmem:[#allocation13 + $0xe30] sm:$0xff]
    %v6576 = vld [vmem:[#allocation13 + $0xe38] sm:$0xff]
    %v6577 = vld [vmem:[#allocation13 + $0xe40] sm:$0xff]
    %v6578 = vld [vmem:[#allocation13 + $0xe48] sm:$0xff]
    %v6579 = vld [vmem:[#allocation13 + $0xe50] sm:$0xff]
    %v6580 = vld [vmem:[#allocation13 + $0xe58] sm:$0xff]
    %v6581 = vld [vmem:[#allocation13 + $0xe60] sm:$0xff]
    %v6582 = vld [vmem:[#allocation13 + $0xe68] sm:$0xff]
    %v6583 = vld [vmem:[#allocation13 + $0xe70] sm:$0xff]
    %v6584 = vld [vmem:[#allocation13 + $0xe78] sm:$0xff]
    %v6585 = vld [vmem:[#allocation13 + $0xe80] sm:$0xff]
    %v6586 = vld [vmem:[#allocation13 + $0xe88] sm:$0xff]
    %v6587 = vld [vmem:[#allocation13 + $0xe90] sm:$0xff]
    %v6588 = vld [vmem:[#allocation13 + $0xe98] sm:$0xff]
    %v6589 = vld [vmem:[#allocation13 + $0xea0] sm:$0xff]
    %v6590 = vld [vmem:[#allocation13 + $0xea8] sm:$0xff]
    %v6591 = vld [vmem:[#allocation13 + $0xeb0] sm:$0xff]
    %v6592 = vld [vmem:[#allocation13 + $0xeb8] sm:$0xff]
    %v6593 = vld [vmem:[#allocation13 + $0xec0] sm:$0xff]
    %v6594 = vld [vmem:[#allocation13 + $0xec8] sm:$0xff]
    %v6595 = vld [vmem:[#allocation13 + $0xed0] sm:$0xff]
    %v6596 = vld [vmem:[#allocation13 + $0xed8] sm:$0xff]
    %v6597 = vld [vmem:[#allocation13 + $0xee0] sm:$0xff]
    %v6598 = vld [vmem:[#allocation13 + $0xee8] sm:$0xff]
    %v6599 = vld [vmem:[#allocation13 + $0xef0] sm:$0xff]
    %v6600 = vld [vmem:[#allocation13 + $0xef8] sm:$0xff]
    %v6601 = vld [vmem:[#allocation13 + $0xf00] sm:$0xff]
    %v6602 = vld [vmem:[#allocation13 + $0xf08] sm:$0xff]
    %v6603 = vld [vmem:[#allocation13 + $0xf10] sm:$0xff]
    %v6604 = vld [vmem:[#allocation13 + $0xf18] sm:$0xff]
    %v6605 = vld [vmem:[#allocation13 + $0xf20] sm:$0xff]
    %v6606 = vld [vmem:[#allocation13 + $0xf28] sm:$0xff]
    %v6607 = vld [vmem:[#allocation13 + $0xf30] sm:$0xff]
    %v6608 = vld [vmem:[#allocation13 + $0xf38] sm:$0xff]
    %v6609 = vld [vmem:[#allocation13 + $0xf40] sm:$0xff]
    %v6610 = vld [vmem:[#allocation13 + $0xf48] sm:$0xff]
    %v6611 = vld [vmem:[#allocation13 + $0xf50] sm:$0xff]
    %v6612 = vld [vmem:[#allocation13 + $0xf58] sm:$0xff]
    %v6613 = vld [vmem:[#allocation13 + $0xf60] sm:$0xff]
    %v6614 = vld [vmem:[#allocation13 + $0xf68] sm:$0xff]
    %v6615 = vld [vmem:[#allocation13 + $0xf70] sm:$0xff]
    %v6616 = vld [vmem:[#allocation13 + $0xf78] sm:$0xff]
    %v6617 = vld [vmem:[#allocation13 + $0xf80] sm:$0xff]
    %v6618 = vld [vmem:[#allocation13 + $0xf88] sm:$0xff]
    %v6619 = vld [vmem:[#allocation13 + $0xf90] sm:$0xff]
    %v6620 = vld [vmem:[#allocation13 + $0xf98] sm:$0xff]
    %v6621 = vld [vmem:[#allocation13 + $0xfa0] sm:$0xff]
    %v6622 = vld [vmem:[#allocation13 + $0xfa8] sm:$0xff]
    %v6623 = vld [vmem:[#allocation13 + $0xfb0] sm:$0xff]
    %v6624 = vld [vmem:[#allocation13 + $0xfb8] sm:$0xff]
    %v6625 = vld [vmem:[#allocation13 + $0xfc0] sm:$0xff]
    %v6626 = vld [vmem:[#allocation13 + $0xfc8] sm:$0xff]
    %v6627 = vld [vmem:[#allocation13 + $0xfd0] sm:$0xff]
    %v6628 = vld [vmem:[#allocation13 + $0xfd8] sm:$0xff]
    %v6629 = vld [vmem:[#allocation13 + $0xfe0] sm:$0xff]
    %v6630 = vld [vmem:[#allocation13 + $0xfe8] sm:$0xff]
    %v6631 = vld [vmem:[#allocation13 + $0xff0] sm:$0xff]
    %v6632 = vld [vmem:[#allocation13 + $0xff8] sm:$0xff]
    %v7145 = vunpack.c.l.b16 %v6121
    %v7146 = vunpack.c.h.b16 %v6121
    %v7147 = vunpack.c.l.b16 %v6122
    %v7148 = vunpack.c.h.b16 %v6122
    %v7149 = vunpack.c.l.b16 %v6123
    %v7150 = vunpack.c.h.b16 %v6123
    %v7151 = vunpack.c.l.b16 %v6124
    %v7152 = vunpack.c.h.b16 %v6124
    %v7153 = vunpack.c.l.b16 %v6125
    %v7154 = vunpack.c.h.b16 %v6125
    %v7155 = vunpack.c.l.b16 %v6126
    %v7156 = vunpack.c.h.b16 %v6126
    %v7157 = vunpack.c.l.b16 %v6127
    %v7158 = vunpack.c.h.b16 %v6127
    %v7159 = vunpack.c.l.b16 %v6128
    %v7160 = vunpack.c.h.b16 %v6128
    %v7161 = vunpack.c.l.b16 %v6129
    %v7162 = vunpack.c.h.b16 %v6129
    %v7163 = vunpack.c.l.b16 %v6130
    %v7164 = vunpack.c.h.b16 %v6130
    %v7165 = vunpack.c.l.b16 %v6131
    %v7166 = vunpack.c.h.b16 %v6131
    %v7167 = vunpack.c.l.b16 %v6132
    %v7168 = vunpack.c.h.b16 %v6132
    %v7169 = vunpack.c.l.b16 %v6133
    %v7170 = vunpack.c.h.b16 %v6133
    %v7171 = vunpack.c.l.b16 %v6134
    %v7172 = vunpack.c.h.b16 %v6134
    %v7173 = vunpack.c.l.b16 %v6135
    %v7174 = vunpack.c.h.b16 %v6135
    %v7175 = vunpack.c.l.b16 %v6136
    %v7176 = vunpack.c.h.b16 %v6136
    %v7177 = vunpack.c.l.b16 %v6137
    %v7178 = vunpack.c.h.b16 %v6137
    %v7179 = vunpack.c.l.b16 %v6138
    %v7180 = vunpack.c.h.b16 %v6138
    %v7181 = vunpack.c.l.b16 %v6139
    %v7182 = vunpack.c.h.b16 %v6139
    %v7183 = vunpack.c.l.b16 %v6140
    %v7184 = vunpack.c.h.b16 %v6140
    %v7185 = vunpack.c.l.b16 %v6141
    %v7186 = vunpack.c.h.b16 %v6141
    %v7187 = vunpack.c.l.b16 %v6142
    %v7188 = vunpack.c.h.b16 %v6142
    %v7189 = vunpack.c.l.b16 %v6143
    %v7190 = vunpack.c.h.b16 %v6143
    %v7191 = vunpack.c.l.b16 %v6144
    %v7192 = vunpack.c.h.b16 %v6144
    %v7193 = vunpack.c.l.b16 %v6145
    %v7194 = vunpack.c.h.b16 %v6145
    %v7195 = vunpack.c.l.b16 %v6146
    %v7196 = vunpack.c.h.b16 %v6146
    %v7197 = vunpack.c.l.b16 %v6147
    %v7198 = vunpack.c.h.b16 %v6147
    %v7199 = vunpack.c.l.b16 %v6148
    %v7200 = vunpack.c.h.b16 %v6148
    %v7201 = vunpack.c.l.b16 %v6149
    %v7202 = vunpack.c.h.b16 %v6149
    %v7203 = vunpack.c.l.b16 %v6150
    %v7204 = vunpack.c.h.b16 %v6150
    %v7205 = vunpack.c.l.b16 %v6151
    %v7206 = vunpack.c.h.b16 %v6151
    %v7207 = vunpack.c.l.b16 %v6152
    %v7208 = vunpack.c.h.b16 %v6152
    %v7209 = vunpack.c.l.b16 %v6153
    %v7210 = vunpack.c.h.b16 %v6153
    %v7211 = vunpack.c.l.b16 %v6154
    %v7212 = vunpack.c.h.b16 %v6154
    %v7213 = vunpack.c.l.b16 %v6155
    %v7214 = vunpack.c.h.b16 %v6155
    %v7215 = vunpack.c.l.b16 %v6156
    %v7216 = vunpack.c.h.b16 %v6156
    %v7217 = vunpack.c.l.b16 %v6157
    %v7218 = vunpack.c.h.b16 %v6157
    %v7219 = vunpack.c.l.b16 %v6158
    %v7220 = vunpack.c.h.b16 %v6158
    %v7221 = vunpack.c.l.b16 %v6159
    %v7222 = vunpack.c.h.b16 %v6159
    %v7223 = vunpack.c.l.b16 %v6160
    %v7224 = vunpack.c.h.b16 %v6160
    %v7225 = vunpack.c.l.b16 %v6161
    %v7226 = vunpack.c.h.b16 %v6161
    %v7227 = vunpack.c.l.b16 %v6162
    %v7228 = vunpack.c.h.b16 %v6162
    %v7229 = vunpack.c.l.b16 %v6163
    %v7230 = vunpack.c.h.b16 %v6163
    %v7231 = vunpack.c.l.b16 %v6164
    %v7232 = vunpack.c.h.b16 %v6164
    %v7233 = vunpack.c.l.b16 %v6165
    %v7234 = vunpack.c.h.b16 %v6165
    %v7235 = vunpack.c.l.b16 %v6166
    %v7236 = vunpack.c.h.b16 %v6166
    %v7237 = vunpack.c.l.b16 %v6167
    %v7238 = vunpack.c.h.b16 %v6167
    %v7239 = vunpack.c.l.b16 %v6168
    %v7240 = vunpack.c.h.b16 %v6168
    %v7241 = vunpack.c.l.b16 %v6169
    %v7242 = vunpack.c.h.b16 %v6169
    %v7243 = vunpack.c.l.b16 %v6170
    %v7244 = vunpack.c.h.b16 %v6170
    %v7245 = vunpack.c.l.b16 %v6171
    %v7246 = vunpack.c.h.b16 %v6171
    %v7247 = vunpack.c.l.b16 %v6172
    %v7248 = vunpack.c.h.b16 %v6172
    %v7249 = vunpack.c.l.b16 %v6173
    %v7250 = vunpack.c.h.b16 %v6173
    %v7251 = vunpack.c.l.b16 %v6174
    %v7252 = vunpack.c.h.b16 %v6174
    %v7253 = vunpack.c.l.b16 %v6175
    %v7254 = vunpack.c.h.b16 %v6175
    %v7255 = vunpack.c.l.b16 %v6176
    %v7256 = vunpack.c.h.b16 %v6176
    %v7257 = vunpack.c.l.b16 %v6177
    %v7258 = vunpack.c.h.b16 %v6177
    %v7259 = vunpack.c.l.b16 %v6178
    %v7260 = vunpack.c.h.b16 %v6178
    %v7261 = vunpack.c.l.b16 %v6179
    %v7262 = vunpack.c.h.b16 %v6179
    %v7263 = vunpack.c.l.b16 %v6180
    %v7264 = vunpack.c.h.b16 %v6180
    %v7265 = vunpack.c.l.b16 %v6181
    %v7266 = vunpack.c.h.b16 %v6181
    %v7267 = vunpack.c.l.b16 %v6182
    %v7268 = vunpack.c.h.b16 %v6182
    %v7269 = vunpack.c.l.b16 %v6183
    %v7270 = vunpack.c.h.b16 %v6183
    %v7271 = vunpack.c.l.b16 %v6184
    %v7272 = vunpack.c.h.b16 %v6184
    %v7273 = vunpack.c.l.b16 %v6185
    %v7274 = vunpack.c.h.b16 %v6185
    %v7275 = vunpack.c.l.b16 %v6186
    %v7276 = vunpack.c.h.b16 %v6186
    %v7277 = vunpack.c.l.b16 %v6187
    %v7278 = vunpack.c.h.b16 %v6187
    %v7279 = vunpack.c.l.b16 %v6188
    %v7280 = vunpack.c.h.b16 %v6188
    %v7281 = vunpack.c.l.b16 %v6189
    %v7282 = vunpack.c.h.b16 %v6189
    %v7283 = vunpack.c.l.b16 %v6190
    %v7284 = vunpack.c.h.b16 %v6190
    %v7285 = vunpack.c.l.b16 %v6191
    %v7286 = vunpack.c.h.b16 %v6191
    %v7287 = vunpack.c.l.b16 %v6192
    %v7288 = vunpack.c.h.b16 %v6192
    %v7289 = vunpack.c.l.b16 %v6193
    %v7290 = vunpack.c.h.b16 %v6193
    %v7291 = vunpack.c.l.b16 %v6194
    %v7292 = vunpack.c.h.b16 %v6194
    %v7293 = vunpack.c.l.b16 %v6195
    %v7294 = vunpack.c.h.b16 %v6195
    %v7295 = vunpack.c.l.b16 %v6196
    %v7296 = vunpack.c.h.b16 %v6196
    %v7297 = vunpack.c.l.b16 %v6197
    %v7298 = vunpack.c.h.b16 %v6197
    %v7299 = vunpack.c.l.b16 %v6198
    %v7300 = vunpack.c.h.b16 %v6198
    %v7301 = vunpack.c.l.b16 %v6199
    %v7302 = vunpack.c.h.b16 %v6199
    %v7303 = vunpack.c.l.b16 %v6200
    %v7304 = vunpack.c.h.b16 %v6200
    %v7305 = vunpack.c.l.b16 %v6201
    %v7306 = vunpack.c.h.b16 %v6201
    %v7307 = vunpack.c.l.b16 %v6202
    %v7308 = vunpack.c.h.b16 %v6202
    %v7309 = vunpack.c.l.b16 %v6203
    %v7310 = vunpack.c.h.b16 %v6203
    %v7311 = vunpack.c.l.b16 %v6204
    %v7312 = vunpack.c.h.b16 %v6204
    %v7313 = vunpack.c.l.b16 %v6205
    %v7314 = vunpack.c.h.b16 %v6205
    %v7315 = vunpack.c.l.b16 %v6206
    %v7316 = vunpack.c.h.b16 %v6206
    %v7317 = vunpack.c.l.b16 %v6207
    %v7318 = vunpack.c.h.b16 %v6207
    %v7319 = vunpack.c.l.b16 %v6208
    %v7320 = vunpack.c.h.b16 %v6208
    %v7321 = vunpack.c.l.b16 %v6209
    %v7322 = vunpack.c.h.b16 %v6209
    %v7323 = vunpack.c.l.b16 %v6210
    %v7324 = vunpack.c.h.b16 %v6210
    %v7325 = vunpack.c.l.b16 %v6211
    %v7326 = vunpack.c.h.b16 %v6211
    %v7327 = vunpack.c.l.b16 %v6212
    %v7328 = vunpack.c.h.b16 %v6212
    %v7329 = vunpack.c.l.b16 %v6213
    %v7330 = vunpack.c.h.b16 %v6213
    %v7331 = vunpack.c.l.b16 %v6214
    %v7332 = vunpack.c.h.b16 %v6214
    %v7333 = vunpack.c.l.b16 %v6215
    %v7334 = vunpack.c.h.b16 %v6215
    %v7335 = vunpack.c.l.b16 %v6216
    %v7336 = vunpack.c.h.b16 %v6216
    %v7337 = vunpack.c.l.b16 %v6217
    %v7338 = vunpack.c.h.b16 %v6217
    %v7339 = vunpack.c.l.b16 %v6218
    %v7340 = vunpack.c.h.b16 %v6218
    %v7341 = vunpack.c.l.b16 %v6219
    %v7342 = vunpack.c.h.b16 %v6219
    %v7343 = vunpack.c.l.b16 %v6220
    %v7344 = vunpack.c.h.b16 %v6220
    %v7345 = vunpack.c.l.b16 %v6221
    %v7346 = vunpack.c.h.b16 %v6221
    %v7347 = vunpack.c.l.b16 %v6222
    %v7348 = vunpack.c.h.b16 %v6222
    %v7349 = vunpack.c.l.b16 %v6223
    %v7350 = vunpack.c.h.b16 %v6223
    %v7351 = vunpack.c.l.b16 %v6224
    %v7352 = vunpack.c.h.b16 %v6224
    %v7353 = vunpack.c.l.b16 %v6225
    %v7354 = vunpack.c.h.b16 %v6225
    %v7355 = vunpack.c.l.b16 %v6226
    %v7356 = vunpack.c.h.b16 %v6226
    %v7357 = vunpack.c.l.b16 %v6227
    %v7358 = vunpack.c.h.b16 %v6227
    %v7359 = vunpack.c.l.b16 %v6228
    %v7360 = vunpack.c.h.b16 %v6228
    %v7361 = vunpack.c.l.b16 %v6229
    %v7362 = vunpack.c.h.b16 %v6229
    %v7363 = vunpack.c.l.b16 %v6230
    %v7364 = vunpack.c.h.b16 %v6230
    %v7365 = vunpack.c.l.b16 %v6231
    %v7366 = vunpack.c.h.b16 %v6231
    %v7367 = vunpack.c.l.b16 %v6232
    %v7368 = vunpack.c.h.b16 %v6232
    %v7369 = vunpack.c.l.b16 %v6233
    %v7370 = vunpack.c.h.b16 %v6233
    %v7371 = vunpack.c.l.b16 %v6234
    %v7372 = vunpack.c.h.b16 %v6234
    %v7373 = vunpack.c.l.b16 %v6235
    %v7374 = vunpack.c.h.b16 %v6235
    %v7375 = vunpack.c.l.b16 %v6236
    %v7376 = vunpack.c.h.b16 %v6236
    %v7377 = vunpack.c.l.b16 %v6237
    %v7378 = vunpack.c.h.b16 %v6237
    %v7379 = vunpack.c.l.b16 %v6238
    %v7380 = vunpack.c.h.b16 %v6238
    %v7381 = vunpack.c.l.b16 %v6239
    %v7382 = vunpack.c.h.b16 %v6239
    %v7383 = vunpack.c.l.b16 %v6240
    %v7384 = vunpack.c.h.b16 %v6240
    %v7385 = vunpack.c.l.b16 %v6241
    %v7386 = vunpack.c.h.b16 %v6241
    %v7387 = vunpack.c.l.b16 %v6242
    %v7388 = vunpack.c.h.b16 %v6242
    %v7389 = vunpack.c.l.b16 %v6243
    %v7390 = vunpack.c.h.b16 %v6243
    %v7391 = vunpack.c.l.b16 %v6244
    %v7392 = vunpack.c.h.b16 %v6244
    %v7393 = vunpack.c.l.b16 %v6245
    %v7394 = vunpack.c.h.b16 %v6245
    %v7395 = vunpack.c.l.b16 %v6246
    %v7396 = vunpack.c.h.b16 %v6246
    %v7397 = vunpack.c.l.b16 %v6247
    %v7398 = vunpack.c.h.b16 %v6247
    %v7399 = vunpack.c.l.b16 %v6248
    %v7400 = vunpack.c.h.b16 %v6248
    %v7401 = vunpack.c.l.b16 %v6249
    %v7402 = vunpack.c.h.b16 %v6249
    %v7403 = vunpack.c.l.b16 %v6250
    %v7404 = vunpack.c.h.b16 %v6250
    %v7405 = vunpack.c.l.b16 %v6251
    %v7406 = vunpack.c.h.b16 %v6251
    %v7407 = vunpack.c.l.b16 %v6252
    %v7408 = vunpack.c.h.b16 %v6252
    %v7409 = vunpack.c.l.b16 %v6253
    %v7410 = vunpack.c.h.b16 %v6253
    %v7411 = vunpack.c.l.b16 %v6254
    %v7412 = vunpack.c.h.b16 %v6254
    %v7413 = vunpack.c.l.b16 %v6255
    %v7414 = vunpack.c.h.b16 %v6255
    %v7415 = vunpack.c.l.b16 %v6256
    %v7416 = vunpack.c.h.b16 %v6256
    %v7417 = vunpack.c.l.b16 %v6257
    %v7418 = vunpack.c.h.b16 %v6257
    %v7419 = vunpack.c.l.b16 %v6258
    %v7420 = vunpack.c.h.b16 %v6258
    %v7421 = vunpack.c.l.b16 %v6259
    %v7422 = vunpack.c.h.b16 %v6259
    %v7423 = vunpack.c.l.b16 %v6260
    %v7424 = vunpack.c.h.b16 %v6260
    %v7425 = vunpack.c.l.b16 %v6261
    %v7426 = vunpack.c.h.b16 %v6261
    %v7427 = vunpack.c.l.b16 %v6262
    %v7428 = vunpack.c.h.b16 %v6262
    %v7429 = vunpack.c.l.b16 %v6263
    %v7430 = vunpack.c.h.b16 %v6263
    %v7431 = vunpack.c.l.b16 %v6264
    %v7432 = vunpack.c.h.b16 %v6264
    %v7433 = vunpack.c.l.b16 %v6265
    %v7434 = vunpack.c.h.b16 %v6265
    %v7435 = vunpack.c.l.b16 %v6266
    %v7436 = vunpack.c.h.b16 %v6266
    %v7437 = vunpack.c.l.b16 %v6267
    %v7438 = vunpack.c.h.b16 %v6267
    %v7439 = vunpack.c.l.b16 %v6268
    %v7440 = vunpack.c.h.b16 %v6268
    %v7441 = vunpack.c.l.b16 %v6269
    %v7442 = vunpack.c.h.b16 %v6269
    %v7443 = vunpack.c.l.b16 %v6270
    %v7444 = vunpack.c.h.b16 %v6270
    %v7445 = vunpack.c.l.b16 %v6271
    %v7446 = vunpack.c.h.b16 %v6271
    %v7447 = vunpack.c.l.b16 %v6272
    %v7448 = vunpack.c.h.b16 %v6272
    %v7449 = vunpack.c.l.b16 %v6273
    %v7450 = vunpack.c.h.b16 %v6273
    %v7451 = vunpack.c.l.b16 %v6274
    %v7452 = vunpack.c.h.b16 %v6274
    %v7453 = vunpack.c.l.b16 %v6275
    %v7454 = vunpack.c.h.b16 %v6275
    %v7455 = vunpack.c.l.b16 %v6276
    %v7456 = vunpack.c.h.b16 %v6276
    %v7457 = vunpack.c.l.b16 %v6277
    %v7458 = vunpack.c.h.b16 %v6277
    %v7459 = vunpack.c.l.b16 %v6278
    %v7460 = vunpack.c.h.b16 %v6278
    %v7461 = vunpack.c.l.b16 %v6279
    %v7462 = vunpack.c.h.b16 %v6279
    %v7463 = vunpack.c.l.b16 %v6280
    %v7464 = vunpack.c.h.b16 %v6280
    %v7465 = vunpack.c.l.b16 %v6281
    %v7466 = vunpack.c.h.b16 %v6281
    %v7467 = vunpack.c.l.b16 %v6282
    %v7468 = vunpack.c.h.b16 %v6282
    %v7469 = vunpack.c.l.b16 %v6283
    %v7470 = vunpack.c.h.b16 %v6283
    %v7471 = vunpack.c.l.b16 %v6284
    %v7472 = vunpack.c.h.b16 %v6284
    %v7473 = vunpack.c.l.b16 %v6285
    %v7474 = vunpack.c.h.b16 %v6285
    %v7475 = vunpack.c.l.b16 %v6286
    %v7476 = vunpack.c.h.b16 %v6286
    %v7477 = vunpack.c.l.b16 %v6287
    %v7478 = vunpack.c.h.b16 %v6287
    %v7479 = vunpack.c.l.b16 %v6288
    %v7480 = vunpack.c.h.b16 %v6288
    %v7481 = vunpack.c.l.b16 %v6289
    %v7482 = vunpack.c.h.b16 %v6289
    %v7483 = vunpack.c.l.b16 %v6290
    %v7484 = vunpack.c.h.b16 %v6290
    %v7485 = vunpack.c.l.b16 %v6291
    %v7486 = vunpack.c.h.b16 %v6291
    %v7487 = vunpack.c.l.b16 %v6292
    %v7488 = vunpack.c.h.b16 %v6292
    %v7489 = vunpack.c.l.b16 %v6293
    %v7490 = vunpack.c.h.b16 %v6293
    %v7491 = vunpack.c.l.b16 %v6294
    %v7492 = vunpack.c.h.b16 %v6294
    %v7493 = vunpack.c.l.b16 %v6295
    %v7494 = vunpack.c.h.b16 %v6295
    %v7495 = vunpack.c.l.b16 %v6296
    %v7496 = vunpack.c.h.b16 %v6296
    %v7497 = vunpack.c.l.b16 %v6297
    %v7498 = vunpack.c.h.b16 %v6297
    %v7499 = vunpack.c.l.b16 %v6298
    %v7500 = vunpack.c.h.b16 %v6298
    %v7501 = vunpack.c.l.b16 %v6299
    %v7502 = vunpack.c.h.b16 %v6299
    %v7503 = vunpack.c.l.b16 %v6300
    %v7504 = vunpack.c.h.b16 %v6300
    %v7505 = vunpack.c.l.b16 %v6301
    %v7506 = vunpack.c.h.b16 %v6301
    %v7507 = vunpack.c.l.b16 %v6302
    %v7508 = vunpack.c.h.b16 %v6302
    %v7509 = vunpack.c.l.b16 %v6303
    %v7510 = vunpack.c.h.b16 %v6303
    %v7511 = vunpack.c.l.b16 %v6304
    %v7512 = vunpack.c.h.b16 %v6304
    %v7513 = vunpack.c.l.b16 %v6305
    %v7514 = vunpack.c.h.b16 %v6305
    %v7515 = vunpack.c.l.b16 %v6306
    %v7516 = vunpack.c.h.b16 %v6306
    %v7517 = vunpack.c.l.b16 %v6307
    %v7518 = vunpack.c.h.b16 %v6307
    %v7519 = vunpack.c.l.b16 %v6308
    %v7520 = vunpack.c.h.b16 %v6308
    %v7521 = vunpack.c.l.b16 %v6309
    %v7522 = vunpack.c.h.b16 %v6309
    %v7523 = vunpack.c.l.b16 %v6310
    %v7524 = vunpack.c.h.b16 %v6310
    %v7525 = vunpack.c.l.b16 %v6311
    %v7526 = vunpack.c.h.b16 %v6311
    %v7527 = vunpack.c.l.b16 %v6312
    %v7528 = vunpack.c.h.b16 %v6312
    %v7529 = vunpack.c.l.b16 %v6313
    %v7530 = vunpack.c.h.b16 %v6313
    %v7531 = vunpack.c.l.b16 %v6314
    %v7532 = vunpack.c.h.b16 %v6314
    %v7533 = vunpack.c.l.b16 %v6315
    %v7534 = vunpack.c.h.b16 %v6315
    %v7535 = vunpack.c.l.b16 %v6316
    %v7536 = vunpack.c.h.b16 %v6316
    %v7537 = vunpack.c.l.b16 %v6317
    %v7538 = vunpack.c.h.b16 %v6317
    %v7539 = vunpack.c.l.b16 %v6318
    %v7540 = vunpack.c.h.b16 %v6318
    %v7541 = vunpack.c.l.b16 %v6319
    %v7542 = vunpack.c.h.b16 %v6319
    %v7543 = vunpack.c.l.b16 %v6320
    %v7544 = vunpack.c.h.b16 %v6320
    %v7545 = vunpack.c.l.b16 %v6321
    %v7546 = vunpack.c.h.b16 %v6321
    %v7547 = vunpack.c.l.b16 %v6322
    %v7548 = vunpack.c.h.b16 %v6322
    %v7549 = vunpack.c.l.b16 %v6323
    %v7550 = vunpack.c.h.b16 %v6323
    %v7551 = vunpack.c.l.b16 %v6324
    %v7552 = vunpack.c.h.b16 %v6324
    %v7553 = vunpack.c.l.b16 %v6325
    %v7554 = vunpack.c.h.b16 %v6325
    %v7555 = vunpack.c.l.b16 %v6326
    %v7556 = vunpack.c.h.b16 %v6326
    %v7557 = vunpack.c.l.b16 %v6327
    %v7558 = vunpack.c.h.b16 %v6327
    %v7559 = vunpack.c.l.b16 %v6328
    %v7560 = vunpack.c.h.b16 %v6328
    %v7561 = vunpack.c.l.b16 %v6329
    %v7562 = vunpack.c.h.b16 %v6329
    %v7563 = vunpack.c.l.b16 %v6330
    %v7564 = vunpack.c.h.b16 %v6330
    %v7565 = vunpack.c.l.b16 %v6331
    %v7566 = vunpack.c.h.b16 %v6331
    %v7567 = vunpack.c.l.b16 %v6332
    %v7568 = vunpack.c.h.b16 %v6332
    %v7569 = vunpack.c.l.b16 %v6333
    %v7570 = vunpack.c.h.b16 %v6333
    %v7571 = vunpack.c.l.b16 %v6334
    %v7572 = vunpack.c.h.b16 %v6334
    %v7573 = vunpack.c.l.b16 %v6335
    %v7574 = vunpack.c.h.b16 %v6335
    %v7575 = vunpack.c.l.b16 %v6336
    %v7576 = vunpack.c.h.b16 %v6336
    %v7577 = vunpack.c.l.b16 %v6337
    %v7578 = vunpack.c.h.b16 %v6337
    %v7579 = vunpack.c.l.b16 %v6338
    %v7580 = vunpack.c.h.b16 %v6338
    %v7581 = vunpack.c.l.b16 %v6339
    %v7582 = vunpack.c.h.b16 %v6339
    %v7583 = vunpack.c.l.b16 %v6340
    %v7584 = vunpack.c.h.b16 %v6340
    %v7585 = vunpack.c.l.b16 %v6341
    %v7586 = vunpack.c.h.b16 %v6341
    %v7587 = vunpack.c.l.b16 %v6342
    %v7588 = vunpack.c.h.b16 %v6342
    %v7589 = vunpack.c.l.b16 %v6343
    %v7590 = vunpack.c.h.b16 %v6343
    %v7591 = vunpack.c.l.b16 %v6344
    %v7592 = vunpack.c.h.b16 %v6344
    %v7593 = vunpack.c.l.b16 %v6345
    %v7594 = vunpack.c.h.b16 %v6345
    %v7595 = vunpack.c.l.b16 %v6346
    %v7596 = vunpack.c.h.b16 %v6346
    %v7597 = vunpack.c.l.b16 %v6347
    %v7598 = vunpack.c.h.b16 %v6347
    %v7599 = vunpack.c.l.b16 %v6348
    %v7600 = vunpack.c.h.b16 %v6348
    %v7601 = vunpack.c.l.b16 %v6349
    %v7602 = vunpack.c.h.b16 %v6349
    %v7603 = vunpack.c.l.b16 %v6350
    %v7604 = vunpack.c.h.b16 %v6350
    %v7605 = vunpack.c.l.b16 %v6351
    %v7606 = vunpack.c.h.b16 %v6351
    %v7607 = vunpack.c.l.b16 %v6352
    %v7608 = vunpack.c.h.b16 %v6352
    %v7609 = vunpack.c.l.b16 %v6353
    %v7610 = vunpack.c.h.b16 %v6353
    %v7611 = vunpack.c.l.b16 %v6354
    %v7612 = vunpack.c.h.b16 %v6354
    %v7613 = vunpack.c.l.b16 %v6355
    %v7614 = vunpack.c.h.b16 %v6355
    %v7615 = vunpack.c.l.b16 %v6356
    %v7616 = vunpack.c.h.b16 %v6356
    %v7617 = vunpack.c.l.b16 %v6357
    %v7618 = vunpack.c.h.b16 %v6357
    %v7619 = vunpack.c.l.b16 %v6358
    %v7620 = vunpack.c.h.b16 %v6358
    %v7621 = vunpack.c.l.b16 %v6359
    %v7622 = vunpack.c.h.b16 %v6359
    %v7623 = vunpack.c.l.b16 %v6360
    %v7624 = vunpack.c.h.b16 %v6360
    %v7625 = vunpack.c.l.b16 %v6361
    %v7626 = vunpack.c.h.b16 %v6361
    %v7627 = vunpack.c.l.b16 %v6362
    %v7628 = vunpack.c.h.b16 %v6362
    %v7629 = vunpack.c.l.b16 %v6363
    %v7630 = vunpack.c.h.b16 %v6363
    %v7631 = vunpack.c.l.b16 %v6364
    %v7632 = vunpack.c.h.b16 %v6364
    %v7633 = vunpack.c.l.b16 %v6365
    %v7634 = vunpack.c.h.b16 %v6365
    %v7635 = vunpack.c.l.b16 %v6366
    %v7636 = vunpack.c.h.b16 %v6366
    %v7637 = vunpack.c.l.b16 %v6367
    %v7638 = vunpack.c.h.b16 %v6367
    %v7639 = vunpack.c.l.b16 %v6368
    %v7640 = vunpack.c.h.b16 %v6368
    %v7641 = vunpack.c.l.b16 %v6369
    %v7642 = vunpack.c.h.b16 %v6369
    %v7643 = vunpack.c.l.b16 %v6370
    %v7644 = vunpack.c.h.b16 %v6370
    %v7645 = vunpack.c.l.b16 %v6371
    %v7646 = vunpack.c.h.b16 %v6371
    %v7647 = vunpack.c.l.b16 %v6372
    %v7648 = vunpack.c.h.b16 %v6372
    %v7649 = vunpack.c.l.b16 %v6373
    %v7650 = vunpack.c.h.b16 %v6373
    %v7651 = vunpack.c.l.b16 %v6374
    %v7652 = vunpack.c.h.b16 %v6374
    %v7653 = vunpack.c.l.b16 %v6375
    %v7654 = vunpack.c.h.b16 %v6375
    %v7655 = vunpack.c.l.b16 %v6376
    %v7656 = vunpack.c.h.b16 %v6376
    %v7657 = vunpack.c.l.b16 %v6377
    %v7658 = vunpack.c.h.b16 %v6377
    %v7659 = vunpack.c.l.b16 %v6378
    %v7660 = vunpack.c.h.b16 %v6378
    %v7661 = vunpack.c.l.b16 %v6379
    %v7662 = vunpack.c.h.b16 %v6379
    %v7663 = vunpack.c.l.b16 %v6380
    %v7664 = vunpack.c.h.b16 %v6380
    %v7665 = vunpack.c.l.b16 %v6381
    %v7666 = vunpack.c.h.b16 %v6381
    %v7667 = vunpack.c.l.b16 %v6382
    %v7668 = vunpack.c.h.b16 %v6382
    %v7669 = vunpack.c.l.b16 %v6383
    %v7670 = vunpack.c.h.b16 %v6383
    %v7671 = vunpack.c.l.b16 %v6384
    %v7672 = vunpack.c.h.b16 %v6384
    %v7673 = vunpack.c.l.b16 %v6385
    %v7674 = vunpack.c.h.b16 %v6385
    %v7675 = vunpack.c.l.b16 %v6386
    %v7676 = vunpack.c.h.b16 %v6386
    %v7677 = vunpack.c.l.b16 %v6387
    %v7678 = vunpack.c.h.b16 %v6387
    %v7679 = vunpack.c.l.b16 %v6388
    %v7680 = vunpack.c.h.b16 %v6388
    %v7681 = vunpack.c.l.b16 %v6389
    %v7682 = vunpack.c.h.b16 %v6389
    %v7683 = vunpack.c.l.b16 %v6390
    %v7684 = vunpack.c.h.b16 %v6390
    %v7685 = vunpack.c.l.b16 %v6391
    %v7686 = vunpack.c.h.b16 %v6391
    %v7687 = vunpack.c.l.b16 %v6392
    %v7688 = vunpack.c.h.b16 %v6392
    %v7689 = vunpack.c.l.b16 %v6393
    %v7690 = vunpack.c.h.b16 %v6393
    %v7691 = vunpack.c.l.b16 %v6394
    %v7692 = vunpack.c.h.b16 %v6394
    %v7693 = vunpack.c.l.b16 %v6395
    %v7694 = vunpack.c.h.b16 %v6395
    %v7695 = vunpack.c.l.b16 %v6396
    %v7696 = vunpack.c.h.b16 %v6396
    %v7697 = vunpack.c.l.b16 %v6397
    %v7698 = vunpack.c.h.b16 %v6397
    %v7699 = vunpack.c.l.b16 %v6398
    %v7700 = vunpack.c.h.b16 %v6398
    %v7701 = vunpack.c.l.b16 %v6399
    %v7702 = vunpack.c.h.b16 %v6399
    %v7703 = vunpack.c.l.b16 %v6400
    %v7704 = vunpack.c.h.b16 %v6400
    %v7705 = vunpack.c.l.b16 %v6401
    %v7706 = vunpack.c.h.b16 %v6401
    %v7707 = vunpack.c.l.b16 %v6402
    %v7708 = vunpack.c.h.b16 %v6402
    %v7709 = vunpack.c.l.b16 %v6403
    %v7710 = vunpack.c.h.b16 %v6403
    %v7711 = vunpack.c.l.b16 %v6404
    %v7712 = vunpack.c.h.b16 %v6404
    %v7713 = vunpack.c.l.b16 %v6405
    %v7714 = vunpack.c.h.b16 %v6405
    %v7715 = vunpack.c.l.b16 %v6406
    %v7716 = vunpack.c.h.b16 %v6406
    %v7717 = vunpack.c.l.b16 %v6407
    %v7718 = vunpack.c.h.b16 %v6407
    %v7719 = vunpack.c.l.b16 %v6408
    %v7720 = vunpack.c.h.b16 %v6408
    %v7721 = vunpack.c.l.b16 %v6409
    %v7722 = vunpack.c.h.b16 %v6409
    %v7723 = vunpack.c.l.b16 %v6410
    %v7724 = vunpack.c.h.b16 %v6410
    %v7725 = vunpack.c.l.b16 %v6411
    %v7726 = vunpack.c.h.b16 %v6411
    %v7727 = vunpack.c.l.b16 %v6412
    %v7728 = vunpack.c.h.b16 %v6412
    %v7729 = vunpack.c.l.b16 %v6413
    %v7730 = vunpack.c.h.b16 %v6413
    %v7731 = vunpack.c.l.b16 %v6414
    %v7732 = vunpack.c.h.b16 %v6414
    %v7733 = vunpack.c.l.b16 %v6415
    %v7734 = vunpack.c.h.b16 %v6415
    %v7735 = vunpack.c.l.b16 %v6416
    %v7736 = vunpack.c.h.b16 %v6416
    %v7737 = vunpack.c.l.b16 %v6417
    %v7738 = vunpack.c.h.b16 %v6417
    %v7739 = vunpack.c.l.b16 %v6418
    %v7740 = vunpack.c.h.b16 %v6418
    %v7741 = vunpack.c.l.b16 %v6419
    %v7742 = vunpack.c.h.b16 %v6419
    %v7743 = vunpack.c.l.b16 %v6420
    %v7744 = vunpack.c.h.b16 %v6420
    %v7745 = vunpack.c.l.b16 %v6421
    %v7746 = vunpack.c.h.b16 %v6421
    %v7747 = vunpack.c.l.b16 %v6422
    %v7748 = vunpack.c.h.b16 %v6422
    %v7749 = vunpack.c.l.b16 %v6423
    %v7750 = vunpack.c.h.b16 %v6423
    %v7751 = vunpack.c.l.b16 %v6424
    %v7752 = vunpack.c.h.b16 %v6424
    %v7753 = vunpack.c.l.b16 %v6425
    %v7754 = vunpack.c.h.b16 %v6425
    %v7755 = vunpack.c.l.b16 %v6426
    %v7756 = vunpack.c.h.b16 %v6426
    %v7757 = vunpack.c.l.b16 %v6427
    %v7758 = vunpack.c.h.b16 %v6427
    %v7759 = vunpack.c.l.b16 %v6428
    %v7760 = vunpack.c.h.b16 %v6428
    %v7761 = vunpack.c.l.b16 %v6429
    %v7762 = vunpack.c.h.b16 %v6429
    %v7763 = vunpack.c.l.b16 %v6430
    %v7764 = vunpack.c.h.b16 %v6430
    %v7765 = vunpack.c.l.b16 %v6431
    %v7766 = vunpack.c.h.b16 %v6431
    %v7767 = vunpack.c.l.b16 %v6432
    %v7768 = vunpack.c.h.b16 %v6432
    %v7769 = vunpack.c.l.b16 %v6433
    %v7770 = vunpack.c.h.b16 %v6433
    %v7771 = vunpack.c.l.b16 %v6434
    %v7772 = vunpack.c.h.b16 %v6434
    %v7773 = vunpack.c.l.b16 %v6435
    %v7774 = vunpack.c.h.b16 %v6435
    %v7775 = vunpack.c.l.b16 %v6436
    %v7776 = vunpack.c.h.b16 %v6436
    %v7777 = vunpack.c.l.b16 %v6437
    %v7778 = vunpack.c.h.b16 %v6437
    %v7779 = vunpack.c.l.b16 %v6438
    %v7780 = vunpack.c.h.b16 %v6438
    %v7781 = vunpack.c.l.b16 %v6439
    %v7782 = vunpack.c.h.b16 %v6439
    %v7783 = vunpack.c.l.b16 %v6440
    %v7784 = vunpack.c.h.b16 %v6440
    %v7785 = vunpack.c.l.b16 %v6441
    %v7786 = vunpack.c.h.b16 %v6441
    %v7787 = vunpack.c.l.b16 %v6442
    %v7788 = vunpack.c.h.b16 %v6442
    %v7789 = vunpack.c.l.b16 %v6443
    %v7790 = vunpack.c.h.b16 %v6443
    %v7791 = vunpack.c.l.b16 %v6444
    %v7792 = vunpack.c.h.b16 %v6444
    %v7793 = vunpack.c.l.b16 %v6445
    %v7794 = vunpack.c.h.b16 %v6445
    %v7795 = vunpack.c.l.b16 %v6446
    %v7796 = vunpack.c.h.b16 %v6446
    %v7797 = vunpack.c.l.b16 %v6447
    %v7798 = vunpack.c.h.b16 %v6447
    %v7799 = vunpack.c.l.b16 %v6448
    %v7800 = vunpack.c.h.b16 %v6448
    %v7801 = vunpack.c.l.b16 %v6449
    %v7802 = vunpack.c.h.b16 %v6449
    %v7803 = vunpack.c.l.b16 %v6450
    %v7804 = vunpack.c.h.b16 %v6450
    %v7805 = vunpack.c.l.b16 %v6451
    %v7806 = vunpack.c.h.b16 %v6451
    %v7807 = vunpack.c.l.b16 %v6452
    %v7808 = vunpack.c.h.b16 %v6452
    %v7809 = vunpack.c.l.b16 %v6453
    %v7810 = vunpack.c.h.b16 %v6453
    %v7811 = vunpack.c.l.b16 %v6454
    %v7812 = vunpack.c.h.b16 %v6454
    %v7813 = vunpack.c.l.b16 %v6455
    %v7814 = vunpack.c.h.b16 %v6455
    %v7815 = vunpack.c.l.b16 %v6456
    %v7816 = vunpack.c.h.b16 %v6456
    %v7817 = vunpack.c.l.b16 %v6457
    %v7818 = vunpack.c.h.b16 %v6457
    %v7819 = vunpack.c.l.b16 %v6458
    %v7820 = vunpack.c.h.b16 %v6458
    %v7821 = vunpack.c.l.b16 %v6459
    %v7822 = vunpack.c.h.b16 %v6459
    %v7823 = vunpack.c.l.b16 %v6460
    %v7824 = vunpack.c.h.b16 %v6460
    %v7825 = vunpack.c.l.b16 %v6461
    %v7826 = vunpack.c.h.b16 %v6461
    %v7827 = vunpack.c.l.b16 %v6462
    %v7828 = vunpack.c.h.b16 %v6462
    %v7829 = vunpack.c.l.b16 %v6463
    %v7830 = vunpack.c.h.b16 %v6463
    %v7831 = vunpack.c.l.b16 %v6464
    %v7832 = vunpack.c.h.b16 %v6464
    %v7833 = vunpack.c.l.b16 %v6465
    %v7834 = vunpack.c.h.b16 %v6465
    %v7835 = vunpack.c.l.b16 %v6466
    %v7836 = vunpack.c.h.b16 %v6466
    %v7837 = vunpack.c.l.b16 %v6467
    %v7838 = vunpack.c.h.b16 %v6467
    %v7839 = vunpack.c.l.b16 %v6468
    %v7840 = vunpack.c.h.b16 %v6468
    %v7841 = vunpack.c.l.b16 %v6469
    %v7842 = vunpack.c.h.b16 %v6469
    %v7843 = vunpack.c.l.b16 %v6470
    %v7844 = vunpack.c.h.b16 %v6470
    %v7845 = vunpack.c.l.b16 %v6471
    %v7846 = vunpack.c.h.b16 %v6471
    %v7847 = vunpack.c.l.b16 %v6472
    %v7848 = vunpack.c.h.b16 %v6472
    %v7849 = vunpack.c.l.b16 %v6473
    %v7850 = vunpack.c.h.b16 %v6473
    %v7851 = vunpack.c.l.b16 %v6474
    %v7852 = vunpack.c.h.b16 %v6474
    %v7853 = vunpack.c.l.b16 %v6475
    %v7854 = vunpack.c.h.b16 %v6475
    %v7855 = vunpack.c.l.b16 %v6476
    %v7856 = vunpack.c.h.b16 %v6476
    %v7857 = vunpack.c.l.b16 %v6477
    %v7858 = vunpack.c.h.b16 %v6477
    %v7859 = vunpack.c.l.b16 %v6478
    %v7860 = vunpack.c.h.b16 %v6478
    %v7861 = vunpack.c.l.b16 %v6479
    %v7862 = vunpack.c.h.b16 %v6479
    %v7863 = vunpack.c.l.b16 %v6480
    %v7864 = vunpack.c.h.b16 %v6480
    %v7865 = vunpack.c.l.b16 %v6481
    %v7866 = vunpack.c.h.b16 %v6481
    %v7867 = vunpack.c.l.b16 %v6482
    %v7868 = vunpack.c.h.b16 %v6482
    %v7869 = vunpack.c.l.b16 %v6483
    %v7870 = vunpack.c.h.b16 %v6483
    %v7871 = vunpack.c.l.b16 %v6484
    %v7872 = vunpack.c.h.b16 %v6484
    %v7873 = vunpack.c.l.b16 %v6485
    %v7874 = vunpack.c.h.b16 %v6485
    %v7875 = vunpack.c.l.b16 %v6486
    %v7876 = vunpack.c.h.b16 %v6486
    %v7877 = vunpack.c.l.b16 %v6487
    %v7878 = vunpack.c.h.b16 %v6487
    %v7879 = vunpack.c.l.b16 %v6488
    %v7880 = vunpack.c.h.b16 %v6488
    %v7881 = vunpack.c.l.b16 %v6489
    %v7882 = vunpack.c.h.b16 %v6489
    %v7883 = vunpack.c.l.b16 %v6490
    %v7884 = vunpack.c.h.b16 %v6490
    %v7885 = vunpack.c.l.b16 %v6491
    %v7886 = vunpack.c.h.b16 %v6491
    %v7887 = vunpack.c.l.b16 %v6492
    %v7888 = vunpack.c.h.b16 %v6492
    %v7889 = vunpack.c.l.b16 %v6493
    %v7890 = vunpack.c.h.b16 %v6493
    %v7891 = vunpack.c.l.b16 %v6494
    %v7892 = vunpack.c.h.b16 %v6494
    %v7893 = vunpack.c.l.b16 %v6495
    %v7894 = vunpack.c.h.b16 %v6495
    %v7895 = vunpack.c.l.b16 %v6496
    %v7896 = vunpack.c.h.b16 %v6496
    %v7897 = vunpack.c.l.b16 %v6497
    %v7898 = vunpack.c.h.b16 %v6497
    %v7899 = vunpack.c.l.b16 %v6498
    %v7900 = vunpack.c.h.b16 %v6498
    %v7901 = vunpack.c.l.b16 %v6499
    %v7902 = vunpack.c.h.b16 %v6499
    %v7903 = vunpack.c.l.b16 %v6500
    %v7904 = vunpack.c.h.b16 %v6500
    %v7905 = vunpack.c.l.b16 %v6501
    %v7906 = vunpack.c.h.b16 %v6501
    %v7907 = vunpack.c.l.b16 %v6502
    %v7908 = vunpack.c.h.b16 %v6502
    %v7909 = vunpack.c.l.b16 %v6503
    %v7910 = vunpack.c.h.b16 %v6503
    %v7911 = vunpack.c.l.b16 %v6504
    %v7912 = vunpack.c.h.b16 %v6504
    %v7913 = vunpack.c.l.b16 %v6505
    %v7914 = vunpack.c.h.b16 %v6505
    %v7915 = vunpack.c.l.b16 %v6506
    %v7916 = vunpack.c.h.b16 %v6506
    %v7917 = vunpack.c.l.b16 %v6507
    %v7918 = vunpack.c.h.b16 %v6507
    %v7919 = vunpack.c.l.b16 %v6508
    %v7920 = vunpack.c.h.b16 %v6508
    %v7921 = vunpack.c.l.b16 %v6509
    %v7922 = vunpack.c.h.b16 %v6509
    %v7923 = vunpack.c.l.b16 %v6510
    %v7924 = vunpack.c.h.b16 %v6510
    %v7925 = vunpack.c.l.b16 %v6511
    %v7926 = vunpack.c.h.b16 %v6511
    %v7927 = vunpack.c.l.b16 %v6512
    %v7928 = vunpack.c.h.b16 %v6512
    %v7929 = vunpack.c.l.b16 %v6513
    %v7930 = vunpack.c.h.b16 %v6513
    %v7931 = vunpack.c.l.b16 %v6514
    %v7932 = vunpack.c.h.b16 %v6514
    %v7933 = vunpack.c.l.b16 %v6515
    %v7934 = vunpack.c.h.b16 %v6515
    %v7935 = vunpack.c.l.b16 %v6516
    %v7936 = vunpack.c.h.b16 %v6516
    %v7937 = vunpack.c.l.b16 %v6517
    %v7938 = vunpack.c.h.b16 %v6517
    %v7939 = vunpack.c.l.b16 %v6518
    %v7940 = vunpack.c.h.b16 %v6518
    %v7941 = vunpack.c.l.b16 %v6519
    %v7942 = vunpack.c.h.b16 %v6519
    %v7943 = vunpack.c.l.b16 %v6520
    %v7944 = vunpack.c.h.b16 %v6520
    %v7945 = vunpack.c.l.b16 %v6521
    %v7946 = vunpack.c.h.b16 %v6521
    %v7947 = vunpack.c.l.b16 %v6522
    %v7948 = vunpack.c.h.b16 %v6522
    %v7949 = vunpack.c.l.b16 %v6523
    %v7950 = vunpack.c.h.b16 %v6523
    %v7951 = vunpack.c.l.b16 %v6524
    %v7952 = vunpack.c.h.b16 %v6524
    %v7953 = vunpack.c.l.b16 %v6525
    %v7954 = vunpack.c.h.b16 %v6525
    %v7955 = vunpack.c.l.b16 %v6526
    %v7956 = vunpack.c.h.b16 %v6526
    %v7957 = vunpack.c.l.b16 %v6527
    %v7958 = vunpack.c.h.b16 %v6527
    %v7959 = vunpack.c.l.b16 %v6528
    %v7960 = vunpack.c.h.b16 %v6528
    %v7961 = vunpack.c.l.b16 %v6529
    %v7962 = vunpack.c.h.b16 %v6529
    %v7963 = vunpack.c.l.b16 %v6530
    %v7964 = vunpack.c.h.b16 %v6530
    %v7965 = vunpack.c.l.b16 %v6531
    %v7966 = vunpack.c.h.b16 %v6531
    %v7967 = vunpack.c.l.b16 %v6532
    %v7968 = vunpack.c.h.b16 %v6532
    %v7969 = vunpack.c.l.b16 %v6533
    %v7970 = vunpack.c.h.b16 %v6533
    %v7971 = vunpack.c.l.b16 %v6534
    %v7972 = vunpack.c.h.b16 %v6534
    %v7973 = vunpack.c.l.b16 %v6535
    %v7974 = vunpack.c.h.b16 %v6535
    %v7975 = vunpack.c.l.b16 %v6536
    %v7976 = vunpack.c.h.b16 %v6536
    %v7977 = vunpack.c.l.b16 %v6537
    %v7978 = vunpack.c.h.b16 %v6537
    %v7979 = vunpack.c.l.b16 %v6538
    %v7980 = vunpack.c.h.b16 %v6538
    %v7981 = vunpack.c.l.b16 %v6539
    %v7982 = vunpack.c.h.b16 %v6539
    %v7983 = vunpack.c.l.b16 %v6540
    %v7984 = vunpack.c.h.b16 %v6540
    %v7985 = vunpack.c.l.b16 %v6541
    %v7986 = vunpack.c.h.b16 %v6541
    %v7987 = vunpack.c.l.b16 %v6542
    %v7988 = vunpack.c.h.b16 %v6542
    %v7989 = vunpack.c.l.b16 %v6543
    %v7990 = vunpack.c.h.b16 %v6543
    %v7991 = vunpack.c.l.b16 %v6544
    %v7992 = vunpack.c.h.b16 %v6544
    %v7993 = vunpack.c.l.b16 %v6545
    %v7994 = vunpack.c.h.b16 %v6545
    %v7995 = vunpack.c.l.b16 %v6546
    %v7996 = vunpack.c.h.b16 %v6546
    %v7997 = vunpack.c.l.b16 %v6547
    %v7998 = vunpack.c.h.b16 %v6547
    %v7999 = vunpack.c.l.b16 %v6548
    %v8000 = vunpack.c.h.b16 %v6548
    %v8001 = vunpack.c.l.b16 %v6549
    %v8002 = vunpack.c.h.b16 %v6549
    %v8003 = vunpack.c.l.b16 %v6550
    %v8004 = vunpack.c.h.b16 %v6550
    %v8005 = vunpack.c.l.b16 %v6551
    %v8006 = vunpack.c.h.b16 %v6551
    %v8007 = vunpack.c.l.b16 %v6552
    %v8008 = vunpack.c.h.b16 %v6552
    %v8009 = vunpack.c.l.b16 %v6553
    %v8010 = vunpack.c.h.b16 %v6553
    %v8011 = vunpack.c.l.b16 %v6554
    %v8012 = vunpack.c.h.b16 %v6554
    %v8013 = vunpack.c.l.b16 %v6555
    %v8014 = vunpack.c.h.b16 %v6555
    %v8015 = vunpack.c.l.b16 %v6556
    %v8016 = vunpack.c.h.b16 %v6556
    %v8017 = vunpack.c.l.b16 %v6557
    %v8018 = vunpack.c.h.b16 %v6557
    %v8019 = vunpack.c.l.b16 %v6558
    %v8020 = vunpack.c.h.b16 %v6558
    %v8021 = vunpack.c.l.b16 %v6559
    %v8022 = vunpack.c.h.b16 %v6559
    %v8023 = vunpack.c.l.b16 %v6560
    %v8024 = vunpack.c.h.b16 %v6560
    %v8025 = vunpack.c.l.b16 %v6561
    %v8026 = vunpack.c.h.b16 %v6561
    %v8027 = vunpack.c.l.b16 %v6562
    %v8028 = vunpack.c.h.b16 %v6562
    %v8029 = vunpack.c.l.b16 %v6563
    %v8030 = vunpack.c.h.b16 %v6563
    %v8031 = vunpack.c.l.b16 %v6564
    %v8032 = vunpack.c.h.b16 %v6564
    %v8033 = vunpack.c.l.b16 %v6565
    %v8034 = vunpack.c.h.b16 %v6565
    %v8035 = vunpack.c.l.b16 %v6566
    %v8036 = vunpack.c.h.b16 %v6566
    %v8037 = vunpack.c.l.b16 %v6567
    %v8038 = vunpack.c.h.b16 %v6567
    %v8039 = vunpack.c.l.b16 %v6568
    %v8040 = vunpack.c.h.b16 %v6568
    %v8041 = vunpack.c.l.b16 %v6569
    %v8042 = vunpack.c.h.b16 %v6569
    %v8043 = vunpack.c.l.b16 %v6570
    %v8044 = vunpack.c.h.b16 %v6570
    %v8045 = vunpack.c.l.b16 %v6571
    %v8046 = vunpack.c.h.b16 %v6571
    %v8047 = vunpack.c.l.b16 %v6572
    %v8048 = vunpack.c.h.b16 %v6572
    %v8049 = vunpack.c.l.b16 %v6573
    %v8050 = vunpack.c.h.b16 %v6573
    %v8051 = vunpack.c.l.b16 %v6574
    %v8052 = vunpack.c.h.b16 %v6574
    %v8053 = vunpack.c.l.b16 %v6575
    %v8054 = vunpack.c.h.b16 %v6575
    %v8055 = vunpack.c.l.b16 %v6576
    %v8056 = vunpack.c.h.b16 %v6576
    %v8057 = vunpack.c.l.b16 %v6577
    %v8058 = vunpack.c.h.b16 %v6577
    %v8059 = vunpack.c.l.b16 %v6578
    %v8060 = vunpack.c.h.b16 %v6578
    %v8061 = vunpack.c.l.b16 %v6579
    %v8062 = vunpack.c.h.b16 %v6579
    %v8063 = vunpack.c.l.b16 %v6580
    %v8064 = vunpack.c.h.b16 %v6580
    %v8065 = vunpack.c.l.b16 %v6581
    %v8066 = vunpack.c.h.b16 %v6581
    %v8067 = vunpack.c.l.b16 %v6582
    %v8068 = vunpack.c.h.b16 %v6582
    %v8069 = vunpack.c.l.b16 %v6583
    %v8070 = vunpack.c.h.b16 %v6583
    %v8071 = vunpack.c.l.b16 %v6584
    %v8072 = vunpack.c.h.b16 %v6584
    %v8073 = vunpack.c.l.b16 %v6585
    %v8074 = vunpack.c.h.b16 %v6585
    %v8075 = vunpack.c.l.b16 %v6586
    %v8076 = vunpack.c.h.b16 %v6586
    %v8077 = vunpack.c.l.b16 %v6587
    %v8078 = vunpack.c.h.b16 %v6587
    %v8079 = vunpack.c.l.b16 %v6588
    %v8080 = vunpack.c.h.b16 %v6588
    %v8081 = vunpack.c.l.b16 %v6589
    %v8082 = vunpack.c.h.b16 %v6589
    %v8083 = vunpack.c.l.b16 %v6590
    %v8084 = vunpack.c.h.b16 %v6590
    %v8085 = vunpack.c.l.b16 %v6591
    %v8086 = vunpack.c.h.b16 %v6591
    %v8087 = vunpack.c.l.b16 %v6592
    %v8088 = vunpack.c.h.b16 %v6592
    %v8089 = vunpack.c.l.b16 %v6593
    %v8090 = vunpack.c.h.b16 %v6593
    %v8091 = vunpack.c.l.b16 %v6594
    %v8092 = vunpack.c.h.b16 %v6594
    %v8093 = vunpack.c.l.b16 %v6595
    %v8094 = vunpack.c.h.b16 %v6595
    %v8095 = vunpack.c.l.b16 %v6596
    %v8096 = vunpack.c.h.b16 %v6596
    %v8097 = vunpack.c.l.b16 %v6597
    %v8098 = vunpack.c.h.b16 %v6597
    %v8099 = vunpack.c.l.b16 %v6598
    %v8100 = vunpack.c.h.b16 %v6598
    %v8101 = vunpack.c.l.b16 %v6599
    %v8102 = vunpack.c.h.b16 %v6599
    %v8103 = vunpack.c.l.b16 %v6600
    %v8104 = vunpack.c.h.b16 %v6600
    %v8105 = vunpack.c.l.b16 %v6601
    %v8106 = vunpack.c.h.b16 %v6601
    %v8107 = vunpack.c.l.b16 %v6602
    %v8108 = vunpack.c.h.b16 %v6602
    %v8109 = vunpack.c.l.b16 %v6603
    %v8110 = vunpack.c.h.b16 %v6603
    %v8111 = vunpack.c.l.b16 %v6604
    %v8112 = vunpack.c.h.b16 %v6604
    %v8113 = vunpack.c.l.b16 %v6605
    %v8114 = vunpack.c.h.b16 %v6605
    %v8115 = vunpack.c.l.b16 %v6606
    %v8116 = vunpack.c.h.b16 %v6606
    %v8117 = vunpack.c.l.b16 %v6607
    %v8118 = vunpack.c.h.b16 %v6607
    %v8119 = vunpack.c.l.b16 %v6608
    %v8120 = vunpack.c.h.b16 %v6608
    %v8121 = vunpack.c.l.b16 %v6609
    %v8122 = vunpack.c.h.b16 %v6609
    %v8123 = vunpack.c.l.b16 %v6610
    %v8124 = vunpack.c.h.b16 %v6610
    %v8125 = vunpack.c.l.b16 %v6611
    %v8126 = vunpack.c.h.b16 %v6611
    %v8127 = vunpack.c.l.b16 %v6612
    %v8128 = vunpack.c.h.b16 %v6612
    %v8129 = vunpack.c.l.b16 %v6613
    %v8130 = vunpack.c.h.b16 %v6613
    %v8131 = vunpack.c.l.b16 %v6614
    %v8132 = vunpack.c.h.b16 %v6614
    %v8133 = vunpack.c.l.b16 %v6615
    %v8134 = vunpack.c.h.b16 %v6615
    %v8135 = vunpack.c.l.b16 %v6616
    %v8136 = vunpack.c.h.b16 %v6616
    %v8137 = vunpack.c.l.b16 %v6617
    %v8138 = vunpack.c.h.b16 %v6617
    %v8139 = vunpack.c.l.b16 %v6618
    %v8140 = vunpack.c.h.b16 %v6618
    %v8141 = vunpack.c.l.b16 %v6619
    %v8142 = vunpack.c.h.b16 %v6619
    %v8143 = vunpack.c.l.b16 %v6620
    %v8144 = vunpack.c.h.b16 %v6620
    %v8145 = vunpack.c.l.b16 %v6621
    %v8146 = vunpack.c.h.b16 %v6621
    %v8147 = vunpack.c.l.b16 %v6622
    %v8148 = vunpack.c.h.b16 %v6622
    %v8149 = vunpack.c.l.b16 %v6623
    %v8150 = vunpack.c.h.b16 %v6623
    %v8151 = vunpack.c.l.b16 %v6624
    %v8152 = vunpack.c.h.b16 %v6624
    %v8153 = vunpack.c.l.b16 %v6625
    %v8154 = vunpack.c.h.b16 %v6625
    %v8155 = vunpack.c.l.b16 %v6626
    %v8156 = vunpack.c.h.b16 %v6626
    %v8157 = vunpack.c.l.b16 %v6627
    %v8158 = vunpack.c.h.b16 %v6627
    %v8159 = vunpack.c.l.b16 %v6628
    %v8160 = vunpack.c.h.b16 %v6628
    %v8161 = vunpack.c.l.b16 %v6629
    %v8162 = vunpack.c.h.b16 %v6629
    %v8163 = vunpack.c.l.b16 %v6630
    %v8164 = vunpack.c.h.b16 %v6630
    %v8165 = vunpack.c.l.b16 %v6631
    %v8166 = vunpack.c.h.b16 %v6631
    %v8167 = vunpack.c.l.b16 %v6632
    %v8168 = vunpack.c.h.b16 %v6632
    %v8169 = vpack.c.b16 %v7149, %v7145
    %v8170 = vpack.c.b16 %v7150, %v7146
    %v8171 = vpack.c.b16 %v7151, %v7147
    %v8172 = vpack.c.b16 %v7152, %v7148
    %v8173 = vpack.c.b16 %v7157, %v7153
    %v8174 = vpack.c.b16 %v7158, %v7154
    %v8175 = vpack.c.b16 %v7159, %v7155
    %v8176 = vpack.c.b16 %v7160, %v7156
    %v8177 = vpack.c.b16 %v7165, %v7161
    %v8178 = vpack.c.b16 %v7166, %v7162
    %v8179 = vpack.c.b16 %v7167, %v7163
    %v8180 = vpack.c.b16 %v7168, %v7164
    %v8181 = vpack.c.b16 %v7173, %v7169
    %v8182 = vpack.c.b16 %v7174, %v7170
    %v8183 = vpack.c.b16 %v7175, %v7171
    %v8184 = vpack.c.b16 %v7176, %v7172
    %v8185 = vpack.c.b16 %v7181, %v7177
    %v8186 = vpack.c.b16 %v7182, %v7178
    %v8187 = vpack.c.b16 %v7183, %v7179
    %v8188 = vpack.c.b16 %v7184, %v7180
    %v8189 = vpack.c.b16 %v7189, %v7185
    %v8190 = vpack.c.b16 %v7190, %v7186
    %v8191 = vpack.c.b16 %v7191, %v7187
    %v8192 = vpack.c.b16 %v7192, %v7188
    %v8193 = vpack.c.b16 %v7197, %v7193
    %v8194 = vpack.c.b16 %v7198, %v7194
    %v8195 = vpack.c.b16 %v7199, %v7195
    %v8196 = vpack.c.b16 %v7200, %v7196
    %v8197 = vpack.c.b16 %v7205, %v7201
    %v8198 = vpack.c.b16 %v7206, %v7202
    %v8199 = vpack.c.b16 %v7207, %v7203
    %v8200 = vpack.c.b16 %v7208, %v7204
    %v8201 = vpack.c.b16 %v7213, %v7209
    %v8202 = vpack.c.b16 %v7214, %v7210
    %v8203 = vpack.c.b16 %v7215, %v7211
    %v8204 = vpack.c.b16 %v7216, %v7212
    %v8205 = vpack.c.b16 %v7221, %v7217
    %v8206 = vpack.c.b16 %v7222, %v7218
    %v8207 = vpack.c.b16 %v7223, %v7219
    %v8208 = vpack.c.b16 %v7224, %v7220
    %v8209 = vpack.c.b16 %v7229, %v7225
    %v8210 = vpack.c.b16 %v7230, %v7226
    %v8211 = vpack.c.b16 %v7231, %v7227
    %v8212 = vpack.c.b16 %v7232, %v7228
    %v8213 = vpack.c.b16 %v7237, %v7233
    %v8214 = vpack.c.b16 %v7238, %v7234
    %v8215 = vpack.c.b16 %v7239, %v7235
    %v8216 = vpack.c.b16 %v7240, %v7236
    %v8217 = vpack.c.b16 %v7245, %v7241
    %v8218 = vpack.c.b16 %v7246, %v7242
    %v8219 = vpack.c.b16 %v7247, %v7243
    %v8220 = vpack.c.b16 %v7248, %v7244
    %v8221 = vpack.c.b16 %v7253, %v7249
    %v8222 = vpack.c.b16 %v7254, %v7250
    %v8223 = vpack.c.b16 %v7255, %v7251
    %v8224 = vpack.c.b16 %v7256, %v7252
    %v8225 = vpack.c.b16 %v7261, %v7257
    %v8226 = vpack.c.b16 %v7262, %v7258
    %v8227 = vpack.c.b16 %v7263, %v7259
    %v8228 = vpack.c.b16 %v7264, %v7260
    %v8229 = vpack.c.b16 %v7269, %v7265
    %v8230 = vpack.c.b16 %v7270, %v7266
    %v8231 = vpack.c.b16 %v7271, %v7267
    %v8232 = vpack.c.b16 %v7272, %v7268
    %v8233 = vpack.c.b16 %v7277, %v7273
    %v8234 = vpack.c.b16 %v7278, %v7274
    %v8235 = vpack.c.b16 %v7279, %v7275
    %v8236 = vpack.c.b16 %v7280, %v7276
    %v8237 = vpack.c.b16 %v7285, %v7281
    %v8238 = vpack.c.b16 %v7286, %v7282
    %v8239 = vpack.c.b16 %v7287, %v7283
    %v8240 = vpack.c.b16 %v7288, %v7284
    %v8241 = vpack.c.b16 %v7293, %v7289
    %v8242 = vpack.c.b16 %v7294, %v7290
    %v8243 = vpack.c.b16 %v7295, %v7291
    %v8244 = vpack.c.b16 %v7296, %v7292
    %v8245 = vpack.c.b16 %v7301, %v7297
    %v8246 = vpack.c.b16 %v7302, %v7298
    %v8247 = vpack.c.b16 %v7303, %v7299
    %v8248 = vpack.c.b16 %v7304, %v7300
    %v8249 = vpack.c.b16 %v7309, %v7305
    %v8250 = vpack.c.b16 %v7310, %v7306
    %v8251 = vpack.c.b16 %v7311, %v7307
    %v8252 = vpack.c.b16 %v7312, %v7308
    %v8253 = vpack.c.b16 %v7317, %v7313
    %v8254 = vpack.c.b16 %v7318, %v7314
    %v8255 = vpack.c.b16 %v7319, %v7315
    %v8256 = vpack.c.b16 %v7320, %v7316
    %v8257 = vpack.c.b16 %v7325, %v7321
    %v8258 = vpack.c.b16 %v7326, %v7322
    %v8259 = vpack.c.b16 %v7327, %v7323
    %v8260 = vpack.c.b16 %v7328, %v7324
    %v8261 = vpack.c.b16 %v7333, %v7329
    %v8262 = vpack.c.b16 %v7334, %v7330
    %v8263 = vpack.c.b16 %v7335, %v7331
    %v8264 = vpack.c.b16 %v7336, %v7332
    %v8265 = vpack.c.b16 %v7341, %v7337
    %v8266 = vpack.c.b16 %v7342, %v7338
    %v8267 = vpack.c.b16 %v7343, %v7339
    %v8268 = vpack.c.b16 %v7344, %v7340
    %v8269 = vpack.c.b16 %v7349, %v7345
    %v8270 = vpack.c.b16 %v7350, %v7346
    %v8271 = vpack.c.b16 %v7351, %v7347
    %v8272 = vpack.c.b16 %v7352, %v7348
    %v8273 = vpack.c.b16 %v7357, %v7353
    %v8274 = vpack.c.b16 %v7358, %v7354
    %v8275 = vpack.c.b16 %v7359, %v7355
    %v8276 = vpack.c.b16 %v7360, %v7356
    %v8277 = vpack.c.b16 %v7365, %v7361
    %v8278 = vpack.c.b16 %v7366, %v7362
    %v8279 = vpack.c.b16 %v7367, %v7363
    %v8280 = vpack.c.b16 %v7368, %v7364
    %v8281 = vpack.c.b16 %v7373, %v7369
    %v8282 = vpack.c.b16 %v7374, %v7370
    %v8283 = vpack.c.b16 %v7375, %v7371
    %v8284 = vpack.c.b16 %v7376, %v7372
    %v8285 = vpack.c.b16 %v7381, %v7377
    %v8286 = vpack.c.b16 %v7382, %v7378
    %v8287 = vpack.c.b16 %v7383, %v7379
    %v8288 = vpack.c.b16 %v7384, %v7380
    %v8289 = vpack.c.b16 %v7389, %v7385
    %v8290 = vpack.c.b16 %v7390, %v7386
    %v8291 = vpack.c.b16 %v7391, %v7387
    %v8292 = vpack.c.b16 %v7392, %v7388
    %v8293 = vpack.c.b16 %v7397, %v7393
    %v8294 = vpack.c.b16 %v7398, %v7394
    %v8295 = vpack.c.b16 %v7399, %v7395
    %v8296 = vpack.c.b16 %v7400, %v7396
    %v8297 = vpack.c.b16 %v7405, %v7401
    %v8298 = vpack.c.b16 %v7406, %v7402
    %v8299 = vpack.c.b16 %v7407, %v7403
    %v8300 = vpack.c.b16 %v7408, %v7404
    %v8301 = vpack.c.b16 %v7413, %v7409
    %v8302 = vpack.c.b16 %v7414, %v7410
    %v8303 = vpack.c.b16 %v7415, %v7411
    %v8304 = vpack.c.b16 %v7416, %v7412
    %v8305 = vpack.c.b16 %v7421, %v7417
    %v8306 = vpack.c.b16 %v7422, %v7418
    %v8307 = vpack.c.b16 %v7423, %v7419
    %v8308 = vpack.c.b16 %v7424, %v7420
    %v8309 = vpack.c.b16 %v7429, %v7425
    %v8310 = vpack.c.b16 %v7430, %v7426
    %v8311 = vpack.c.b16 %v7431, %v7427
    %v8312 = vpack.c.b16 %v7432, %v7428
    %v8313 = vpack.c.b16 %v7437, %v7433
    %v8314 = vpack.c.b16 %v7438, %v7434
    %v8315 = vpack.c.b16 %v7439, %v7435
    %v8316 = vpack.c.b16 %v7440, %v7436
    %v8317 = vpack.c.b16 %v7445, %v7441
    %v8318 = vpack.c.b16 %v7446, %v7442
    %v8319 = vpack.c.b16 %v7447, %v7443
    %v8320 = vpack.c.b16 %v7448, %v7444
    %v8321 = vpack.c.b16 %v7453, %v7449
    %v8322 = vpack.c.b16 %v7454, %v7450
    %v8323 = vpack.c.b16 %v7455, %v7451
    %v8324 = vpack.c.b16 %v7456, %v7452
    %v8325 = vpack.c.b16 %v7461, %v7457
    %v8326 = vpack.c.b16 %v7462, %v7458
    %v8327 = vpack.c.b16 %v7463, %v7459
    %v8328 = vpack.c.b16 %v7464, %v7460
    %v8329 = vpack.c.b16 %v7469, %v7465
    %v8330 = vpack.c.b16 %v7470, %v7466
    %v8331 = vpack.c.b16 %v7471, %v7467
    %v8332 = vpack.c.b16 %v7472, %v7468
    %v8333 = vpack.c.b16 %v7477, %v7473
    %v8334 = vpack.c.b16 %v7478, %v7474
    %v8335 = vpack.c.b16 %v7479, %v7475
    %v8336 = vpack.c.b16 %v7480, %v7476
    %v8337 = vpack.c.b16 %v7485, %v7481
    %v8338 = vpack.c.b16 %v7486, %v7482
    %v8339 = vpack.c.b16 %v7487, %v7483
    %v8340 = vpack.c.b16 %v7488, %v7484
    %v8341 = vpack.c.b16 %v7493, %v7489
    %v8342 = vpack.c.b16 %v7494, %v7490
    %v8343 = vpack.c.b16 %v7495, %v7491
    %v8344 = vpack.c.b16 %v7496, %v7492
    %v8345 = vpack.c.b16 %v7501, %v7497
    %v8346 = vpack.c.b16 %v7502, %v7498
    %v8347 = vpack.c.b16 %v7503, %v7499
    %v8348 = vpack.c.b16 %v7504, %v7500
    %v8349 = vpack.c.b16 %v7509, %v7505
    %v8350 = vpack.c.b16 %v7510, %v7506
    %v8351 = vpack.c.b16 %v7511, %v7507
    %v8352 = vpack.c.b16 %v7512, %v7508
    %v8353 = vpack.c.b16 %v7517, %v7513
    %v8354 = vpack.c.b16 %v7518, %v7514
    %v8355 = vpack.c.b16 %v7519, %v7515
    %v8356 = vpack.c.b16 %v7520, %v7516
    %v8357 = vpack.c.b16 %v7525, %v7521
    %v8358 = vpack.c.b16 %v7526, %v7522
    %v8359 = vpack.c.b16 %v7527, %v7523
    %v8360 = vpack.c.b16 %v7528, %v7524
    %v8361 = vpack.c.b16 %v7533, %v7529
    %v8362 = vpack.c.b16 %v7534, %v7530
    %v8363 = vpack.c.b16 %v7535, %v7531
    %v8364 = vpack.c.b16 %v7536, %v7532
    %v8365 = vpack.c.b16 %v7541, %v7537
    %v8366 = vpack.c.b16 %v7542, %v7538
    %v8367 = vpack.c.b16 %v7543, %v7539
    %v8368 = vpack.c.b16 %v7544, %v7540
    %v8369 = vpack.c.b16 %v7549, %v7545
    %v8370 = vpack.c.b16 %v7550, %v7546
    %v8371 = vpack.c.b16 %v7551, %v7547
    %v8372 = vpack.c.b16 %v7552, %v7548
    %v8373 = vpack.c.b16 %v7557, %v7553
    %v8374 = vpack.c.b16 %v7558, %v7554
    %v8375 = vpack.c.b16 %v7559, %v7555
    %v8376 = vpack.c.b16 %v7560, %v7556
    %v8377 = vpack.c.b16 %v7565, %v7561
    %v8378 = vpack.c.b16 %v7566, %v7562
    %v8379 = vpack.c.b16 %v7567, %v7563
    %v8380 = vpack.c.b16 %v7568, %v7564
    %v8381 = vpack.c.b16 %v7573, %v7569
    %v8382 = vpack.c.b16 %v7574, %v7570
    %v8383 = vpack.c.b16 %v7575, %v7571
    %v8384 = vpack.c.b16 %v7576, %v7572
    %v8385 = vpack.c.b16 %v7581, %v7577
    %v8386 = vpack.c.b16 %v7582, %v7578
    %v8387 = vpack.c.b16 %v7583, %v7579
    %v8388 = vpack.c.b16 %v7584, %v7580
    %v8389 = vpack.c.b16 %v7589, %v7585
    %v8390 = vpack.c.b16 %v7590, %v7586
    %v8391 = vpack.c.b16 %v7591, %v7587
    %v8392 = vpack.c.b16 %v7592, %v7588
    %v8393 = vpack.c.b16 %v7597, %v7593
    %v8394 = vpack.c.b16 %v7598, %v7594
    %v8395 = vpack.c.b16 %v7599, %v7595
    %v8396 = vpack.c.b16 %v7600, %v7596
    %v8397 = vpack.c.b16 %v7605, %v7601
    %v8398 = vpack.c.b16 %v7606, %v7602
    %v8399 = vpack.c.b16 %v7607, %v7603
    %v8400 = vpack.c.b16 %v7608, %v7604
    %v8401 = vpack.c.b16 %v7613, %v7609
    %v8402 = vpack.c.b16 %v7614, %v7610
    %v8403 = vpack.c.b16 %v7615, %v7611
    %v8404 = vpack.c.b16 %v7616, %v7612
    %v8405 = vpack.c.b16 %v7621, %v7617
    %v8406 = vpack.c.b16 %v7622, %v7618
    %v8407 = vpack.c.b16 %v7623, %v7619
    %v8408 = vpack.c.b16 %v7624, %v7620
    %v8409 = vpack.c.b16 %v7629, %v7625
    %v8410 = vpack.c.b16 %v7630, %v7626
    %v8411 = vpack.c.b16 %v7631, %v7627
    %v8412 = vpack.c.b16 %v7632, %v7628
    %v8413 = vpack.c.b16 %v7637, %v7633
    %v8414 = vpack.c.b16 %v7638, %v7634
    %v8415 = vpack.c.b16 %v7639, %v7635
    %v8416 = vpack.c.b16 %v7640, %v7636
    %v8417 = vpack.c.b16 %v7645, %v7641
    %v8418 = vpack.c.b16 %v7646, %v7642
    %v8419 = vpack.c.b16 %v7647, %v7643
    %v8420 = vpack.c.b16 %v7648, %v7644
    %v8421 = vpack.c.b16 %v7653, %v7649
    %v8422 = vpack.c.b16 %v7654, %v7650
    %v8423 = vpack.c.b16 %v7655, %v7651
    %v8424 = vpack.c.b16 %v7656, %v7652
    %v8425 = vpack.c.b16 %v7661, %v7657
    %v8426 = vpack.c.b16 %v7662, %v7658
    %v8427 = vpack.c.b16 %v7663, %v7659
    %v8428 = vpack.c.b16 %v7664, %v7660
    %v8429 = vpack.c.b16 %v7669, %v7665
    %v8430 = vpack.c.b16 %v7670, %v7666
    %v8431 = vpack.c.b16 %v7671, %v7667
    %v8432 = vpack.c.b16 %v7672, %v7668
    %v8433 = vpack.c.b16 %v7677, %v7673
    %v8434 = vpack.c.b16 %v7678, %v7674
    %v8435 = vpack.c.b16 %v7679, %v7675
    %v8436 = vpack.c.b16 %v7680, %v7676
    %v8437 = vpack.c.b16 %v7685, %v7681
    %v8438 = vpack.c.b16 %v7686, %v7682
    %v8439 = vpack.c.b16 %v7687, %v7683
    %v8440 = vpack.c.b16 %v7688, %v7684
    %v8441 = vpack.c.b16 %v7693, %v7689
    %v8442 = vpack.c.b16 %v7694, %v7690
    %v8443 = vpack.c.b16 %v7695, %v7691
    %v8444 = vpack.c.b16 %v7696, %v7692
    %v8445 = vpack.c.b16 %v7701, %v7697
    %v8446 = vpack.c.b16 %v7702, %v7698
    %v8447 = vpack.c.b16 %v7703, %v7699
    %v8448 = vpack.c.b16 %v7704, %v7700
    %v8449 = vpack.c.b16 %v7709, %v7705
    %v8450 = vpack.c.b16 %v7710, %v7706
    %v8451 = vpack.c.b16 %v7711, %v7707
    %v8452 = vpack.c.b16 %v7712, %v7708
    %v8453 = vpack.c.b16 %v7717, %v7713
    %v8454 = vpack.c.b16 %v7718, %v7714
    %v8455 = vpack.c.b16 %v7719, %v7715
    %v8456 = vpack.c.b16 %v7720, %v7716
    %v8457 = vpack.c.b16 %v7725, %v7721
    %v8458 = vpack.c.b16 %v7726, %v7722
    %v8459 = vpack.c.b16 %v7727, %v7723
    %v8460 = vpack.c.b16 %v7728, %v7724
    %v8461 = vpack.c.b16 %v7733, %v7729
    %v8462 = vpack.c.b16 %v7734, %v7730
    %v8463 = vpack.c.b16 %v7735, %v7731
    %v8464 = vpack.c.b16 %v7736, %v7732
    %v8465 = vpack.c.b16 %v7741, %v7737
    %v8466 = vpack.c.b16 %v7742, %v7738
    %v8467 = vpack.c.b16 %v7743, %v7739
    %v8468 = vpack.c.b16 %v7744, %v7740
    %v8469 = vpack.c.b16 %v7749, %v7745
    %v8470 = vpack.c.b16 %v7750, %v7746
    %v8471 = vpack.c.b16 %v7751, %v7747
    %v8472 = vpack.c.b16 %v7752, %v7748
    %v8473 = vpack.c.b16 %v7757, %v7753
    %v8474 = vpack.c.b16 %v7758, %v7754
    %v8475 = vpack.c.b16 %v7759, %v7755
    %v8476 = vpack.c.b16 %v7760, %v7756
    %v8477 = vpack.c.b16 %v7765, %v7761
    %v8478 = vpack.c.b16 %v7766, %v7762
    %v8479 = vpack.c.b16 %v7767, %v7763
    %v8480 = vpack.c.b16 %v7768, %v7764
    %v8481 = vpack.c.b16 %v7773, %v7769
    %v8482 = vpack.c.b16 %v7774, %v7770
    %v8483 = vpack.c.b16 %v7775, %v7771
    %v8484 = vpack.c.b16 %v7776, %v7772
    %v8485 = vpack.c.b16 %v7781, %v7777
    %v8486 = vpack.c.b16 %v7782, %v7778
    %v8487 = vpack.c.b16 %v7783, %v7779
    %v8488 = vpack.c.b16 %v7784, %v7780
    %v8489 = vpack.c.b16 %v7789, %v7785
    %v8490 = vpack.c.b16 %v7790, %v7786
    %v8491 = vpack.c.b16 %v7791, %v7787
    %v8492 = vpack.c.b16 %v7792, %v7788
    %v8493 = vpack.c.b16 %v7797, %v7793
    %v8494 = vpack.c.b16 %v7798, %v7794
    %v8495 = vpack.c.b16 %v7799, %v7795
    %v8496 = vpack.c.b16 %v7800, %v7796
    %v8497 = vpack.c.b16 %v7805, %v7801
    %v8498 = vpack.c.b16 %v7806, %v7802
    %v8499 = vpack.c.b16 %v7807, %v7803
    %v8500 = vpack.c.b16 %v7808, %v7804
    %v8501 = vpack.c.b16 %v7813, %v7809
    %v8502 = vpack.c.b16 %v7814, %v7810
    %v8503 = vpack.c.b16 %v7815, %v7811
    %v8504 = vpack.c.b16 %v7816, %v7812
    %v8505 = vpack.c.b16 %v7821, %v7817
    %v8506 = vpack.c.b16 %v7822, %v7818
    %v8507 = vpack.c.b16 %v7823, %v7819
    %v8508 = vpack.c.b16 %v7824, %v7820
    %v8509 = vpack.c.b16 %v7829, %v7825
    %v8510 = vpack.c.b16 %v7830, %v7826
    %v8511 = vpack.c.b16 %v7831, %v7827
    %v8512 = vpack.c.b16 %v7832, %v7828
    %v8513 = vpack.c.b16 %v7837, %v7833
    %v8514 = vpack.c.b16 %v7838, %v7834
    %v8515 = vpack.c.b16 %v7839, %v7835
    %v8516 = vpack.c.b16 %v7840, %v7836
    %v8517 = vpack.c.b16 %v7845, %v7841
    %v8518 = vpack.c.b16 %v7846, %v7842
    %v8519 = vpack.c.b16 %v7847, %v7843
    %v8520 = vpack.c.b16 %v7848, %v7844
    %v8521 = vpack.c.b16 %v7853, %v7849
    %v8522 = vpack.c.b16 %v7854, %v7850
    %v8523 = vpack.c.b16 %v7855, %v7851
    %v8524 = vpack.c.b16 %v7856, %v7852
    %v8525 = vpack.c.b16 %v7861, %v7857
    %v8526 = vpack.c.b16 %v7862, %v7858
    %v8527 = vpack.c.b16 %v7863, %v7859
    %v8528 = vpack.c.b16 %v7864, %v7860
    %v8529 = vpack.c.b16 %v7869, %v7865
    %v8530 = vpack.c.b16 %v7870, %v7866
    %v8531 = vpack.c.b16 %v7871, %v7867
    %v8532 = vpack.c.b16 %v7872, %v7868
    %v8533 = vpack.c.b16 %v7877, %v7873
    %v8534 = vpack.c.b16 %v7878, %v7874
    %v8535 = vpack.c.b16 %v7879, %v7875
    %v8536 = vpack.c.b16 %v7880, %v7876
    %v8537 = vpack.c.b16 %v7885, %v7881
    %v8538 = vpack.c.b16 %v7886, %v7882
    %v8539 = vpack.c.b16 %v7887, %v7883
    %v8540 = vpack.c.b16 %v7888, %v7884
    %v8541 = vpack.c.b16 %v7893, %v7889
    %v8542 = vpack.c.b16 %v7894, %v7890
    %v8543 = vpack.c.b16 %v7895, %v7891
    %v8544 = vpack.c.b16 %v7896, %v7892
    %v8545 = vpack.c.b16 %v7901, %v7897
    %v8546 = vpack.c.b16 %v7902, %v7898
    %v8547 = vpack.c.b16 %v7903, %v7899
    %v8548 = vpack.c.b16 %v7904, %v7900
    %v8549 = vpack.c.b16 %v7909, %v7905
    %v8550 = vpack.c.b16 %v7910, %v7906
    %v8551 = vpack.c.b16 %v7911, %v7907
    %v8552 = vpack.c.b16 %v7912, %v7908
    %v8553 = vpack.c.b16 %v7917, %v7913
    %v8554 = vpack.c.b16 %v7918, %v7914
    %v8555 = vpack.c.b16 %v7919, %v7915
    %v8556 = vpack.c.b16 %v7920, %v7916
    %v8557 = vpack.c.b16 %v7925, %v7921
    %v8558 = vpack.c.b16 %v7926, %v7922
    %v8559 = vpack.c.b16 %v7927, %v7923
    %v8560 = vpack.c.b16 %v7928, %v7924
    %v8561 = vpack.c.b16 %v7933, %v7929
    %v8562 = vpack.c.b16 %v7934, %v7930
    %v8563 = vpack.c.b16 %v7935, %v7931
    %v8564 = vpack.c.b16 %v7936, %v7932
    %v8565 = vpack.c.b16 %v7941, %v7937
    %v8566 = vpack.c.b16 %v7942, %v7938
    %v8567 = vpack.c.b16 %v7943, %v7939
    %v8568 = vpack.c.b16 %v7944, %v7940
    %v8569 = vpack.c.b16 %v7949, %v7945
    %v8570 = vpack.c.b16 %v7950, %v7946
    %v8571 = vpack.c.b16 %v7951, %v7947
    %v8572 = vpack.c.b16 %v7952, %v7948
    %v8573 = vpack.c.b16 %v7957, %v7953
    %v8574 = vpack.c.b16 %v7958, %v7954
    %v8575 = vpack.c.b16 %v7959, %v7955
    %v8576 = vpack.c.b16 %v7960, %v7956
    %v8577 = vpack.c.b16 %v7965, %v7961
    %v8578 = vpack.c.b16 %v7966, %v7962
    %v8579 = vpack.c.b16 %v7967, %v7963
    %v8580 = vpack.c.b16 %v7968, %v7964
    %v8581 = vpack.c.b16 %v7973, %v7969
    %v8582 = vpack.c.b16 %v7974, %v7970
    %v8583 = vpack.c.b16 %v7975, %v7971
    %v8584 = vpack.c.b16 %v7976, %v7972
    %v8585 = vpack.c.b16 %v7981, %v7977
    %v8586 = vpack.c.b16 %v7982, %v7978
    %v8587 = vpack.c.b16 %v7983, %v7979
    %v8588 = vpack.c.b16 %v7984, %v7980
    %v8589 = vpack.c.b16 %v7989, %v7985
    %v8590 = vpack.c.b16 %v7990, %v7986
    %v8591 = vpack.c.b16 %v7991, %v7987
    %v8592 = vpack.c.b16 %v7992, %v7988
    %v8593 = vpack.c.b16 %v7997, %v7993
    %v8594 = vpack.c.b16 %v7998, %v7994
    %v8595 = vpack.c.b16 %v7999, %v7995
    %v8596 = vpack.c.b16 %v8000, %v7996
    %v8597 = vpack.c.b16 %v8005, %v8001
    %v8598 = vpack.c.b16 %v8006, %v8002
    %v8599 = vpack.c.b16 %v8007, %v8003
    %v8600 = vpack.c.b16 %v8008, %v8004
    %v8601 = vpack.c.b16 %v8013, %v8009
    %v8602 = vpack.c.b16 %v8014, %v8010
    %v8603 = vpack.c.b16 %v8015, %v8011
    %v8604 = vpack.c.b16 %v8016, %v8012
    %v8605 = vpack.c.b16 %v8021, %v8017
    %v8606 = vpack.c.b16 %v8022, %v8018
    %v8607 = vpack.c.b16 %v8023, %v8019
    %v8608 = vpack.c.b16 %v8024, %v8020
    %v8609 = vpack.c.b16 %v8029, %v8025
    %v8610 = vpack.c.b16 %v8030, %v8026
    %v8611 = vpack.c.b16 %v8031, %v8027
    %v8612 = vpack.c.b16 %v8032, %v8028
    %v8613 = vpack.c.b16 %v8037, %v8033
    %v8614 = vpack.c.b16 %v8038, %v8034
    %v8615 = vpack.c.b16 %v8039, %v8035
    %v8616 = vpack.c.b16 %v8040, %v8036
    %v8617 = vpack.c.b16 %v8045, %v8041
    %v8618 = vpack.c.b16 %v8046, %v8042
    %v8619 = vpack.c.b16 %v8047, %v8043
    %v8620 = vpack.c.b16 %v8048, %v8044
    %v8621 = vpack.c.b16 %v8053, %v8049
    %v8622 = vpack.c.b16 %v8054, %v8050
    %v8623 = vpack.c.b16 %v8055, %v8051
    %v8624 = vpack.c.b16 %v8056, %v8052
    %v8625 = vpack.c.b16 %v8061, %v8057
    %v8626 = vpack.c.b16 %v8062, %v8058
    %v8627 = vpack.c.b16 %v8063, %v8059
    %v8628 = vpack.c.b16 %v8064, %v8060
    %v8629 = vpack.c.b16 %v8069, %v8065
    %v8630 = vpack.c.b16 %v8070, %v8066
    %v8631 = vpack.c.b16 %v8071, %v8067
    %v8632 = vpack.c.b16 %v8072, %v8068
    %v8633 = vpack.c.b16 %v8077, %v8073
    %v8634 = vpack.c.b16 %v8078, %v8074
    %v8635 = vpack.c.b16 %v8079, %v8075
    %v8636 = vpack.c.b16 %v8080, %v8076
    %v8637 = vpack.c.b16 %v8085, %v8081
    %v8638 = vpack.c.b16 %v8086, %v8082
    %v8639 = vpack.c.b16 %v8087, %v8083
    %v8640 = vpack.c.b16 %v8088, %v8084
    %v8641 = vpack.c.b16 %v8093, %v8089
    %v8642 = vpack.c.b16 %v8094, %v8090
    %v8643 = vpack.c.b16 %v8095, %v8091
    %v8644 = vpack.c.b16 %v8096, %v8092
    %v8645 = vpack.c.b16 %v8101, %v8097
    %v8646 = vpack.c.b16 %v8102, %v8098
    %v8647 = vpack.c.b16 %v8103, %v8099
    %v8648 = vpack.c.b16 %v8104, %v8100
    %v8649 = vpack.c.b16 %v8109, %v8105
    %v8650 = vpack.c.b16 %v8110, %v8106
    %v8651 = vpack.c.b16 %v8111, %v8107
    %v8652 = vpack.c.b16 %v8112, %v8108
    %v8653 = vpack.c.b16 %v8117, %v8113
    %v8654 = vpack.c.b16 %v8118, %v8114
    %v8655 = vpack.c.b16 %v8119, %v8115
    %v8656 = vpack.c.b16 %v8120, %v8116
    %v8657 = vpack.c.b16 %v8125, %v8121
    %v8658 = vpack.c.b16 %v8126, %v8122
    %v8659 = vpack.c.b16 %v8127, %v8123
    %v8660 = vpack.c.b16 %v8128, %v8124
    %v8661 = vpack.c.b16 %v8133, %v8129
    %v8662 = vpack.c.b16 %v8134, %v8130
    %v8663 = vpack.c.b16 %v8135, %v8131
    %v8664 = vpack.c.b16 %v8136, %v8132
    %v8665 = vpack.c.b16 %v8141, %v8137
    %v8666 = vpack.c.b16 %v8142, %v8138
    %v8667 = vpack.c.b16 %v8143, %v8139
    %v8668 = vpack.c.b16 %v8144, %v8140
    %v8669 = vpack.c.b16 %v8149, %v8145
    %v8670 = vpack.c.b16 %v8150, %v8146
    %v8671 = vpack.c.b16 %v8151, %v8147
    %v8672 = vpack.c.b16 %v8152, %v8148
    %v8673 = vpack.c.b16 %v8157, %v8153
    %v8674 = vpack.c.b16 %v8158, %v8154
    %v8675 = vpack.c.b16 %v8159, %v8155
    %v8676 = vpack.c.b16 %v8160, %v8156
    %v8677 = vpack.c.b16 %v8165, %v8161
    %v8678 = vpack.c.b16 %v8166, %v8162
    %v8679 = vpack.c.b16 %v8167, %v8163
    %v8680 = vpack.c.b16 %v8168, %v8164
    %9193 = vmatprep.subr.bf16.mxu0 %v8170
    %9194 = vmatpush1.bf16.msra.mxu0 %v8169
    %9195 = vmatprep.subr.bf16.mxu0 %v8174
    %9196 = vmatpush1.bf16.msra.mxu0 %v8173
    %9197 = vmatprep.subr.bf16.mxu0 %v8178
    %9198 = vmatpush1.bf16.msra.mxu0 %v8177
    %9199 = vmatprep.subr.bf16.mxu0 %v8182
    %9200 = vmatpush1.bf16.msra.mxu0 %v8181
    %9201 = vmatprep.subr.bf16.mxu0 %v8186
    %9202 = vmatpush1.bf16.msra.mxu0 %v8185
    %9203 = vmatprep.subr.bf16.mxu0 %v8190
    %9204 = vmatpush1.bf16.msra.mxu0 %v8189
    %9205 = vmatprep.subr.bf16.mxu0 %v8194
    %9206 = vmatpush1.bf16.msra.mxu0 %v8193
    %9207 = vmatprep.subr.bf16.mxu0 %v8198
    %9208 = vmatpush1.bf16.msra.mxu0 %v8197
    %9209 = vmatprep.subr.bf16.mxu0 %v8202
    %9210 = vmatpush1.bf16.msra.mxu0 %v8201
    %9211 = vmatprep.subr.bf16.mxu0 %v8206
    %9212 = vmatpush1.bf16.msra.mxu0 %v8205
    %9213 = vmatprep.subr.bf16.mxu0 %v8210
    %9214 = vmatpush1.bf16.msra.mxu0 %v8209
    %9215 = vmatprep.subr.bf16.mxu0 %v8214
    %9216 = vmatpush1.bf16.msra.mxu0 %v8213
    %9217 = vmatprep.subr.bf16.mxu0 %v8218
    %9218 = vmatpush1.bf16.msra.mxu0 %v8217
    %9219 = vmatprep.subr.bf16.mxu0 %v8222
    %9220 = vmatpush1.bf16.msra.mxu0 %v8221
    %9221 = vmatprep.subr.bf16.mxu0 %v8226
    %9222 = vmatpush1.bf16.msra.mxu0 %v8225
    %9223 = vmatprep.subr.bf16.mxu0 %v8230
    %9224 = vmatpush1.bf16.msra.mxu0 %v8229
    %9225 = vmatprep.mubr.bf16.mxu0 %v6106
    %9226 = vmatmul.mubr.bf16.gmra.mrb[0].mxu0 %v6105
    %v9227 = vpop.f32.mrb[0].mxu0
    %v9228 = vadd.f32 %v2301, %v9227
    %v9229 = vpop.f32.mrb[0].mxu0
    %v9230 = vadd.f32 %v2302, %v9229
    %v9231 = vpop.f32.mrb[0].mxu0
    %v9232 = vadd.f32 %v2305, %v9231
    %v9233 = vpop.f32.mrb[0].mxu0
    %v9234 = vadd.f32 %v2306, %v9233
    %9235 = vdwg.mxu0
    %9236 = vmatprep.subr.bf16.mxu0 %v8234
    %9237 = vmatpush1.bf16.msra.mxu0 %v8233
    %9238 = vmatprep.subr.bf16.mxu0 %v8238
    %9239 = vmatpush1.bf16.msra.mxu0 %v8237
    %9240 = vmatprep.subr.bf16.mxu0 %v8242
    %9241 = vmatpush1.bf16.msra.mxu0 %v8241
    %9242 = vmatprep.subr.bf16.mxu0 %v8246
    %9243 = vmatpush1.bf16.msra.mxu0 %v8245
    %9244 = vmatprep.subr.bf16.mxu0 %v8250
    %9245 = vmatpush1.bf16.msra.mxu0 %v8249
    %9246 = vmatprep.subr.bf16.mxu0 %v8254
    %9247 = vmatpush1.bf16.msra.mxu0 %v8253
    %9248 = vmatprep.subr.bf16.mxu0 %v8258
    %9249 = vmatpush1.bf16.msra.mxu0 %v8257
    %9250 = vmatprep.subr.bf16.mxu0 %v8262
    %9251 = vmatpush1.bf16.msra.mxu0 %v8261
    %9252 = vmatprep.subr.bf16.mxu0 %v8266
    %9253 = vmatpush1.bf16.msra.mxu0 %v8265
    %9254 = vmatprep.subr.bf16.mxu0 %v8270
    %9255 = vmatpush1.bf16.msra.mxu0 %v8269
    %9256 = vmatprep.subr.bf16.mxu0 %v8274
    %9257 = vmatpush1.bf16.msra.mxu0 %v8273
    %9258 = vmatprep.subr.bf16.mxu0 %v8278
    %9259 = vmatpush1.bf16.msra.mxu0 %v8277
    %9260 = vmatprep.subr.bf16.mxu0 %v8282
    %9261 = vmatpush1.bf16.msra.mxu0 %v8281
    %9262 = vmatprep.subr.bf16.mxu0 %v8286
    %9263 = vmatpush1.bf16.msra.mxu0 %v8285
    %9264 = vmatprep.subr.bf16.mxu0 %v8290
    %9265 = vmatpush1.bf16.msra.mxu0 %v8289
    %9266 = vmatprep.subr.bf16.mxu0 %v8294
    %9267 = vmatpush1.bf16.msra.mxu0 %v8293
    %9268 = vmatprep.mubr.bf16.mxu0 %v6108
    %9269 = vmatmul.mubr.bf16.gmra.mrb[0].mxu0 %v6107
    %v9270 = vpop.f32.mrb[0].mxu0
    %v9271 = vadd.f32 %v9228, %v9270
    %v9272 = vpop.f32.mrb[0].mxu0
    %v9273 = vadd.f32 %v9230, %v9272
    %v9274 = vpop.f32.mrb[0].mxu0
    %v9275 = vadd.f32 %v9232, %v9274
    %v9276 = vpop.f32.mrb[0].mxu0
    %v9277 = vadd.f32 %v9234, %v9276
    %9278 = vdwg.mxu0
    %9279 = vmatprep.subr.bf16.mxu0 %v8298
    %9280 = vmatpush1.bf16.msra.mxu0 %v8297
    %9281 = vmatprep.subr.bf16.mxu0 %v8302
    %9282 = vmatpush1.bf16.msra.mxu0 %v8301
    %9283 = vmatprep.subr.bf16.mxu0 %v8306
    %9284 = vmatpush1.bf16.msra.mxu0 %v8305
    %9285 = vmatprep.subr.bf16.mxu0 %v8310
    %9286 = vmatpush1.bf16.msra.mxu0 %v8309
    %9287 = vmatprep.subr.bf16.mxu0 %v8314
    %9288 = vmatpush1.bf16.msra.mxu0 %v8313
    %9289 = vmatprep.subr.bf16.mxu0 %v8318
    %9290 = vmatpush1.bf16.msra.mxu0 %v8317
    %9291 = vmatprep.subr.bf16.mxu0 %v8322
    %9292 = vmatpush1.bf16.msra.mxu0 %v8321
    %9293 = vmatprep.subr.bf16.mxu0 %v8326
    %9294 = vmatpush1.bf16.msra.mxu0 %v8325
    %9295 = vmatprep.subr.bf16.mxu0 %v8330
    %9296 = vmatpush1.bf16.msra.mxu0 %v8329
    %9297 = vmatprep.subr.bf16.mxu0 %v8334
    %9298 = vmatpush1.bf16.msra.mxu0 %v8333
    %9299 = vmatprep.subr.bf16.mxu0 %v8338
    %9300 = vmatpush1.bf16.msra.mxu0 %v8337
    %9301 = vmatprep.subr.bf16.mxu0 %v8342
    %9302 = vmatpush1.bf16.msra.mxu0 %v8341
    %9303 = vmatprep.subr.bf16.mxu0 %v8346
    %9304 = vmatpush1.bf16.msra.mxu0 %v8345
    %9305 = vmatprep.subr.bf16.mxu0 %v8350
    %9306 = vmatpush1.bf16.msra.mxu0 %v8349
    %9307 = vmatprep.subr.bf16.mxu0 %v8354
    %9308 = vmatpush1.bf16.msra.mxu0 %v8353
    %9309 = vmatprep.subr.bf16.mxu0 %v8358
    %9310 = vmatpush1.bf16.msra.mxu0 %v8357
    %9311 = vmatprep.mubr.bf16.mxu0 %v6110
    %9312 = vmatmul.mubr.bf16.gmra.mrb[0].mxu0 %v6109
    %v9313 = vpop.f32.mrb[0].mxu0
    %v9314 = vadd.f32 %v9271, %v9313
    %v9315 = vpop.f32.mrb[0].mxu0
    %v9316 = vadd.f32 %v9273, %v9315
    %v9317 = vpop.f32.mrb[0].mxu0
    %v9318 = vadd.f32 %v9275, %v9317
    %v9319 = vpop.f32.mrb[0].mxu0
    %v9320 = vadd.f32 %v9277, %v9319
    %9321 = vdwg.mxu0
    %9322 = vmatprep.subr.bf16.mxu0 %v8362
    %9323 = vmatpush1.bf16.msra.mxu0 %v8361
    %9324 = vmatprep.subr.bf16.mxu0 %v8366
    %9325 = vmatpush1.bf16.msra.mxu0 %v8365
    %9326 = vmatprep.subr.bf16.mxu0 %v8370
    %9327 = vmatpush1.bf16.msra.mxu0 %v8369
    %9328 = vmatprep.subr.bf16.mxu0 %v8374
    %9329 = vmatpush1.bf16.msra.mxu0 %v8373
    %9330 = vmatprep.subr.bf16.mxu0 %v8378
    %9331 = vmatpush1.bf16.msra.mxu0 %v8377
    %9332 = vmatprep.subr.bf16.mxu0 %v8382
    %9333 = vmatpush1.bf16.msra.mxu0 %v8381
    %9334 = vmatprep.subr.bf16.mxu0 %v8386
    %9335 = vmatpush1.bf16.msra.mxu0 %v8385
    %9336 = vmatprep.subr.bf16.mxu0 %v8390
    %9337 = vmatpush1.bf16.msra.mxu0 %v8389
    %9338 = vmatprep.subr.bf16.mxu0 %v8394
    %9339 = vmatpush1.bf16.msra.mxu0 %v8393
    %9340 = vmatprep.subr.bf16.mxu0 %v8398
    %9341 = vmatpush1.bf16.msra.mxu0 %v8397
    %9342 = vmatprep.subr.bf16.mxu0 %v8402
    %9343 = vmatpush1.bf16.msra.mxu0 %v8401
    %9344 = vmatprep.subr.bf16.mxu0 %v8406
    %9345 = vmatpush1.bf16.msra.mxu0 %v8405
    %9346 = vmatprep.subr.bf16.mxu0 %v8410
    %9347 = vmatpush1.bf16.msra.mxu0 %v8409
    %9348 = vmatprep.subr.bf16.mxu0 %v8414
    %9349 = vmatpush1.bf16.msra.mxu0 %v8413
    %9350 = vmatprep.subr.bf16.mxu0 %v8418
    %9351 = vmatpush1.bf16.msra.mxu0 %v8417
    %9352 = vmatprep.subr.bf16.mxu0 %v8422
    %9353 = vmatpush1.bf16.msra.mxu0 %v8421
    %9354 = vmatprep.mubr.bf16.mxu0 %v6112
    %9355 = vmatmul.mubr.bf16.gmra.mrb[0].mxu0 %v6111
    %v9356 = vpop.f32.mrb[0].mxu0
    %v9357 = vadd.f32 %v9314, %v9356
    %v9358 = vpop.f32.mrb[0].mxu0
    %v9359 = vadd.f32 %v9316, %v9358
    %v9360 = vpop.f32.mrb[0].mxu0
    %v9361 = vadd.f32 %v9318, %v9360
    %v9362 = vpop.f32.mrb[0].mxu0
    %v9363 = vadd.f32 %v9320, %v9362
    %9364 = vdwg.mxu0
    %9365 = vmatprep.subr.bf16.mxu0 %v8426
    %9366 = vmatpush1.bf16.msra.mxu0 %v8425
    %9367 = vmatprep.subr.bf16.mxu0 %v8430
    %9368 = vmatpush1.bf16.msra.mxu0 %v8429
    %9369 = vmatprep.subr.bf16.mxu0 %v8434
    %9370 = vmatpush1.bf16.msra.mxu0 %v8433
    %9371 = vmatprep.subr.bf16.mxu0 %v8438
    %9372 = vmatpush1.bf16.msra.mxu0 %v8437
    %9373 = vmatprep.subr.bf16.mxu0 %v8442
    %9374 = vmatpush1.bf16.msra.mxu0 %v8441
    %9375 = vmatprep.subr.bf16.mxu0 %v8446
    %9376 = vmatpush1.bf16.msra.mxu0 %v8445
    %9377 = vmatprep.subr.bf16.mxu0 %v8450
    %9378 = vmatpush1.bf16.msra.mxu0 %v8449
    %9379 = vmatprep.subr.bf16.mxu0 %v8454
    %9380 = vmatpush1.bf16.msra.mxu0 %v8453
    %9381 = vmatprep.subr.bf16.mxu0 %v8458
    %9382 = vmatpush1.bf16.msra.mxu0 %v8457
    %9383 = vmatprep.subr.bf16.mxu0 %v8462
    %9384 = vmatpush1.bf16.msra.mxu0 %v8461
    %9385 = vmatprep.subr.bf16.mxu0 %v8466
    %9386 = vmatpush1.bf16.msra.mxu0 %v8465
    %9387 = vmatprep.subr.bf16.mxu0 %v8470
    %9388 = vmatpush1.bf16.msra.mxu0 %v8469
    %9389 = vmatprep.subr.bf16.mxu0 %v8474
    %9390 = vmatpush1.bf16.msra.mxu0 %v8473
    %9391 = vmatprep.subr.bf16.mxu0 %v8478
    %9392 = vmatpush1.bf16.msra.mxu0 %v8477
    %9393 = vmatprep.subr.bf16.mxu0 %v8482
    %9394 = vmatpush1.bf16.msra.mxu0 %v8481
    %9395 = vmatprep.subr.bf16.mxu0 %v8486
    %9396 = vmatpush1.bf16.msra.mxu0 %v8485
    %9397 = vmatprep.mubr.bf16.mxu0 %v6114
    %9398 = vmatmul.mubr.bf16.gmra.mrb[0].mxu0 %v6113
    %v9399 = vpop.f32.mrb[0].mxu0
    %v9400 = vadd.f32 %v9357, %v9399
    %v9401 = vpop.f32.mrb[0].mxu0
    %v9402 = vadd.f32 %v9359, %v9401
    %v9403 = vpop.f32.mrb[0].mxu0
    %v9404 = vadd.f32 %v9361, %v9403
    %v9405 = vpop.f32.mrb[0].mxu0
    %v9406 = vadd.f32 %v9363, %v9405
    %9407 = vdwg.mxu0
    %9408 = vmatprep.subr.bf16.mxu0 %v8490
    %9409 = vmatpush1.bf16.msra.mxu0 %v8489
    %9410 = vmatprep.subr.bf16.mxu0 %v8494
    %9411 = vmatpush1.bf16.msra.mxu0 %v8493
    %9412 = vmatprep.subr.bf16.mxu0 %v8498
    %9413 = vmatpush1.bf16.msra.mxu0 %v8497
    %9414 = vmatprep.subr.bf16.mxu0 %v8502
    %9415 = vmatpush1.bf16.msra.mxu0 %v8501
    %9416 = vmatprep.subr.bf16.mxu0 %v8506
    %9417 = vmatpush1.bf16.msra.mxu0 %v8505
    %9418 = vmatprep.subr.bf16.mxu0 %v8510
    %9419 = vmatpush1.bf16.msra.mxu0 %v8509
    %9420 = vmatprep.subr.bf16.mxu0 %v8514
    %9421 = vmatpush1.bf16.msra.mxu0 %v8513
    %9422 = vmatprep.subr.bf16.mxu0 %v8518
    %9423 = vmatpush1.bf16.msra.mxu0 %v8517
    %9424 = vmatprep.subr.bf16.mxu0 %v8522
    %9425 = vmatpush1.bf16.msra.mxu0 %v8521
    %9426 = vmatprep.subr.bf16.mxu0 %v8526
    %9427 = vmatpush1.bf16.msra.mxu0 %v8525
    %9428 = vmatprep.subr.bf16.mxu0 %v8530
    %9429 = vmatpush1.bf16.msra.mxu0 %v8529
    %9430 = vmatprep.subr.bf16.mxu0 %v8534
    %9431 = vmatpush1.bf16.msra.mxu0 %v8533
    %9432 = vmatprep.subr.bf16.mxu0 %v8538
    %9433 = vmatpush1.bf16.msra.mxu0 %v8537
    %9434 = vmatprep.subr.bf16.mxu0 %v8542
    %9435 = vmatpush1.bf16.msra.mxu0 %v8541
    %9436 = vmatprep.subr.bf16.mxu0 %v8546
    %9437 = vmatpush1.bf16.msra.mxu0 %v8545
    %9438 = vmatprep.subr.bf16.mxu0 %v8550
    %9439 = vmatpush1.bf16.msra.mxu0 %v8549
    %9440 = vmatprep.mubr.bf16.mxu0 %v6116
    %9441 = vmatmul.mubr.bf16.gmra.mrb[0].mxu0 %v6115
    %v9442 = vpop.f32.mrb[0].mxu0
    %v9443 = vadd.f32 %v9400, %v9442
    %v9444 = vpop.f32.mrb[0].mxu0
    %v9445 = vadd.f32 %v9402, %v9444
    %v9446 = vpop.f32.mrb[0].mxu0
    %v9447 = vadd.f32 %v9404, %v9446
    %v9448 = vpop.f32.mrb[0].mxu0
    %v9449 = vadd.f32 %v9406, %v9448
    %9450 = vdwg.mxu0
    %9451 = vmatprep.subr.bf16.mxu0 %v8554
    %9452 = vmatpush1.bf16.msra.mxu0 %v8553
    %9453 = vmatprep.subr.bf16.mxu0 %v8558
    %9454 = vmatpush1.bf16.msra.mxu0 %v8557
    %9455 = vmatprep.subr.bf16.mxu0 %v8562
    %9456 = vmatpush1.bf16.msra.mxu0 %v8561
    %9457 = vmatprep.subr.bf16.mxu0 %v8566
    %9458 = vmatpush1.bf16.msra.mxu0 %v8565
    %9459 = vmatprep.subr.bf16.mxu0 %v8570
    %9460 = vmatpush1.bf16.msra.mxu0 %v8569
    %9461 = vmatprep.subr.bf16.mxu0 %v8574
    %9462 = vmatpush1.bf16.msra.mxu0 %v8573
    %9463 = vmatprep.subr.bf16.mxu0 %v8578
    %9464 = vmatpush1.bf16.msra.mxu0 %v8577
    %9465 = vmatprep.subr.bf16.mxu0 %v8582
    %9466 = vmatpush1.bf16.msra.mxu0 %v8581
    %9467 = vmatprep.subr.bf16.mxu0 %v8586
    %9468 = vmatpush1.bf16.msra.mxu0 %v8585
    %9469 = vmatprep.subr.bf16.mxu0 %v8590
    %9470 = vmatpush1.bf16.msra.mxu0 %v8589
    %9471 = vmatprep.subr.bf16.mxu0 %v8594
    %9472 = vmatpush1.bf16.msra.mxu0 %v8593
    %9473 = vmatprep.subr.bf16.mxu0 %v8598
    %9474 = vmatpush1.bf16.msra.mxu0 %v8597
    %9475 = vmatprep.subr.bf16.mxu0 %v8602
    %9476 = vmatpush1.bf16.msra.mxu0 %v8601
    %9477 = vmatprep.subr.bf16.mxu0 %v8606
    %9478 = vmatpush1.bf16.msra.mxu0 %v8605
    %9479 = vmatprep.subr.bf16.mxu0 %v8610
    %9480 = vmatpush1.bf16.msra.mxu0 %v8609
    %9481 = vmatprep.subr.bf16.mxu0 %v8614
    %9482 = vmatpush1.bf16.msra.mxu0 %v8613
    %9483 = vmatprep.mubr.bf16.mxu0 %v6118
    %9484 = vmatmul.mubr.bf16.gmra.mrb[0].mxu0 %v6117
    %v9485 = vpop.f32.mrb[0].mxu0
    %v9486 = vadd.f32 %v9443, %v9485
    %v9487 = vpop.f32.mrb[0].mxu0
    %v9488 = vadd.f32 %v9445, %v9487
    %v9489 = vpop.f32.mrb[0].mxu0
    %v9490 = vadd.f32 %v9447, %v9489
    %v9491 = vpop.f32.mrb[0].mxu0
    %v9492 = vadd.f32 %v9449, %v9491
    %9493 = vdwg.mxu0
    %9494 = vmatprep.subr.bf16.mxu0 %v8618
    %9495 = vmatpush1.bf16.msra.mxu0 %v8617
    %9496 = vmatprep.subr.bf16.mxu0 %v8622
    %9497 = vmatpush1.bf16.msra.mxu0 %v8621
    %9498 = vmatprep.subr.bf16.mxu0 %v8626
    %9499 = vmatpush1.bf16.msra.mxu0 %v8625
    %9500 = vmatprep.subr.bf16.mxu0 %v8630
    %9501 = vmatpush1.bf16.msra.mxu0 %v8629
    %9502 = vmatprep.subr.bf16.mxu0 %v8634
    %9503 = vmatpush1.bf16.msra.mxu0 %v8633
    %9504 = vmatprep.subr.bf16.mxu0 %v8638
    %9505 = vmatpush1.bf16.msra.mxu0 %v8637
    %9506 = vmatprep.subr.bf16.mxu0 %v8642
    %9507 = vmatpush1.bf16.msra.mxu0 %v8641
    %9508 = vmatprep.subr.bf16.mxu0 %v8646
    %9509 = vmatpush1.bf16.msra.mxu0 %v8645
    %9510 = vmatprep.subr.bf16.mxu0 %v8650
    %9511 = vmatpush1.bf16.msra.mxu0 %v8649
    %9512 = vmatprep.subr.bf16.mxu0 %v8654
    %9513 = vmatpush1.bf16.msra.mxu0 %v8653
    %9514 = vmatprep.subr.bf16.mxu0 %v8658
    %9515 = vmatpush1.bf16.msra.mxu0 %v8657
    %9516 = vmatprep.subr.bf16.mxu0 %v8662
    %9517 = vmatpush1.bf16.msra.mxu0 %v8661
    %9518 = vmatprep.subr.bf16.mxu0 %v8666
    %9519 = vmatpush1.bf16.msra.mxu0 %v8665
    %9520 = vmatprep.subr.bf16.mxu0 %v8670
    %9521 = vmatpush1.bf16.msra.mxu0 %v8669
    %9522 = vmatprep.subr.bf16.mxu0 %v8674
    %9523 = vmatpush1.bf16.msra.mxu0 %v8673
    %9524 = vmatprep.subr.bf16.mxu0 %v8678
    %9525 = vmatpush1.bf16.msra.mxu0 %v8677
    %9526 = vmatprep.mubr.bf16.mxu0 %v6120
    %9527 = vmatmul.mubr.bf16.gmra.mrb[0].mxu0 %v6119
    %v9528 = vpop.f32.mrb[0].mxu0
    %v9529 = vadd.f32 %v9486, %v9528
    %v9530 = vpop.f32.mrb[0].mxu0
    %v9531 = vadd.f32 %v9488, %v9530
    %v9532 = vpop.f32.mrb[0].mxu0
    %v9533 = vadd.f32 %v9490, %v9532
    %v9534 = vpop.f32.mrb[0].mxu0
    %v9535 = vadd.f32 %v9492, %v9534
    %9536 = vdwg.mxu0
    %9537 = vmatprep.subr.bf16.mxu0 %v8172
    %9538 = vmatpush1.bf16.msra.mxu0 %v8171
    %9539 = vmatprep.subr.bf16.mxu0 %v8176
    %9540 = vmatpush1.bf16.msra.mxu0 %v8175
    %9541 = vmatprep.subr.bf16.mxu0 %v8180
    %9542 = vmatpush1.bf16.msra.mxu0 %v8179
    %9543 = vmatprep.subr.bf16.mxu0 %v8184
    %9544 = vmatpush1.bf16.msra.mxu0 %v8183
    %9545 = vmatprep.subr.bf16.mxu0 %v8188
    %9546 = vmatpush1.bf16.msra.mxu0 %v8187
    %9547 = vmatprep.subr.bf16.mxu0 %v8192
    %9548 = vmatpush1.bf16.msra.mxu0 %v8191
    %9549 = vmatprep.subr.bf16.mxu0 %v8196
    %9550 = vmatpush1.bf16.msra.mxu0 %v8195
    %9551 = vmatprep.subr.bf16.mxu0 %v8200
    %9552 = vmatpush1.bf16.msra.mxu0 %v8199
    %9553 = vmatprep.subr.bf16.mxu0 %v8204
    %9554 = vmatpush1.bf16.msra.mxu0 %v8203
    %9555 = vmatprep.subr.bf16.mxu0 %v8208
    %9556 = vmatpush1.bf16.msra.mxu0 %v8207
    %9557 = vmatprep.subr.bf16.mxu0 %v8212
    %9558 = vmatpush1.bf16.msra.mxu0 %v8211
    %9559 = vmatprep.subr.bf16.mxu0 %v8216
    %9560 = vmatpush1.bf16.msra.mxu0 %v8215
    %9561 = vmatprep.subr.bf16.mxu0 %v8220
    %9562 = vmatpush1.bf16.msra.mxu0 %v8219
    %9563 = vmatprep.subr.bf16.mxu0 %v8224
    %9564 = vmatpush1.bf16.msra.mxu0 %v8223
    %9565 = vmatprep.subr.bf16.mxu0 %v8228
    %9566 = vmatpush1.bf16.msra.mxu0 %v8227
    %9567 = vmatprep.subr.bf16.mxu0 %v8232
    %9568 = vmatpush1.bf16.msra.mxu0 %v8231
    %9569 = vmatprep.mubr.bf16.mxu0 %v6106
    %9570 = vmatmul.mubr.bf16.gmra.mrb[0].mxu0 %v6105
    %v9571 = vpop.f32.mrb[0].mxu0
    %v9572 = vadd.f32 %v2303, %v9571
    %v9573 = vpop.f32.mrb[0].mxu0
    %v9574 = vadd.f32 %v2304, %v9573
    %v9575 = vpop.f32.mrb[0].mxu0
    %v9576 = vadd.f32 %v2307, %v9575
    %v9577 = vpop.f32.mrb[0].mxu0
    %v9578 = vadd.f32 %v2308, %v9577
    %9579 = vdwg.mxu0
    %9580 = vmatprep.subr.bf16.mxu0 %v8236
    %9581 = vmatpush1.bf16.msra.mxu0 %v8235
    %9582 = vmatprep.subr.bf16.mxu0 %v8240
    %9583 = vmatpush1.bf16.msra.mxu0 %v8239
    %9584 = vmatprep.subr.bf16.mxu0 %v8244
    %9585 = vmatpush1.bf16.msra.mxu0 %v8243
    %9586 = vmatprep.subr.bf16.mxu0 %v8248
    %9587 = vmatpush1.bf16.msra.mxu0 %v8247
    %9588 = vmatprep.subr.bf16.mxu0 %v8252
    %9589 = vmatpush1.bf16.msra.mxu0 %v8251
    %9590 = vmatprep.subr.bf16.mxu0 %v8256
    %9591 = vmatpush1.bf16.msra.mxu0 %v8255
    %9592 = vmatprep.subr.bf16.mxu0 %v8260
    %9593 = vmatpush1.bf16.msra.mxu0 %v8259
    %9594 = vmatprep.subr.bf16.mxu0 %v8264
    %9595 = vmatpush1.bf16.msra.mxu0 %v8263
    %9596 = vmatprep.subr.bf16.mxu0 %v8268
    %9597 = vmatpush1.bf16.msra.mxu0 %v8267
    %9598 = vmatprep.subr.bf16.mxu0 %v8272
    %9599 = vmatpush1.bf16.msra.mxu0 %v8271
    %9600 = vmatprep.subr.bf16.mxu0 %v8276
    %9601 = vmatpush1.bf16.msra.mxu0 %v8275
    %9602 = vmatprep.subr.bf16.mxu0 %v8280
    %9603 = vmatpush1.bf16.msra.mxu0 %v8279
    %9604 = vmatprep.subr.bf16.mxu0 %v8284
    %9605 = vmatpush1.bf16.msra.mxu0 %v8283
    %9606 = vmatprep.subr.bf16.mxu0 %v8288
    %9607 = vmatpush1.bf16.msra.mxu0 %v8287
    %9608 = vmatprep.subr.bf16.mxu0 %v8292
    %9609 = vmatpush1.bf16.msra.mxu0 %v8291
    %9610 = vmatprep.subr.bf16.mxu0 %v8296
    %9611 = vmatpush1.bf16.msra.mxu0 %v8295
    %9612 = vmatprep.mubr.bf16.mxu0 %v6108
    %9613 = vmatmul.mubr.bf16.gmra.mrb[0].mxu0 %v6107
    %v9614 = vpop.f32.mrb[0].mxu0
    %v9615 = vadd.f32 %v9572, %v9614
    %v9616 = vpop.f32.mrb[0].mxu0
    %v9617 = vadd.f32 %v9574, %v9616
    %v9618 = vpop.f32.mrb[0].mxu0
    %v9619 = vadd.f32 %v9576, %v9618
    %v9620 = vpop.f32.mrb[0].mxu0
    %v9621 = vadd.f32 %v9578, %v9620
    %9622 = vdwg.mxu0
    %9623 = vmatprep.subr.bf16.mxu0 %v8300
    %9624 = vmatpush1.bf16.msra.mxu0 %v8299
    %9625 = vmatprep.subr.bf16.mxu0 %v8304
    %9626 = vmatpush1.bf16.msra.mxu0 %v8303
    %9627 = vmatprep.subr.bf16.mxu0 %v8308
    %9628 = vmatpush1.bf16.msra.mxu0 %v8307
    %9629 = vmatprep.subr.bf16.mxu0 %v8312
    %9630 = vmatpush1.bf16.msra.mxu0 %v8311
    %9631 = vmatprep.subr.bf16.mxu0 %v8316
    %9632 = vmatpush1.bf16.msra.mxu0 %v8315
    %9633 = vmatprep.subr.bf16.mxu0 %v8320
    %9634 = vmatpush1.bf16.msra.mxu0 %v8319
    %9635 = vmatprep.subr.bf16.mxu0 %v8324
    %9636 = vmatpush1.bf16.msra.mxu0 %v8323
    %9637 = vmatprep.subr.bf16.mxu0 %v8328
    %9638 = vmatpush1.bf16.msra.mxu0 %v8327
    %9639 = vmatprep.subr.bf16.mxu0 %v8332
    %9640 = vmatpush1.bf16.msra.mxu0 %v8331
    %9641 = vmatprep.subr.bf16.mxu0 %v8336
    %9642 = vmatpush1.bf16.msra.mxu0 %v8335
    %9643 = vmatprep.subr.bf16.mxu0 %v8340
    %9644 = vmatpush1.bf16.msra.mxu0 %v8339
    %9645 = vmatprep.subr.bf16.mxu0 %v8344
    %9646 = vmatpush1.bf16.msra.mxu0 %v8343
    %9647 = vmatprep.subr.bf16.mxu0 %v8348
    %9648 = vmatpush1.bf16.msra.mxu0 %v8347
    %9649 = vmatprep.subr.bf16.mxu0 %v8352
    %9650 = vmatpush1.bf16.msra.mxu0 %v8351
    %9651 = vmatprep.subr.bf16.mxu0 %v8356
    %9652 = vmatpush1.bf16.msra.mxu0 %v8355
    %9653 = vmatprep.subr.bf16.mxu0 %v8360
    %9654 = vmatpush1.bf16.msra.mxu0 %v8359
    %9655 = vmatprep.mubr.bf16.mxu0 %v6110
    %9656 = vmatmul.mubr.bf16.gmra.mrb[0].mxu0 %v6109
    %v9657 = vpop.f32.mrb[0].mxu0
    %v9658 = vadd.f32 %v9615, %v9657
    %v9659 = vpop.f32.mrb[0].mxu0
    %v9660 = vadd.f32 %v9617, %v9659
    %v9661 = vpop.f32.mrb[0].mxu0
    %v9662 = vadd.f32 %v9619, %v9661
    %v9663 = vpop.f32.mrb[0].mxu0
    %v9664 = vadd.f32 %v9621, %v9663
    %9665 = vdwg.mxu0
    %9666 = vmatprep.subr.bf16.mxu0 %v8364
    %9667 = vmatpush1.bf16.msra.mxu0 %v8363
    %9668 = vmatprep.subr.bf16.mxu0 %v8368
    %9669 = vmatpush1.bf16.msra.mxu0 %v8367
    %9670 = vmatprep.subr.bf16.mxu0 %v8372
    %9671 = vmatpush1.bf16.msra.mxu0 %v8371
    %9672 = vmatprep.subr.bf16.mxu0 %v8376
    %9673 = vmatpush1.bf16.msra.mxu0 %v8375
    %9674 = vmatprep.subr.bf16.mxu0 %v8380
    %9675 = vmatpush1.bf16.msra.mxu0 %v8379
    %9676 = vmatprep.subr.bf16.mxu0 %v8384
    %9677 = vmatpush1.bf16.msra.mxu0 %v8383
    %9678 = vmatprep.subr.bf16.mxu0 %v8388
    %9679 = vmatpush1.bf16.msra.mxu0 %v8387
    %9680 = vmatprep.subr.bf16.mxu0 %v8392
    %9681 = vmatpush1.bf16.msra.mxu0 %v8391
    %9682 = vmatprep.subr.bf16.mxu0 %v8396
    %9683 = vmatpush1.bf16.msra.mxu0 %v8395
    %9684 = vmatprep.subr.bf16.mxu0 %v8400
    %9685 = vmatpush1.bf16.msra.mxu0 %v8399
    %9686 = vmatprep.subr.bf16.mxu0 %v8404
    %9687 = vmatpush1.bf16.msra.mxu0 %v8403
    %9688 = vmatprep.subr.bf16.mxu0 %v8408
    %9689 = vmatpush1.bf16.msra.mxu0 %v8407
    %9690 = vmatprep.subr.bf16.mxu0 %v8412
    %9691 = vmatpush1.bf16.msra.mxu0 %v8411
    %9692 = vmatprep.subr.bf16.mxu0 %v8416
    %9693 = vmatpush1.bf16.msra.mxu0 %v8415
    %9694 = vmatprep.subr.bf16.mxu0 %v8420
    %9695 = vmatpush1.bf16.msra.mxu0 %v8419
    %9696 = vmatprep.subr.bf16.mxu0 %v8424
    %9697 = vmatpush1.bf16.msra.mxu0 %v8423
    %9698 = vmatprep.mubr.bf16.mxu0 %v6112
    %9699 = vmatmul.mubr.bf16.gmra.mrb[0].mxu0 %v6111
    %v9700 = vpop.f32.mrb[0].mxu0
    %v9701 = vadd.f32 %v9658, %v9700
    %v9702 = vpop.f32.mrb[0].mxu0
    %v9703 = vadd.f32 %v9660, %v9702
    %v9704 = vpop.f32.mrb[0].mxu0
    %v9705 = vadd.f32 %v9662, %v9704
    %v9706 = vpop.f32.mrb[0].mxu0
    %v9707 = vadd.f32 %v9664, %v9706
    %9708 = vdwg.mxu0
    %9709 = vmatprep.subr.bf16.mxu0 %v8428
    %9710 = vmatpush1.bf16.msra.mxu0 %v8427
    %9711 = vmatprep.subr.bf16.mxu0 %v8432
    %9712 = vmatpush1.bf16.msra.mxu0 %v8431
    %9713 = vmatprep.subr.bf16.mxu0 %v8436
    %9714 = vmatpush1.bf16.msra.mxu0 %v8435
    %9715 = vmatprep.subr.bf16.mxu0 %v8440
    %9716 = vmatpush1.bf16.msra.mxu0 %v8439
    %9717 = vmatprep.subr.bf16.mxu0 %v8444
    %9718 = vmatpush1.bf16.msra.mxu0 %v8443
    %9719 = vmatprep.subr.bf16.mxu0 %v8448
    %9720 = vmatpush1.bf16.msra.mxu0 %v8447
    %9721 = vmatprep.subr.bf16.mxu0 %v8452
    %9722 = vmatpush1.bf16.msra.mxu0 %v8451
    %9723 = vmatprep.subr.bf16.mxu0 %v8456
    %9724 = vmatpush1.bf16.msra.mxu0 %v8455
    %9725 = vmatprep.subr.bf16.mxu0 %v8460
    %9726 = vmatpush1.bf16.msra.mxu0 %v8459
    %9727 = vmatprep.subr.bf16.mxu0 %v8464
    %9728 = vmatpush1.bf16.msra.mxu0 %v8463
    %9729 = vmatprep.subr.bf16.mxu0 %v8468
    %9730 = vmatpush1.bf16.msra.mxu0 %v8467
    %9731 = vmatprep.subr.bf16.mxu0 %v8472
    %9732 = vmatpush1.bf16.msra.mxu0 %v8471
    %9733 = vmatprep.subr.bf16.mxu0 %v8476
    %9734 = vmatpush1.bf16.msra.mxu0 %v8475
    %9735 = vmatprep.subr.bf16.mxu0 %v8480
    %9736 = vmatpush1.bf16.msra.mxu0 %v8479
    %9737 = vmatprep.subr.bf16.mxu0 %v8484
    %9738 = vmatpush1.bf16.msra.mxu0 %v8483
    %9739 = vmatprep.subr.bf16.mxu0 %v8488
    %9740 = vmatpush1.bf16.msra.mxu0 %v8487
    %9741 = vmatprep.mubr.bf16.mxu0 %v6114
    %9742 = vmatmul.mubr.bf16.gmra.mrb[0].mxu0 %v6113
    %v9743 = vpop.f32.mrb[0].mxu0
    %v9744 = vadd.f32 %v9701, %v9743
    %v9745 = vpop.f32.mrb[0].mxu0
    %v9746 = vadd.f32 %v9703, %v9745
    %v9747 = vpop.f32.mrb[0].mxu0
    %v9748 = vadd.f32 %v9705, %v9747
    %v9749 = vpop.f32.mrb[0].mxu0
    %v9750 = vadd.f32 %v9707, %v9749
    %9751 = vdwg.mxu0
    %9752 = vmatprep.subr.bf16.mxu0 %v8492
    %9753 = vmatpush1.bf16.msra.mxu0 %v8491
    %9754 = vmatprep.subr.bf16.mxu0 %v8496
    %9755 = vmatpush1.bf16.msra.mxu0 %v8495
    %9756 = vmatprep.subr.bf16.mxu0 %v8500
    %9757 = vmatpush1.bf16.msra.mxu0 %v8499
    %9758 = vmatprep.subr.bf16.mxu0 %v8504
    %9759 = vmatpush1.bf16.msra.mxu0 %v8503
    %9760 = vmatprep.subr.bf16.mxu0 %v8508
    %9761 = vmatpush1.bf16.msra.mxu0 %v8507
    %9762 = vmatprep.subr.bf16.mxu0 %v8512
    %9763 = vmatpush1.bf16.msra.mxu0 %v8511
    %9764 = vmatprep.subr.bf16.mxu0 %v8516
    %9765 = vmatpush1.bf16.msra.mxu0 %v8515
    %9766 = vmatprep.subr.bf16.mxu0 %v8520
    %9767 = vmatpush1.bf16.msra.mxu0 %v8519
    %9768 = vmatprep.subr.bf16.mxu0 %v8524
    %9769 = vmatpush1.bf16.msra.mxu0 %v8523
    %9770 = vmatprep.subr.bf16.mxu0 %v8528
    %9771 = vmatpush1.bf16.msra.mxu0 %v8527
    %9772 = vmatprep.subr.bf16.mxu0 %v8532
    %9773 = vmatpush1.bf16.msra.mxu0 %v8531
    %9774 = vmatprep.subr.bf16.mxu0 %v8536
    %9775 = vmatpush1.bf16.msra.mxu0 %v8535
    %9776 = vmatprep.subr.bf16.mxu0 %v8540
    %9777 = vmatpush1.bf16.msra.mxu0 %v8539
    %9778 = vmatprep.subr.bf16.mxu0 %v8544
    %9779 = vmatpush1.bf16.msra.mxu0 %v8543
    %9780 = vmatprep.subr.bf16.mxu0 %v8548
    %9781 = vmatpush1.bf16.msra.mxu0 %v8547
    %9782 = vmatprep.subr.bf16.mxu0 %v8552
    %9783 = vmatpush1.bf16.msra.mxu0 %v8551
    %9784 = vmatprep.mubr.bf16.mxu0 %v6116
    %9785 = vmatmul.mubr.bf16.gmra.mrb[0].mxu0 %v6115
    %v9786 = vpop.f32.mrb[0].mxu0
    %v9787 = vadd.f32 %v9744, %v9786
    %v9788 = vpop.f32.mrb[0].mxu0
    %v9789 = vadd.f32 %v9746, %v9788
    %v9790 = vpop.f32.mrb[0].mxu0
    %v9791 = vadd.f32 %v9748, %v9790
    %v9792 = vpop.f32.mrb[0].mxu0
    %v9793 = vadd.f32 %v9750, %v9792
    %9794 = vdwg.mxu0
    %9795 = vmatprep.subr.bf16.mxu0 %v8556
    %9796 = vmatpush1.bf16.msra.mxu0 %v8555
    %9797 = vmatprep.subr.bf16.mxu0 %v8560
    %9798 = vmatpush1.bf16.msra.mxu0 %v8559
    %9799 = vmatprep.subr.bf16.mxu0 %v8564
    %9800 = vmatpush1.bf16.msra.mxu0 %v8563
    %9801 = vmatprep.subr.bf16.mxu0 %v8568
    %9802 = vmatpush1.bf16.msra.mxu0 %v8567
    %9803 = vmatprep.subr.bf16.mxu0 %v8572
    %9804 = vmatpush1.bf16.msra.mxu0 %v8571
    %9805 = vmatprep.subr.bf16.mxu0 %v8576
    %9806 = vmatpush1.bf16.msra.mxu0 %v8575
    %9807 = vmatprep.subr.bf16.mxu0 %v8580
    %9808 = vmatpush1.bf16.msra.mxu0 %v8579
    %9809 = vmatprep.subr.bf16.mxu0 %v8584
    %9810 = vmatpush1.bf16.msra.mxu0 %v8583
    %9811 = vmatprep.subr.bf16.mxu0 %v8588
    %9812 = vmatpush1.bf16.msra.mxu0 %v8587
    %9813 = vmatprep.subr.bf16.mxu0 %v8592
    %9814 = vmatpush1.bf16.msra.mxu0 %v8591
    %9815 = vmatprep.subr.bf16.mxu0 %v8596
    %9816 = vmatpush1.bf16.msra.mxu0 %v8595
    %9817 = vmatprep.subr.bf16.mxu0 %v8600
    %9818 = vmatpush1.bf16.msra.mxu0 %v8599
    %9819 = vmatprep.subr.bf16.mxu0 %v8604
    %9820 = vmatpush1.bf16.msra.mxu0 %v8603
    %9821 = vmatprep.subr.bf16.mxu0 %v8608
    %9822 = vmatpush1.bf16.msra.mxu0 %v8607
    %9823 = vmatprep.subr.bf16.mxu0 %v8612
    %9824 = vmatpush1.bf16.msra.mxu0 %v8611
    %9825 = vmatprep.subr.bf16.mxu0 %v8616
    %9826 = vmatpush1.bf16.msra.mxu0 %v8615
    %9827 = vmatprep.mubr.bf16.mxu0 %v6118
    %9828 = vmatmul.mubr.bf16.gmra.mrb[0].mxu0 %v6117
    %v9829 = vpop.f32.mrb[0].mxu0
    %v9830 = vadd.f32 %v9787, %v9829
    %v9831 = vpop.f32.mrb[0].mxu0
    %v9832 = vadd.f32 %v9789, %v9831
    %v9833 = vpop.f32.mrb[0].mxu0
    %v9834 = vadd.f32 %v9791, %v9833
    %v9835 = vpop.f32.mrb[0].mxu0
    %v9836 = vadd.f32 %v9793, %v9835
    %9837 = vdwg.mxu0
    %9838 = vmatprep.subr.bf16.mxu0 %v8620
    %9839 = vmatpush1.bf16.msra.mxu0 %v8619
    %9840 = vmatprep.subr.bf16.mxu0 %v8624
    %9841 = vmatpush1.bf16.msra.mxu0 %v8623
    %9842 = vmatprep.subr.bf16.mxu0 %v8628
    %9843 = vmatpush1.bf16.msra.mxu0 %v8627
    %9844 = vmatprep.subr.bf16.mxu0 %v8632
    %9845 = vmatpush1.bf16.msra.mxu0 %v8631
    %9846 = vmatprep.subr.bf16.mxu0 %v8636
    %9847 = vmatpush1.bf16.msra.mxu0 %v8635
    %9848 = vmatprep.subr.bf16.mxu0 %v8640
    %9849 = vmatpush1.bf16.msra.mxu0 %v8639
    %9850 = vmatprep.subr.bf16.mxu0 %v8644
    %9851 = vmatpush1.bf16.msra.mxu0 %v8643
    %9852 = vmatprep.subr.bf16.mxu0 %v8648
    %9853 = vmatpush1.bf16.msra.mxu0 %v8647
    %9854 = vmatprep.subr.bf16.mxu0 %v8652
    %9855 = vmatpush1.bf16.msra.mxu0 %v8651
    %9856 = vmatprep.subr.bf16.mxu0 %v8656
    %9857 = vmatpush1.bf16.msra.mxu0 %v8655
    %9858 = vmatprep.subr.bf16.mxu0 %v8660
    %9859 = vmatpush1.bf16.msra.mxu0 %v8659
    %9860 = vmatprep.subr.bf16.mxu0 %v8664
    %9861 = vmatpush1.bf16.msra.mxu0 %v8663
    %9862 = vmatprep.subr.bf16.mxu0 %v8668
    %9863 = vmatpush1.bf16.msra.mxu0 %v8667
    %9864 = vmatprep.subr.bf16.mxu0 %v8672
    %9865 = vmatpush1.bf16.msra.mxu0 %v8671
    %9866 = vmatprep.subr.bf16.mxu0 %v8676
    %9867 = vmatpush1.bf16.msra.mxu0 %v8675
    %9868 = vmatprep.subr.bf16.mxu0 %v8680
    %9869 = vmatpush1.bf16.msra.mxu0 %v8679
    %9870 = vmatprep.mubr.bf16.mxu0 %v6120
    %9871 = vmatmul.mubr.bf16.gmra.mrb[0].mxu0 %v6119
    %v9872 = vpop.f32.mrb[0].mxu0
    %v9873 = vadd.f32 %v9830, %v9872
    %v9874 = vpop.f32.mrb[0].mxu0
    %v9875 = vadd.f32 %v9832, %v9874
    %v9876 = vpop.f32.mrb[0].mxu0
    %v9877 = vadd.f32 %v9834, %v9876
    %v9878 = vpop.f32.mrb[0].mxu0
    %v9879 = vadd.f32 %v9836, %v9878
    %9880 = vdwg.mxu0
    %v9881 = vadd.f32 %v9529, %v9531
    %v9882 = vadd.f32 %v9881, %v9873
    %v9883 = vadd.f32 %v9882, %v9875
    %9884 = vadd.xlane.f32.xlu0 %v9883
    %v9885 = vpop.xlane.xlu0 %9884
    %v9886 = vadd.f32 %v9533, %v9535
    %v9887 = vadd.f32 %v9886, %v9877
    %v9888 = vadd.f32 %v9887, %v9879
    %9889 = vadd.xlane.f32.xlu0 %v9888
    %v9890 = vpop.xlane.xlu0 %9889
    %v9891 = vmul.f32 %v9885, %v2266
    %v9892 = vmul.f32 %v9890, %v2266
    %v9893 = vsub.f32 %v9529, %v9891
    %v9894 = vsub.f32 %v9531, %v9891
    %v9895 = vsub.f32 %v9873, %v9891
    %v9896 = vsub.f32 %v9875, %v9891
    %v9897 = vsub.f32 %v9533, %v9892
    %v9898 = vsub.f32 %v9535, %v9892
    %v9899 = vsub.f32 %v9877, %v9892
    %v9900 = vsub.f32 %v9879, %v9892
    %v9901 = vmul.f32 %v9893, %v9893
    %v9902 = vmul.f32 %v9894, %v9894
    %v9903 = vmul.f32 %v9895, %v9895
    %v9904 = vmul.f32 %v9896, %v9896
    %v9905 = vmul.f32 %v9897, %v9897
    %v9906 = vmul.f32 %v9898, %v9898
    %v9907 = vmul.f32 %v9899, %v9899
    %v9908 = vmul.f32 %v9900, %v9900
    %v9909 = vadd.f32 %v9901, %v9902
    %v9910 = vadd.f32 %v9909, %v9903
    %v9911 = vadd.f32 %v9910, %v9904
    %9912 = vadd.xlane.f32.xlu0 %v9911
    %v9913 = vpop.xlane.xlu0 %9912
    %v9914 = vadd.f32 %v9905, %v9906
    %v9915 = vadd.f32 %v9914, %v9907
    %v9916 = vadd.f32 %v9915, %v9908
    %9917 = vadd.xlane.f32.xlu0 %v9916
    %v9918 = vpop.xlane.xlu0 %9917
    %v9919 = vmul.f32 %v9913, %v2266
    %v9920 = vmul.f32 %v9918, %v2266
    %v9921 = vadd.f32 %v9919, 1e-05
    %v9922 = vadd.f32 %v9920, 1e-05
    %v9923 = vrsqrt.pop %v9921
    %v9924 = vrsqrt.pop %v9922
    %v9925 = vmul.f32 %v9893, %v9923
    %v9926 = vmul.f32 %v9894, %v9923
    %v9927 = vmul.f32 %v9895, %v9923
    %v9928 = vmul.f32 %v9896, %v9923
    %v9929 = vmul.f32 %v9897, %v9924
    %v9930 = vmul.f32 %v9898, %v9924
    %v9931 = vmul.f32 %v9899, %v9924
    %v9932 = vmul.f32 %v9900, %v9924
    %v9933 = vld [vmem:[#allocation14] sm:$0xf]
    %v9935 = vlaneseq
    %v9936 = vshrl.u32 %v9935, 7
    %v9937 = vsub.s32 0, %v9936
    %v9938 = vrot.slane %v9933, %v9937
    %v9939 = vlaneseq
    %v9940 = vshrl.u32 %v9939, 7
    %v9941 = vsub.s32 1, %v9940
    %v9942 = vrot.slane %v9933, %v9941
    %v9943 = vlaneseq
    %v9944 = vshrl.u32 %v9943, 7
    %v9945 = vsub.s32 2, %v9944
    %v9946 = vrot.slane %v9933, %v9945
    %v9947 = vlaneseq
    %v9948 = vshrl.u32 %v9947, 7
    %v9949 = vsub.s32 3, %v9948
    %v9950 = vrot.slane %v9933, %v9949
    %v9955 = vmul.f32 %v9925, %v9938
    %v9956 = vmul.f32 %v9926, %v9942
    %v9957 = vmul.f32 %v9927, %v9946
    %v9958 = vmul.f32 %v9928, %v9950
    %v9959 = vmul.f32 %v9929, %v9938
    %v9960 = vmul.f32 %v9930, %v9942
    %v9961 = vmul.f32 %v9931, %v9946
    %v9962 = vmul.f32 %v9932, %v9950
    %v9963 = vadd.f32 %v9955, %v9956
    %v9964 = vadd.f32 %v9963, %v9957
    %v9965 = vadd.f32 %v9964, %v9958
    %9966 = vadd.xlane.f32.xlu0 %v9965
    %v9967 = vpop.xlane.xlu0 %9966
    %v9968 = vadd.f32 %v9959, %v9960
    %v9969 = vadd.f32 %v9968, %v9961
    %v9970 = vadd.f32 %v9969, %v9962
    %9971 = vadd.xlane.f32.xlu0 %v9970
    %v9972 = vpop.xlane.xlu0 %9971
    %9973 = vst [vmem:[#allocation16] sm:$0xff] %v9967
    %9974 = vst [vmem:[#allocation16 + $0x8] sm:$0xff] %v9972
    // Predicated region
    $region66: #{tpu_custom_call.1} parent=1 // pred_check
      _
    $region67: #{tpu_custom_call.1} parent=1 // pred_check_branch
      %9976 = sbr.rel (0) target = $region69
    $region68: #{tpu_custom_call.1} parent=1 // pred_region
      %s9978 = ssub.s32 256, 256
      %9979 = vsyncadd [#allocation4], %s9978
      %s9980 = sshll.u32 [#allocation16], 4
      %s9981 = int_to_ptr.vmem [resolvable:$true] %s9980
      %9986 = dma.vmem_to_hbm [thread:$0]  %s9981, 256, %s8, [#allocation4], 128, 128, 8
    $region69: #{tpu_custom_call.1} parent=1 // pred_fallthru
      _
    // Predicated region
    $region70: #{tpu_custom_call.1} parent=1 // pred_check
      _
    $region71: #{tpu_custom_call.1} parent=1 // pred_check_branch
      %9988 = sbr.rel (0) target = $region73
    $region72: #{tpu_custom_call.1} parent=1 // pred_region
      %9989 = dma.done [#allocation4], 256
    $region73: #{tpu_custom_call.1} parent=1 // pred_fallthru
      _
    %9990 = vsyncpa [#allocation3], 1
    %9991 = vsyncpa [#allocation6], 1
    %9992 = vsyncpa [#allocation9], 1
    %9993 = vsyncpa [#allocation12], 1
    %9994 = vsyncpa [#allocation15], 1
    %9995 = vsyncpa [#allocation4], 1

</llo_original>
